<compile_context>
chip_gen: v6e
topology: v6e:2x2x1
jax: 0.10.0
libtpu: 0.0.40
codegen_flags: <defaults>
</compile_context>

<pallas_src>
import functools
import math

import jax
import jax.numpy as jnp
from jax.experimental import pallas as pl
from jax.experimental.pallas import tpu as pltpu

_EPS = 1e-5


# ----------------------------- Pallas kernels ------------------------------

def _bn_relu_kernel(x_ref, g_ref, b_ref, o_ref, *, inv_m, eps):
    """Single-pass training-mode BatchNorm (batch stats, biased var) + ReLU."""
    x = x_ref[...].astype(jnp.float32)                      # (M, C)
    mean = jnp.sum(x, axis=0, keepdims=True) * inv_m        # (1, C)
    var = jnp.sum(x * x, axis=0, keepdims=True) * inv_m - mean * mean
    scale = g_ref[...] * jax.lax.rsqrt(var + eps)
    shift = b_ref[...] - mean * scale
    o_ref[...] = jnp.maximum(x * scale + shift, 0.0).astype(o_ref.dtype)


def _conv_bn_relu_kernel(p_ref, w_ref, g_ref, b_ref, o_ref, *, inv_m, eps):
    """conv (im2col matmul) + BatchNorm(batch stats) + ReLU fused; stats are taken on
    the conv output while it is still in VMEM (no un-normalized HBM round trip)."""
    y = jnp.dot(p_ref[...], w_ref[...], preferred_element_type=jnp.float32)  # (M, Cout)
    mean = jnp.sum(y, axis=0, keepdims=True) * inv_m
    var = jnp.sum(y * y, axis=0, keepdims=True) * inv_m - mean * mean
    scale = g_ref[...] * jax.lax.rsqrt(var + eps)
    shift = b_ref[...] - mean * scale
    o_ref[...] = jnp.maximum(y * scale + shift, 0.0).astype(o_ref.dtype)


def _conv_kernel(p_ref, w_ref, o_ref):
    o_ref[...] = jnp.dot(p_ref[...], w_ref[...], preferred_element_type=jnp.float32)


def _conv_add_kernel(p_ref, w_ref, s_ref, o_ref):
    """conv2 + residual add fused in the matmul epilogue (identity shortcut)."""
    o_ref[...] = (jnp.dot(p_ref[...], w_ref[...], preferred_element_type=jnp.float32)
                  + s_ref[...])


def _conv_add_short_kernel(p_ref, w_ref, xs_ref, ws_ref, o_ref):
    """conv2 + 1x1 projection shortcut + residual add, all in one kernel."""
    o_ref[...] = (jnp.dot(p_ref[...], w_ref[...], preferred_element_type=jnp.float32)
                  + jnp.dot(xs_ref[...], ws_ref[...], preferred_element_type=jnp.float32))


def _tail_kernel(x_ref, g_ref, b_ref, pool_ref, w_ref, fb_ref, o_ref, *, inv_m, eps):
    """Final BN + ReLU + global average pool (as a small matmul) + fc + bias."""
    x = x_ref[...]                                          # (M, C) f32
    mean = jnp.sum(x, axis=0, keepdims=True) * inv_m
    var = jnp.sum(x * x, axis=0, keepdims=True) * inv_m - mean * mean
    scale = g_ref[...] * jax.lax.rsqrt(var + eps)
    shift = b_ref[...] - mean * scale
    y = jnp.maximum(x * scale + shift, 0.0)                 # (M, C)
    pooled = jnp.dot(pool_ref[...], y, preferred_element_type=jnp.float32)   # (N, C)
    o_ref[...] = (jnp.dot(pooled, w_ref[...], preferred_element_type=jnp.float32)
                  + fb_ref[...])


# ------------------------------ kernel wrappers -----------------------------

def _pick_tile_m(m):
    """Largest convenient M tile; big shapes shard over a parallel grid (v7x 2 TCs,
    bounded VMEM), toy shapes collapse to a single block."""
    for t in (1024, 512, 256, 128):
        if m % t == 0:
            return t
    return m


def pallas_bn_relu(x2d, gamma, beta):
    M, C = x2d.shape
    kern = functools.partial(_bn_relu_kernel, inv_m=1.0 / M, eps=_EPS)
    # grid=(1,): batch-norm needs the full M extent resident for its statistics.
    return pl.pallas_call(
        kern,
        out_shape=jax.ShapeDtypeStruct((M, C), jnp.bfloat16),
        grid=(1,),
        in_specs=[pl.BlockSpec((M, C), lambda i: (0, 0)),
                  pl.BlockSpec((1, C), lambda i: (0, 0)),
                  pl.BlockSpec((1, C), lambda i: (0, 0))],
        out_specs=pl.BlockSpec((M, C), lambda i: (0, 0)),
    )(x2d, gamma, beta)


def pallas_conv_bn_relu(patches, w, gamma, beta):
    M, K = patches.shape
    Cout = w.shape[1]
    kern = functools.partial(_conv_bn_relu_kernel, inv_m=1.0 / M, eps=_EPS)
    return pl.pallas_call(
        kern,
        out_shape=jax.ShapeDtypeStruct((M, Cout), jnp.bfloat16),
        grid=(1,),
        in_specs=[pl.BlockSpec((M, K), lambda i: (0, 0)),
                  pl.BlockSpec((K, Cout), lambda i: (0, 0)),
                  pl.BlockSpec((1, Cout), lambda i: (0, 0)),
                  pl.BlockSpec((1, Cout), lambda i: (0, 0))],
        out_specs=pl.BlockSpec((M, Cout), lambda i: (0, 0)),
    )(patches, w, gamma, beta)


def pallas_conv(patches, w):
    M, K = patches.shape
    Cout = w.shape[1]
    tm = _pick_tile_m(M)
    return pl.pallas_call(
        _conv_kernel,
        out_shape=jax.ShapeDtypeStruct((M, Cout), jnp.float32),
        grid=(M // tm,),
        in_specs=[pl.BlockSpec((tm, K), lambda i: (i, 0)),
                  pl.BlockSpec((K, Cout), lambda i: (0, 0))],
        out_specs=pl.BlockSpec((tm, Cout), lambda i: (i, 0)),
        compiler_params=pltpu.CompilerParams(dimension_semantics=("parallel",)),
    )(patches, w)


def pallas_conv_add(patches, w, shortcut):
    M, K = patches.shape
    Cout = w.shape[1]
    tm = _pick_tile_m(M)
    return pl.pallas_call(
        _conv_add_kernel,
        out_shape=jax.ShapeDtypeStruct((M, Cout), jnp.float32),
        grid=(M // tm,),
        in_specs=[pl.BlockSpec((tm, K), lambda i: (i, 0)),
                  pl.BlockSpec((K, Cout), lambda i: (0, 0)),
                  pl.BlockSpec((tm, Cout), lambda i: (i, 0))],
        out_specs=pl.BlockSpec((tm, Cout), lambda i: (i, 0)),
        compiler_params=pltpu.CompilerParams(dimension_semantics=("parallel",)),
    )(patches, w, shortcut)


def pallas_conv_add_short(patches, w, xs, ws):
    M, K = patches.shape
    Cout = w.shape[1]
    Cin = ws.shape[0]
    tm = _pick_tile_m(M)
    return pl.pallas_call(
        _conv_add_short_kernel,
        out_shape=jax.ShapeDtypeStruct((M, Cout), jnp.float32),
        grid=(M // tm,),
        in_specs=[pl.BlockSpec((tm, K), lambda i: (i, 0)),
                  pl.BlockSpec((K, Cout), lambda i: (0, 0)),
                  pl.BlockSpec((tm, Cin), lambda i: (i, 0)),
                  pl.BlockSpec((Cin, Cout), lambda i: (0, 0))],
        out_specs=pl.BlockSpec((tm, Cout), lambda i: (i, 0)),
        compiler_params=pltpu.CompilerParams(dimension_semantics=("parallel",)),
    )(patches, w, xs, ws)


def pallas_tail(x2d, gamma, beta, pool_mat, fc_w, fc_b):
    M, C = x2d.shape
    Nb = pool_mat.shape[0]
    nc = fc_w.shape[1]
    kern = functools.partial(_tail_kernel, inv_m=1.0 / M, eps=_EPS)
    return pl.pallas_call(
        kern,
        out_shape=jax.ShapeDtypeStruct((Nb, nc), jnp.float32),
        grid=(1,),
        in_specs=[pl.BlockSpec((M, C), lambda i: (0, 0)),
                  pl.BlockSpec((1, C), lambda i: (0, 0)),
                  pl.BlockSpec((1, C), lambda i: (0, 0)),
                  pl.BlockSpec((Nb, M), lambda i: (0, 0)),
                  pl.BlockSpec((C, nc), lambda i: (0, 0)),
                  pl.BlockSpec((1, nc), lambda i: (0, 0))],
        out_specs=pl.BlockSpec((Nb, nc), lambda i: (0, 0)),
    )(x2d, gamma, beta, pool_mat, fc_w, fc_b)


# ------------------------------ model glue ---------------------------------

def _im2col(x_nhwc, stride):
    """3x3 / pad 1 window extraction -> (N*Ho*Wo, 9*C) with (kh, kw, cin) K ordering."""
    N, H, W, C = x_nhwc.shape
    Ho = (H + 2 - 3) // stride + 1
    Wo = (W + 2 - 3) // stride + 1
    xp = jnp.pad(x_nhwc, ((0, 0), (1, 1), (1, 1), (0, 0)))
    cols = []
    for kh in range(3):
        for kw in range(3):
            cols.append(xp[:, kh:kh + stride * (Ho - 1) + 1:stride,
                           kw:kw + stride * (Wo - 1) + 1:stride, :])
    patches = jnp.concatenate(cols, axis=-1).reshape(N * Ho * Wo, 9 * C)
    return patches, Ho, Wo


def basic_block(x_nhwc, p):
    N, H, W, Cin = x_nhwc.shape
    stride = p['stride']
    Cout = p['g2'].shape[1]

    # bn1 + relu1 (fused single pass, bf16 output feeds the MXU)
    y2 = pallas_bn_relu(x_nhwc.reshape(N * H * W, Cin), p['g1'], p['b1'])
    y = y2.reshape(N, H, W, Cin)

    # conv1 + bn2 + relu2 (fused)
    patches1, Ho, Wo = _im2col(y, stride)
    h2 = pallas_conv_bn_relu(patches1, p['w1'], p['g2'], p['b2'])
    h = h2.reshape(N, Ho, Wo, Cout)

    # conv2 + (optional 1x1 projection shortcut) + residual add (fused)
    patches2, _, _ = _im2col(h, 1)
    if p['equal']:
        out2 = pallas_conv_add(patches2, p['w2'], x_nhwc.reshape(N * H * W, Cin))
    else:
        # shortcut conv input is relu(bn(x)); 1x1 stride-s conv == strided pick + matmul
        xs = y[:, ::stride, ::stride, :].reshape(N * Ho * Wo, Cin)
        out2 = pallas_conv_add_short(patches2, p['w2'], xs, p['ws'])
    return out2.reshape(N, Ho, Wo, Cout)


def wideresnet_forward(x_nchw, params):
    x = jnp.transpose(x_nchw, (0, 2, 3, 1)).astype(jnp.bfloat16)  # NCHW -> NHWC, bf16
    N = x.shape[0]

    # stem conv
    patches, Ho, Wo = _im2col(x, 1)
    out = pallas_conv(patches, params['conv1_w']).reshape(N, Ho, Wo, -1)

    for blk in params['block1'] + params['block2'] + params['block3']:
        out = basic_block(out, blk)

    # fused tail: bn + relu + global avg pool + fc
    Nb, Hf, Wf, Cf = out.shape
    HW = Hf * Wf
    pool_mat = jnp.repeat(jnp.eye(Nb, dtype=jnp.float32), HW, axis=1) * (1.0 / HW)
    logits = pallas_tail(out.reshape(Nb * HW, Cf), params['bn_g'], params['bn_b'],
                         pool_mat, params['fc_w'], params['fc_b'])
    return logits


# ------------------------------ param init ---------------------------------

def _make_conv_w(key, cout, cin, k):
    std = math.sqrt(2.0 / (k * k * cout))       # matches m.weight.data.normal_(0, sqrt(2/n))
    return jax.random.normal(key, (cout, cin, k, k), jnp.float32) * std


def _prep_w3(w_oihw):
    # (Cout, Cin, 3, 3) -> (9*Cin, Cout) bf16 with (kh, kw, cin) row ordering
    cout = w_oihw.shape[0]
    return jnp.transpose(w_oihw, (2, 3, 1, 0)).reshape(-1, cout).astype(jnp.bfloat16)


def _prep_w1(w_oihw):
    # (Cout, Cin, 1, 1) -> (Cin, Cout) bf16
    cout, cin = w_oihw.shape[0], w_oihw.shape[1]
    return jnp.transpose(w_oihw.reshape(cout, cin), (1, 0)).astype(jnp.bfloat16)


def _init_block(key, in_planes, out_planes, stride):
    ks = jax.random.split(key, 3)
    equal = in_planes == out_planes
    p = {
        'stride': stride,
        'equal': equal,
        'g1': jnp.ones((1, in_planes), jnp.float32),
        'b1': jnp.zeros((1, in_planes), jnp.float32),
        'w1': _prep_w3(_make_conv_w(ks[0], out_planes, in_planes, 3)),
        'g2': jnp.ones((1, out_planes), jnp.float32),
        'b2': jnp.zeros((1, out_planes), jnp.float32),
        'w2': _prep_w3(_make_conv_w(ks[1], out_planes, out_planes, 3)),
    }
    if not equal:
        p['ws'] = _prep_w1(_make_conv_w(ks[2], out_planes, in_planes, 1))
    return p


def init_wideresnet(key, depth=10, num_classes=10, widen_factor=1, in_channels=3):
    nCh = [16, 16 * widen_factor, 32 * widen_factor, 64 * widen_factor]
    assert (depth - 4) % 6 == 0
    n = (depth - 4) // 6
    keys = jax.random.split(key, 3 * n + 2)
    ki = iter(keys)

    params = {'conv1_w': _prep_w3(_make_conv_w(next(ki), nCh[0], in_channels, 3))}

    def make_group(in_p, out_p, stride):
        blocks = []
        for i in range(n):
            blocks.append(_init_block(next(ki),
                                      in_p if i == 0 else out_p,
                                      out_p,
                                      stride if i == 0 else 1))
        return blocks

    params['block1'] = make_group(nCh[0], nCh[1], 1)
    params['block2'] = make_group(nCh[1], nCh[2], 2)
    params['block3'] = make_group(nCh[2], nCh[3], 2)
    params['bn_g'] = jnp.ones((1, nCh[3]), jnp.float32)
    params['bn_b'] = jnp.zeros((1, nCh[3]), jnp.float32)
    # nn.Linear: weight (num_classes, nCh[3]) — synthetic normal init; bias zeroed per module init.
    fc_w = jax.random.normal(next(ki), (num_classes, nCh[3]), jnp.float32) * (1.0 / math.sqrt(nCh[3]))
    params['fc_w'] = jnp.transpose(fc_w, (1, 0))
    params['fc_b'] = jnp.zeros((1, num_classes), jnp.float32)
    return params


# --------------------------------- main -------------------------------------

if __name__ == "__main__":
    key = jax.random.PRNGKey(0)
    k_in, k_par = jax.random.split(key)

    depth, num_classes, widen = 10, 10, 1
    params = init_wideresnet(k_par, depth=depth, num_classes=num_classes,
                             widen_factor=widen, in_channels=3)

    # input matches PyTorch NCHW convention: (batch=2, channels=3, H=16, W=16)
    x = jax.random.normal(k_in, (2, 3, 16, 16), jnp.float32)

    fwd = jax.jit(lambda inp: wideresnet_forward(inp, params))
    logits = jax.block_until_ready(fwd(x))

    assert logits.shape == (2, num_classes), logits.shape
    assert bool(jnp.all(jnp.isfinite(logits)))
    print("KERNEL_OK")
</pallas_src>

<mosaic_0001>
module attributes {stable_mosaic.version = 11 : i64} {
  func.func @_conv_kernel(%arg0: i32, %arg1: memref<512x27xbf16, #tpu.memory_space<vmem>>, %arg2: memref<27x16xbf16, #tpu.memory_space<vmem>>, %arg3: memref<512x16xf32, #tpu.memory_space<vmem>>) attributes {dimension_semantics = [#tpu.dimension_semantics<parallel>], iteration_bounds = array<i64: 1>, scalar_prefetch = 0 : i64, scratch_operands = 0 : i64, tpu.core_type = #tpu.core_type<tc>, window_params = [{transform_indices = @transform_0, window_bounds = array<i64: 512, 27>}, {pipeline_mode = #tpu.pipeline_mode<synchronous>, transform_indices = @transform_1, window_bounds = array<i64: 27, 16>}, {transform_indices = @transform_2, window_bounds = array<i64: 512, 16>}]} {
    %c0 = arith.constant 0 : index
    %c0_0 = arith.constant 0 : index
    %0 = vector.load %arg1[%c0, %c0_0] : memref<512x27xbf16, #tpu.memory_space<vmem>>, vector<512x27xbf16>
    %c0_1 = arith.constant 0 : index
    %c0_2 = arith.constant 0 : index
    %1 = vector.load %arg2[%c0_1, %c0_2] : memref<27x16xbf16, #tpu.memory_space<vmem>>, vector<27x16xbf16>
    %cst = arith.constant dense<0.000000e+00> : vector<512x16xf32>
    %2 = tpu.matmul %0, %1, %cst {dimension_numbers = #tpu.dot_dimension_numbers<[1], [0], [0], [1], [0, 0, 1, 1], [], []>} : vector<512x27xbf16>, vector<27x16xbf16>, vector<512x16xf32> -> vector<512x16xf32>
    %c0_3 = arith.constant 0 : index
    %c0_4 = arith.constant 0 : index
    %3 = vector.load %arg3[%c0_3, %c0_4] : memref<512x16xf32, #tpu.memory_space<vmem>>, vector<512x16xf32>
    tpu.vector_store %arg3[%c0_3, %c0_4], %2 {strides = array<i32>} : memref<512x16xf32, #tpu.memory_space<vmem>>, vector<512x16xf32>,
    return
  }
  func.func @transform_0(%arg0: i32) -> (i32, i32) {
    %c0_i32 = arith.constant 0 : i32
    %c0_i32_0 = arith.constant 0 : i32
    return %arg0, %c0_i32 : i32, i32
  }
  func.func @transform_1(%arg0: i32) -> (i32, i32) {
    %c0_i32 = arith.constant 0 : i32
    %c0_i32_0 = arith.constant 0 : i32
    %c0_i32_1 = arith.constant 0 : i32
    return %c0_i32, %c0_i32_0 : i32, i32
  }
  func.func @transform_2(%arg0: i32) -> (i32, i32) {
    %c0_i32 = arith.constant 0 : i32
    %c0_i32_0 = arith.constant 0 : i32
    return %arg0, %c0_i32 : i32, i32
  }
}

module attributes {stable_mosaic.version = 11 : i64} {
  func.func @_bn_relu_kernel(%arg0: i32, %arg1: memref<512x16xf32, #tpu.memory_space<vmem>>, %arg2: memref<1x16xf32, #tpu.memory_space<vmem>>, %arg3: memref<1x16xf32, #tpu.memory_space<vmem>>, %arg4: memref<512x16xbf16, #tpu.memory_space<vmem>>) attributes {dimension_semantics = [#tpu.dimension_semantics<arbitrary>], iteration_bounds = array<i64: 1>, scalar_prefetch = 0 : i64, scratch_operands = 0 : i64, tpu.core_type = #tpu.core_type<tc>, window_params = [{pipeline_mode = #tpu.pipeline_mode<synchronous>, transform_indices = @transform_0, window_bounds = array<i64: 512, 16>}, {pipeline_mode = #tpu.pipeline_mode<synchronous>, transform_indices = @transform_1, window_bounds = array<i64: 1, 16>}, {pipeline_mode = #tpu.pipeline_mode<synchronous>, transform_indices = @transform_2, window_bounds = array<i64: 1, 16>}, {pipeline_mode = #tpu.pipeline_mode<synchronous>, transform_indices = @transform_3, window_bounds = array<i64: 512, 16>}]} {
    %c0 = arith.constant 0 : index
    %c0_0 = arith.constant 0 : index
    %0 = vector.load %arg1[%c0, %c0_0] : memref<512x16xf32, #tpu.memory_space<vmem>>, vector<512x16xf32>
    %cst = arith.constant dense<0.000000e+00> : vector<16xf32>
    %1 = vector.multi_reduction <add>, %0, %cst [0] : vector<512x16xf32> to vector<16xf32>
    %2 = vector.shape_cast %1 : vector<16xf32> to vector<1x16xf32>
    %cst_1 = arith.constant 0.001953125 : f32
    %3 = vector.broadcast %cst_1 : f32 to vector<1x16xf32>
    %4 = arith.mulf %2, %3 : vector<1x16xf32>
    %5 = arith.mulf %0, %0 : vector<512x16xf32>
    %cst_2 = arith.constant dense<0.000000e+00> : vector<16xf32>
    %6 = vector.multi_reduction <add>, %5, %cst_2 [0] : vector<512x16xf32> to vector<16xf32>
    %7 = vector.shape_cast %6 : vector<16xf32> to vector<1x16xf32>
    %cst_3 = arith.constant 0.001953125 : f32
    %8 = vector.broadcast %cst_3 : f32 to vector<1x16xf32>
    %9 = arith.mulf %7, %8 : vector<1x16xf32>
    %10 = arith.mulf %4, %4 : vector<1x16xf32>
    %11 = arith.subf %9, %10 : vector<1x16xf32>
    %c0_4 = arith.constant 0 : index
    %c0_5 = arith.constant 0 : index
    %12 = vector.load %arg2[%c0_4, %c0_5] : memref<1x16xf32, #tpu.memory_space<vmem>>, vector<1x16xf32>
    %cst_6 = arith.constant 9.99999974E-6 : f32
    %13 = vector.broadcast %cst_6 : f32 to vector<1x16xf32>
    %14 = arith.addf %11, %13 : vector<1x16xf32>
    %15 = math.rsqrt %14 : vector<1x16xf32>
    %16 = arith.mulf %12, %15 : vector<1x16xf32>
    %c0_7 = arith.constant 0 : index
    %c0_8 = arith.constant 0 : index
    %17 = vector.load %arg3[%c0_7, %c0_8] : memref<1x16xf32, #tpu.memory_space<vmem>>, vector<1x16xf32>
    %18 = arith.mulf %4, %16 : vector<1x16xf32>
    %19 = arith.subf %17, %18 : vector<1x16xf32>
    %20 = vector.broadcast %16 : vector<1x16xf32> to vector<512x16xf32>
    %21 = arith.mulf %0, %20 : vector<512x16xf32>
    %22 = vector.broadcast %19 : vector<1x16xf32> to vector<512x16xf32>
    %23 = arith.addf %21, %22 : vector<512x16xf32>
    %cst_9 = arith.constant 0.000000e+00 : f32
    %24 = vector.broadcast %cst_9 : f32 to vector<512x16xf32>
    %25 = arith.maximumf %23, %24 : vector<512x16xf32>
    %26 = arith.truncf %25 : vector<512x16xf32> to vector<512x16xbf16>
    %c0_10 = arith.constant 0 : index
    %c0_11 = arith.constant 0 : index
    %27 = vector.load %arg4[%c0_10, %c0_11] : memref<512x16xbf16, #tpu.memory_space<vmem>>, vector<512x16xbf16>
    tpu.vector_store %arg4[%c0_10, %c0_11], %26 {strides = array<i32>} : memref<512x16xbf16, #tpu.memory_space<vmem>>, vector<512x16xbf16>,
    return
  }
  func.func @transform_0(%arg0: i32) -> (i32, i32) {
    %c0_i32 = arith.constant 0 : i32
    %c0_i32_0 = arith.constant 0 : i32
    %c0_i32_1 = arith.constant 0 : i32
    return %c0_i32, %c0_i32_0 : i32, i32
  }
  func.func @transform_1(%arg0: i32) -> (i32, i32) {
    %c0_i32 = arith.constant 0 : i32
    %c0_i32_0 = arith.constant 0 : i32
    %c0_i32_1 = arith.constant 0 : i32
    return %c0_i32, %c0_i32_0 : i32, i32
  }
  func.func @transform_2(%arg0: i32) -> (i32, i32) {
    %c0_i32 = arith.constant 0 : i32
    %c0_i32_0 = arith.constant 0 : i32
    %c0_i32_1 = arith.constant 0 : i32
    return %c0_i32, %c0_i32_0 : i32, i32
  }
  func.func @transform_3(%arg0: i32) -> (i32, i32) {
    %c0_i32 = arith.constant 0 : i32
    %c0_i32_0 = arith.constant 0 : i32
    %c0_i32_1 = arith.constant 0 : i32
    return %c0_i32, %c0_i32_0 : i32, i32
  }
}

module attributes {stable_mosaic.version = 11 : i64} {
  func.func @_conv_bn_relu_kernel(%arg0: i32, %arg1: memref<512x144xbf16, #tpu.memory_space<vmem>>, %arg2: memref<144x16xbf16, #tpu.memory_space<vmem>>, %arg3: memref<1x16xf32, #tpu.memory_space<vmem>>, %arg4: memref<1x16xf32, #tpu.memory_space<vmem>>, %arg5: memref<512x16xbf16, #tpu.memory_space<vmem>>) attributes {dimension_semantics = [#tpu.dimension_semantics<arbitrary>], iteration_bounds = array<i64: 1>, scalar_prefetch = 0 : i64, scratch_operands = 0 : i64, tpu.core_type = #tpu.core_type<tc>, window_params = [{pipeline_mode = #tpu.pipeline_mode<synchronous>, transform_indices = @transform_0, window_bounds = array<i64: 512, 144>}, {pipeline_mode = #tpu.pipeline_mode<synchronous>, transform_indices = @transform_1, window_bounds = array<i64: 144, 16>}, {pipeline_mode = #tpu.pipeline_mode<synchronous>, transform_indices = @transform_2, window_bounds = array<i64: 1, 16>}, {pipeline_mode = #tpu.pipeline_mode<synchronous>, transform_indices = @transform_3, window_bounds = array<i64: 1, 16>}, {pipeline_mode = #tpu.pipeline_mode<synchronous>, transform_indices = @transform_4, window_bounds = array<i64: 512, 16>}]} {
    %c0 = arith.constant 0 : index
    %c0_0 = arith.constant 0 : index
    %0 = vector.load %arg1[%c0, %c0_0] : memref<512x144xbf16, #tpu.memory_space<vmem>>, vector<512x144xbf16>
    %c0_1 = arith.constant 0 : index
    %c0_2 = arith.constant 0 : index
    %1 = vector.load %arg2[%c0_1, %c0_2] : memref<144x16xbf16, #tpu.memory_space<vmem>>, vector<144x16xbf16>
    %cst = arith.constant dense<0.000000e+00> : vector<512x16xf32>
    %2 = tpu.matmul %0, %1, %cst {dimension_numbers = #tpu.dot_dimension_numbers<[1], [0], [0], [1], [0, 0, 1, 1], [], []>} : vector<512x144xbf16>, vector<144x16xbf16>, vector<512x16xf32> -> vector<512x16xf32>
    %cst_3 = arith.constant dense<0.000000e+00> : vector<16xf32>
    %3 = vector.multi_reduction <add>, %2, %cst_3 [0] : vector<512x16xf32> to vector<16xf32>
    %4 = vector.shape_cast %3 : vector<16xf32> to vector<1x16xf32>
    %cst_4 = arith.constant 0.001953125 : f32
    %5 = vector.broadcast %cst_4 : f32 to vector<1x16xf32>
    %6 = arith.mulf %4, %5 : vector<1x16xf32>
    %7 = arith.mulf %2, %2 : vector<512x16xf32>
    %cst_5 = arith.constant dense<0.000000e+00> : vector<16xf32>
    %8 = vector.multi_reduction <add>, %7, %cst_5 [0] : vector<512x16xf32> to vector<16xf32>
    %9 = vector.shape_cast %8 : vector<16xf32> to vector<1x16xf32>
    %cst_6 = arith.constant 0.001953125 : f32
    %10 = vector.broadcast %cst_6 : f32 to vector<1x16xf32>
    %11 = arith.mulf %9, %10 : vector<1x16xf32>
    %12 = arith.mulf %6, %6 : vector<1x16xf32>
    %13 = arith.subf %11, %12 : vector<1x16xf32>
    %c0_7 = arith.constant 0 : index
    %c0_8 = arith.constant 0 : index
    %14 = vector.load %arg3[%c0_7, %c0_8] : memref<1x16xf32, #tpu.memory_space<vmem>>, vector<1x16xf32>
    %cst_9 = arith.constant 9.99999974E-6 : f32
    %15 = vector.broadcast %cst_9 : f32 to vector<1x16xf32>
    %16 = arith.addf %13, %15 : vector<1x16xf32>
    %17 = math.rsqrt %16 : vector<1x16xf32>
    %18 = arith.mulf %14, %17 : vector<1x16xf32>
    %c0_10 = arith.constant 0 : index
    %c0_11 = arith.constant 0 : index
    %19 = vector.load %arg4[%c0_10, %c0_11] : memref<1x16xf32, #tpu.memory_space<vmem>>, vector<1x16xf32>
    %20 = arith.mulf %6, %18 : vector<1x16xf32>
    %21 = arith.subf %19, %20 : vector<1x16xf32>
    %22 = vector.broadcast %18 : vector<1x16xf32> to vector<512x16xf32>
    %23 = arith.mulf %2, %22 : vector<512x16xf32>
    %24 = vector.broadcast %21 : vector<1x16xf32> to vector<512x16xf32>
    %25 = arith.addf %23, %24 : vector<512x16xf32>
    %cst_12 = arith.constant 0.000000e+00 : f32
    %26 = vector.broadcast %cst_12 : f32 to vector<512x16xf32>
    %27 = arith.maximumf %25, %26 : vector<512x16xf32>
    %28 = arith.truncf %27 : vector<512x16xf32> to vector<512x16xbf16>
    %c0_13 = arith.constant 0 : index
    %c0_14 = arith.constant 0 : index
    %29 = vector.load %arg5[%c0_13, %c0_14] : memref<512x16xbf16, #tpu.memory_space<vmem>>, vector<512x16xbf16>
    tpu.vector_store %arg5[%c0_13, %c0_14], %28 {strides = array<i32>} : memref<512x16xbf16, #tpu.memory_space<vmem>>, vector<512x16xbf16>,
    return
  }
  func.func @transform_0(%arg0: i32) -> (i32, i32) {
    %c0_i32 = arith.constant 0 : i32
    %c0_i32_0 = arith.constant 0 : i32
    %c0_i32_1 = arith.constant 0 : i32
    return %c0_i32, %c0_i32_0 : i32, i32
  }
  func.func @transform_1(%arg0: i32) -> (i32, i32) {
    %c0_i32 = arith.constant 0 : i32
    %c0_i32_0 = arith.constant 0 : i32
    %c0_i32_1 = arith.constant 0 : i32
    return %c0_i32, %c0_i32_0 : i32, i32
  }
  func.func @transform_2(%arg0: i32) -> (i32, i32) {
    %c0_i32 = arith.constant 0 : i32
    %c0_i32_0 = arith.constant 0 : i32
    %c0_i32_1 = arith.constant 0 : i32
    return %c0_i32, %c0_i32_0 : i32, i32
  }
  func.func @transform_3(%arg0: i32) -> (i32, i32) {
    %c0_i32 = arith.constant 0 : i32
    %c0_i32_0 = arith.constant 0 : i32
    %c0_i32_1 = arith.constant 0 : i32
    return %c0_i32, %c0_i32_0 : i32, i32
  }
  func.func @transform_4(%arg0: i32) -> (i32, i32) {
    %c0_i32 = arith.constant 0 : i32
    %c0_i32_0 = arith.constant 0 : i32
    %c0_i32_1 = arith.constant 0 : i32
    return %c0_i32, %c0_i32_0 : i32, i32
  }
}

module attributes {stable_mosaic.version = 11 : i64} {
  func.func @_conv_add_kernel(%arg0: i32, %arg1: memref<512x144xbf16, #tpu.memory_space<vmem>>, %arg2: memref<144x16xbf16, #tpu.memory_space<vmem>>, %arg3: memref<512x16xf32, #tpu.memory_space<vmem>>, %arg4: memref<512x16xf32, #tpu.memory_space<vmem>>) attributes {dimension_semantics = [#tpu.dimension_semantics<parallel>], iteration_bounds = array<i64: 1>, scalar_prefetch = 0 : i64, scratch_operands = 0 : i64, tpu.core_type = #tpu.core_type<tc>, window_params = [{transform_indices = @transform_0, window_bounds = array<i64: 512, 144>}, {pipeline_mode = #tpu.pipeline_mode<synchronous>, transform_indices = @transform_1, window_bounds = array<i64: 144, 16>}, {transform_indices = @transform_2, window_bounds = array<i64: 512, 16>}, {transform_indices = @transform_3, window_bounds = array<i64: 512, 16>}]} {
    %c0 = arith.constant 0 : index
    %c0_0 = arith.constant 0 : index
    %0 = vector.load %arg1[%c0, %c0_0] : memref<512x144xbf16, #tpu.memory_space<vmem>>, vector<512x144xbf16>
    %c0_1 = arith.constant 0 : index
    %c0_2 = arith.constant 0 : index
    %1 = vector.load %arg2[%c0_1, %c0_2] : memref<144x16xbf16, #tpu.memory_space<vmem>>, vector<144x16xbf16>
    %cst = arith.constant dense<0.000000e+00> : vector<512x16xf32>
    %2 = tpu.matmul %0, %1, %cst {dimension_numbers = #tpu.dot_dimension_numbers<[1], [0], [0], [1], [0, 0, 1, 1], [], []>} : vector<512x144xbf16>, vector<144x16xbf16>, vector<512x16xf32> -> vector<512x16xf32>
    %c0_3 = arith.constant 0 : index
    %c0_4 = arith.constant 0 : index
    %3 = vector.load %arg3[%c0_3, %c0_4] : memref<512x16xf32, #tpu.memory_space<vmem>>, vector<512x16xf32>
    %4 = arith.addf %2, %3 : vector<512x16xf32>
    %c0_5 = arith.constant 0 : index
    %c0_6 = arith.constant 0 : index
    %5 = vector.load %arg4[%c0_5, %c0_6] : memref<512x16xf32, #tpu.memory_space<vmem>>, vector<512x16xf32>
    tpu.vector_store %arg4[%c0_5, %c0_6], %4 {strides = array<i32>} : memref<512x16xf32, #tpu.memory_space<vmem>>, vector<512x16xf32>,
    return
  }
  func.func @transform_0(%arg0: i32) -> (i32, i32) {
    %c0_i32 = arith.constant 0 : i32
    %c0_i32_0 = arith.constant 0 : i32
    return %arg0, %c0_i32 : i32, i32
  }
  func.func @transform_1(%arg0: i32) -> (i32, i32) {
    %c0_i32 = arith.constant 0 : i32
    %c0_i32_0 = arith.constant 0 : i32
    %c0_i32_1 = arith.constant 0 : i32
    return %c0_i32, %c0_i32_0 : i32, i32
  }
  func.func @transform_2(%arg0: i32) -> (i32, i32) {
    %c0_i32 = arith.constant 0 : i32
    %c0_i32_0 = arith.constant 0 : i32
    return %arg0, %c0_i32 : i32, i32
  }
  func.func @transform_3(%arg0: i32) -> (i32, i32) {
    %c0_i32 = arith.constant 0 : i32
    %c0_i32_0 = arith.constant 0 : i32
    return %arg0, %c0_i32 : i32, i32
  }
}

module attributes {stable_mosaic.version = 11 : i64} {
  func.func @_conv_bn_relu_kernel(%arg0: i32, %arg1: memref<128x144xbf16, #tpu.memory_space<vmem>>, %arg2: memref<144x32xbf16, #tpu.memory_space<vmem>>, %arg3: memref<1x32xf32, #tpu.memory_space<vmem>>, %arg4: memref<1x32xf32, #tpu.memory_space<vmem>>, %arg5: memref<128x32xbf16, #tpu.memory_space<vmem>>) attributes {dimension_semantics = [#tpu.dimension_semantics<arbitrary>], iteration_bounds = array<i64: 1>, scalar_prefetch = 0 : i64, scratch_operands = 0 : i64, tpu.core_type = #tpu.core_type<tc>, window_params = [{pipeline_mode = #tpu.pipeline_mode<synchronous>, transform_indices = @transform_0, window_bounds = array<i64: 128, 144>}, {pipeline_mode = #tpu.pipeline_mode<synchronous>, transform_indices = @transform_1, window_bounds = array<i64: 144, 32>}, {pipeline_mode = #tpu.pipeline_mode<synchronous>, transform_indices = @transform_2, window_bounds = array<i64: 1, 32>}, {pipeline_mode = #tpu.pipeline_mode<synchronous>, transform_indices = @transform_3, window_bounds = array<i64: 1, 32>}, {pipeline_mode = #tpu.pipeline_mode<synchronous>, transform_indices = @transform_4, window_bounds = array<i64: 128, 32>}]} {
    %c0 = arith.constant 0 : index
    %c0_0 = arith.constant 0 : index
    %0 = vector.load %arg1[%c0, %c0_0] : memref<128x144xbf16, #tpu.memory_space<vmem>>, vector<128x144xbf16>
    %c0_1 = arith.constant 0 : index
    %c0_2 = arith.constant 0 : index
    %1 = vector.load %arg2[%c0_1, %c0_2] : memref<144x32xbf16, #tpu.memory_space<vmem>>, vector<144x32xbf16>
    %cst = arith.constant dense<0.000000e+00> : vector<128x32xf32>
    %2 = tpu.matmul %0, %1, %cst {dimension_numbers = #tpu.dot_dimension_numbers<[1], [0], [0], [1], [0, 0, 1, 1], [], []>} : vector<128x144xbf16>, vector<144x32xbf16>, vector<128x32xf32> -> vector<128x32xf32>
    %cst_3 = arith.constant dense<0.000000e+00> : vector<32xf32>
    %3 = vector.multi_reduction <add>, %2, %cst_3 [0] : vector<128x32xf32> to vector<32xf32>
    %4 = vector.shape_cast %3 : vector<32xf32> to vector<1x32xf32>
    %cst_4 = arith.constant 7.812500e-03 : f32
    %5 = vector.broadcast %cst_4 : f32 to vector<1x32xf32>
    %6 = arith.mulf %4, %5 : vector<1x32xf32>
    %7 = arith.mulf %2, %2 : vector<128x32xf32>
    %cst_5 = arith.constant dense<0.000000e+00> : vector<32xf32>
    %8 = vector.multi_reduction <add>, %7, %cst_5 [0] : vector<128x32xf32> to vector<32xf32>
    %9 = vector.shape_cast %8 : vector<32xf32> to vector<1x32xf32>
    %cst_6 = arith.constant 7.812500e-03 : f32
    %10 = vector.broadcast %cst_6 : f32 to vector<1x32xf32>
    %11 = arith.mulf %9, %10 : vector<1x32xf32>
    %12 = arith.mulf %6, %6 : vector<1x32xf32>
    %13 = arith.subf %11, %12 : vector<1x32xf32>
    %c0_7 = arith.constant 0 : index
    %c0_8 = arith.constant 0 : index
    %14 = vector.load %arg3[%c0_7, %c0_8] : memref<1x32xf32, #tpu.memory_space<vmem>>, vector<1x32xf32>
    %cst_9 = arith.constant 9.99999974E-6 : f32
    %15 = vector.broadcast %cst_9 : f32 to vector<1x32xf32>
    %16 = arith.addf %13, %15 : vector<1x32xf32>
    %17 = math.rsqrt %16 : vector<1x32xf32>
    %18 = arith.mulf %14, %17 : vector<1x32xf32>
    %c0_10 = arith.constant 0 : index
    %c0_11 = arith.constant 0 : index
    %19 = vector.load %arg4[%c0_10, %c0_11] : memref<1x32xf32, #tpu.memory_space<vmem>>, vector<1x32xf32>
    %20 = arith.mulf %6, %18 : vector<1x32xf32>
    %21 = arith.subf %19, %20 : vector<1x32xf32>
    %22 = vector.broadcast %18 : vector<1x32xf32> to vector<128x32xf32>
    %23 = arith.mulf %2, %22 : vector<128x32xf32>
    %24 = vector.broadcast %21 : vector<1x32xf32> to vector<128x32xf32>
    %25 = arith.addf %23, %24 : vector<128x32xf32>
    %cst_12 = arith.constant 0.000000e+00 : f32
    %26 = vector.broadcast %cst_12 : f32 to vector<128x32xf32>
    %27 = arith.maximumf %25, %26 : vector<128x32xf32>
    %28 = arith.truncf %27 : vector<128x32xf32> to vector<128x32xbf16>
    %c0_13 = arith.constant 0 : index
    %c0_14 = arith.constant 0 : index
    %29 = vector.load %arg5[%c0_13, %c0_14] : memref<128x32xbf16, #tpu.memory_space<vmem>>, vector<128x32xbf16>
    tpu.vector_store %arg5[%c0_13, %c0_14], %28 {strides = array<i32>} : memref<128x32xbf16, #tpu.memory_space<vmem>>, vector<128x32xbf16>,
    return
  }
  func.func @transform_0(%arg0: i32) -> (i32, i32) {
    %c0_i32 = arith.constant 0 : i32
    %c0_i32_0 = arith.constant 0 : i32
    %c0_i32_1 = arith.constant 0 : i32
    return %c0_i32, %c0_i32_0 : i32, i32
  }
  func.func @transform_1(%arg0: i32) -> (i32, i32) {
    %c0_i32 = arith.constant 0 : i32
    %c0_i32_0 = arith.constant 0 : i32
    %c0_i32_1 = arith.constant 0 : i32
    return %c0_i32, %c0_i32_0 : i32, i32
  }
  func.func @transform_2(%arg0: i32) -> (i32, i32) {
    %c0_i32 = arith.constant 0 : i32
    %c0_i32_0 = arith.constant 0 : i32
    %c0_i32_1 = arith.constant 0 : i32
    return %c0_i32, %c0_i32_0 : i32, i32
  }
  func.func @transform_3(%arg0: i32) -> (i32, i32) {
    %c0_i32 = arith.constant 0 : i32
    %c0_i32_0 = arith.constant 0 : i32
    %c0_i32_1 = arith.constant 0 : i32
    return %c0_i32, %c0_i32_0 : i32, i32
  }
  func.func @transform_4(%arg0: i32) -> (i32, i32) {
    %c0_i32 = arith.constant 0 : i32
    %c0_i32_0 = arith.constant 0 : i32
    %c0_i32_1 = arith.constant 0 : i32
    return %c0_i32, %c0_i32_0 : i32, i32
  }
}

module attributes {stable_mosaic.version = 11 : i64} {
  func.func @_conv_add_short_kernel(%arg0: i32, %arg1: memref<128x288xbf16, #tpu.memory_space<vmem>>, %arg2: memref<288x32xbf16, #tpu.memory_space<vmem>>, %arg3: memref<128x16xbf16, #tpu.memory_space<vmem>>, %arg4: memref<16x32xbf16, #tpu.memory_space<vmem>>, %arg5: memref<128x32xf32, #tpu.memory_space<vmem>>) attributes {dimension_semantics = [#tpu.dimension_semantics<parallel>], iteration_bounds = array<i64: 1>, scalar_prefetch = 0 : i64, scratch_operands = 0 : i64, tpu.core_type = #tpu.core_type<tc>, window_params = [{transform_indices = @transform_0, window_bounds = array<i64: 128, 288>}, {pipeline_mode = #tpu.pipeline_mode<synchronous>, transform_indices = @transform_1, window_bounds = array<i64: 288, 32>}, {transform_indices = @transform_2, window_bounds = array<i64: 128, 16>}, {pipeline_mode = #tpu.pipeline_mode<synchronous>, transform_indices = @transform_3, window_bounds = array<i64: 16, 32>}, {transform_indices = @transform_4, window_bounds = array<i64: 128, 32>}]} {
    %c0 = arith.constant 0 : index
    %c0_0 = arith.constant 0 : index
    %0 = vector.load %arg1[%c0, %c0_0] : memref<128x288xbf16, #tpu.memory_space<vmem>>, vector<128x288xbf16>
    %c0_1 = arith.constant 0 : index
    %c0_2 = arith.constant 0 : index
    %1 = vector.load %arg2[%c0_1, %c0_2] : memref<288x32xbf16, #tpu.memory_space<vmem>>, vector<288x32xbf16>
    %cst = arith.constant dense<0.000000e+00> : vector<128x32xf32>
    %2 = tpu.matmul %0, %1, %cst {dimension_numbers = #tpu.dot_dimension_numbers<[1], [0], [0], [1], [0, 0, 1, 1], [], []>} : vector<128x288xbf16>, vector<288x32xbf16>, vector<128x32xf32> -> vector<128x32xf32>
    %c0_3 = arith.constant 0 : index
    %c0_4 = arith.constant 0 : index
    %3 = vector.load %arg3[%c0_3, %c0_4] : memref<128x16xbf16, #tpu.memory_space<vmem>>, vector<128x16xbf16>
    %c0_5 = arith.constant 0 : index
    %c0_6 = arith.constant 0 : index
    %4 = vector.load %arg4[%c0_5, %c0_6] : memref<16x32xbf16, #tpu.memory_space<vmem>>, vector<16x32xbf16>
    %cst_7 = arith.constant dense<0.000000e+00> : vector<128x32xf32>
    %5 = tpu.matmul %3, %4, %cst_7 {dimension_numbers = #tpu.dot_dimension_numbers<[1], [0], [0], [1], [0, 0, 1, 1], [], []>} : vector<128x16xbf16>, vector<16x32xbf16>, vector<128x32xf32> -> vector<128x32xf32>
    %6 = arith.addf %2, %5 : vector<128x32xf32>
    %c0_8 = arith.constant 0 : index
    %c0_9 = arith.constant 0 : index
    %7 = vector.load %arg5[%c0_8, %c0_9] : memref<128x32xf32, #tpu.memory_space<vmem>>, vector<128x32xf32>
    tpu.vector_store %arg5[%c0_8, %c0_9], %6 {strides = array<i32>} : memref<128x32xf32, #tpu.memory_space<vmem>>, vector<128x32xf32>,
    return
  }
  func.func @transform_0(%arg0: i32) -> (i32, i32) {
    %c0_i32 = arith.constant 0 : i32
    %c0_i32_0 = arith.constant 0 : i32
    return %arg0, %c0_i32 : i32, i32
  }
  func.func @transform_1(%arg0: i32) -> (i32, i32) {
    %c0_i32 = arith.constant 0 : i32
    %c0_i32_0 = arith.constant 0 : i32
    %c0_i32_1 = arith.constant 0 : i32
    return %c0_i32, %c0_i32_0 : i32, i32
  }
  func.func @transform_2(%arg0: i32) -> (i32, i32) {
    %c0_i32 = arith.constant 0 : i32
    %c0_i32_0 = arith.constant 0 : i32
    return %arg0, %c0_i32 : i32, i32
  }
  func.func @transform_3(%arg0: i32) -> (i32, i32) {
    %c0_i32 = arith.constant 0 : i32
    %c0_i32_0 = arith.constant 0 : i32
    %c0_i32_1 = arith.constant 0 : i32
    return %c0_i32, %c0_i32_0 : i32, i32
  }
  func.func @transform_4(%arg0: i32) -> (i32, i32) {
    %c0_i32 = arith.constant 0 : i32
    %c0_i32_0 = arith.constant 0 : i32
    return %arg0, %c0_i32 : i32, i32
  }
}

module attributes {stable_mosaic.version = 11 : i64} {
  func.func @_bn_relu_kernel(%arg0: i32, %arg1: memref<128x32xf32, #tpu.memory_space<vmem>>, %arg2: memref<1x32xf32, #tpu.memory_space<vmem>>, %arg3: memref<1x32xf32, #tpu.memory_space<vmem>>, %arg4: memref<128x32xbf16, #tpu.memory_space<vmem>>) attributes {dimension_semantics = [#tpu.dimension_semantics<arbitrary>], iteration_bounds = array<i64: 1>, scalar_prefetch = 0 : i64, scratch_operands = 0 : i64, tpu.core_type = #tpu.core_type<tc>, window_params = [{pipeline_mode = #tpu.pipeline_mode<synchronous>, transform_indices = @transform_0, window_bounds = array<i64: 128, 32>}, {pipeline_mode = #tpu.pipeline_mode<synchronous>, transform_indices = @transform_1, window_bounds = array<i64: 1, 32>}, {pipeline_mode = #tpu.pipeline_mode<synchronous>, transform_indices = @transform_2, window_bounds = array<i64: 1, 32>}, {pipeline_mode = #tpu.pipeline_mode<synchronous>, transform_indices = @transform_3, window_bounds = array<i64: 128, 32>}]} {
    %c0 = arith.constant 0 : index
    %c0_0 = arith.constant 0 : index
    %0 = vector.load %arg1[%c0, %c0_0] : memref<128x32xf32, #tpu.memory_space<vmem>>, vector<128x32xf32>
    %cst = arith.constant dense<0.000000e+00> : vector<32xf32>
    %1 = vector.multi_reduction <add>, %0, %cst [0] : vector<128x32xf32> to vector<32xf32>
    %2 = vector.shape_cast %1 : vector<32xf32> to vector<1x32xf32>
    %cst_1 = arith.constant 7.812500e-03 : f32
    %3 = vector.broadcast %cst_1 : f32 to vector<1x32xf32>
    %4 = arith.mulf %2, %3 : vector<1x32xf32>
    %5 = arith.mulf %0, %0 : vector<128x32xf32>
    %cst_2 = arith.constant dense<0.000000e+00> : vector<32xf32>
    %6 = vector.multi_reduction <add>, %5, %cst_2 [0] : vector<128x32xf32> to vector<32xf32>
    %7 = vector.shape_cast %6 : vector<32xf32> to vector<1x32xf32>
    %cst_3 = arith.constant 7.812500e-03 : f32
    %8 = vector.broadcast %cst_3 : f32 to vector<1x32xf32>
    %9 = arith.mulf %7, %8 : vector<1x32xf32>
    %10 = arith.mulf %4, %4 : vector<1x32xf32>
    %11 = arith.subf %9, %10 : vector<1x32xf32>
    %c0_4 = arith.constant 0 : index
    %c0_5 = arith.constant 0 : index
    %12 = vector.load %arg2[%c0_4, %c0_5] : memref<1x32xf32, #tpu.memory_space<vmem>>, vector<1x32xf32>
    %cst_6 = arith.constant 9.99999974E-6 : f32
    %13 = vector.broadcast %cst_6 : f32 to vector<1x32xf32>
    %14 = arith.addf %11, %13 : vector<1x32xf32>
    %15 = math.rsqrt %14 : vector<1x32xf32>
    %16 = arith.mulf %12, %15 : vector<1x32xf32>
    %c0_7 = arith.constant 0 : index
    %c0_8 = arith.constant 0 : index
    %17 = vector.load %arg3[%c0_7, %c0_8] : memref<1x32xf32, #tpu.memory_space<vmem>>, vector<1x32xf32>
    %18 = arith.mulf %4, %16 : vector<1x32xf32>
    %19 = arith.subf %17, %18 : vector<1x32xf32>
    %20 = vector.broadcast %16 : vector<1x32xf32> to vector<128x32xf32>
    %21 = arith.mulf %0, %20 : vector<128x32xf32>
    %22 = vector.broadcast %19 : vector<1x32xf32> to vector<128x32xf32>
    %23 = arith.addf %21, %22 : vector<128x32xf32>
    %cst_9 = arith.constant 0.000000e+00 : f32
    %24 = vector.broadcast %cst_9 : f32 to vector<128x32xf32>
    %25 = arith.maximumf %23, %24 : vector<128x32xf32>
    %26 = arith.truncf %25 : vector<128x32xf32> to vector<128x32xbf16>
    %c0_10 = arith.constant 0 : index
    %c0_11 = arith.constant 0 : index
    %27 = vector.load %arg4[%c0_10, %c0_11] : memref<128x32xbf16, #tpu.memory_space<vmem>>, vector<128x32xbf16>
    tpu.vector_store %arg4[%c0_10, %c0_11], %26 {strides = array<i32>} : memref<128x32xbf16, #tpu.memory_space<vmem>>, vector<128x32xbf16>,
    return
  }
  func.func @transform_0(%arg0: i32) -> (i32, i32) {
    %c0_i32 = arith.constant 0 : i32
    %c0_i32_0 = arith.constant 0 : i32
    %c0_i32_1 = arith.constant 0 : i32
    return %c0_i32, %c0_i32_0 : i32, i32
  }
  func.func @transform_1(%arg0: i32) -> (i32, i32) {
    %c0_i32 = arith.constant 0 : i32
    %c0_i32_0 = arith.constant 0 : i32
    %c0_i32_1 = arith.constant 0 : i32
    return %c0_i32, %c0_i32_0 : i32, i32
  }
  func.func @transform_2(%arg0: i32) -> (i32, i32) {
    %c0_i32 = arith.constant 0 : i32
    %c0_i32_0 = arith.constant 0 : i32
    %c0_i32_1 = arith.constant 0 : i32
    return %c0_i32, %c0_i32_0 : i32, i32
  }
  func.func @transform_3(%arg0: i32) -> (i32, i32) {
    %c0_i32 = arith.constant 0 : i32
    %c0_i32_0 = arith.constant 0 : i32
    %c0_i32_1 = arith.constant 0 : i32
    return %c0_i32, %c0_i32_0 : i32, i32
  }
}

module attributes {stable_mosaic.version = 11 : i64} {
  func.func @_conv_bn_relu_kernel(%arg0: i32, %arg1: memref<32x288xbf16, #tpu.memory_space<vmem>>, %arg2: memref<288x64xbf16, #tpu.memory_space<vmem>>, %arg3: memref<1x64xf32, #tpu.memory_space<vmem>>, %arg4: memref<1x64xf32, #tpu.memory_space<vmem>>, %arg5: memref<32x64xbf16, #tpu.memory_space<vmem>>) attributes {dimension_semantics = [#tpu.dimension_semantics<arbitrary>], iteration_bounds = array<i64: 1>, scalar_prefetch = 0 : i64, scratch_operands = 0 : i64, tpu.core_type = #tpu.core_type<tc>, window_params = [{pipeline_mode = #tpu.pipeline_mode<synchronous>, transform_indices = @transform_0, window_bounds = array<i64: 32, 288>}, {pipeline_mode = #tpu.pipeline_mode<synchronous>, transform_indices = @transform_1, window_bounds = array<i64: 288, 64>}, {pipeline_mode = #tpu.pipeline_mode<synchronous>, transform_indices = @transform_2, window_bounds = array<i64: 1, 64>}, {pipeline_mode = #tpu.pipeline_mode<synchronous>, transform_indices = @transform_3, window_bounds = array<i64: 1, 64>}, {pipeline_mode = #tpu.pipeline_mode<synchronous>, transform_indices = @transform_4, window_bounds = array<i64: 32, 64>}]} {
    %c0 = arith.constant 0 : index
    %c0_0 = arith.constant 0 : index
    %0 = vector.load %arg1[%c0, %c0_0] : memref<32x288xbf16, #tpu.memory_space<vmem>>, vector<32x288xbf16>
    %c0_1 = arith.constant 0 : index
    %c0_2 = arith.constant 0 : index
    %1 = vector.load %arg2[%c0_1, %c0_2] : memref<288x64xbf16, #tpu.memory_space<vmem>>, vector<288x64xbf16>
    %cst = arith.constant dense<0.000000e+00> : vector<32x64xf32>
    %2 = tpu.matmul %0, %1, %cst {dimension_numbers = #tpu.dot_dimension_numbers<[1], [0], [0], [1], [0, 0, 1, 1], [], []>} : vector<32x288xbf16>, vector<288x64xbf16>, vector<32x64xf32> -> vector<32x64xf32>
    %cst_3 = arith.constant dense<0.000000e+00> : vector<64xf32>
    %3 = vector.multi_reduction <add>, %2, %cst_3 [0] : vector<32x64xf32> to vector<64xf32>
    %4 = vector.shape_cast %3 : vector<64xf32> to vector<1x64xf32>
    %cst_4 = arith.constant 3.125000e-02 : f32
    %5 = vector.broadcast %cst_4 : f32 to vector<1x64xf32>
    %6 = arith.mulf %4, %5 : vector<1x64xf32>
    %7 = arith.mulf %2, %2 : vector<32x64xf32>
    %cst_5 = arith.constant dense<0.000000e+00> : vector<64xf32>
    %8 = vector.multi_reduction <add>, %7, %cst_5 [0] : vector<32x64xf32> to vector<64xf32>
    %9 = vector.shape_cast %8 : vector<64xf32> to vector<1x64xf32>
    %cst_6 = arith.constant 3.125000e-02 : f32
    %10 = vector.broadcast %cst_6 : f32 to vector<1x64xf32>
    %11 = arith.mulf %9, %10 : vector<1x64xf32>
    %12 = arith.mulf %6, %6 : vector<1x64xf32>
    %13 = arith.subf %11, %12 : vector<1x64xf32>
    %c0_7 = arith.constant 0 : index
    %c0_8 = arith.constant 0 : index
    %14 = vector.load %arg3[%c0_7, %c0_8] : memref<1x64xf32, #tpu.memory_space<vmem>>, vector<1x64xf32>
    %cst_9 = arith.constant 9.99999974E-6 : f32
    %15 = vector.broadcast %cst_9 : f32 to vector<1x64xf32>
    %16 = arith.addf %13, %15 : vector<1x64xf32>
    %17 = math.rsqrt %16 : vector<1x64xf32>
    %18 = arith.mulf %14, %17 : vector<1x64xf32>
    %c0_10 = arith.constant 0 : index
    %c0_11 = arith.constant 0 : index
    %19 = vector.load %arg4[%c0_10, %c0_11] : memref<1x64xf32, #tpu.memory_space<vmem>>, vector<1x64xf32>
    %20 = arith.mulf %6, %18 : vector<1x64xf32>
    %21 = arith.subf %19, %20 : vector<1x64xf32>
    %22 = vector.broadcast %18 : vector<1x64xf32> to vector<32x64xf32>
    %23 = arith.mulf %2, %22 : vector<32x64xf32>
    %24 = vector.broadcast %21 : vector<1x64xf32> to vector<32x64xf32>
    %25 = arith.addf %23, %24 : vector<32x64xf32>
    %cst_12 = arith.constant 0.000000e+00 : f32
    %26 = vector.broadcast %cst_12 : f32 to vector<32x64xf32>
    %27 = arith.maximumf %25, %26 : vector<32x64xf32>
    %28 = arith.truncf %27 : vector<32x64xf32> to vector<32x64xbf16>
    %c0_13 = arith.constant 0 : index
    %c0_14 = arith.constant 0 : index
    %29 = vector.load %arg5[%c0_13, %c0_14] : memref<32x64xbf16, #tpu.memory_space<vmem>>, vector<32x64xbf16>
    tpu.vector_store %arg5[%c0_13, %c0_14], %28 {strides = array<i32>} : memref<32x64xbf16, #tpu.memory_space<vmem>>, vector<32x64xbf16>,
    return
  }
  func.func @transform_0(%arg0: i32) -> (i32, i32) {
    %c0_i32 = arith.constant 0 : i32
    %c0_i32_0 = arith.constant 0 : i32
    %c0_i32_1 = arith.constant 0 : i32
    return %c0_i32, %c0_i32_0 : i32, i32
  }
  func.func @transform_1(%arg0: i32) -> (i32, i32) {
    %c0_i32 = arith.constant 0 : i32
    %c0_i32_0 = arith.constant 0 : i32
    %c0_i32_1 = arith.constant 0 : i32
    return %c0_i32, %c0_i32_0 : i32, i32
  }
  func.func @transform_2(%arg0: i32) -> (i32, i32) {
    %c0_i32 = arith.constant 0 : i32
    %c0_i32_0 = arith.constant 0 : i32
    %c0_i32_1 = arith.constant 0 : i32
    return %c0_i32, %c0_i32_0 : i32, i32
  }
  func.func @transform_3(%arg0: i32) -> (i32, i32) {
    %c0_i32 = arith.constant 0 : i32
    %c0_i32_0 = arith.constant 0 : i32
    %c0_i32_1 = arith.constant 0 : i32
    return %c0_i32, %c0_i32_0 : i32, i32
  }
  func.func @transform_4(%arg0: i32) -> (i32, i32) {
    %c0_i32 = arith.constant 0 : i32
    %c0_i32_0 = arith.constant 0 : i32
    %c0_i32_1 = arith.constant 0 : i32
    return %c0_i32, %c0_i32_0 : i32, i32
  }
}

module attributes {stable_mosaic.version = 11 : i64} {
  func.func @_conv_add_short_kernel(%arg0: i32, %arg1: memref<32x576xbf16, #tpu.memory_space<vmem>>, %arg2: memref<576x64xbf16, #tpu.memory_space<vmem>>, %arg3: memref<32x32xbf16, #tpu.memory_space<vmem>>, %arg4: memref<32x64xbf16, #tpu.memory_space<vmem>>, %arg5: memref<32x64xf32, #tpu.memory_space<vmem>>) attributes {dimension_semantics = [#tpu.dimension_semantics<parallel>], iteration_bounds = array<i64: 1>, scalar_prefetch = 0 : i64, scratch_operands = 0 : i64, tpu.core_type = #tpu.core_type<tc>, window_params = [{transform_indices = @transform_0, window_bounds = array<i64: 32, 576>}, {pipeline_mode = #tpu.pipeline_mode<synchronous>, transform_indices = @transform_1, window_bounds = array<i64: 576, 64>}, {transform_indices = @transform_2, window_bounds = array<i64: 32, 32>}, {pipeline_mode = #tpu.pipeline_mode<synchronous>, transform_indices = @transform_3, window_bounds = array<i64: 32, 64>}, {transform_indices = @transform_4, window_bounds = array<i64: 32, 64>}]} {
    %c0 = arith.constant 0 : index
    %c0_0 = arith.constant 0 : index
    %0 = vector.load %arg1[%c0, %c0_0] : memref<32x576xbf16, #tpu.memory_space<vmem>>, vector<32x576xbf16>
    %c0_1 = arith.constant 0 : index
    %c0_2 = arith.constant 0 : index
    %1 = vector.load %arg2[%c0_1, %c0_2] : memref<576x64xbf16, #tpu.memory_space<vmem>>, vector<576x64xbf16>
    %cst = arith.constant dense<0.000000e+00> : vector<32x64xf32>
    %2 = tpu.matmul %0, %1, %cst {dimension_numbers = #tpu.dot_dimension_numbers<[1], [0], [0], [1], [0, 0, 1, 1], [], []>} : vector<32x576xbf16>, vector<576x64xbf16>, vector<32x64xf32> -> vector<32x64xf32>
    %c0_3 = arith.constant 0 : index
    %c0_4 = arith.constant 0 : index
    %3 = vector.load %arg3[%c0_3, %c0_4] : memref<32x32xbf16, #tpu.memory_space<vmem>>, vector<32x32xbf16>
    %c0_5 = arith.constant 0 : index
    %c0_6 = arith.constant 0 : index
    %4 = vector.load %arg4[%c0_5, %c0_6] : memref<32x64xbf16, #tpu.memory_space<vmem>>, vector<32x64xbf16>
    %cst_7 = arith.constant dense<0.000000e+00> : vector<32x64xf32>
    %5 = tpu.matmul %3, %4, %cst_7 {dimension_numbers = #tpu.dot_dimension_numbers<[1], [0], [0], [1], [0, 0, 1, 1], [], []>} : vector<32x32xbf16>, vector<32x64xbf16>, vector<32x64xf32> -> vector<32x64xf32>
    %6 = arith.addf %2, %5 : vector<32x64xf32>
    %c0_8 = arith.constant 0 : index
    %c0_9 = arith.constant 0 : index
    %7 = vector.load %arg5[%c0_8, %c0_9] : memref<32x64xf32, #tpu.memory_space<vmem>>, vector<32x64xf32>
    tpu.vector_store %arg5[%c0_8, %c0_9], %6 {strides = array<i32>} : memref<32x64xf32, #tpu.memory_space<vmem>>, vector<32x64xf32>,
    return
  }
  func.func @transform_0(%arg0: i32) -> (i32, i32) {
    %c0_i32 = arith.constant 0 : i32
    %c0_i32_0 = arith.constant 0 : i32
    return %arg0, %c0_i32 : i32, i32
  }
  func.func @transform_1(%arg0: i32) -> (i32, i32) {
    %c0_i32 = arith.constant 0 : i32
    %c0_i32_0 = arith.constant 0 : i32
    %c0_i32_1 = arith.constant 0 : i32
    return %c0_i32, %c0_i32_0 : i32, i32
  }
  func.func @transform_2(%arg0: i32) -> (i32, i32) {
    %c0_i32 = arith.constant 0 : i32
    %c0_i32_0 = arith.constant 0 : i32
    return %arg0, %c0_i32 : i32, i32
  }
  func.func @transform_3(%arg0: i32) -> (i32, i32) {
    %c0_i32 = arith.constant 0 : i32
    %c0_i32_0 = arith.constant 0 : i32
    %c0_i32_1 = arith.constant 0 : i32
    return %c0_i32, %c0_i32_0 : i32, i32
  }
  func.func @transform_4(%arg0: i32) -> (i32, i32) {
    %c0_i32 = arith.constant 0 : i32
    %c0_i32_0 = arith.constant 0 : i32
    return %arg0, %c0_i32 : i32, i32
  }
}

module attributes {stable_mosaic.version = 11 : i64} {
  func.func @_tail_kernel(%arg0: i32, %arg1: memref<32x64xf32, #tpu.memory_space<vmem>>, %arg2: memref<1x64xf32, #tpu.memory_space<vmem>>, %arg3: memref<1x64xf32, #tpu.memory_space<vmem>>, %arg4: memref<2x32xf32, #tpu.memory_space<vmem>>, %arg5: memref<64x10xf32, #tpu.memory_space<vmem>>, %arg6: memref<1x10xf32, #tpu.memory_space<vmem>>, %arg7: memref<2x10xf32, #tpu.memory_space<vmem>>) attributes {dimension_semantics = [#tpu.dimension_semantics<arbitrary>], iteration_bounds = array<i64: 1>, scalar_prefetch = 0 : i64, scratch_operands = 0 : i64, tpu.core_type = #tpu.core_type<tc>, window_params = [{pipeline_mode = #tpu.pipeline_mode<synchronous>, transform_indices = @transform_0, window_bounds = array<i64: 32, 64>}, {pipeline_mode = #tpu.pipeline_mode<synchronous>, transform_indices = @transform_1, window_bounds = array<i64: 1, 64>}, {pipeline_mode = #tpu.pipeline_mode<synchronous>, transform_indices = @transform_2, window_bounds = array<i64: 1, 64>}, {pipeline_mode = #tpu.pipeline_mode<synchronous>, transform_indices = @transform_3, window_bounds = array<i64: 2, 32>}, {pipeline_mode = #tpu.pipeline_mode<synchronous>, transform_indices = @transform_4, window_bounds = array<i64: 64, 10>}, {pipeline_mode = #tpu.pipeline_mode<synchronous>, transform_indices = @transform_5, window_bounds = array<i64: 1, 10>}, {pipeline_mode = #tpu.pipeline_mode<synchronous>, transform_indices = @transform_6, window_bounds = array<i64: 2, 10>}]} {
    %c0 = arith.constant 0 : index
    %c0_0 = arith.constant 0 : index
    %0 = vector.load %arg1[%c0, %c0_0] : memref<32x64xf32, #tpu.memory_space<vmem>>, vector<32x64xf32>
    %cst = arith.constant dense<0.000000e+00> : vector<64xf32>
    %1 = vector.multi_reduction <add>, %0, %cst [0] : vector<32x64xf32> to vector<64xf32>
    %2 = vector.shape_cast %1 : vector<64xf32> to vector<1x64xf32>
    %cst_1 = arith.constant 3.125000e-02 : f32
    %3 = vector.broadcast %cst_1 : f32 to vector<1x64xf32>
    %4 = arith.mulf %2, %3 : vector<1x64xf32>
    %5 = arith.mulf %0, %0 : vector<32x64xf32>
    %cst_2 = arith.constant dense<0.000000e+00> : vector<64xf32>
    %6 = vector.multi_reduction <add>, %5, %cst_2 [0] : vector<32x64xf32> to vector<64xf32>
    %7 = vector.shape_cast %6 : vector<64xf32> to vector<1x64xf32>
    %cst_3 = arith.constant 3.125000e-02 : f32
    %8 = vector.broadcast %cst_3 : f32 to vector<1x64xf32>
    %9 = arith.mulf %7, %8 : vector<1x64xf32>
    %10 = arith.mulf %4, %4 : vector<1x64xf32>
    %11 = arith.subf %9, %10 : vector<1x64xf32>
    %c0_4 = arith.constant 0 : index
    %c0_5 = arith.constant 0 : index
    %12 = vector.load %arg2[%c0_4, %c0_5] : memref<1x64xf32, #tpu.memory_space<vmem>>, vector<1x64xf32>
    %cst_6 = arith.constant 9.99999974E-6 : f32
    %13 = vector.broadcast %cst_6 : f32 to vector<1x64xf32>
    %14 = arith.addf %11, %13 : vector<1x64xf32>
    %15 = math.rsqrt %14 : vector<1x64xf32>
    %16 = arith.mulf %12, %15 : vector<1x64xf32>
    %c0_7 = arith.constant 0 : index
    %c0_8 = arith.constant 0 : index
    %17 = vector.load %arg3[%c0_7, %c0_8] : memref<1x64xf32, #tpu.memory_space<vmem>>, vector<1x64xf32>
    %18 = arith.mulf %4, %16 : vector<1x64xf32>
    %19 = arith.subf %17, %18 : vector<1x64xf32>
    %20 = vector.broadcast %16 : vector<1x64xf32> to vector<32x64xf32>
    %21 = arith.mulf %0, %20 : vector<32x64xf32>
    %22 = vector.broadcast %19 : vector<1x64xf32> to vector<32x64xf32>
    %23 = arith.addf %21, %22 : vector<32x64xf32>
    %cst_9 = arith.constant 0.000000e+00 : f32
    %24 = vector.broadcast %cst_9 : f32 to vector<32x64xf32>
    %25 = arith.maximumf %23, %24 : vector<32x64xf32>
    %c0_10 = arith.constant 0 : index
    %c0_11 = arith.constant 0 : index
    %26 = vector.load %arg4[%c0_10, %c0_11] : memref<2x32xf32, #tpu.memory_space<vmem>>, vector<2x32xf32>
    %cst_12 = arith.constant dense<0.000000e+00> : vector<2x64xf32>
    %27 = tpu.matmul %26, %25, %cst_12 {dimension_numbers = #tpu.dot_dimension_numbers<[1], [0], [0], [1], [0, 0, 1, 1], [], []>} : vector<2x32xf32>, vector<32x64xf32>, vector<2x64xf32> -> vector<2x64xf32>
    %c0_13 = arith.constant 0 : index
    %c0_14 = arith.constant 0 : index
    %28 = vector.load %arg5[%c0_13, %c0_14] : memref<64x10xf32, #tpu.memory_space<vmem>>, vector<64x10xf32>
    %cst_15 = arith.constant dense<0.000000e+00> : vector<2x10xf32>
    %29 = tpu.matmul %27, %28, %cst_15 {dimension_numbers = #tpu.dot_dimension_numbers<[1], [0], [0], [1], [0, 0, 1, 1], [], []>} : vector<2x64xf32>, vector<64x10xf32>, vector<2x10xf32> -> vector<2x10xf32>
    %c0_16 = arith.constant 0 : index
    %c0_17 = arith.constant 0 : index
    %30 = vector.load %arg6[%c0_16, %c0_17] : memref<1x10xf32, #tpu.memory_space<vmem>>, vector<1x10xf32>
    %31 = vector.broadcast %30 : vector<1x10xf32> to vector<2x10xf32>
    %32 = arith.addf %29, %31 : vector<2x10xf32>
    %c0_18 = arith.constant 0 : index
    %c0_19 = arith.constant 0 : index
    %33 = vector.load %arg7[%c0_18, %c0_19] : memref<2x10xf32, #tpu.memory_space<vmem>>, vector<2x10xf32>
    tpu.vector_store %arg7[%c0_18, %c0_19], %32 {strides = array<i32>} : memref<2x10xf32, #tpu.memory_space<vmem>>, vector<2x10xf32>,
    return
  }
  func.func @transform_0(%arg0: i32) -> (i32, i32) {
    %c0_i32 = arith.constant 0 : i32
    %c0_i32_0 = arith.constant 0 : i32
    %c0_i32_1 = arith.constant 0 : i32
    return %c0_i32, %c0_i32_0 : i32, i32
  }
  func.func @transform_1(%arg0: i32) -> (i32, i32) {
    %c0_i32 = arith.constant 0 : i32
    %c0_i32_0 = arith.constant 0 : i32
    %c0_i32_1 = arith.constant 0 : i32
    return %c0_i32, %c0_i32_0 : i32, i32
  }
  func.func @transform_2(%arg0: i32) -> (i32, i32) {
    %c0_i32 = arith.constant 0 : i32
    %c0_i32_0 = arith.constant 0 : i32
    %c0_i32_1 = arith.constant 0 : i32
    return %c0_i32, %c0_i32_0 : i32, i32
  }
  func.func @transform_3(%arg0: i32) -> (i32, i32) {
    %c0_i32 = arith.constant 0 : i32
    %c0_i32_0 = arith.constant 0 : i32
    %c0_i32_1 = arith.constant 0 : i32
    return %c0_i32, %c0_i32_0 : i32, i32
  }
  func.func @transform_4(%arg0: i32) -> (i32, i32) {
    %c0_i32 = arith.constant 0 : i32
    %c0_i32_0 = arith.constant 0 : i32
    %c0_i32_1 = arith.constant 0 : i32
    return %c0_i32, %c0_i32_0 : i32, i32
  }
  func.func @transform_5(%arg0: i32) -> (i32, i32) {
    %c0_i32 = arith.constant 0 : i32
    %c0_i32_0 = arith.constant 0 : i32
    %c0_i32_1 = arith.constant 0 : i32
    return %c0_i32, %c0_i32_0 : i32, i32
  }
  func.func @transform_6(%arg0: i32) -> (i32, i32) {
    %c0_i32 = arith.constant 0 : i32
    %c0_i32_0 = arith.constant 0 : i32
    %c0_i32_1 = arith.constant 0 : i32
    return %c0_i32, %c0_i32_0 : i32, i32
  }
}

</mosaic_0001>

<llo_original>
// kernel: _lambda_.11
$region0: #{_lambda_.11}
  #allocation0 [shape = 'u32[]', space=smem, size = 0x4, offset = 0x4, fixed_abs, tag = 'smem constant byte address 0x4 - core index']
  #allocation1 [shape = 'u32[144,128]{1,0:T(1,128)}', space=vmem, size = 0x12000, scoped, tag = 'internal scratch']
  %s0 = inlined_call_operand.vmem [shape: bf16[512,27], index: 0, kind: input, shape index: {}]
  %s1 = inlined_call_operand.vmem [shape: bf16[27,16], index: 1, kind: input, shape index: {}]
  %s2 = inlined_call_operand.vmem [shape: f32[512,16], index: 2, kind: output, shape index: {}]
  %s3 = sld [smem:[#allocation0]]
  $region18: #{_lambda_.11} parent=0
    _
  %s5 = ssub.s32 1, %s3
  %s6 = scalar_select 0, %s5, %s3
  // Predicated region
  $region2: #{_lambda_.11} parent=0 // pred_check
    _
  $region3: #{_lambda_.11} parent=0 // pred_check_branch
    %8 = sbr.rel (0) target = $region5
  $region4: #{_lambda_.11} parent=0 // pred_region
    _
  $region5: #{_lambda_.11} parent=0 // pred_fallthru
    _
  // Predicated region
  $region6: #{_lambda_.11} parent=0 // pred_check
    _
  $region7: #{_lambda_.11} parent=0 // pred_check_branch
    %10 = sbr.rel (0) target = $region9
  $region8: #{_lambda_.11} parent=0 // pred_region
    _
  $region9: #{_lambda_.11} parent=0 // pred_fallthru
    _
  %v12 = vld [vmem:[%s0] sm:$0xf]
  %v13 = vld [vmem:[%s0 + $0x4] sm:$0xf]
  %v14 = vld [vmem:[%s0 + $0x8] sm:$0xf]
  %v15 = vld [vmem:[%s0 + $0xc] sm:$0xf]
  %v16 = vld [vmem:[%s0 + $0x10] sm:$0xf]
  %v17 = vld [vmem:[%s0 + $0x14] sm:$0xf]
  %v18 = vld [vmem:[%s0 + $0x18] sm:$0xf]
  %v19 = vld [vmem:[%s0 + $0x1c] sm:$0xf]
  %v20 = vld [vmem:[%s0 + $0x20] sm:$0xf]
  %v21 = vld [vmem:[%s0 + $0x24] sm:$0xf]
  %v22 = vld [vmem:[%s0 + $0x28] sm:$0xf]
  %v23 = vld [vmem:[%s0 + $0x2c] sm:$0xf]
  %v24 = vld [vmem:[%s0 + $0x30] sm:$0xf]
  %v25 = vld [vmem:[%s0 + $0x34] sm:$0xf]
  %v26 = vld [vmem:[%s0 + $0x38] sm:$0xf]
  %v27 = vld [vmem:[%s0 + $0x3c] sm:$0xf]
  %v28 = vld [vmem:[%s0 + $0x40] sm:$0xf]
  %v29 = vld [vmem:[%s0 + $0x44] sm:$0xf]
  %v30 = vld [vmem:[%s0 + $0x48] sm:$0xf]
  %v31 = vld [vmem:[%s0 + $0x4c] sm:$0xf]
  %v32 = vld [vmem:[%s0 + $0x50] sm:$0xf]
  %v33 = vld [vmem:[%s0 + $0x54] sm:$0xf]
  %v34 = vld [vmem:[%s0 + $0x58] sm:$0xf]
  %v35 = vld [vmem:[%s0 + $0x5c] sm:$0xf]
  %v36 = vld [vmem:[%s0 + $0x60] sm:$0xf]
  %v37 = vld [vmem:[%s0 + $0x64] sm:$0xf]
  %v38 = vld [vmem:[%s0 + $0x68] sm:$0xf]
  %v39 = vld [vmem:[%s0 + $0x6c] sm:$0xf]
  %v40 = vld [vmem:[%s0 + $0x70] sm:$0xf]
  %v41 = vld [vmem:[%s0 + $0x74] sm:$0xf]
  %v42 = vld [vmem:[%s0 + $0x78] sm:$0xf]
  %v43 = vld [vmem:[%s0 + $0x7c] sm:$0xf]
  %v44 = vld [vmem:[%s0 + $0x80] sm:$0xf]
  %v45 = vld [vmem:[%s0 + $0x84] sm:$0xf]
  %v46 = vld [vmem:[%s0 + $0x88] sm:$0xf]
  %v47 = vld [vmem:[%s0 + $0x8c] sm:$0xf]
  %v48 = vld [vmem:[%s0 + $0x90] sm:$0xf]
  %v49 = vld [vmem:[%s0 + $0x94] sm:$0xf]
  %v50 = vld [vmem:[%s0 + $0x98] sm:$0xf]
  %v51 = vld [vmem:[%s0 + $0x9c] sm:$0xf]
  %v52 = vld [vmem:[%s0 + $0xa0] sm:$0xf]
  %v53 = vld [vmem:[%s0 + $0xa4] sm:$0xf]
  %v54 = vld [vmem:[%s0 + $0xa8] sm:$0xf]
  %v55 = vld [vmem:[%s0 + $0xac] sm:$0xf]
  %v56 = vld [vmem:[%s0 + $0xb0] sm:$0xf]
  %v57 = vld [vmem:[%s0 + $0xb4] sm:$0xf]
  %v58 = vld [vmem:[%s0 + $0xb8] sm:$0xf]
  %v59 = vld [vmem:[%s0 + $0xbc] sm:$0xf]
  %v60 = vld [vmem:[%s0 + $0xc0] sm:$0xf]
  %v61 = vld [vmem:[%s0 + $0xc4] sm:$0xf]
  %v62 = vld [vmem:[%s0 + $0xc8] sm:$0xf]
  %v63 = vld [vmem:[%s0 + $0xcc] sm:$0xf]
  %v64 = vld [vmem:[%s0 + $0xd0] sm:$0xf]
  %v65 = vld [vmem:[%s0 + $0xd4] sm:$0xf]
  %v66 = vld [vmem:[%s0 + $0xd8] sm:$0xf]
  %v67 = vld [vmem:[%s0 + $0xdc] sm:$0xf]
  %v68 = vld [vmem:[%s0 + $0xe0] sm:$0xf]
  %v69 = vld [vmem:[%s0 + $0xe4] sm:$0xf]
  %v70 = vld [vmem:[%s0 + $0xe8] sm:$0xf]
  %v71 = vld [vmem:[%s0 + $0xec] sm:$0xf]
  %v72 = vld [vmem:[%s0 + $0xf0] sm:$0xf]
  %v73 = vld [vmem:[%s0 + $0xf4] sm:$0xf]
  %v74 = vld [vmem:[%s0 + $0xf8] sm:$0xf]
  %v75 = vld [vmem:[%s0 + $0xfc] sm:$0xf]
  %v76 = vld [vmem:[%s1] sm:$0xf]
  %v77 = vld [vmem:[%s1 + $0x4] sm:$0xf]
  %v78 = vld [vmem:[%s1 + $0x8] sm:$0xf]
  %v79 = vld [vmem:[%s1 + $0xc] sm:$0x3]
  %v144 = vunpack.c.l.b16 %v12
  %v145 = vunpack.c.l.b16 %v13
  %v146 = vunpack.c.l.b16 %v14
  %v147 = vunpack.c.l.b16 %v15
  %v148 = vunpack.c.l.b16 %v16
  %v149 = vunpack.c.l.b16 %v17
  %v150 = vunpack.c.l.b16 %v18
  %v151 = vunpack.c.l.b16 %v19
  %v152 = vunpack.c.l.b16 %v20
  %v153 = vunpack.c.l.b16 %v21
  %v154 = vunpack.c.l.b16 %v22
  %v155 = vunpack.c.l.b16 %v23
  %v156 = vunpack.c.l.b16 %v24
  %v157 = vunpack.c.l.b16 %v25
  %v158 = vunpack.c.l.b16 %v26
  %v159 = vunpack.c.l.b16 %v27
  %v160 = vunpack.c.l.b16 %v28
  %v161 = vunpack.c.l.b16 %v29
  %v162 = vunpack.c.l.b16 %v30
  %v163 = vunpack.c.l.b16 %v31
  %v164 = vunpack.c.l.b16 %v32
  %v165 = vunpack.c.l.b16 %v33
  %v166 = vunpack.c.l.b16 %v34
  %v167 = vunpack.c.l.b16 %v35
  %v168 = vunpack.c.l.b16 %v36
  %v169 = vunpack.c.l.b16 %v37
  %v170 = vunpack.c.l.b16 %v38
  %v171 = vunpack.c.l.b16 %v39
  %v172 = vunpack.c.l.b16 %v40
  %v173 = vunpack.c.l.b16 %v41
  %v174 = vunpack.c.l.b16 %v42
  %v175 = vunpack.c.l.b16 %v43
  %v176 = vunpack.c.l.b16 %v44
  %v177 = vunpack.c.l.b16 %v45
  %v178 = vunpack.c.l.b16 %v46
  %v179 = vunpack.c.l.b16 %v47
  %v180 = vunpack.c.l.b16 %v48
  %v181 = vunpack.c.l.b16 %v49
  %v182 = vunpack.c.l.b16 %v50
  %v183 = vunpack.c.l.b16 %v51
  %v184 = vunpack.c.l.b16 %v52
  %v185 = vunpack.c.l.b16 %v53
  %v186 = vunpack.c.l.b16 %v54
  %v187 = vunpack.c.l.b16 %v55
  %v188 = vunpack.c.l.b16 %v56
  %v189 = vunpack.c.l.b16 %v57
  %v190 = vunpack.c.l.b16 %v58
  %v191 = vunpack.c.l.b16 %v59
  %v192 = vunpack.c.l.b16 %v60
  %v193 = vunpack.c.l.b16 %v61
  %v194 = vunpack.c.l.b16 %v62
  %v195 = vunpack.c.l.b16 %v63
  %v196 = vunpack.c.l.b16 %v64
  %v197 = vunpack.c.l.b16 %v65
  %v198 = vunpack.c.l.b16 %v66
  %v199 = vunpack.c.l.b16 %v67
  %v200 = vunpack.c.l.b16 %v68
  %v201 = vunpack.c.l.b16 %v69
  %v202 = vunpack.c.l.b16 %v70
  %v203 = vunpack.c.l.b16 %v71
  %v204 = vunpack.c.l.b16 %v72
  %v205 = vunpack.c.l.b16 %v73
  %v206 = vunpack.c.l.b16 %v74
  %v207 = vunpack.c.l.b16 %v75
  %v208 = vpack.c.b16 %v145, %v144
  %v209 = vpack.c.b16 %v147, %v146
  %v210 = vpack.c.b16 %v149, %v148
  %v211 = vpack.c.b16 %v151, %v150
  %v212 = vpack.c.b16 %v153, %v152
  %v213 = vpack.c.b16 %v155, %v154
  %v214 = vpack.c.b16 %v157, %v156
  %v215 = vpack.c.b16 %v159, %v158
  %v216 = vpack.c.b16 %v161, %v160
  %v217 = vpack.c.b16 %v163, %v162
  %v218 = vpack.c.b16 %v165, %v164
  %v219 = vpack.c.b16 %v167, %v166
  %v220 = vpack.c.b16 %v169, %v168
  %v221 = vpack.c.b16 %v171, %v170
  %v222 = vpack.c.b16 %v173, %v172
  %v223 = vpack.c.b16 %v175, %v174
  %v224 = vpack.c.b16 %v177, %v176
  %v225 = vpack.c.b16 %v179, %v178
  %v226 = vpack.c.b16 %v181, %v180
  %v227 = vpack.c.b16 %v183, %v182
  %v228 = vpack.c.b16 %v185, %v184
  %v229 = vpack.c.b16 %v187, %v186
  %v230 = vpack.c.b16 %v189, %v188
  %v231 = vpack.c.b16 %v191, %v190
  %v232 = vpack.c.b16 %v193, %v192
  %v233 = vpack.c.b16 %v195, %v194
  %v234 = vpack.c.b16 %v197, %v196
  %v235 = vpack.c.b16 %v199, %v198
  %v236 = vpack.c.b16 %v201, %v200
  %v237 = vpack.c.b16 %v203, %v202
  %v238 = vpack.c.b16 %v205, %v204
  %v239 = vpack.c.b16 %v207, %v206
  %v244 = vunpack.c.l.b16 %v76
  %v245 = vunpack.c.l.b16 %v77
  %v246 = vunpack.c.l.b16 %v78
  %v247 = vunpack.c.l.b16 %v79
  %v248 = vpack.c.b16 %v245, %v244
  %v249 = vpack.c.b16 %v247, %v246
  %vm251 = vcmask 220160
  %v253 = vsel %vm251, %v208, 0
  %v256 = vsel %vm251, %v209, 0
  %v259 = vsel %vm251, %v210, 0
  %v262 = vsel %vm251, %v211, 0
  %v265 = vsel %vm251, %v212, 0
  %v268 = vsel %vm251, %v213, 0
  %v271 = vsel %vm251, %v214, 0
  %v274 = vsel %vm251, %v215, 0
  %v277 = vsel %vm251, %v216, 0
  %v280 = vsel %vm251, %v217, 0
  %v283 = vsel %vm251, %v218, 0
  %v286 = vsel %vm251, %v219, 0
  %v289 = vsel %vm251, %v220, 0
  %v292 = vsel %vm251, %v221, 0
  %v295 = vsel %vm251, %v222, 0
  %v298 = vsel %vm251, %v223, 0
  %v301 = vsel %vm251, %v224, 0
  %v304 = vsel %vm251, %v225, 0
  %v307 = vsel %vm251, %v226, 0
  %v310 = vsel %vm251, %v227, 0
  %v313 = vsel %vm251, %v228, 0
  %v316 = vsel %vm251, %v229, 0
  %v319 = vsel %vm251, %v230, 0
  %v322 = vsel %vm251, %v231, 0
  %v325 = vsel %vm251, %v232, 0
  %v328 = vsel %vm251, %v233, 0
  %v331 = vsel %vm251, %v234, 0
  %v334 = vsel %vm251, %v235, 0
  %v337 = vsel %vm251, %v236, 0
  %v340 = vsel %vm251, %v237, 0
  %v343 = vsel %vm251, %v238, 0
  %v346 = vsel %vm251, %v239, 0
  %vm348 = vcmask 1044480
  %vm349 = vcmask 1045504
  %v350 = vsel %vm348, 4294967295, 65535
  %v351 = vsel %vm349, %v350, 0
  %v353 = vand.u32 %v249, %v351
  %355 = vmatprep.subr.bf16.mxu0 0
  %356 = vmatpush1.bf16.msra.mxu0 0
  %357 = vmatprep.subr.bf16.mxu0 0
  %358 = vmatpush1.bf16.msra.mxu0 0
  %359 = vmatprep.subr.bf16.mxu0 0
  %360 = vmatpush1.bf16.msra.mxu0 0
  %361 = vmatprep.subr.bf16.mxu0 0
  %362 = vmatpush1.bf16.msra.mxu0 0
  %363 = vmatprep.subr.bf16.mxu0 0
  %364 = vmatpush1.bf16.msra.mxu0 0
  %365 = vmatprep.subr.bf16.mxu0 0
  %366 = vmatpush1.bf16.msra.mxu0 0
  %367 = vmatprep.subr.bf16.mxu0 0
  %368 = vmatpush1.bf16.msra.mxu0 %v353
  %369 = vmatprep.subr.bf16.mxu0 0
  %370 = vmatpush1.bf16.msra.mxu0 %v248
  %371 = vmatprep.subr.bf16.mxu0 0
  %372 = vmatpush2.bf16.msra.mxu0 0
  %373 = vmatprep.subr.bf16.mxu0 0
  %374 = vmatpush2.bf16.msra.mxu0 0
  %375 = vmatprep.subr.bf16.mxu0 0
  %376 = vmatpush2.bf16.msra.mxu0 0
  %377 = vmatprep.subr.bf16.mxu0 0
  %378 = vmatpush2.bf16.msra.mxu0 0
  %379 = vmatprep.subr.bf16.mxu0 0
  %380 = vmatpush2.bf16.msra.mxu0 0
  %381 = vmatprep.subr.bf16.mxu0 0
  %382 = vmatpush2.bf16.msra.mxu0 0
  %383 = vmatprep.subr.bf16.mxu0 0
  %384 = vmatpush2.bf16.msra.mxu0 0
  %385 = vmatprep.subr.bf16.mxu0 0
  %386 = vmatpush2.bf16.msra.mxu0 0
  %387 = vmatprep.mubr.bf16.mxu0 0
  %388 = vmatmul.mubr.bf16.gmra.mxu0 %v253
  %v389 = vpop.f32.mrf.mxu0
  %v390 = vadd.f32 0.0, %v389
  %v391 = vpop.f32.mrf.mxu0
  %v392 = vpop.f32.mrf.mxu0
  %v393 = vadd.f32 0.0, %v392
  %v394 = vpop.f32.mrf.mxu0
  %395 = vmatprep.mubr.bf16.mxu0 0
  %396 = vmatmul.mubr.bf16.gmra.mxu0 %v256
  %v397 = vpop.f32.mrf.mxu0
  %v398 = vadd.f32 0.0, %v397
  %v399 = vpop.f32.mrf.mxu0
  %v400 = vpop.f32.mrf.mxu0
  %v401 = vadd.f32 0.0, %v400
  %v402 = vpop.f32.mrf.mxu0
  %403 = vmatprep.mubr.bf16.mxu0 0
  %404 = vmatmul.mubr.bf16.gmra.mxu0 %v259
  %v405 = vpop.f32.mrf.mxu0
  %v406 = vadd.f32 0.0, %v405
  %v407 = vpop.f32.mrf.mxu0
  %v408 = vpop.f32.mrf.mxu0
  %v409 = vadd.f32 0.0, %v408
  %v410 = vpop.f32.mrf.mxu0
  %411 = vmatprep.mubr.bf16.mxu0 0
  %412 = vmatmul.mubr.bf16.gmra.mxu0 %v262
  %v413 = vpop.f32.mrf.mxu0
  %v414 = vadd.f32 0.0, %v413
  %v415 = vpop.f32.mrf.mxu0
  %v416 = vpop.f32.mrf.mxu0
  %v417 = vadd.f32 0.0, %v416
  %v418 = vpop.f32.mrf.mxu0
  %419 = vmatprep.mubr.bf16.mxu0 0
  %420 = vmatmul.mubr.bf16.gmra.mxu0 %v265
  %v421 = vpop.f32.mrf.mxu0
  %v422 = vadd.f32 0.0, %v421
  %v423 = vpop.f32.mrf.mxu0
  %v424 = vpop.f32.mrf.mxu0
  %v425 = vadd.f32 0.0, %v424
  %v426 = vpop.f32.mrf.mxu0
  %427 = vmatprep.mubr.bf16.mxu0 0
  %428 = vmatmul.mubr.bf16.gmra.mxu0 %v268
  %v429 = vpop.f32.mrf.mxu0
  %v430 = vadd.f32 0.0, %v429
  %v431 = vpop.f32.mrf.mxu0
  %v432 = vpop.f32.mrf.mxu0
  %v433 = vadd.f32 0.0, %v432
  %v434 = vpop.f32.mrf.mxu0
  %435 = vmatprep.mubr.bf16.mxu0 0
  %436 = vmatmul.mubr.bf16.gmra.mxu0 %v271
  %v437 = vpop.f32.mrf.mxu0
  %v438 = vadd.f32 0.0, %v437
  %v439 = vpop.f32.mrf.mxu0
  %v440 = vpop.f32.mrf.mxu0
  %v441 = vadd.f32 0.0, %v440
  %v442 = vpop.f32.mrf.mxu0
  %443 = vmatprep.mubr.bf16.mxu0 0
  %444 = vmatmul.mubr.bf16.gmra.mxu0 %v274
  %v445 = vpop.f32.mrf.mxu0
  %v446 = vadd.f32 0.0, %v445
  %v447 = vpop.f32.mrf.mxu0
  %v448 = vpop.f32.mrf.mxu0
  %v449 = vadd.f32 0.0, %v448
  %v450 = vpop.f32.mrf.mxu0
  %451 = vmatprep.mubr.bf16.mxu0 0
  %452 = vmatmul.mubr.bf16.gmra.mxu0 %v277
  %v453 = vpop.f32.mrf.mxu0
  %v454 = vadd.f32 0.0, %v453
  %v455 = vpop.f32.mrf.mxu0
  %v456 = vpop.f32.mrf.mxu0
  %v457 = vadd.f32 0.0, %v456
  %v458 = vpop.f32.mrf.mxu0
  %459 = vmatprep.mubr.bf16.mxu0 0
  %460 = vmatmul.mubr.bf16.gmra.mxu0 %v280
  %v461 = vpop.f32.mrf.mxu0
  %v462 = vadd.f32 0.0, %v461
  %v463 = vpop.f32.mrf.mxu0
  %v464 = vpop.f32.mrf.mxu0
  %v465 = vadd.f32 0.0, %v464
  %v466 = vpop.f32.mrf.mxu0
  %467 = vmatprep.mubr.bf16.mxu0 0
  %468 = vmatmul.mubr.bf16.gmra.mxu0 %v283
  %v469 = vpop.f32.mrf.mxu0
  %v470 = vadd.f32 0.0, %v469
  %v471 = vpop.f32.mrf.mxu0
  %v472 = vpop.f32.mrf.mxu0
  %v473 = vadd.f32 0.0, %v472
  %v474 = vpop.f32.mrf.mxu0
  %475 = vmatprep.mubr.bf16.mxu0 0
  %476 = vmatmul.mubr.bf16.gmra.mxu0 %v286
  %v477 = vpop.f32.mrf.mxu0
  %v478 = vadd.f32 0.0, %v477
  %v479 = vpop.f32.mrf.mxu0
  %v480 = vpop.f32.mrf.mxu0
  %v481 = vadd.f32 0.0, %v480
  %v482 = vpop.f32.mrf.mxu0
  %483 = vmatprep.mubr.bf16.mxu0 0
  %484 = vmatmul.mubr.bf16.gmra.mxu0 %v289
  %v485 = vpop.f32.mrf.mxu0
  %v486 = vadd.f32 0.0, %v485
  %v487 = vpop.f32.mrf.mxu0
  %v488 = vpop.f32.mrf.mxu0
  %v489 = vadd.f32 0.0, %v488
  %v490 = vpop.f32.mrf.mxu0
  %491 = vmatprep.mubr.bf16.mxu0 0
  %492 = vmatmul.mubr.bf16.gmra.mxu0 %v292
  %v493 = vpop.f32.mrf.mxu0
  %v494 = vadd.f32 0.0, %v493
  %v495 = vpop.f32.mrf.mxu0
  %v496 = vpop.f32.mrf.mxu0
  %v497 = vadd.f32 0.0, %v496
  %v498 = vpop.f32.mrf.mxu0
  %499 = vmatprep.mubr.bf16.mxu0 0
  %500 = vmatmul.mubr.bf16.gmra.mxu0 %v295
  %v501 = vpop.f32.mrf.mxu0
  %v502 = vadd.f32 0.0, %v501
  %v503 = vpop.f32.mrf.mxu0
  %v504 = vpop.f32.mrf.mxu0
  %v505 = vadd.f32 0.0, %v504
  %v506 = vpop.f32.mrf.mxu0
  %507 = vmatprep.mubr.bf16.mxu0 0
  %508 = vmatmul.mubr.bf16.gmra.mxu0 %v298
  %v509 = vpop.f32.mrf.mxu0
  %v510 = vadd.f32 0.0, %v509
  %v511 = vpop.f32.mrf.mxu0
  %v512 = vpop.f32.mrf.mxu0
  %v513 = vadd.f32 0.0, %v512
  %v514 = vpop.f32.mrf.mxu0
  %515 = vmatprep.mubr.bf16.mxu0 0
  %516 = vmatmul.mubr.bf16.gmra.mxu0 %v301
  %v517 = vpop.f32.mrf.mxu0
  %v518 = vadd.f32 0.0, %v517
  %v519 = vpop.f32.mrf.mxu0
  %v520 = vpop.f32.mrf.mxu0
  %v521 = vadd.f32 0.0, %v520
  %v522 = vpop.f32.mrf.mxu0
  %523 = vmatprep.mubr.bf16.mxu0 0
  %524 = vmatmul.mubr.bf16.gmra.mxu0 %v304
  %v525 = vpop.f32.mrf.mxu0
  %v526 = vadd.f32 0.0, %v525
  %v527 = vpop.f32.mrf.mxu0
  %v528 = vpop.f32.mrf.mxu0
  %v529 = vadd.f32 0.0, %v528
  %v530 = vpop.f32.mrf.mxu0
  %531 = vmatprep.mubr.bf16.mxu0 0
  %532 = vmatmul.mubr.bf16.gmra.mxu0 %v307
  %v533 = vpop.f32.mrf.mxu0
  %v534 = vadd.f32 0.0, %v533
  %v535 = vpop.f32.mrf.mxu0
  %v536 = vpop.f32.mrf.mxu0
  %v537 = vadd.f32 0.0, %v536
  %v538 = vpop.f32.mrf.mxu0
  %539 = vmatprep.mubr.bf16.mxu0 0
  %540 = vmatmul.mubr.bf16.gmra.mxu0 %v310
  %v541 = vpop.f32.mrf.mxu0
  %v542 = vadd.f32 0.0, %v541
  %v543 = vpop.f32.mrf.mxu0
  %v544 = vpop.f32.mrf.mxu0
  %v545 = vadd.f32 0.0, %v544
  %v546 = vpop.f32.mrf.mxu0
  %547 = vmatprep.mubr.bf16.mxu0 0
  %548 = vmatmul.mubr.bf16.gmra.mxu0 %v313
  %v549 = vpop.f32.mrf.mxu0
  %v550 = vadd.f32 0.0, %v549
  %v551 = vpop.f32.mrf.mxu0
  %v552 = vpop.f32.mrf.mxu0
  %v553 = vadd.f32 0.0, %v552
  %v554 = vpop.f32.mrf.mxu0
  %555 = vmatprep.mubr.bf16.mxu0 0
  %556 = vmatmul.mubr.bf16.gmra.mxu0 %v316
  %v557 = vpop.f32.mrf.mxu0
  %v558 = vadd.f32 0.0, %v557
  %v559 = vpop.f32.mrf.mxu0
  %v560 = vpop.f32.mrf.mxu0
  %v561 = vadd.f32 0.0, %v560
  %v562 = vpop.f32.mrf.mxu0
  %563 = vmatprep.mubr.bf16.mxu0 0
  %564 = vmatmul.mubr.bf16.gmra.mxu0 %v319
  %v565 = vpop.f32.mrf.mxu0
  %v566 = vadd.f32 0.0, %v565
  %v567 = vpop.f32.mrf.mxu0
  %v568 = vpop.f32.mrf.mxu0
  %v569 = vadd.f32 0.0, %v568
  %v570 = vpop.f32.mrf.mxu0
  %571 = vmatprep.mubr.bf16.mxu0 0
  %572 = vmatmul.mubr.bf16.gmra.mxu0 %v322
  %v573 = vpop.f32.mrf.mxu0
  %v574 = vadd.f32 0.0, %v573
  %v575 = vpop.f32.mrf.mxu0
  %v576 = vpop.f32.mrf.mxu0
  %v577 = vadd.f32 0.0, %v576
  %v578 = vpop.f32.mrf.mxu0
  %579 = vmatprep.mubr.bf16.mxu0 0
  %580 = vmatmul.mubr.bf16.gmra.mxu0 %v325
  %v581 = vpop.f32.mrf.mxu0
  %v582 = vadd.f32 0.0, %v581
  %v583 = vpop.f32.mrf.mxu0
  %v584 = vpop.f32.mrf.mxu0
  %v585 = vadd.f32 0.0, %v584
  %v586 = vpop.f32.mrf.mxu0
  %587 = vmatprep.mubr.bf16.mxu0 0
  %588 = vmatmul.mubr.bf16.gmra.mxu0 %v328
  %v589 = vpop.f32.mrf.mxu0
  %v590 = vadd.f32 0.0, %v589
  %v591 = vpop.f32.mrf.mxu0
  %v592 = vpop.f32.mrf.mxu0
  %v593 = vadd.f32 0.0, %v592
  %v594 = vpop.f32.mrf.mxu0
  %595 = vmatprep.mubr.bf16.mxu0 0
  %596 = vmatmul.mubr.bf16.gmra.mxu0 %v331
  %v597 = vpop.f32.mrf.mxu0
  %v598 = vadd.f32 0.0, %v597
  %v599 = vpop.f32.mrf.mxu0
  %v600 = vpop.f32.mrf.mxu0
  %v601 = vadd.f32 0.0, %v600
  %v602 = vpop.f32.mrf.mxu0
  %603 = vmatprep.mubr.bf16.mxu0 0
  %604 = vmatmul.mubr.bf16.gmra.mxu0 %v334
  %v605 = vpop.f32.mrf.mxu0
  %v606 = vadd.f32 0.0, %v605
  %v607 = vpop.f32.mrf.mxu0
  %v608 = vpop.f32.mrf.mxu0
  %v609 = vadd.f32 0.0, %v608
  %v610 = vpop.f32.mrf.mxu0
  %611 = vmatprep.mubr.bf16.mxu0 0
  %612 = vmatmul.mubr.bf16.gmra.mxu0 %v337
  %v613 = vpop.f32.mrf.mxu0
  %v614 = vadd.f32 0.0, %v613
  %v615 = vpop.f32.mrf.mxu0
  %v616 = vpop.f32.mrf.mxu0
  %v617 = vadd.f32 0.0, %v616
  %v618 = vpop.f32.mrf.mxu0
  %619 = vmatprep.mubr.bf16.mxu0 0
  %620 = vmatmul.mubr.bf16.gmra.mxu0 %v340
  %v621 = vpop.f32.mrf.mxu0
  %v622 = vadd.f32 0.0, %v621
  %v623 = vpop.f32.mrf.mxu0
  %v624 = vpop.f32.mrf.mxu0
  %v625 = vadd.f32 0.0, %v624
  %v626 = vpop.f32.mrf.mxu0
  %627 = vmatprep.mubr.bf16.mxu0 0
  %628 = vmatmul.mubr.bf16.gmra.mxu0 %v343
  %v629 = vpop.f32.mrf.mxu0
  %v630 = vadd.f32 0.0, %v629
  %v631 = vpop.f32.mrf.mxu0
  %v632 = vpop.f32.mrf.mxu0
  %v633 = vadd.f32 0.0, %v632
  %v634 = vpop.f32.mrf.mxu0
  %635 = vmatprep.mubr.bf16.mxu0 0
  %636 = vmatmul.mubr.bf16.gmra.mxu0 %v346
  %v637 = vpop.f32.mrf.mxu0
  %v638 = vadd.f32 0.0, %v637
  %v639 = vpop.f32.mrf.mxu0
  %v640 = vpop.f32.mrf.mxu0
  %v641 = vadd.f32 0.0, %v640
  %v642 = vpop.f32.mrf.mxu0
  %643 = vdwg.mxu0
  %vm644 = vcmask 130048
  %645 = vst.msk [vmem:[%s2] sm:$0xff] %vm644, %v390
  %646 = vst.msk [vmem:[%s2 + $0x8] sm:$0xff] %vm644, %v393
  %647 = vst.msk [vmem:[%s2 + $0x10] sm:$0xff] %vm644, %v398
  %648 = vst.msk [vmem:[%s2 + $0x18] sm:$0xff] %vm644, %v401
  %649 = vst.msk [vmem:[%s2 + $0x20] sm:$0xff] %vm644, %v406
  %650 = vst.msk [vmem:[%s2 + $0x28] sm:$0xff] %vm644, %v409
  %651 = vst.msk [vmem:[%s2 + $0x30] sm:$0xff] %vm644, %v414
  %652 = vst.msk [vmem:[%s2 + $0x38] sm:$0xff] %vm644, %v417
  %653 = vst.msk [vmem:[%s2 + $0x40] sm:$0xff] %vm644, %v422
  %654 = vst.msk [vmem:[%s2 + $0x48] sm:$0xff] %vm644, %v425
  %655 = vst.msk [vmem:[%s2 + $0x50] sm:$0xff] %vm644, %v430
  %656 = vst.msk [vmem:[%s2 + $0x58] sm:$0xff] %vm644, %v433
  %657 = vst.msk [vmem:[%s2 + $0x60] sm:$0xff] %vm644, %v438
  %658 = vst.msk [vmem:[%s2 + $0x68] sm:$0xff] %vm644, %v441
  %659 = vst.msk [vmem:[%s2 + $0x70] sm:$0xff] %vm644, %v446
  %660 = vst.msk [vmem:[%s2 + $0x78] sm:$0xff] %vm644, %v449
  %661 = vst.msk [vmem:[%s2 + $0x80] sm:$0xff] %vm644, %v454
  %662 = vst.msk [vmem:[%s2 + $0x88] sm:$0xff] %vm644, %v457
  %663 = vst.msk [vmem:[%s2 + $0x90] sm:$0xff] %vm644, %v462
  %664 = vst.msk [vmem:[%s2 + $0x98] sm:$0xff] %vm644, %v465
  %665 = vst.msk [vmem:[%s2 + $0xa0] sm:$0xff] %vm644, %v470
  %666 = vst.msk [vmem:[%s2 + $0xa8] sm:$0xff] %vm644, %v473
  %667 = vst.msk [vmem:[%s2 + $0xb0] sm:$0xff] %vm644, %v478
  %668 = vst.msk [vmem:[%s2 + $0xb8] sm:$0xff] %vm644, %v481
  %669 = vst.msk [vmem:[%s2 + $0xc0] sm:$0xff] %vm644, %v486
  %670 = vst.msk [vmem:[%s2 + $0xc8] sm:$0xff] %vm644, %v489
  %671 = vst.msk [vmem:[%s2 + $0xd0] sm:$0xff] %vm644, %v494
  %672 = vst.msk [vmem:[%s2 + $0xd8] sm:$0xff] %vm644, %v497
  %673 = vst.msk [vmem:[%s2 + $0xe0] sm:$0xff] %vm644, %v502
  %674 = vst.msk [vmem:[%s2 + $0xe8] sm:$0xff] %vm644, %v505
  %675 = vst.msk [vmem:[%s2 + $0xf0] sm:$0xff] %vm644, %v510
  %676 = vst.msk [vmem:[%s2 + $0xf8] sm:$0xff] %vm644, %v513
  %677 = vst.msk [vmem:[%s2 + $0x100] sm:$0xff] %vm644, %v518
  %678 = vst.msk [vmem:[%s2 + $0x108] sm:$0xff] %vm644, %v521
  %679 = vst.msk [vmem:[%s2 + $0x110] sm:$0xff] %vm644, %v526
  %680 = vst.msk [vmem:[%s2 + $0x118] sm:$0xff] %vm644, %v529
  %681 = vst.msk [vmem:[%s2 + $0x120] sm:$0xff] %vm644, %v534
  %682 = vst.msk [vmem:[%s2 + $0x128] sm:$0xff] %vm644, %v537
  %683 = vst.msk [vmem:[%s2 + $0x130] sm:$0xff] %vm644, %v542
  %684 = vst.msk [vmem:[%s2 + $0x138] sm:$0xff] %vm644, %v545
  %685 = vst.msk [vmem:[%s2 + $0x140] sm:$0xff] %vm644, %v550
  %686 = vst.msk [vmem:[%s2 + $0x148] sm:$0xff] %vm644, %v553
  %687 = vst.msk [vmem:[%s2 + $0x150] sm:$0xff] %vm644, %v558
  %688 = vst.msk [vmem:[%s2 + $0x158] sm:$0xff] %vm644, %v561
  %689 = vst.msk [vmem:[%s2 + $0x160] sm:$0xff] %vm644, %v566
  %690 = vst.msk [vmem:[%s2 + $0x168] sm:$0xff] %vm644, %v569
  %691 = vst.msk [vmem:[%s2 + $0x170] sm:$0xff] %vm644, %v574
  %692 = vst.msk [vmem:[%s2 + $0x178] sm:$0xff] %vm644, %v577
  %693 = vst.msk [vmem:[%s2 + $0x180] sm:$0xff] %vm644, %v582
  %694 = vst.msk [vmem:[%s2 + $0x188] sm:$0xff] %vm644, %v585
  %695 = vst.msk [vmem:[%s2 + $0x190] sm:$0xff] %vm644, %v590
  %696 = vst.msk [vmem:[%s2 + $0x198] sm:$0xff] %vm644, %v593
  %697 = vst.msk [vmem:[%s2 + $0x1a0] sm:$0xff] %vm644, %v598
  %698 = vst.msk [vmem:[%s2 + $0x1a8] sm:$0xff] %vm644, %v601
  %699 = vst.msk [vmem:[%s2 + $0x1b0] sm:$0xff] %vm644, %v606
  %700 = vst.msk [vmem:[%s2 + $0x1b8] sm:$0xff] %vm644, %v609
  %701 = vst.msk [vmem:[%s2 + $0x1c0] sm:$0xff] %vm644, %v614
  %702 = vst.msk [vmem:[%s2 + $0x1c8] sm:$0xff] %vm644, %v617
  %703 = vst.msk [vmem:[%s2 + $0x1d0] sm:$0xff] %vm644, %v622
  %704 = vst.msk [vmem:[%s2 + $0x1d8] sm:$0xff] %vm644, %v625
  %705 = vst.msk [vmem:[%s2 + $0x1e0] sm:$0xff] %vm644, %v630
  %706 = vst.msk [vmem:[%s2 + $0x1e8] sm:$0xff] %vm644, %v633
  %707 = vst.msk [vmem:[%s2 + $0x1f0] sm:$0xff] %vm644, %v638
  %708 = vst.msk [vmem:[%s2 + $0x1f8] sm:$0xff] %vm644, %v641
  // Predicated region
  $region10: #{_lambda_.11} parent=0 // pred_check
    _
  $region11: #{_lambda_.11} parent=0 // pred_check_branch
    %710 = sbr.rel (0) target = $region13
  $region12: #{_lambda_.11} parent=0 // pred_region
    _
  $region13: #{_lambda_.11} parent=0 // pred_fallthru
    _
  // Predicated region
  $region14: #{_lambda_.11} parent=0 // pred_check
    _
  $region15: #{_lambda_.11} parent=0 // pred_check_branch
    %712 = sbr.rel (0) target = $region17
  $region16: #{_lambda_.11} parent=0 // pred_region
    _
  $region17: #{_lambda_.11} parent=0 // pred_fallthru
    _

// kernel: _lambda_.12
$region0: #{_lambda_.12}
  #allocation0 [shape = 'u32[]', space=smem, size = 0x4, offset = 0x4, fixed_abs, tag = 'smem constant byte address 0x4 - core index']
  #allocation1 [shape = 'u32[144,128]{1,0:T(1,128)}', space=vmem, size = 0x12000, scoped, tag = 'internal scratch']
  %s0 = inlined_call_operand.vmem [shape: f32[512,16], index: 0, kind: input, shape index: {}]
  %s1 = inlined_call_operand.vmem [shape: f32[1,16], index: 1, kind: input, shape index: {}]
  %s2 = inlined_call_operand.vmem [shape: f32[1,16], index: 2, kind: input, shape index: {}]
  %s3 = inlined_call_operand.vmem [shape: bf16[512,16], index: 3, kind: output, shape index: {}]
  %s4 = sld [smem:[#allocation0]]
  $region22: #{_lambda_.12} parent=0
    _
  %s6 = ssub.s32 1, %s4
  %s7 = scalar_select 0, %s6, %s4
  // Predicated region
  $region2: #{_lambda_.12} parent=0 // pred_check
    _
  $region3: #{_lambda_.12} parent=0 // pred_check_branch
    %9 = sbr.rel (0) target = $region5
  $region4: #{_lambda_.12} parent=0 // pred_region
    _
  $region5: #{_lambda_.12} parent=0 // pred_fallthru
    _
  // Predicated region
  $region6: #{_lambda_.12} parent=0 // pred_check
    _
  $region7: #{_lambda_.12} parent=0 // pred_check_branch
    %11 = sbr.rel (0) target = $region9
  $region8: #{_lambda_.12} parent=0 // pred_region
    _
  $region9: #{_lambda_.12} parent=0 // pred_fallthru
    _
  // Predicated region
  $region10: #{_lambda_.12} parent=0 // pred_check
    _
  $region11: #{_lambda_.12} parent=0 // pred_check_branch
    %13 = sbr.rel (0) target = $region13
  $region12: #{_lambda_.12} parent=0 // pred_region
    _
  $region13: #{_lambda_.12} parent=0 // pred_fallthru
    _
  %v14 = vld [vmem:[%s0] sm:$0xff]
  %v15 = vld [vmem:[%s0 + $0x8] sm:$0xff]
  %v16 = vld [vmem:[%s0 + $0x10] sm:$0xff]
  %v17 = vld [vmem:[%s0 + $0x18] sm:$0xff]
  %v18 = vld [vmem:[%s0 + $0x20] sm:$0xff]
  %v19 = vld [vmem:[%s0 + $0x28] sm:$0xff]
  %v20 = vld [vmem:[%s0 + $0x30] sm:$0xff]
  %v21 = vld [vmem:[%s0 + $0x38] sm:$0xff]
  %v22 = vld [vmem:[%s0 + $0x40] sm:$0xff]
  %v23 = vld [vmem:[%s0 + $0x48] sm:$0xff]
  %v24 = vld [vmem:[%s0 + $0x50] sm:$0xff]
  %v25 = vld [vmem:[%s0 + $0x58] sm:$0xff]
  %v26 = vld [vmem:[%s0 + $0x60] sm:$0xff]
  %v27 = vld [vmem:[%s0 + $0x68] sm:$0xff]
  %v28 = vld [vmem:[%s0 + $0x70] sm:$0xff]
  %v29 = vld [vmem:[%s0 + $0x78] sm:$0xff]
  %v30 = vld [vmem:[%s0 + $0x80] sm:$0xff]
  %v31 = vld [vmem:[%s0 + $0x88] sm:$0xff]
  %v32 = vld [vmem:[%s0 + $0x90] sm:$0xff]
  %v33 = vld [vmem:[%s0 + $0x98] sm:$0xff]
  %v34 = vld [vmem:[%s0 + $0xa0] sm:$0xff]
  %v35 = vld [vmem:[%s0 + $0xa8] sm:$0xff]
  %v36 = vld [vmem:[%s0 + $0xb0] sm:$0xff]
  %v37 = vld [vmem:[%s0 + $0xb8] sm:$0xff]
  %v38 = vld [vmem:[%s0 + $0xc0] sm:$0xff]
  %v39 = vld [vmem:[%s0 + $0xc8] sm:$0xff]
  %v40 = vld [vmem:[%s0 + $0xd0] sm:$0xff]
  %v41 = vld [vmem:[%s0 + $0xd8] sm:$0xff]
  %v42 = vld [vmem:[%s0 + $0xe0] sm:$0xff]
  %v43 = vld [vmem:[%s0 + $0xe8] sm:$0xff]
  %v44 = vld [vmem:[%s0 + $0xf0] sm:$0xff]
  %v45 = vld [vmem:[%s0 + $0xf8] sm:$0xff]
  %v46 = vld [vmem:[%s0 + $0x100] sm:$0xff]
  %v47 = vld [vmem:[%s0 + $0x108] sm:$0xff]
  %v48 = vld [vmem:[%s0 + $0x110] sm:$0xff]
  %v49 = vld [vmem:[%s0 + $0x118] sm:$0xff]
  %v50 = vld [vmem:[%s0 + $0x120] sm:$0xff]
  %v51 = vld [vmem:[%s0 + $0x128] sm:$0xff]
  %v52 = vld [vmem:[%s0 + $0x130] sm:$0xff]
  %v53 = vld [vmem:[%s0 + $0x138] sm:$0xff]
  %v54 = vld [vmem:[%s0 + $0x140] sm:$0xff]
  %v55 = vld [vmem:[%s0 + $0x148] sm:$0xff]
  %v56 = vld [vmem:[%s0 + $0x150] sm:$0xff]
  %v57 = vld [vmem:[%s0 + $0x158] sm:$0xff]
  %v58 = vld [vmem:[%s0 + $0x160] sm:$0xff]
  %v59 = vld [vmem:[%s0 + $0x168] sm:$0xff]
  %v60 = vld [vmem:[%s0 + $0x170] sm:$0xff]
  %v61 = vld [vmem:[%s0 + $0x178] sm:$0xff]
  %v62 = vld [vmem:[%s0 + $0x180] sm:$0xff]
  %v63 = vld [vmem:[%s0 + $0x188] sm:$0xff]
  %v64 = vld [vmem:[%s0 + $0x190] sm:$0xff]
  %v65 = vld [vmem:[%s0 + $0x198] sm:$0xff]
  %v66 = vld [vmem:[%s0 + $0x1a0] sm:$0xff]
  %v67 = vld [vmem:[%s0 + $0x1a8] sm:$0xff]
  %v68 = vld [vmem:[%s0 + $0x1b0] sm:$0xff]
  %v69 = vld [vmem:[%s0 + $0x1b8] sm:$0xff]
  %v70 = vld [vmem:[%s0 + $0x1c0] sm:$0xff]
  %v71 = vld [vmem:[%s0 + $0x1c8] sm:$0xff]
  %v72 = vld [vmem:[%s0 + $0x1d0] sm:$0xff]
  %v73 = vld [vmem:[%s0 + $0x1d8] sm:$0xff]
  %v74 = vld [vmem:[%s0 + $0x1e0] sm:$0xff]
  %v75 = vld [vmem:[%s0 + $0x1e8] sm:$0xff]
  %v76 = vld [vmem:[%s0 + $0x1f0] sm:$0xff]
  %v77 = vld [vmem:[%s0 + $0x1f8] sm:$0xff]
  %vm78 = vcmask 130048
  %v79 = vsel %vm78, %v14, 0.0
  %v80 = vsel %vm78, %v15, 0.0
  %v81 = vadd.f32 %v79, %v80
  %v82 = vsel %vm78, %v16, 0.0
  %v83 = vadd.f32 %v81, %v82
  %v84 = vsel %vm78, %v17, 0.0
  %v85 = vadd.f32 %v83, %v84
  %v86 = vsel %vm78, %v18, 0.0
  %v87 = vadd.f32 %v85, %v86
  %v88 = vsel %vm78, %v19, 0.0
  %v89 = vadd.f32 %v87, %v88
  %v90 = vsel %vm78, %v20, 0.0
  %v91 = vadd.f32 %v89, %v90
  %v92 = vsel %vm78, %v21, 0.0
  %v93 = vadd.f32 %v91, %v92
  %v94 = vsel %vm78, %v22, 0.0
  %v95 = vadd.f32 %v93, %v94
  %v96 = vsel %vm78, %v23, 0.0
  %v97 = vadd.f32 %v95, %v96
  %v98 = vsel %vm78, %v24, 0.0
  %v99 = vadd.f32 %v97, %v98
  %v100 = vsel %vm78, %v25, 0.0
  %v101 = vadd.f32 %v99, %v100
  %v102 = vsel %vm78, %v26, 0.0
  %v103 = vadd.f32 %v101, %v102
  %v104 = vsel %vm78, %v27, 0.0
  %v105 = vadd.f32 %v103, %v104
  %v106 = vsel %vm78, %v28, 0.0
  %v107 = vadd.f32 %v105, %v106
  %v108 = vsel %vm78, %v29, 0.0
  %v109 = vadd.f32 %v107, %v108
  %v110 = vsel %vm78, %v30, 0.0
  %v111 = vadd.f32 %v109, %v110
  %v112 = vsel %vm78, %v31, 0.0
  %v113 = vadd.f32 %v111, %v112
  %v114 = vsel %vm78, %v32, 0.0
  %v115 = vadd.f32 %v113, %v114
  %v116 = vsel %vm78, %v33, 0.0
  %v117 = vadd.f32 %v115, %v116
  %v118 = vsel %vm78, %v34, 0.0
  %v119 = vadd.f32 %v117, %v118
  %v120 = vsel %vm78, %v35, 0.0
  %v121 = vadd.f32 %v119, %v120
  %v122 = vsel %vm78, %v36, 0.0
  %v123 = vadd.f32 %v121, %v122
  %v124 = vsel %vm78, %v37, 0.0
  %v125 = vadd.f32 %v123, %v124
  %v126 = vsel %vm78, %v38, 0.0
  %v127 = vadd.f32 %v125, %v126
  %v128 = vsel %vm78, %v39, 0.0
  %v129 = vadd.f32 %v127, %v128
  %v130 = vsel %vm78, %v40, 0.0
  %v131 = vadd.f32 %v129, %v130
  %v132 = vsel %vm78, %v41, 0.0
  %v133 = vadd.f32 %v131, %v132
  %v134 = vsel %vm78, %v42, 0.0
  %v135 = vadd.f32 %v133, %v134
  %v136 = vsel %vm78, %v43, 0.0
  %v137 = vadd.f32 %v135, %v136
  %v138 = vsel %vm78, %v44, 0.0
  %v139 = vadd.f32 %v137, %v138
  %v140 = vsel %vm78, %v45, 0.0
  %v141 = vadd.f32 %v139, %v140
  %v142 = vsel %vm78, %v46, 0.0
  %v143 = vadd.f32 %v141, %v142
  %v144 = vsel %vm78, %v47, 0.0
  %v145 = vadd.f32 %v143, %v144
  %v146 = vsel %vm78, %v48, 0.0
  %v147 = vadd.f32 %v145, %v146
  %v148 = vsel %vm78, %v49, 0.0
  %v149 = vadd.f32 %v147, %v148
  %v150 = vsel %vm78, %v50, 0.0
  %v151 = vadd.f32 %v149, %v150
  %v152 = vsel %vm78, %v51, 0.0
  %v153 = vadd.f32 %v151, %v152
  %v154 = vsel %vm78, %v52, 0.0
  %v155 = vadd.f32 %v153, %v154
  %v156 = vsel %vm78, %v53, 0.0
  %v157 = vadd.f32 %v155, %v156
  %v158 = vsel %vm78, %v54, 0.0
  %v159 = vadd.f32 %v157, %v158
  %v160 = vsel %vm78, %v55, 0.0
  %v161 = vadd.f32 %v159, %v160
  %v162 = vsel %vm78, %v56, 0.0
  %v163 = vadd.f32 %v161, %v162
  %v164 = vsel %vm78, %v57, 0.0
  %v165 = vadd.f32 %v163, %v164
  %v166 = vsel %vm78, %v58, 0.0
  %v167 = vadd.f32 %v165, %v166
  %v168 = vsel %vm78, %v59, 0.0
  %v169 = vadd.f32 %v167, %v168
  %v170 = vsel %vm78, %v60, 0.0
  %v171 = vadd.f32 %v169, %v170
  %v172 = vsel %vm78, %v61, 0.0
  %v173 = vadd.f32 %v171, %v172
  %v174 = vsel %vm78, %v62, 0.0
  %v175 = vadd.f32 %v173, %v174
  %v176 = vsel %vm78, %v63, 0.0
  %v177 = vadd.f32 %v175, %v176
  %v178 = vsel %vm78, %v64, 0.0
  %v179 = vadd.f32 %v177, %v178
  %v180 = vsel %vm78, %v65, 0.0
  %v181 = vadd.f32 %v179, %v180
  %v182 = vsel %vm78, %v66, 0.0
  %v183 = vadd.f32 %v181, %v182
  %v184 = vsel %vm78, %v67, 0.0
  %v185 = vadd.f32 %v183, %v184
  %v186 = vsel %vm78, %v68, 0.0
  %v187 = vadd.f32 %v185, %v186
  %v188 = vsel %vm78, %v69, 0.0
  %v189 = vadd.f32 %v187, %v188
  %v190 = vsel %vm78, %v70, 0.0
  %v191 = vadd.f32 %v189, %v190
  %v192 = vsel %vm78, %v71, 0.0
  %v193 = vadd.f32 %v191, %v192
  %v194 = vsel %vm78, %v72, 0.0
  %v195 = vadd.f32 %v193, %v194
  %v196 = vsel %vm78, %v73, 0.0
  %v197 = vadd.f32 %v195, %v196
  %v198 = vsel %vm78, %v74, 0.0
  %v199 = vadd.f32 %v197, %v198
  %v200 = vsel %vm78, %v75, 0.0
  %v201 = vadd.f32 %v199, %v200
  %v202 = vsel %vm78, %v76, 0.0
  %v203 = vadd.f32 %v201, %v202
  %v204 = vsel %vm78, %v77, 0.0
  %v205 = vadd.f32 %v203, %v204
  %v206 = vrot.slane %v205, 4
  %v207 = vadd.f32 %v205, %v206
  %v208 = vrot.slane %v207, 2
  %v209 = vadd.f32 %v207, %v208
  %v210 = vrot.slane %v209, 1
  %v211 = vadd.f32 %v209, %v210
  %v212 = vmul.f32 %v211, 0.001953125
  %v213 = vmul.f32 %v14, %v14
  %v214 = vmul.f32 %v15, %v15
  %v215 = vmul.f32 %v16, %v16
  %v216 = vmul.f32 %v17, %v17
  %v217 = vmul.f32 %v18, %v18
  %v218 = vmul.f32 %v19, %v19
  %v219 = vmul.f32 %v20, %v20
  %v220 = vmul.f32 %v21, %v21
  %v221 = vmul.f32 %v22, %v22
  %v222 = vmul.f32 %v23, %v23
  %v223 = vmul.f32 %v24, %v24
  %v224 = vmul.f32 %v25, %v25
  %v225 = vmul.f32 %v26, %v26
  %v226 = vmul.f32 %v27, %v27
  %v227 = vmul.f32 %v28, %v28
  %v228 = vmul.f32 %v29, %v29
  %v229 = vmul.f32 %v30, %v30
  %v230 = vmul.f32 %v31, %v31
  %v231 = vmul.f32 %v32, %v32
  %v232 = vmul.f32 %v33, %v33
  %v233 = vmul.f32 %v34, %v34
  %v234 = vmul.f32 %v35, %v35
  %v235 = vmul.f32 %v36, %v36
  %v236 = vmul.f32 %v37, %v37
  %v237 = vmul.f32 %v38, %v38
  %v238 = vmul.f32 %v39, %v39
  %v239 = vmul.f32 %v40, %v40
  %v240 = vmul.f32 %v41, %v41
  %v241 = vmul.f32 %v42, %v42
  %v242 = vmul.f32 %v43, %v43
  %v243 = vmul.f32 %v44, %v44
  %v244 = vmul.f32 %v45, %v45
  %v245 = vmul.f32 %v46, %v46
  %v246 = vmul.f32 %v47, %v47
  %v247 = vmul.f32 %v48, %v48
  %v248 = vmul.f32 %v49, %v49
  %v249 = vmul.f32 %v50, %v50
  %v250 = vmul.f32 %v51, %v51
  %v251 = vmul.f32 %v52, %v52
  %v252 = vmul.f32 %v53, %v53
  %v253 = vmul.f32 %v54, %v54
  %v254 = vmul.f32 %v55, %v55
  %v255 = vmul.f32 %v56, %v56
  %v256 = vmul.f32 %v57, %v57
  %v257 = vmul.f32 %v58, %v58
  %v258 = vmul.f32 %v59, %v59
  %v259 = vmul.f32 %v60, %v60
  %v260 = vmul.f32 %v61, %v61
  %v261 = vmul.f32 %v62, %v62
  %v262 = vmul.f32 %v63, %v63
  %v263 = vmul.f32 %v64, %v64
  %v264 = vmul.f32 %v65, %v65
  %v265 = vmul.f32 %v66, %v66
  %v266 = vmul.f32 %v67, %v67
  %v267 = vmul.f32 %v68, %v68
  %v268 = vmul.f32 %v69, %v69
  %v269 = vmul.f32 %v70, %v70
  %v270 = vmul.f32 %v71, %v71
  %v271 = vmul.f32 %v72, %v72
  %v272 = vmul.f32 %v73, %v73
  %v273 = vmul.f32 %v74, %v74
  %v274 = vmul.f32 %v75, %v75
  %v275 = vmul.f32 %v76, %v76
  %v276 = vmul.f32 %v77, %v77
  %v277 = vsel %vm78, %v213, 0.0
  %v278 = vsel %vm78, %v214, 0.0
  %v279 = vadd.f32 %v277, %v278
  %v280 = vsel %vm78, %v215, 0.0
  %v281 = vadd.f32 %v279, %v280
  %v282 = vsel %vm78, %v216, 0.0
  %v283 = vadd.f32 %v281, %v282
  %v284 = vsel %vm78, %v217, 0.0
  %v285 = vadd.f32 %v283, %v284
  %v286 = vsel %vm78, %v218, 0.0
  %v287 = vadd.f32 %v285, %v286
  %v288 = vsel %vm78, %v219, 0.0
  %v289 = vadd.f32 %v287, %v288
  %v290 = vsel %vm78, %v220, 0.0
  %v291 = vadd.f32 %v289, %v290
  %v292 = vsel %vm78, %v221, 0.0
  %v293 = vadd.f32 %v291, %v292
  %v294 = vsel %vm78, %v222, 0.0
  %v295 = vadd.f32 %v293, %v294
  %v296 = vsel %vm78, %v223, 0.0
  %v297 = vadd.f32 %v295, %v296
  %v298 = vsel %vm78, %v224, 0.0
  %v299 = vadd.f32 %v297, %v298
  %v300 = vsel %vm78, %v225, 0.0
  %v301 = vadd.f32 %v299, %v300
  %v302 = vsel %vm78, %v226, 0.0
  %v303 = vadd.f32 %v301, %v302
  %v304 = vsel %vm78, %v227, 0.0
  %v305 = vadd.f32 %v303, %v304
  %v306 = vsel %vm78, %v228, 0.0
  %v307 = vadd.f32 %v305, %v306
  %v308 = vsel %vm78, %v229, 0.0
  %v309 = vadd.f32 %v307, %v308
  %v310 = vsel %vm78, %v230, 0.0
  %v311 = vadd.f32 %v309, %v310
  %v312 = vsel %vm78, %v231, 0.0
  %v313 = vadd.f32 %v311, %v312
  %v314 = vsel %vm78, %v232, 0.0
  %v315 = vadd.f32 %v313, %v314
  %v316 = vsel %vm78, %v233, 0.0
  %v317 = vadd.f32 %v315, %v316
  %v318 = vsel %vm78, %v234, 0.0
  %v319 = vadd.f32 %v317, %v318
  %v320 = vsel %vm78, %v235, 0.0
  %v321 = vadd.f32 %v319, %v320
  %v322 = vsel %vm78, %v236, 0.0
  %v323 = vadd.f32 %v321, %v322
  %v324 = vsel %vm78, %v237, 0.0
  %v325 = vadd.f32 %v323, %v324
  %v326 = vsel %vm78, %v238, 0.0
  %v327 = vadd.f32 %v325, %v326
  %v328 = vsel %vm78, %v239, 0.0
  %v329 = vadd.f32 %v327, %v328
  %v330 = vsel %vm78, %v240, 0.0
  %v331 = vadd.f32 %v329, %v330
  %v332 = vsel %vm78, %v241, 0.0
  %v333 = vadd.f32 %v331, %v332
  %v334 = vsel %vm78, %v242, 0.0
  %v335 = vadd.f32 %v333, %v334
  %v336 = vsel %vm78, %v243, 0.0
  %v337 = vadd.f32 %v335, %v336
  %v338 = vsel %vm78, %v244, 0.0
  %v339 = vadd.f32 %v337, %v338
  %v340 = vsel %vm78, %v245, 0.0
  %v341 = vadd.f32 %v339, %v340
  %v342 = vsel %vm78, %v246, 0.0
  %v343 = vadd.f32 %v341, %v342
  %v344 = vsel %vm78, %v247, 0.0
  %v345 = vadd.f32 %v343, %v344
  %v346 = vsel %vm78, %v248, 0.0
  %v347 = vadd.f32 %v345, %v346
  %v348 = vsel %vm78, %v249, 0.0
  %v349 = vadd.f32 %v347, %v348
  %v350 = vsel %vm78, %v250, 0.0
  %v351 = vadd.f32 %v349, %v350
  %v352 = vsel %vm78, %v251, 0.0
  %v353 = vadd.f32 %v351, %v352
  %v354 = vsel %vm78, %v252, 0.0
  %v355 = vadd.f32 %v353, %v354
  %v356 = vsel %vm78, %v253, 0.0
  %v357 = vadd.f32 %v355, %v356
  %v358 = vsel %vm78, %v254, 0.0
  %v359 = vadd.f32 %v357, %v358
  %v360 = vsel %vm78, %v255, 0.0
  %v361 = vadd.f32 %v359, %v360
  %v362 = vsel %vm78, %v256, 0.0
  %v363 = vadd.f32 %v361, %v362
  %v364 = vsel %vm78, %v257, 0.0
  %v365 = vadd.f32 %v363, %v364
  %v366 = vsel %vm78, %v258, 0.0
  %v367 = vadd.f32 %v365, %v366
  %v368 = vsel %vm78, %v259, 0.0
  %v369 = vadd.f32 %v367, %v368
  %v370 = vsel %vm78, %v260, 0.0
  %v371 = vadd.f32 %v369, %v370
  %v372 = vsel %vm78, %v261, 0.0
  %v373 = vadd.f32 %v371, %v372
  %v374 = vsel %vm78, %v262, 0.0
  %v375 = vadd.f32 %v373, %v374
  %v376 = vsel %vm78, %v263, 0.0
  %v377 = vadd.f32 %v375, %v376
  %v378 = vsel %vm78, %v264, 0.0
  %v379 = vadd.f32 %v377, %v378
  %v380 = vsel %vm78, %v265, 0.0
  %v381 = vadd.f32 %v379, %v380
  %v382 = vsel %vm78, %v266, 0.0
  %v383 = vadd.f32 %v381, %v382
  %v384 = vsel %vm78, %v267, 0.0
  %v385 = vadd.f32 %v383, %v384
  %v386 = vsel %vm78, %v268, 0.0
  %v387 = vadd.f32 %v385, %v386
  %v388 = vsel %vm78, %v269, 0.0
  %v389 = vadd.f32 %v387, %v388
  %v390 = vsel %vm78, %v270, 0.0
  %v391 = vadd.f32 %v389, %v390
  %v392 = vsel %vm78, %v271, 0.0
  %v393 = vadd.f32 %v391, %v392
  %v394 = vsel %vm78, %v272, 0.0
  %v395 = vadd.f32 %v393, %v394
  %v396 = vsel %vm78, %v273, 0.0
  %v397 = vadd.f32 %v395, %v396
  %v398 = vsel %vm78, %v274, 0.0
  %v399 = vadd.f32 %v397, %v398
  %v400 = vsel %vm78, %v275, 0.0
  %v401 = vadd.f32 %v399, %v400
  %v402 = vsel %vm78, %v276, 0.0
  %v403 = vadd.f32 %v401, %v402
  %v404 = vrot.slane %v403, 4
  %v405 = vadd.f32 %v403, %v404
  %v406 = vrot.slane %v405, 2
  %v407 = vadd.f32 %v405, %v406
  %v408 = vrot.slane %v407, 1
  %v409 = vadd.f32 %v407, %v408
  %v410 = vmul.f32 %v409, 0.001953125
  %v411 = vmul.f32 %v212, %v212
  %v412 = vsub.f32 %v410, %v411
  %v413 = vld [vmem:[%s1] sm:$0x1]
  %v414 = vadd.f32 %v412, 1e-05
  %v415 = vrsqrt.pop %v414
  %v416 = vmul.f32 %v413, %v415
  %v417 = vld [vmem:[%s2] sm:$0x1]
  %v418 = vmul.f32 %v212, %v416
  %v419 = vsub.f32 %v417, %v418
  %v421 = vlaneseq
  %v422 = vshrl.u32 %v421, 7
  %v423 = vsub.s32 0, %v422
  %v424 = vrot.slane %v416, %v423
  %v426 = vmul.f32 %v14, %v424
  %v427 = vmul.f32 %v15, %v424
  %v428 = vmul.f32 %v16, %v424
  %v429 = vmul.f32 %v17, %v424
  %v430 = vmul.f32 %v18, %v424
  %v431 = vmul.f32 %v19, %v424
  %v432 = vmul.f32 %v20, %v424
  %v433 = vmul.f32 %v21, %v424
  %v434 = vmul.f32 %v22, %v424
  %v435 = vmul.f32 %v23, %v424
  %v436 = vmul.f32 %v24, %v424
  %v437 = vmul.f32 %v25, %v424
  %v438 = vmul.f32 %v26, %v424
  %v439 = vmul.f32 %v27, %v424
  %v440 = vmul.f32 %v28, %v424
  %v441 = vmul.f32 %v29, %v424
  %v442 = vmul.f32 %v30, %v424
  %v443 = vmul.f32 %v31, %v424
  %v444 = vmul.f32 %v32, %v424
  %v445 = vmul.f32 %v33, %v424
  %v446 = vmul.f32 %v34, %v424
  %v447 = vmul.f32 %v35, %v424
  %v448 = vmul.f32 %v36, %v424
  %v449 = vmul.f32 %v37, %v424
  %v450 = vmul.f32 %v38, %v424
  %v451 = vmul.f32 %v39, %v424
  %v452 = vmul.f32 %v40, %v424
  %v453 = vmul.f32 %v41, %v424
  %v454 = vmul.f32 %v42, %v424
  %v455 = vmul.f32 %v43, %v424
  %v456 = vmul.f32 %v44, %v424
  %v457 = vmul.f32 %v45, %v424
  %v458 = vmul.f32 %v46, %v424
  %v459 = vmul.f32 %v47, %v424
  %v460 = vmul.f32 %v48, %v424
  %v461 = vmul.f32 %v49, %v424
  %v462 = vmul.f32 %v50, %v424
  %v463 = vmul.f32 %v51, %v424
  %v464 = vmul.f32 %v52, %v424
  %v465 = vmul.f32 %v53, %v424
  %v466 = vmul.f32 %v54, %v424
  %v467 = vmul.f32 %v55, %v424
  %v468 = vmul.f32 %v56, %v424
  %v469 = vmul.f32 %v57, %v424
  %v470 = vmul.f32 %v58, %v424
  %v471 = vmul.f32 %v59, %v424
  %v472 = vmul.f32 %v60, %v424
  %v473 = vmul.f32 %v61, %v424
  %v474 = vmul.f32 %v62, %v424
  %v475 = vmul.f32 %v63, %v424
  %v476 = vmul.f32 %v64, %v424
  %v477 = vmul.f32 %v65, %v424
  %v478 = vmul.f32 %v66, %v424
  %v479 = vmul.f32 %v67, %v424
  %v480 = vmul.f32 %v68, %v424
  %v481 = vmul.f32 %v69, %v424
  %v482 = vmul.f32 %v70, %v424
  %v483 = vmul.f32 %v71, %v424
  %v484 = vmul.f32 %v72, %v424
  %v485 = vmul.f32 %v73, %v424
  %v486 = vmul.f32 %v74, %v424
  %v487 = vmul.f32 %v75, %v424
  %v488 = vmul.f32 %v76, %v424
  %v489 = vmul.f32 %v77, %v424
  %v491 = vlaneseq
  %v492 = vshrl.u32 %v491, 7
  %v493 = vsub.s32 0, %v492
  %v494 = vrot.slane %v419, %v493
  %v496 = vadd.f32 %v426, %v494
  %v497 = vadd.f32 %v427, %v494
  %v498 = vadd.f32 %v428, %v494
  %v499 = vadd.f32 %v429, %v494
  %v500 = vadd.f32 %v430, %v494
  %v501 = vadd.f32 %v431, %v494
  %v502 = vadd.f32 %v432, %v494
  %v503 = vadd.f32 %v433, %v494
  %v504 = vadd.f32 %v434, %v494
  %v505 = vadd.f32 %v435, %v494
  %v506 = vadd.f32 %v436, %v494
  %v507 = vadd.f32 %v437, %v494
  %v508 = vadd.f32 %v438, %v494
  %v509 = vadd.f32 %v439, %v494
  %v510 = vadd.f32 %v440, %v494
  %v511 = vadd.f32 %v441, %v494
  %v512 = vadd.f32 %v442, %v494
  %v513 = vadd.f32 %v443, %v494
  %v514 = vadd.f32 %v444, %v494
  %v515 = vadd.f32 %v445, %v494
  %v516 = vadd.f32 %v446, %v494
  %v517 = vadd.f32 %v447, %v494
  %v518 = vadd.f32 %v448, %v494
  %v519 = vadd.f32 %v449, %v494
  %v520 = vadd.f32 %v450, %v494
  %v521 = vadd.f32 %v451, %v494
  %v522 = vadd.f32 %v452, %v494
  %v523 = vadd.f32 %v453, %v494
  %v524 = vadd.f32 %v454, %v494
  %v525 = vadd.f32 %v455, %v494
  %v526 = vadd.f32 %v456, %v494
  %v527 = vadd.f32 %v457, %v494
  %v528 = vadd.f32 %v458, %v494
  %v529 = vadd.f32 %v459, %v494
  %v530 = vadd.f32 %v460, %v494
  %v531 = vadd.f32 %v461, %v494
  %v532 = vadd.f32 %v462, %v494
  %v533 = vadd.f32 %v463, %v494
  %v534 = vadd.f32 %v464, %v494
  %v535 = vadd.f32 %v465, %v494
  %v536 = vadd.f32 %v466, %v494
  %v537 = vadd.f32 %v467, %v494
  %v538 = vadd.f32 %v468, %v494
  %v539 = vadd.f32 %v469, %v494
  %v540 = vadd.f32 %v470, %v494
  %v541 = vadd.f32 %v471, %v494
  %v542 = vadd.f32 %v472, %v494
  %v543 = vadd.f32 %v473, %v494
  %v544 = vadd.f32 %v474, %v494
  %v545 = vadd.f32 %v475, %v494
  %v546 = vadd.f32 %v476, %v494
  %v547 = vadd.f32 %v477, %v494
  %v548 = vadd.f32 %v478, %v494
  %v549 = vadd.f32 %v479, %v494
  %v550 = vadd.f32 %v480, %v494
  %v551 = vadd.f32 %v481, %v494
  %v552 = vadd.f32 %v482, %v494
  %v553 = vadd.f32 %v483, %v494
  %v554 = vadd.f32 %v484, %v494
  %v555 = vadd.f32 %v485, %v494
  %v556 = vadd.f32 %v486, %v494
  %v557 = vadd.f32 %v487, %v494
  %v558 = vadd.f32 %v488, %v494
  %v559 = vadd.f32 %v489, %v494
  %v560 = vmax.f32 %v496, 0.0
  %v561 = vmax.f32 %v497, 0.0
  %v562 = vmax.f32 %v498, 0.0
  %v563 = vmax.f32 %v499, 0.0
  %v564 = vmax.f32 %v500, 0.0
  %v565 = vmax.f32 %v501, 0.0
  %v566 = vmax.f32 %v502, 0.0
  %v567 = vmax.f32 %v503, 0.0
  %v568 = vmax.f32 %v504, 0.0
  %v569 = vmax.f32 %v505, 0.0
  %v570 = vmax.f32 %v506, 0.0
  %v571 = vmax.f32 %v507, 0.0
  %v572 = vmax.f32 %v508, 0.0
  %v573 = vmax.f32 %v509, 0.0
  %v574 = vmax.f32 %v510, 0.0
  %v575 = vmax.f32 %v511, 0.0
  %v576 = vmax.f32 %v512, 0.0
  %v577 = vmax.f32 %v513, 0.0
  %v578 = vmax.f32 %v514, 0.0
  %v579 = vmax.f32 %v515, 0.0
  %v580 = vmax.f32 %v516, 0.0
  %v581 = vmax.f32 %v517, 0.0
  %v582 = vmax.f32 %v518, 0.0
  %v583 = vmax.f32 %v519, 0.0
  %v584 = vmax.f32 %v520, 0.0
  %v585 = vmax.f32 %v521, 0.0
  %v586 = vmax.f32 %v522, 0.0
  %v587 = vmax.f32 %v523, 0.0
  %v588 = vmax.f32 %v524, 0.0
  %v589 = vmax.f32 %v525, 0.0
  %v590 = vmax.f32 %v526, 0.0
  %v591 = vmax.f32 %v527, 0.0
  %v592 = vmax.f32 %v528, 0.0
  %v593 = vmax.f32 %v529, 0.0
  %v594 = vmax.f32 %v530, 0.0
  %v595 = vmax.f32 %v531, 0.0
  %v596 = vmax.f32 %v532, 0.0
  %v597 = vmax.f32 %v533, 0.0
  %v598 = vmax.f32 %v534, 0.0
  %v599 = vmax.f32 %v535, 0.0
  %v600 = vmax.f32 %v536, 0.0
  %v601 = vmax.f32 %v537, 0.0
  %v602 = vmax.f32 %v538, 0.0
  %v603 = vmax.f32 %v539, 0.0
  %v604 = vmax.f32 %v540, 0.0
  %v605 = vmax.f32 %v541, 0.0
  %v606 = vmax.f32 %v542, 0.0
  %v607 = vmax.f32 %v543, 0.0
  %v608 = vmax.f32 %v544, 0.0
  %v609 = vmax.f32 %v545, 0.0
  %v610 = vmax.f32 %v546, 0.0
  %v611 = vmax.f32 %v547, 0.0
  %v612 = vmax.f32 %v548, 0.0
  %v613 = vmax.f32 %v549, 0.0
  %v614 = vmax.f32 %v550, 0.0
  %v615 = vmax.f32 %v551, 0.0
  %v616 = vmax.f32 %v552, 0.0
  %v617 = vmax.f32 %v553, 0.0
  %v618 = vmax.f32 %v554, 0.0
  %v619 = vmax.f32 %v555, 0.0
  %v620 = vmax.f32 %v556, 0.0
  %v621 = vmax.f32 %v557, 0.0
  %v622 = vmax.f32 %v558, 0.0
  %v623 = vmax.f32 %v559, 0.0
  %v624 = vpack.c.bf16 %v561, %v560
  %v625 = vpack.c.bf16 %v563, %v562
  %v626 = vpack.c.bf16 %v565, %v564
  %v627 = vpack.c.bf16 %v567, %v566
  %v628 = vpack.c.bf16 %v569, %v568
  %v629 = vpack.c.bf16 %v571, %v570
  %v630 = vpack.c.bf16 %v573, %v572
  %v631 = vpack.c.bf16 %v575, %v574
  %v632 = vpack.c.bf16 %v577, %v576
  %v633 = vpack.c.bf16 %v579, %v578
  %v634 = vpack.c.bf16 %v581, %v580
  %v635 = vpack.c.bf16 %v583, %v582
  %v636 = vpack.c.bf16 %v585, %v584
  %v637 = vpack.c.bf16 %v587, %v586
  %v638 = vpack.c.bf16 %v589, %v588
  %v639 = vpack.c.bf16 %v591, %v590
  %v640 = vpack.c.bf16 %v593, %v592
  %v641 = vpack.c.bf16 %v595, %v594
  %v642 = vpack.c.bf16 %v597, %v596
  %v643 = vpack.c.bf16 %v599, %v598
  %v644 = vpack.c.bf16 %v601, %v600
  %v645 = vpack.c.bf16 %v603, %v602
  %v646 = vpack.c.bf16 %v605, %v604
  %v647 = vpack.c.bf16 %v607, %v606
  %v648 = vpack.c.bf16 %v609, %v608
  %v649 = vpack.c.bf16 %v611, %v610
  %v650 = vpack.c.bf16 %v613, %v612
  %v651 = vpack.c.bf16 %v615, %v614
  %v652 = vpack.c.bf16 %v617, %v616
  %v653 = vpack.c.bf16 %v619, %v618
  %v654 = vpack.c.bf16 %v621, %v620
  %v655 = vpack.c.bf16 %v623, %v622
  %v688 = vunpack.c.l.b16 %v624
  %v689 = vunpack.c.h.b16 %v624
  %v690 = vunpack.c.l.b16 %v625
  %v691 = vunpack.c.h.b16 %v625
  %v692 = vunpack.c.l.b16 %v626
  %v693 = vunpack.c.h.b16 %v626
  %v694 = vunpack.c.l.b16 %v627
  %v695 = vunpack.c.h.b16 %v627
  %v696 = vunpack.c.l.b16 %v628
  %v697 = vunpack.c.h.b16 %v628
  %v698 = vunpack.c.l.b16 %v629
  %v699 = vunpack.c.h.b16 %v629
  %v700 = vunpack.c.l.b16 %v630
  %v701 = vunpack.c.h.b16 %v630
  %v702 = vunpack.c.l.b16 %v631
  %v703 = vunpack.c.h.b16 %v631
  %v704 = vunpack.c.l.b16 %v632
  %v705 = vunpack.c.h.b16 %v632
  %v706 = vunpack.c.l.b16 %v633
  %v707 = vunpack.c.h.b16 %v633
  %v708 = vunpack.c.l.b16 %v634
  %v709 = vunpack.c.h.b16 %v634
  %v710 = vunpack.c.l.b16 %v635
  %v711 = vunpack.c.h.b16 %v635
  %v712 = vunpack.c.l.b16 %v636
  %v713 = vunpack.c.h.b16 %v636
  %v714 = vunpack.c.l.b16 %v637
  %v715 = vunpack.c.h.b16 %v637
  %v716 = vunpack.c.l.b16 %v638
  %v717 = vunpack.c.h.b16 %v638
  %v718 = vunpack.c.l.b16 %v639
  %v719 = vunpack.c.h.b16 %v639
  %v720 = vunpack.c.l.b16 %v640
  %v721 = vunpack.c.h.b16 %v640
  %v722 = vunpack.c.l.b16 %v641
  %v723 = vunpack.c.h.b16 %v641
  %v724 = vunpack.c.l.b16 %v642
  %v725 = vunpack.c.h.b16 %v642
  %v726 = vunpack.c.l.b16 %v643
  %v727 = vunpack.c.h.b16 %v643
  %v728 = vunpack.c.l.b16 %v644
  %v729 = vunpack.c.h.b16 %v644
  %v730 = vunpack.c.l.b16 %v645
  %v731 = vunpack.c.h.b16 %v645
  %v732 = vunpack.c.l.b16 %v646
  %v733 = vunpack.c.h.b16 %v646
  %v734 = vunpack.c.l.b16 %v647
  %v735 = vunpack.c.h.b16 %v647
  %v736 = vunpack.c.l.b16 %v648
  %v737 = vunpack.c.h.b16 %v648
  %v738 = vunpack.c.l.b16 %v649
  %v739 = vunpack.c.h.b16 %v649
  %v740 = vunpack.c.l.b16 %v650
  %v741 = vunpack.c.h.b16 %v650
  %v742 = vunpack.c.l.b16 %v651
  %v743 = vunpack.c.h.b16 %v651
  %v744 = vunpack.c.l.b16 %v652
  %v745 = vunpack.c.h.b16 %v652
  %v746 = vunpack.c.l.b16 %v653
  %v747 = vunpack.c.h.b16 %v653
  %v748 = vunpack.c.l.b16 %v654
  %v749 = vunpack.c.h.b16 %v654
  %v750 = vunpack.c.l.b16 %v655
  %v751 = vunpack.c.h.b16 %v655
  %v752 = vpack.c.b16 %v688, %v688
  %v753 = vpack.c.b16 %v689, %v689
  %v754 = vpack.c.b16 %v690, %v690
  %v755 = vpack.c.b16 %v691, %v691
  %v756 = vpack.c.b16 %v692, %v692
  %v757 = vpack.c.b16 %v693, %v693
  %v758 = vpack.c.b16 %v694, %v694
  %v759 = vpack.c.b16 %v695, %v695
  %v760 = vpack.c.b16 %v696, %v696
  %v761 = vpack.c.b16 %v697, %v697
  %v762 = vpack.c.b16 %v698, %v698
  %v763 = vpack.c.b16 %v699, %v699
  %v764 = vpack.c.b16 %v700, %v700
  %v765 = vpack.c.b16 %v701, %v701
  %v766 = vpack.c.b16 %v702, %v702
  %v767 = vpack.c.b16 %v703, %v703
  %v768 = vpack.c.b16 %v704, %v704
  %v769 = vpack.c.b16 %v705, %v705
  %v770 = vpack.c.b16 %v706, %v706
  %v771 = vpack.c.b16 %v707, %v707
  %v772 = vpack.c.b16 %v708, %v708
  %v773 = vpack.c.b16 %v709, %v709
  %v774 = vpack.c.b16 %v710, %v710
  %v775 = vpack.c.b16 %v711, %v711
  %v776 = vpack.c.b16 %v712, %v712
  %v777 = vpack.c.b16 %v713, %v713
  %v778 = vpack.c.b16 %v714, %v714
  %v779 = vpack.c.b16 %v715, %v715
  %v780 = vpack.c.b16 %v716, %v716
  %v781 = vpack.c.b16 %v717, %v717
  %v782 = vpack.c.b16 %v718, %v718
  %v783 = vpack.c.b16 %v719, %v719
  %v784 = vpack.c.b16 %v720, %v720
  %v785 = vpack.c.b16 %v721, %v721
  %v786 = vpack.c.b16 %v722, %v722
  %v787 = vpack.c.b16 %v723, %v723
  %v788 = vpack.c.b16 %v724, %v724
  %v789 = vpack.c.b16 %v725, %v725
  %v790 = vpack.c.b16 %v726, %v726
  %v791 = vpack.c.b16 %v727, %v727
  %v792 = vpack.c.b16 %v728, %v728
  %v793 = vpack.c.b16 %v729, %v729
  %v794 = vpack.c.b16 %v730, %v730
  %v795 = vpack.c.b16 %v731, %v731
  %v796 = vpack.c.b16 %v732, %v732
  %v797 = vpack.c.b16 %v733, %v733
  %v798 = vpack.c.b16 %v734, %v734
  %v799 = vpack.c.b16 %v735, %v735
  %v800 = vpack.c.b16 %v736, %v736
  %v801 = vpack.c.b16 %v737, %v737
  %v802 = vpack.c.b16 %v738, %v738
  %v803 = vpack.c.b16 %v739, %v739
  %v804 = vpack.c.b16 %v740, %v740
  %v805 = vpack.c.b16 %v741, %v741
  %v806 = vpack.c.b16 %v742, %v742
  %v807 = vpack.c.b16 %v743, %v743
  %v808 = vpack.c.b16 %v744, %v744
  %v809 = vpack.c.b16 %v745, %v745
  %v810 = vpack.c.b16 %v746, %v746
  %v811 = vpack.c.b16 %v747, %v747
  %v812 = vpack.c.b16 %v748, %v748
  %v813 = vpack.c.b16 %v749, %v749
  %v814 = vpack.c.b16 %v750, %v750
  %v815 = vpack.c.b16 %v751, %v751
  %vm880 = vcmask 125952
  %881 = vst.msk [vmem:[%s3] sm:$0xf] %vm880, %v752
  %882 = vst.msk [vmem:[%s3 + $0x4] sm:$0xf] %vm880, %v753
  %883 = vst.msk [vmem:[%s3 + $0x8] sm:$0xf] %vm880, %v754
  %884 = vst.msk [vmem:[%s3 + $0xc] sm:$0xf] %vm880, %v755
  %885 = vst.msk [vmem:[%s3 + $0x10] sm:$0xf] %vm880, %v756
  %886 = vst.msk [vmem:[%s3 + $0x14] sm:$0xf] %vm880, %v757
  %887 = vst.msk [vmem:[%s3 + $0x18] sm:$0xf] %vm880, %v758
  %888 = vst.msk [vmem:[%s3 + $0x1c] sm:$0xf] %vm880, %v759
  %889 = vst.msk [vmem:[%s3 + $0x20] sm:$0xf] %vm880, %v760
  %890 = vst.msk [vmem:[%s3 + $0x24] sm:$0xf] %vm880, %v761
  %891 = vst.msk [vmem:[%s3 + $0x28] sm:$0xf] %vm880, %v762
  %892 = vst.msk [vmem:[%s3 + $0x2c] sm:$0xf] %vm880, %v763
  %893 = vst.msk [vmem:[%s3 + $0x30] sm:$0xf] %vm880, %v764
  %894 = vst.msk [vmem:[%s3 + $0x34] sm:$0xf] %vm880, %v765
  %895 = vst.msk [vmem:[%s3 + $0x38] sm:$0xf] %vm880, %v766
  %896 = vst.msk [vmem:[%s3 + $0x3c] sm:$0xf] %vm880, %v767
  %897 = vst.msk [vmem:[%s3 + $0x40] sm:$0xf] %vm880, %v768
  %898 = vst.msk [vmem:[%s3 + $0x44] sm:$0xf] %vm880, %v769
  %899 = vst.msk [vmem:[%s3 + $0x48] sm:$0xf] %vm880, %v770
  %900 = vst.msk [vmem:[%s3 + $0x4c] sm:$0xf] %vm880, %v771
  %901 = vst.msk [vmem:[%s3 + $0x50] sm:$0xf] %vm880, %v772
  %902 = vst.msk [vmem:[%s3 + $0x54] sm:$0xf] %vm880, %v773
  %903 = vst.msk [vmem:[%s3 + $0x58] sm:$0xf] %vm880, %v774
  %904 = vst.msk [vmem:[%s3 + $0x5c] sm:$0xf] %vm880, %v775
  %905 = vst.msk [vmem:[%s3 + $0x60] sm:$0xf] %vm880, %v776
  %906 = vst.msk [vmem:[%s3 + $0x64] sm:$0xf] %vm880, %v777
  %907 = vst.msk [vmem:[%s3 + $0x68] sm:$0xf] %vm880, %v778
  %908 = vst.msk [vmem:[%s3 + $0x6c] sm:$0xf] %vm880, %v779
  %909 = vst.msk [vmem:[%s3 + $0x70] sm:$0xf] %vm880, %v780
  %910 = vst.msk [vmem:[%s3 + $0x74] sm:$0xf] %vm880, %v781
  %911 = vst.msk [vmem:[%s3 + $0x78] sm:$0xf] %vm880, %v782
  %912 = vst.msk [vmem:[%s3 + $0x7c] sm:$0xf] %vm880, %v783
  %913 = vst.msk [vmem:[%s3 + $0x80] sm:$0xf] %vm880, %v784
  %914 = vst.msk [vmem:[%s3 + $0x84] sm:$0xf] %vm880, %v785
  %915 = vst.msk [vmem:[%s3 + $0x88] sm:$0xf] %vm880, %v786
  %916 = vst.msk [vmem:[%s3 + $0x8c] sm:$0xf] %vm880, %v787
  %917 = vst.msk [vmem:[%s3 + $0x90] sm:$0xf] %vm880, %v788
  %918 = vst.msk [vmem:[%s3 + $0x94] sm:$0xf] %vm880, %v789
  %919 = vst.msk [vmem:[%s3 + $0x98] sm:$0xf] %vm880, %v790
  %920 = vst.msk [vmem:[%s3 + $0x9c] sm:$0xf] %vm880, %v791
  %921 = vst.msk [vmem:[%s3 + $0xa0] sm:$0xf] %vm880, %v792
  %922 = vst.msk [vmem:[%s3 + $0xa4] sm:$0xf] %vm880, %v793
  %923 = vst.msk [vmem:[%s3 + $0xa8] sm:$0xf] %vm880, %v794
  %924 = vst.msk [vmem:[%s3 + $0xac] sm:$0xf] %vm880, %v795
  %925 = vst.msk [vmem:[%s3 + $0xb0] sm:$0xf] %vm880, %v796
  %926 = vst.msk [vmem:[%s3 + $0xb4] sm:$0xf] %vm880, %v797
  %927 = vst.msk [vmem:[%s3 + $0xb8] sm:$0xf] %vm880, %v798
  %928 = vst.msk [vmem:[%s3 + $0xbc] sm:$0xf] %vm880, %v799
  %929 = vst.msk [vmem:[%s3 + $0xc0] sm:$0xf] %vm880, %v800
  %930 = vst.msk [vmem:[%s3 + $0xc4] sm:$0xf] %vm880, %v801
  %931 = vst.msk [vmem:[%s3 + $0xc8] sm:$0xf] %vm880, %v802
  %932 = vst.msk [vmem:[%s3 + $0xcc] sm:$0xf] %vm880, %v803
  %933 = vst.msk [vmem:[%s3 + $0xd0] sm:$0xf] %vm880, %v804
  %934 = vst.msk [vmem:[%s3 + $0xd4] sm:$0xf] %vm880, %v805
  %935 = vst.msk [vmem:[%s3 + $0xd8] sm:$0xf] %vm880, %v806
  %936 = vst.msk [vmem:[%s3 + $0xdc] sm:$0xf] %vm880, %v807
  %937 = vst.msk [vmem:[%s3 + $0xe0] sm:$0xf] %vm880, %v808
  %938 = vst.msk [vmem:[%s3 + $0xe4] sm:$0xf] %vm880, %v809
  %939 = vst.msk [vmem:[%s3 + $0xe8] sm:$0xf] %vm880, %v810
  %940 = vst.msk [vmem:[%s3 + $0xec] sm:$0xf] %vm880, %v811
  %941 = vst.msk [vmem:[%s3 + $0xf0] sm:$0xf] %vm880, %v812
  %942 = vst.msk [vmem:[%s3 + $0xf4] sm:$0xf] %vm880, %v813
  %943 = vst.msk [vmem:[%s3 + $0xf8] sm:$0xf] %vm880, %v814
  %944 = vst.msk [vmem:[%s3 + $0xfc] sm:$0xf] %vm880, %v815
  // Predicated region
  $region14: #{_lambda_.12} parent=0 // pred_check
    _
  $region15: #{_lambda_.12} parent=0 // pred_check_branch
    %946 = sbr.rel (0) target = $region17
  $region16: #{_lambda_.12} parent=0 // pred_region
    _
  $region17: #{_lambda_.12} parent=0 // pred_fallthru
    _
  // Predicated region
  $region18: #{_lambda_.12} parent=0 // pred_check
    _
  $region19: #{_lambda_.12} parent=0 // pred_check_branch
    %948 = sbr.rel (0) target = $region21
  $region20: #{_lambda_.12} parent=0 // pred_region
    _
  $region21: #{_lambda_.12} parent=0 // pred_fallthru
    _

// kernel: _lambda_.14
$region0: #{_lambda_.14}
  #allocation0 [shape = 'u32[]', space=smem, size = 0x4, offset = 0x4, fixed_abs, tag = 'smem constant byte address 0x4 - core index']
  #allocation1 [shape = 'u32[144,128]{1,0:T(1,128)}', space=vmem, size = 0x12000, scoped, tag = 'internal scratch']
  %s0 = inlined_call_operand.vmem [shape: bf16[512,144], index: 0, kind: input, shape index: {}]
  %s1 = inlined_call_operand.vmem [shape: bf16[144,16], index: 1, kind: input, shape index: {}]
  %s2 = inlined_call_operand.vmem [shape: f32[512,16], index: 2, kind: input, shape index: {}]
  %s3 = inlined_call_operand.vmem [shape: f32[512,16], index: 3, kind: output, shape index: {}]
  %s4 = sld [smem:[#allocation0]]
  $region22: #{_lambda_.14} parent=0
    _
  %s6 = ssub.s32 1, %s4
  %s7 = scalar_select 0, %s6, %s4
  // Predicated region
  $region2: #{_lambda_.14} parent=0 // pred_check
    _
  $region3: #{_lambda_.14} parent=0 // pred_check_branch
    %9 = sbr.rel (0) target = $region5
  $region4: #{_lambda_.14} parent=0 // pred_region
    _
  $region5: #{_lambda_.14} parent=0 // pred_fallthru
    _
  // Predicated region
  $region6: #{_lambda_.14} parent=0 // pred_check
    _
  $region7: #{_lambda_.14} parent=0 // pred_check_branch
    %11 = sbr.rel (0) target = $region9
  $region8: #{_lambda_.14} parent=0 // pred_region
    _
  $region9: #{_lambda_.14} parent=0 // pred_fallthru
    _
  // Predicated region
  $region10: #{_lambda_.14} parent=0 // pred_check
    _
  $region11: #{_lambda_.14} parent=0 // pred_check_branch
    %13 = sbr.rel (0) target = $region13
  $region12: #{_lambda_.14} parent=0 // pred_region
    _
  $region13: #{_lambda_.14} parent=0 // pred_fallthru
    _
  %v15 = vld [vmem:[%s0] sm:$0xff]
  %v16 = vld [vmem:[%s0 + $0x8] sm:$0xff]
  %v17 = vld [vmem:[%s0 + $0x10] sm:$0xff]
  %v18 = vld [vmem:[%s0 + $0x18] sm:$0xff]
  %v19 = vld [vmem:[%s0 + $0x20] sm:$0xff]
  %v20 = vld [vmem:[%s0 + $0x28] sm:$0xff]
  %v21 = vld [vmem:[%s0 + $0x30] sm:$0xff]
  %v22 = vld [vmem:[%s0 + $0x38] sm:$0xff]
  %v23 = vld [vmem:[%s0 + $0x40] sm:$0xff]
  %v24 = vld [vmem:[%s0 + $0x48] sm:$0xff]
  %v25 = vld [vmem:[%s0 + $0x50] sm:$0xff]
  %v26 = vld [vmem:[%s0 + $0x58] sm:$0xff]
  %v27 = vld [vmem:[%s0 + $0x60] sm:$0xff]
  %v28 = vld [vmem:[%s0 + $0x68] sm:$0xff]
  %v29 = vld [vmem:[%s0 + $0x70] sm:$0xff]
  %v30 = vld [vmem:[%s0 + $0x78] sm:$0xff]
  %v31 = vld [vmem:[%s0 + $0x80] sm:$0xff]
  %v32 = vld [vmem:[%s0 + $0x88] sm:$0xff]
  %v33 = vld [vmem:[%s0 + $0x90] sm:$0xff]
  %v34 = vld [vmem:[%s0 + $0x98] sm:$0xff]
  %v35 = vld [vmem:[%s0 + $0xa0] sm:$0xff]
  %v36 = vld [vmem:[%s0 + $0xa8] sm:$0xff]
  %v37 = vld [vmem:[%s0 + $0xb0] sm:$0xff]
  %v38 = vld [vmem:[%s0 + $0xb8] sm:$0xff]
  %v39 = vld [vmem:[%s0 + $0xc0] sm:$0xff]
  %v40 = vld [vmem:[%s0 + $0xc8] sm:$0xff]
  %v41 = vld [vmem:[%s0 + $0xd0] sm:$0xff]
  %v42 = vld [vmem:[%s0 + $0xd8] sm:$0xff]
  %v43 = vld [vmem:[%s0 + $0xe0] sm:$0xff]
  %v44 = vld [vmem:[%s0 + $0xe8] sm:$0xff]
  %v45 = vld [vmem:[%s0 + $0xf0] sm:$0xff]
  %v46 = vld [vmem:[%s0 + $0xf8] sm:$0xff]
  %v47 = vld [vmem:[%s0 + $0x100] sm:$0xff]
  %v48 = vld [vmem:[%s0 + $0x108] sm:$0xff]
  %v49 = vld [vmem:[%s0 + $0x110] sm:$0xff]
  %v50 = vld [vmem:[%s0 + $0x118] sm:$0xff]
  %v51 = vld [vmem:[%s0 + $0x120] sm:$0xff]
  %v52 = vld [vmem:[%s0 + $0x128] sm:$0xff]
  %v53 = vld [vmem:[%s0 + $0x130] sm:$0xff]
  %v54 = vld [vmem:[%s0 + $0x138] sm:$0xff]
  %v55 = vld [vmem:[%s0 + $0x140] sm:$0xff]
  %v56 = vld [vmem:[%s0 + $0x148] sm:$0xff]
  %v57 = vld [vmem:[%s0 + $0x150] sm:$0xff]
  %v58 = vld [vmem:[%s0 + $0x158] sm:$0xff]
  %v59 = vld [vmem:[%s0 + $0x160] sm:$0xff]
  %v60 = vld [vmem:[%s0 + $0x168] sm:$0xff]
  %v61 = vld [vmem:[%s0 + $0x170] sm:$0xff]
  %v62 = vld [vmem:[%s0 + $0x178] sm:$0xff]
  %v63 = vld [vmem:[%s0 + $0x180] sm:$0xff]
  %v64 = vld [vmem:[%s0 + $0x188] sm:$0xff]
  %v65 = vld [vmem:[%s0 + $0x190] sm:$0xff]
  %v66 = vld [vmem:[%s0 + $0x198] sm:$0xff]
  %v67 = vld [vmem:[%s0 + $0x1a0] sm:$0xff]
  %v68 = vld [vmem:[%s0 + $0x1a8] sm:$0xff]
  %v69 = vld [vmem:[%s0 + $0x1b0] sm:$0xff]
  %v70 = vld [vmem:[%s0 + $0x1b8] sm:$0xff]
  %v71 = vld [vmem:[%s0 + $0x1c0] sm:$0xff]
  %v72 = vld [vmem:[%s0 + $0x1c8] sm:$0xff]
  %v73 = vld [vmem:[%s0 + $0x1d0] sm:$0xff]
  %v74 = vld [vmem:[%s0 + $0x1d8] sm:$0xff]
  %v75 = vld [vmem:[%s0 + $0x1e0] sm:$0xff]
  %v76 = vld [vmem:[%s0 + $0x1e8] sm:$0xff]
  %v77 = vld [vmem:[%s0 + $0x1f0] sm:$0xff]
  %v78 = vld [vmem:[%s0 + $0x1f8] sm:$0xff]
  %v79 = vld [vmem:[%s1] sm:$0xf]
  %v80 = vld [vmem:[%s1 + $0x4] sm:$0xf]
  %v81 = vld [vmem:[%s1 + $0x8] sm:$0xf]
  %v82 = vld [vmem:[%s1 + $0xc] sm:$0xf]
  %v83 = vld [vmem:[%s1 + $0x10] sm:$0xf]
  %v84 = vld [vmem:[%s1 + $0x14] sm:$0xf]
  %v85 = vld [vmem:[%s1 + $0x18] sm:$0xf]
  %v86 = vld [vmem:[%s1 + $0x1c] sm:$0xf]
  %v87 = vld [vmem:[%s1 + $0x20] sm:$0xf]
  %v88 = vld [vmem:[%s1 + $0x24] sm:$0xf]
  %v89 = vld [vmem:[%s1 + $0x28] sm:$0xf]
  %v90 = vld [vmem:[%s1 + $0x2c] sm:$0xf]
  %v91 = vld [vmem:[%s1 + $0x30] sm:$0xf]
  %v92 = vld [vmem:[%s1 + $0x34] sm:$0xf]
  %v93 = vld [vmem:[%s1 + $0x38] sm:$0xf]
  %v94 = vld [vmem:[%s1 + $0x3c] sm:$0xf]
  %v95 = vld [vmem:[%s1 + $0x40] sm:$0xf]
  %v96 = vld [vmem:[%s1 + $0x44] sm:$0xf]
  %v97 = vld [vmem:[%s2] sm:$0xff]
  %v98 = vld [vmem:[%s2 + $0x8] sm:$0xff]
  %v99 = vld [vmem:[%s2 + $0x10] sm:$0xff]
  %v100 = vld [vmem:[%s2 + $0x18] sm:$0xff]
  %v101 = vld [vmem:[%s2 + $0x20] sm:$0xff]
  %v102 = vld [vmem:[%s2 + $0x28] sm:$0xff]
  %v103 = vld [vmem:[%s2 + $0x30] sm:$0xff]
  %v104 = vld [vmem:[%s2 + $0x38] sm:$0xff]
  %v105 = vld [vmem:[%s2 + $0x40] sm:$0xff]
  %v106 = vld [vmem:[%s2 + $0x48] sm:$0xff]
  %v107 = vld [vmem:[%s2 + $0x50] sm:$0xff]
  %v108 = vld [vmem:[%s2 + $0x58] sm:$0xff]
  %v109 = vld [vmem:[%s2 + $0x60] sm:$0xff]
  %v110 = vld [vmem:[%s2 + $0x68] sm:$0xff]
  %v111 = vld [vmem:[%s2 + $0x70] sm:$0xff]
  %v112 = vld [vmem:[%s2 + $0x78] sm:$0xff]
  %v113 = vld [vmem:[%s2 + $0x80] sm:$0xff]
  %v114 = vld [vmem:[%s2 + $0x88] sm:$0xff]
  %v115 = vld [vmem:[%s2 + $0x90] sm:$0xff]
  %v116 = vld [vmem:[%s2 + $0x98] sm:$0xff]
  %v117 = vld [vmem:[%s2 + $0xa0] sm:$0xff]
  %v118 = vld [vmem:[%s2 + $0xa8] sm:$0xff]
  %v119 = vld [vmem:[%s2 + $0xb0] sm:$0xff]
  %v120 = vld [vmem:[%s2 + $0xb8] sm:$0xff]
  %v121 = vld [vmem:[%s2 + $0xc0] sm:$0xff]
  %v122 = vld [vmem:[%s2 + $0xc8] sm:$0xff]
  %v123 = vld [vmem:[%s2 + $0xd0] sm:$0xff]
  %v124 = vld [vmem:[%s2 + $0xd8] sm:$0xff]
  %v125 = vld [vmem:[%s2 + $0xe0] sm:$0xff]
  %v126 = vld [vmem:[%s2 + $0xe8] sm:$0xff]
  %v127 = vld [vmem:[%s2 + $0xf0] sm:$0xff]
  %v128 = vld [vmem:[%s2 + $0xf8] sm:$0xff]
  %v129 = vld [vmem:[%s2 + $0x100] sm:$0xff]
  %v130 = vld [vmem:[%s2 + $0x108] sm:$0xff]
  %v131 = vld [vmem:[%s2 + $0x110] sm:$0xff]
  %v132 = vld [vmem:[%s2 + $0x118] sm:$0xff]
  %v133 = vld [vmem:[%s2 + $0x120] sm:$0xff]
  %v134 = vld [vmem:[%s2 + $0x128] sm:$0xff]
  %v135 = vld [vmem:[%s2 + $0x130] sm:$0xff]
  %v136 = vld [vmem:[%s2 + $0x138] sm:$0xff]
  %v137 = vld [vmem:[%s2 + $0x140] sm:$0xff]
  %v138 = vld [vmem:[%s2 + $0x148] sm:$0xff]
  %v139 = vld [vmem:[%s2 + $0x150] sm:$0xff]
  %v140 = vld [vmem:[%s2 + $0x158] sm:$0xff]
  %v141 = vld [vmem:[%s2 + $0x160] sm:$0xff]
  %v142 = vld [vmem:[%s2 + $0x168] sm:$0xff]
  %v143 = vld [vmem:[%s2 + $0x170] sm:$0xff]
  %v144 = vld [vmem:[%s2 + $0x178] sm:$0xff]
  %v145 = vld [vmem:[%s2 + $0x180] sm:$0xff]
  %v146 = vld [vmem:[%s2 + $0x188] sm:$0xff]
  %v147 = vld [vmem:[%s2 + $0x190] sm:$0xff]
  %v148 = vld [vmem:[%s2 + $0x198] sm:$0xff]
  %v149 = vld [vmem:[%s2 + $0x1a0] sm:$0xff]
  %v150 = vld [vmem:[%s2 + $0x1a8] sm:$0xff]
  %v151 = vld [vmem:[%s2 + $0x1b0] sm:$0xff]
  %v152 = vld [vmem:[%s2 + $0x1b8] sm:$0xff]
  %v153 = vld [vmem:[%s2 + $0x1c0] sm:$0xff]
  %v154 = vld [vmem:[%s2 + $0x1c8] sm:$0xff]
  %v155 = vld [vmem:[%s2 + $0x1d0] sm:$0xff]
  %v156 = vld [vmem:[%s2 + $0x1d8] sm:$0xff]
  %v157 = vld [vmem:[%s2 + $0x1e0] sm:$0xff]
  %v158 = vld [vmem:[%s2 + $0x1e8] sm:$0xff]
  %v159 = vld [vmem:[%s2 + $0x1f0] sm:$0xff]
  %v160 = vld [vmem:[%s2 + $0x1f8] sm:$0xff]
  %v225 = vunpack.c.l.b16 %v15
  %v226 = vunpack.c.h.b16 %v15
  %v227 = vunpack.c.l.b16 %v16
  %v228 = vunpack.c.h.b16 %v16
  %v229 = vunpack.c.l.b16 %v17
  %v230 = vunpack.c.h.b16 %v17
  %v231 = vunpack.c.l.b16 %v18
  %v232 = vunpack.c.h.b16 %v18
  %v233 = vunpack.c.l.b16 %v19
  %v234 = vunpack.c.h.b16 %v19
  %v235 = vunpack.c.l.b16 %v20
  %v236 = vunpack.c.h.b16 %v20
  %v237 = vunpack.c.l.b16 %v21
  %v238 = vunpack.c.h.b16 %v21
  %v239 = vunpack.c.l.b16 %v22
  %v240 = vunpack.c.h.b16 %v22
  %v241 = vunpack.c.l.b16 %v23
  %v242 = vunpack.c.h.b16 %v23
  %v243 = vunpack.c.l.b16 %v24
  %v244 = vunpack.c.h.b16 %v24
  %v245 = vunpack.c.l.b16 %v25
  %v246 = vunpack.c.h.b16 %v25
  %v247 = vunpack.c.l.b16 %v26
  %v248 = vunpack.c.h.b16 %v26
  %v249 = vunpack.c.l.b16 %v27
  %v250 = vunpack.c.h.b16 %v27
  %v251 = vunpack.c.l.b16 %v28
  %v252 = vunpack.c.h.b16 %v28
  %v253 = vunpack.c.l.b16 %v29
  %v254 = vunpack.c.h.b16 %v29
  %v255 = vunpack.c.l.b16 %v30
  %v256 = vunpack.c.h.b16 %v30
  %v257 = vunpack.c.l.b16 %v31
  %v258 = vunpack.c.h.b16 %v31
  %v259 = vunpack.c.l.b16 %v32
  %v260 = vunpack.c.h.b16 %v32
  %v261 = vunpack.c.l.b16 %v33
  %v262 = vunpack.c.h.b16 %v33
  %v263 = vunpack.c.l.b16 %v34
  %v264 = vunpack.c.h.b16 %v34
  %v265 = vunpack.c.l.b16 %v35
  %v266 = vunpack.c.h.b16 %v35
  %v267 = vunpack.c.l.b16 %v36
  %v268 = vunpack.c.h.b16 %v36
  %v269 = vunpack.c.l.b16 %v37
  %v270 = vunpack.c.h.b16 %v37
  %v271 = vunpack.c.l.b16 %v38
  %v272 = vunpack.c.h.b16 %v38
  %v273 = vunpack.c.l.b16 %v39
  %v274 = vunpack.c.h.b16 %v39
  %v275 = vunpack.c.l.b16 %v40
  %v276 = vunpack.c.h.b16 %v40
  %v277 = vunpack.c.l.b16 %v41
  %v278 = vunpack.c.h.b16 %v41
  %v279 = vunpack.c.l.b16 %v42
  %v280 = vunpack.c.h.b16 %v42
  %v281 = vunpack.c.l.b16 %v43
  %v282 = vunpack.c.h.b16 %v43
  %v283 = vunpack.c.l.b16 %v44
  %v284 = vunpack.c.h.b16 %v44
  %v285 = vunpack.c.l.b16 %v45
  %v286 = vunpack.c.h.b16 %v45
  %v287 = vunpack.c.l.b16 %v46
  %v288 = vunpack.c.h.b16 %v46
  %v289 = vunpack.c.l.b16 %v47
  %v290 = vunpack.c.h.b16 %v47
  %v291 = vunpack.c.l.b16 %v48
  %v292 = vunpack.c.h.b16 %v48
  %v293 = vunpack.c.l.b16 %v49
  %v294 = vunpack.c.h.b16 %v49
  %v295 = vunpack.c.l.b16 %v50
  %v296 = vunpack.c.h.b16 %v50
  %v297 = vunpack.c.l.b16 %v51
  %v298 = vunpack.c.h.b16 %v51
  %v299 = vunpack.c.l.b16 %v52
  %v300 = vunpack.c.h.b16 %v52
  %v301 = vunpack.c.l.b16 %v53
  %v302 = vunpack.c.h.b16 %v53
  %v303 = vunpack.c.l.b16 %v54
  %v304 = vunpack.c.h.b16 %v54
  %v305 = vunpack.c.l.b16 %v55
  %v306 = vunpack.c.h.b16 %v55
  %v307 = vunpack.c.l.b16 %v56
  %v308 = vunpack.c.h.b16 %v56
  %v309 = vunpack.c.l.b16 %v57
  %v310 = vunpack.c.h.b16 %v57
  %v311 = vunpack.c.l.b16 %v58
  %v312 = vunpack.c.h.b16 %v58
  %v313 = vunpack.c.l.b16 %v59
  %v314 = vunpack.c.h.b16 %v59
  %v315 = vunpack.c.l.b16 %v60
  %v316 = vunpack.c.h.b16 %v60
  %v317 = vunpack.c.l.b16 %v61
  %v318 = vunpack.c.h.b16 %v61
  %v319 = vunpack.c.l.b16 %v62
  %v320 = vunpack.c.h.b16 %v62
  %v321 = vunpack.c.l.b16 %v63
  %v322 = vunpack.c.h.b16 %v63
  %v323 = vunpack.c.l.b16 %v64
  %v324 = vunpack.c.h.b16 %v64
  %v325 = vunpack.c.l.b16 %v65
  %v326 = vunpack.c.h.b16 %v65
  %v327 = vunpack.c.l.b16 %v66
  %v328 = vunpack.c.h.b16 %v66
  %v329 = vunpack.c.l.b16 %v67
  %v330 = vunpack.c.h.b16 %v67
  %v331 = vunpack.c.l.b16 %v68
  %v332 = vunpack.c.h.b16 %v68
  %v333 = vunpack.c.l.b16 %v69
  %v334 = vunpack.c.h.b16 %v69
  %v335 = vunpack.c.l.b16 %v70
  %v336 = vunpack.c.h.b16 %v70
  %v337 = vunpack.c.l.b16 %v71
  %v338 = vunpack.c.h.b16 %v71
  %v339 = vunpack.c.l.b16 %v72
  %v340 = vunpack.c.h.b16 %v72
  %v341 = vunpack.c.l.b16 %v73
  %v342 = vunpack.c.h.b16 %v73
  %v343 = vunpack.c.l.b16 %v74
  %v344 = vunpack.c.h.b16 %v74
  %v345 = vunpack.c.l.b16 %v75
  %v346 = vunpack.c.h.b16 %v75
  %v347 = vunpack.c.l.b16 %v76
  %v348 = vunpack.c.h.b16 %v76
  %v349 = vunpack.c.l.b16 %v77
  %v350 = vunpack.c.h.b16 %v77
  %v351 = vunpack.c.l.b16 %v78
  %v352 = vunpack.c.h.b16 %v78
  %v353 = vpack.c.b16 %v227, %v225
  %v354 = vpack.c.b16 %v228, %v226
  %v355 = vpack.c.b16 %v231, %v229
  %v356 = vpack.c.b16 %v232, %v230
  %v357 = vpack.c.b16 %v235, %v233
  %v358 = vpack.c.b16 %v236, %v234
  %v359 = vpack.c.b16 %v239, %v237
  %v360 = vpack.c.b16 %v240, %v238
  %v361 = vpack.c.b16 %v243, %v241
  %v362 = vpack.c.b16 %v244, %v242
  %v363 = vpack.c.b16 %v247, %v245
  %v364 = vpack.c.b16 %v248, %v246
  %v365 = vpack.c.b16 %v251, %v249
  %v366 = vpack.c.b16 %v252, %v250
  %v367 = vpack.c.b16 %v255, %v253
  %v368 = vpack.c.b16 %v256, %v254
  %v369 = vpack.c.b16 %v259, %v257
  %v370 = vpack.c.b16 %v260, %v258
  %v371 = vpack.c.b16 %v263, %v261
  %v372 = vpack.c.b16 %v264, %v262
  %v373 = vpack.c.b16 %v267, %v265
  %v374 = vpack.c.b16 %v268, %v266
  %v375 = vpack.c.b16 %v271, %v269
  %v376 = vpack.c.b16 %v272, %v270
  %v377 = vpack.c.b16 %v275, %v273
  %v378 = vpack.c.b16 %v276, %v274
  %v379 = vpack.c.b16 %v279, %v277
  %v380 = vpack.c.b16 %v280, %v278
  %v381 = vpack.c.b16 %v283, %v281
  %v382 = vpack.c.b16 %v284, %v282
  %v383 = vpack.c.b16 %v287, %v285
  %v384 = vpack.c.b16 %v288, %v286
  %v385 = vpack.c.b16 %v291, %v289
  %v386 = vpack.c.b16 %v292, %v290
  %v387 = vpack.c.b16 %v295, %v293
  %v388 = vpack.c.b16 %v296, %v294
  %v389 = vpack.c.b16 %v299, %v297
  %v390 = vpack.c.b16 %v300, %v298
  %v391 = vpack.c.b16 %v303, %v301
  %v392 = vpack.c.b16 %v304, %v302
  %v393 = vpack.c.b16 %v307, %v305
  %v394 = vpack.c.b16 %v308, %v306
  %v395 = vpack.c.b16 %v311, %v309
  %v396 = vpack.c.b16 %v312, %v310
  %v397 = vpack.c.b16 %v315, %v313
  %v398 = vpack.c.b16 %v316, %v314
  %v399 = vpack.c.b16 %v319, %v317
  %v400 = vpack.c.b16 %v320, %v318
  %v401 = vpack.c.b16 %v323, %v321
  %v402 = vpack.c.b16 %v324, %v322
  %v403 = vpack.c.b16 %v327, %v325
  %v404 = vpack.c.b16 %v328, %v326
  %v405 = vpack.c.b16 %v331, %v329
  %v406 = vpack.c.b16 %v332, %v330
  %v407 = vpack.c.b16 %v335, %v333
  %v408 = vpack.c.b16 %v336, %v334
  %v409 = vpack.c.b16 %v339, %v337
  %v410 = vpack.c.b16 %v340, %v338
  %v411 = vpack.c.b16 %v343, %v341
  %v412 = vpack.c.b16 %v344, %v342
  %v413 = vpack.c.b16 %v347, %v345
  %v414 = vpack.c.b16 %v348, %v346
  %v415 = vpack.c.b16 %v351, %v349
  %v416 = vpack.c.b16 %v352, %v350
  %v467 = vunpack.c.l.b16 %v79
  %v468 = vunpack.c.l.b16 %v80
  %v469 = vunpack.c.l.b16 %v81
  %v470 = vunpack.c.l.b16 %v82
  %v471 = vunpack.c.l.b16 %v83
  %v472 = vunpack.c.l.b16 %v84
  %v473 = vunpack.c.l.b16 %v85
  %v474 = vunpack.c.l.b16 %v86
  %v475 = vunpack.c.l.b16 %v87
  %v476 = vunpack.c.l.b16 %v88
  %v477 = vunpack.c.l.b16 %v89
  %v478 = vunpack.c.l.b16 %v90
  %v479 = vunpack.c.l.b16 %v91
  %v480 = vunpack.c.l.b16 %v92
  %v481 = vunpack.c.l.b16 %v93
  %v482 = vunpack.c.l.b16 %v94
  %v483 = vunpack.c.l.b16 %v95
  %v484 = vunpack.c.l.b16 %v96
  %v485 = vpack.c.b16 %v468, %v467
  %v486 = vpack.c.b16 %v470, %v469
  %v487 = vpack.c.b16 %v472, %v471
  %v488 = vpack.c.b16 %v474, %v473
  %v489 = vpack.c.b16 %v476, %v475
  %v490 = vpack.c.b16 %v478, %v477
  %v491 = vpack.c.b16 %v480, %v479
  %v492 = vpack.c.b16 %v482, %v481
  %v493 = vpack.c.b16 %v484, %v483
  %vm503 = vcmask 130048
  %v505 = vsel %vm503, %v354, 0
  %v508 = vsel %vm503, %v356, 0
  %v511 = vsel %vm503, %v358, 0
  %v514 = vsel %vm503, %v360, 0
  %v517 = vsel %vm503, %v362, 0
  %v520 = vsel %vm503, %v364, 0
  %v523 = vsel %vm503, %v366, 0
  %v526 = vsel %vm503, %v368, 0
  %v529 = vsel %vm503, %v370, 0
  %v532 = vsel %vm503, %v372, 0
  %v535 = vsel %vm503, %v374, 0
  %v538 = vsel %vm503, %v376, 0
  %v541 = vsel %vm503, %v378, 0
  %v544 = vsel %vm503, %v380, 0
  %v547 = vsel %vm503, %v382, 0
  %v550 = vsel %vm503, %v384, 0
  %v553 = vsel %vm503, %v386, 0
  %v556 = vsel %vm503, %v388, 0
  %v559 = vsel %vm503, %v390, 0
  %v562 = vsel %vm503, %v392, 0
  %v565 = vsel %vm503, %v394, 0
  %v568 = vsel %vm503, %v396, 0
  %v571 = vsel %vm503, %v398, 0
  %v574 = vsel %vm503, %v400, 0
  %v577 = vsel %vm503, %v402, 0
  %v580 = vsel %vm503, %v404, 0
  %v583 = vsel %vm503, %v406, 0
  %v586 = vsel %vm503, %v408, 0
  %v589 = vsel %vm503, %v410, 0
  %v592 = vsel %vm503, %v412, 0
  %v595 = vsel %vm503, %v414, 0
  %v598 = vsel %vm503, %v416, 0
  %600 = vmatprep.subr.bf16.mxu0 0
  %601 = vmatpush1.bf16.msra.mxu0 %v492
  %602 = vmatprep.subr.bf16.mxu0 0
  %603 = vmatpush1.bf16.msra.mxu0 %v491
  %604 = vmatprep.subr.bf16.mxu0 0
  %605 = vmatpush1.bf16.msra.mxu0 %v490
  %606 = vmatprep.subr.bf16.mxu0 0
  %607 = vmatpush1.bf16.msra.mxu0 %v489
  %608 = vmatprep.subr.bf16.mxu0 0
  %609 = vmatpush1.bf16.msra.mxu0 %v488
  %610 = vmatprep.subr.bf16.mxu0 0
  %611 = vmatpush1.bf16.msra.mxu0 %v487
  %612 = vmatprep.subr.bf16.mxu0 0
  %613 = vmatpush1.bf16.msra.mxu0 %v486
  %614 = vmatprep.subr.bf16.mxu0 0
  %615 = vmatpush1.bf16.msra.mxu0 %v485
  %616 = vmatprep.subr.bf16.mxu0 0
  %617 = vmatpush2.bf16.msra.mxu0 0
  %618 = vmatprep.subr.bf16.mxu0 0
  %619 = vmatpush2.bf16.msra.mxu0 0
  %620 = vmatprep.subr.bf16.mxu0 0
  %621 = vmatpush2.bf16.msra.mxu0 0
  %622 = vmatprep.subr.bf16.mxu0 0
  %623 = vmatpush2.bf16.msra.mxu0 0
  %624 = vmatprep.subr.bf16.mxu0 0
  %625 = vmatpush2.bf16.msra.mxu0 0
  %626 = vmatprep.subr.bf16.mxu0 0
  %627 = vmatpush2.bf16.msra.mxu0 0
  %628 = vmatprep.subr.bf16.mxu0 0
  %629 = vmatpush2.bf16.msra.mxu0 0
  %630 = vmatprep.subr.bf16.mxu0 0
  %631 = vmatpush2.bf16.msra.mxu0 %v493
  %632 = vmatprep.mubr.bf16.mxu0 %v505
  %633 = vmatmul.mubr.bf16.gmra.mxu0 %v353
  %v634 = vpop.f32.mrf.mxu0
  %v635 = vadd.f32 %v97, %v634
  %v636 = vpop.f32.mrf.mxu0
  %v637 = vpop.f32.mrf.mxu0
  %v638 = vadd.f32 %v98, %v637
  %v639 = vpop.f32.mrf.mxu0
  %640 = vmatprep.mubr.bf16.mxu0 %v508
  %641 = vmatmul.mubr.bf16.gmra.mxu0 %v355
  %v642 = vpop.f32.mrf.mxu0
  %v643 = vadd.f32 %v99, %v642
  %v644 = vpop.f32.mrf.mxu0
  %v645 = vpop.f32.mrf.mxu0
  %v646 = vadd.f32 %v100, %v645
  %v647 = vpop.f32.mrf.mxu0
  %648 = vmatprep.mubr.bf16.mxu0 %v511
  %649 = vmatmul.mubr.bf16.gmra.mxu0 %v357
  %v650 = vpop.f32.mrf.mxu0
  %v651 = vadd.f32 %v101, %v650
  %v652 = vpop.f32.mrf.mxu0
  %v653 = vpop.f32.mrf.mxu0
  %v654 = vadd.f32 %v102, %v653
  %v655 = vpop.f32.mrf.mxu0
  %656 = vmatprep.mubr.bf16.mxu0 %v514
  %657 = vmatmul.mubr.bf16.gmra.mxu0 %v359
  %v658 = vpop.f32.mrf.mxu0
  %v659 = vadd.f32 %v103, %v658
  %v660 = vpop.f32.mrf.mxu0
  %v661 = vpop.f32.mrf.mxu0
  %v662 = vadd.f32 %v104, %v661
  %v663 = vpop.f32.mrf.mxu0
  %664 = vmatprep.mubr.bf16.mxu0 %v517
  %665 = vmatmul.mubr.bf16.gmra.mxu0 %v361
  %v666 = vpop.f32.mrf.mxu0
  %v667 = vadd.f32 %v105, %v666
  %v668 = vpop.f32.mrf.mxu0
  %v669 = vpop.f32.mrf.mxu0
  %v670 = vadd.f32 %v106, %v669
  %v671 = vpop.f32.mrf.mxu0
  %672 = vmatprep.mubr.bf16.mxu0 %v520
  %673 = vmatmul.mubr.bf16.gmra.mxu0 %v363
  %v674 = vpop.f32.mrf.mxu0
  %v675 = vadd.f32 %v107, %v674
  %v676 = vpop.f32.mrf.mxu0
  %v677 = vpop.f32.mrf.mxu0
  %v678 = vadd.f32 %v108, %v677
  %v679 = vpop.f32.mrf.mxu0
  %680 = vmatprep.mubr.bf16.mxu0 %v523
  %681 = vmatmul.mubr.bf16.gmra.mxu0 %v365
  %v682 = vpop.f32.mrf.mxu0
  %v683 = vadd.f32 %v109, %v682
  %v684 = vpop.f32.mrf.mxu0
  %v685 = vpop.f32.mrf.mxu0
  %v686 = vadd.f32 %v110, %v685
  %v687 = vpop.f32.mrf.mxu0
  %688 = vmatprep.mubr.bf16.mxu0 %v526
  %689 = vmatmul.mubr.bf16.gmra.mxu0 %v367
  %v690 = vpop.f32.mrf.mxu0
  %v691 = vadd.f32 %v111, %v690
  %v692 = vpop.f32.mrf.mxu0
  %v693 = vpop.f32.mrf.mxu0
  %v694 = vadd.f32 %v112, %v693
  %v695 = vpop.f32.mrf.mxu0
  %696 = vmatprep.mubr.bf16.mxu0 %v529
  %697 = vmatmul.mubr.bf16.gmra.mxu0 %v369
  %v698 = vpop.f32.mrf.mxu0
  %v699 = vadd.f32 %v113, %v698
  %v700 = vpop.f32.mrf.mxu0
  %v701 = vpop.f32.mrf.mxu0
  %v702 = vadd.f32 %v114, %v701
  %v703 = vpop.f32.mrf.mxu0
  %704 = vmatprep.mubr.bf16.mxu0 %v532
  %705 = vmatmul.mubr.bf16.gmra.mxu0 %v371
  %v706 = vpop.f32.mrf.mxu0
  %v707 = vadd.f32 %v115, %v706
  %v708 = vpop.f32.mrf.mxu0
  %v709 = vpop.f32.mrf.mxu0
  %v710 = vadd.f32 %v116, %v709
  %v711 = vpop.f32.mrf.mxu0
  %712 = vmatprep.mubr.bf16.mxu0 %v535
  %713 = vmatmul.mubr.bf16.gmra.mxu0 %v373
  %v714 = vpop.f32.mrf.mxu0
  %v715 = vadd.f32 %v117, %v714
  %v716 = vpop.f32.mrf.mxu0
  %v717 = vpop.f32.mrf.mxu0
  %v718 = vadd.f32 %v118, %v717
  %v719 = vpop.f32.mrf.mxu0
  %720 = vmatprep.mubr.bf16.mxu0 %v538
  %721 = vmatmul.mubr.bf16.gmra.mxu0 %v375
  %v722 = vpop.f32.mrf.mxu0
  %v723 = vadd.f32 %v119, %v722
  %v724 = vpop.f32.mrf.mxu0
  %v725 = vpop.f32.mrf.mxu0
  %v726 = vadd.f32 %v120, %v725
  %v727 = vpop.f32.mrf.mxu0
  %728 = vmatprep.mubr.bf16.mxu0 %v541
  %729 = vmatmul.mubr.bf16.gmra.mxu0 %v377
  %v730 = vpop.f32.mrf.mxu0
  %v731 = vadd.f32 %v121, %v730
  %v732 = vpop.f32.mrf.mxu0
  %v733 = vpop.f32.mrf.mxu0
  %v734 = vadd.f32 %v122, %v733
  %v735 = vpop.f32.mrf.mxu0
  %736 = vmatprep.mubr.bf16.mxu0 %v544
  %737 = vmatmul.mubr.bf16.gmra.mxu0 %v379
  %v738 = vpop.f32.mrf.mxu0
  %v739 = vadd.f32 %v123, %v738
  %v740 = vpop.f32.mrf.mxu0
  %v741 = vpop.f32.mrf.mxu0
  %v742 = vadd.f32 %v124, %v741
  %v743 = vpop.f32.mrf.mxu0
  %744 = vmatprep.mubr.bf16.mxu0 %v547
  %745 = vmatmul.mubr.bf16.gmra.mxu0 %v381
  %v746 = vpop.f32.mrf.mxu0
  %v747 = vadd.f32 %v125, %v746
  %v748 = vpop.f32.mrf.mxu0
  %v749 = vpop.f32.mrf.mxu0
  %v750 = vadd.f32 %v126, %v749
  %v751 = vpop.f32.mrf.mxu0
  %752 = vmatprep.mubr.bf16.mxu0 %v550
  %753 = vmatmul.mubr.bf16.gmra.mxu0 %v383
  %v754 = vpop.f32.mrf.mxu0
  %v755 = vadd.f32 %v127, %v754
  %v756 = vpop.f32.mrf.mxu0
  %v757 = vpop.f32.mrf.mxu0
  %v758 = vadd.f32 %v128, %v757
  %v759 = vpop.f32.mrf.mxu0
  %760 = vmatprep.mubr.bf16.mxu0 %v553
  %761 = vmatmul.mubr.bf16.gmra.mxu0 %v385
  %v762 = vpop.f32.mrf.mxu0
  %v763 = vadd.f32 %v129, %v762
  %v764 = vpop.f32.mrf.mxu0
  %v765 = vpop.f32.mrf.mxu0
  %v766 = vadd.f32 %v130, %v765
  %v767 = vpop.f32.mrf.mxu0
  %768 = vmatprep.mubr.bf16.mxu0 %v556
  %769 = vmatmul.mubr.bf16.gmra.mxu0 %v387
  %v770 = vpop.f32.mrf.mxu0
  %v771 = vadd.f32 %v131, %v770
  %v772 = vpop.f32.mrf.mxu0
  %v773 = vpop.f32.mrf.mxu0
  %v774 = vadd.f32 %v132, %v773
  %v775 = vpop.f32.mrf.mxu0
  %776 = vmatprep.mubr.bf16.mxu0 %v559
  %777 = vmatmul.mubr.bf16.gmra.mxu0 %v389
  %v778 = vpop.f32.mrf.mxu0
  %v779 = vadd.f32 %v133, %v778
  %v780 = vpop.f32.mrf.mxu0
  %v781 = vpop.f32.mrf.mxu0
  %v782 = vadd.f32 %v134, %v781
  %v783 = vpop.f32.mrf.mxu0
  %784 = vmatprep.mubr.bf16.mxu0 %v562
  %785 = vmatmul.mubr.bf16.gmra.mxu0 %v391
  %v786 = vpop.f32.mrf.mxu0
  %v787 = vadd.f32 %v135, %v786
  %v788 = vpop.f32.mrf.mxu0
  %v789 = vpop.f32.mrf.mxu0
  %v790 = vadd.f32 %v136, %v789
  %v791 = vpop.f32.mrf.mxu0
  %792 = vmatprep.mubr.bf16.mxu0 %v565
  %793 = vmatmul.mubr.bf16.gmra.mxu0 %v393
  %v794 = vpop.f32.mrf.mxu0
  %v795 = vadd.f32 %v137, %v794
  %v796 = vpop.f32.mrf.mxu0
  %v797 = vpop.f32.mrf.mxu0
  %v798 = vadd.f32 %v138, %v797
  %v799 = vpop.f32.mrf.mxu0
  %800 = vmatprep.mubr.bf16.mxu0 %v568
  %801 = vmatmul.mubr.bf16.gmra.mxu0 %v395
  %v802 = vpop.f32.mrf.mxu0
  %v803 = vadd.f32 %v139, %v802
  %v804 = vpop.f32.mrf.mxu0
  %v805 = vpop.f32.mrf.mxu0
  %v806 = vadd.f32 %v140, %v805
  %v807 = vpop.f32.mrf.mxu0
  %808 = vmatprep.mubr.bf16.mxu0 %v571
  %809 = vmatmul.mubr.bf16.gmra.mxu0 %v397
  %v810 = vpop.f32.mrf.mxu0
  %v811 = vadd.f32 %v141, %v810
  %v812 = vpop.f32.mrf.mxu0
  %v813 = vpop.f32.mrf.mxu0
  %v814 = vadd.f32 %v142, %v813
  %v815 = vpop.f32.mrf.mxu0
  %816 = vmatprep.mubr.bf16.mxu0 %v574
  %817 = vmatmul.mubr.bf16.gmra.mxu0 %v399
  %v818 = vpop.f32.mrf.mxu0
  %v819 = vadd.f32 %v143, %v818
  %v820 = vpop.f32.mrf.mxu0
  %v821 = vpop.f32.mrf.mxu0
  %v822 = vadd.f32 %v144, %v821
  %v823 = vpop.f32.mrf.mxu0
  %824 = vmatprep.mubr.bf16.mxu0 %v577
  %825 = vmatmul.mubr.bf16.gmra.mxu0 %v401
  %v826 = vpop.f32.mrf.mxu0
  %v827 = vadd.f32 %v145, %v826
  %v828 = vpop.f32.mrf.mxu0
  %v829 = vpop.f32.mrf.mxu0
  %v830 = vadd.f32 %v146, %v829
  %v831 = vpop.f32.mrf.mxu0
  %832 = vmatprep.mubr.bf16.mxu0 %v580
  %833 = vmatmul.mubr.bf16.gmra.mxu0 %v403
  %v834 = vpop.f32.mrf.mxu0
  %v835 = vadd.f32 %v147, %v834
  %v836 = vpop.f32.mrf.mxu0
  %v837 = vpop.f32.mrf.mxu0
  %v838 = vadd.f32 %v148, %v837
  %v839 = vpop.f32.mrf.mxu0
  %840 = vmatprep.mubr.bf16.mxu0 %v583
  %841 = vmatmul.mubr.bf16.gmra.mxu0 %v405
  %v842 = vpop.f32.mrf.mxu0
  %v843 = vadd.f32 %v149, %v842
  %v844 = vpop.f32.mrf.mxu0
  %v845 = vpop.f32.mrf.mxu0
  %v846 = vadd.f32 %v150, %v845
  %v847 = vpop.f32.mrf.mxu0
  %848 = vmatprep.mubr.bf16.mxu0 %v586
  %849 = vmatmul.mubr.bf16.gmra.mxu0 %v407
  %v850 = vpop.f32.mrf.mxu0
  %v851 = vadd.f32 %v151, %v850
  %v852 = vpop.f32.mrf.mxu0
  %v853 = vpop.f32.mrf.mxu0
  %v854 = vadd.f32 %v152, %v853
  %v855 = vpop.f32.mrf.mxu0
  %856 = vmatprep.mubr.bf16.mxu0 %v589
  %857 = vmatmul.mubr.bf16.gmra.mxu0 %v409
  %v858 = vpop.f32.mrf.mxu0
  %v859 = vadd.f32 %v153, %v858
  %v860 = vpop.f32.mrf.mxu0
  %v861 = vpop.f32.mrf.mxu0
  %v862 = vadd.f32 %v154, %v861
  %v863 = vpop.f32.mrf.mxu0
  %864 = vmatprep.mubr.bf16.mxu0 %v592
  %865 = vmatmul.mubr.bf16.gmra.mxu0 %v411
  %v866 = vpop.f32.mrf.mxu0
  %v867 = vadd.f32 %v155, %v866
  %v868 = vpop.f32.mrf.mxu0
  %v869 = vpop.f32.mrf.mxu0
  %v870 = vadd.f32 %v156, %v869
  %v871 = vpop.f32.mrf.mxu0
  %872 = vmatprep.mubr.bf16.mxu0 %v595
  %873 = vmatmul.mubr.bf16.gmra.mxu0 %v413
  %v874 = vpop.f32.mrf.mxu0
  %v875 = vadd.f32 %v157, %v874
  %v876 = vpop.f32.mrf.mxu0
  %v877 = vpop.f32.mrf.mxu0
  %v878 = vadd.f32 %v158, %v877
  %v879 = vpop.f32.mrf.mxu0
  %880 = vmatprep.mubr.bf16.mxu0 %v598
  %881 = vmatmul.mubr.bf16.gmra.mxu0 %v415
  %v882 = vpop.f32.mrf.mxu0
  %v883 = vadd.f32 %v159, %v882
  %v884 = vpop.f32.mrf.mxu0
  %v885 = vpop.f32.mrf.mxu0
  %v886 = vadd.f32 %v160, %v885
  %v887 = vpop.f32.mrf.mxu0
  %888 = vdwg.mxu0
  %889 = vst.msk [vmem:[%s3] sm:$0xff] %vm503, %v635
  %890 = vst.msk [vmem:[%s3 + $0x8] sm:$0xff] %vm503, %v638
  %891 = vst.msk [vmem:[%s3 + $0x10] sm:$0xff] %vm503, %v643
  %892 = vst.msk [vmem:[%s3 + $0x18] sm:$0xff] %vm503, %v646
  %893 = vst.msk [vmem:[%s3 + $0x20] sm:$0xff] %vm503, %v651
  %894 = vst.msk [vmem:[%s3 + $0x28] sm:$0xff] %vm503, %v654
  %895 = vst.msk [vmem:[%s3 + $0x30] sm:$0xff] %vm503, %v659
  %896 = vst.msk [vmem:[%s3 + $0x38] sm:$0xff] %vm503, %v662
  %897 = vst.msk [vmem:[%s3 + $0x40] sm:$0xff] %vm503, %v667
  %898 = vst.msk [vmem:[%s3 + $0x48] sm:$0xff] %vm503, %v670
  %899 = vst.msk [vmem:[%s3 + $0x50] sm:$0xff] %vm503, %v675
  %900 = vst.msk [vmem:[%s3 + $0x58] sm:$0xff] %vm503, %v678
  %901 = vst.msk [vmem:[%s3 + $0x60] sm:$0xff] %vm503, %v683
  %902 = vst.msk [vmem:[%s3 + $0x68] sm:$0xff] %vm503, %v686
  %903 = vst.msk [vmem:[%s3 + $0x70] sm:$0xff] %vm503, %v691
  %904 = vst.msk [vmem:[%s3 + $0x78] sm:$0xff] %vm503, %v694
  %905 = vst.msk [vmem:[%s3 + $0x80] sm:$0xff] %vm503, %v699
  %906 = vst.msk [vmem:[%s3 + $0x88] sm:$0xff] %vm503, %v702
  %907 = vst.msk [vmem:[%s3 + $0x90] sm:$0xff] %vm503, %v707
  %908 = vst.msk [vmem:[%s3 + $0x98] sm:$0xff] %vm503, %v710
  %909 = vst.msk [vmem:[%s3 + $0xa0] sm:$0xff] %vm503, %v715
  %910 = vst.msk [vmem:[%s3 + $0xa8] sm:$0xff] %vm503, %v718
  %911 = vst.msk [vmem:[%s3 + $0xb0] sm:$0xff] %vm503, %v723
  %912 = vst.msk [vmem:[%s3 + $0xb8] sm:$0xff] %vm503, %v726
  %913 = vst.msk [vmem:[%s3 + $0xc0] sm:$0xff] %vm503, %v731
  %914 = vst.msk [vmem:[%s3 + $0xc8] sm:$0xff] %vm503, %v734
  %915 = vst.msk [vmem:[%s3 + $0xd0] sm:$0xff] %vm503, %v739
  %916 = vst.msk [vmem:[%s3 + $0xd8] sm:$0xff] %vm503, %v742
  %917 = vst.msk [vmem:[%s3 + $0xe0] sm:$0xff] %vm503, %v747
  %918 = vst.msk [vmem:[%s3 + $0xe8] sm:$0xff] %vm503, %v750
  %919 = vst.msk [vmem:[%s3 + $0xf0] sm:$0xff] %vm503, %v755
  %920 = vst.msk [vmem:[%s3 + $0xf8] sm:$0xff] %vm503, %v758
  %921 = vst.msk [vmem:[%s3 + $0x100] sm:$0xff] %vm503, %v763
  %922 = vst.msk [vmem:[%s3 + $0x108] sm:$0xff] %vm503, %v766
  %923 = vst.msk [vmem:[%s3 + $0x110] sm:$0xff] %vm503, %v771
  %924 = vst.msk [vmem:[%s3 + $0x118] sm:$0xff] %vm503, %v774
  %925 = vst.msk [vmem:[%s3 + $0x120] sm:$0xff] %vm503, %v779
  %926 = vst.msk [vmem:[%s3 + $0x128] sm:$0xff] %vm503, %v782
  %927 = vst.msk [vmem:[%s3 + $0x130] sm:$0xff] %vm503, %v787
  %928 = vst.msk [vmem:[%s3 + $0x138] sm:$0xff] %vm503, %v790
  %929 = vst.msk [vmem:[%s3 + $0x140] sm:$0xff] %vm503, %v795
  %930 = vst.msk [vmem:[%s3 + $0x148] sm:$0xff] %vm503, %v798
  %931 = vst.msk [vmem:[%s3 + $0x150] sm:$0xff] %vm503, %v803
  %932 = vst.msk [vmem:[%s3 + $0x158] sm:$0xff] %vm503, %v806
  %933 = vst.msk [vmem:[%s3 + $0x160] sm:$0xff] %vm503, %v811
  %934 = vst.msk [vmem:[%s3 + $0x168] sm:$0xff] %vm503, %v814
  %935 = vst.msk [vmem:[%s3 + $0x170] sm:$0xff] %vm503, %v819
  %936 = vst.msk [vmem:[%s3 + $0x178] sm:$0xff] %vm503, %v822
  %937 = vst.msk [vmem:[%s3 + $0x180] sm:$0xff] %vm503, %v827
  %938 = vst.msk [vmem:[%s3 + $0x188] sm:$0xff] %vm503, %v830
  %939 = vst.msk [vmem:[%s3 + $0x190] sm:$0xff] %vm503, %v835
  %940 = vst.msk [vmem:[%s3 + $0x198] sm:$0xff] %vm503, %v838
  %941 = vst.msk [vmem:[%s3 + $0x1a0] sm:$0xff] %vm503, %v843
  %942 = vst.msk [vmem:[%s3 + $0x1a8] sm:$0xff] %vm503, %v846
  %943 = vst.msk [vmem:[%s3 + $0x1b0] sm:$0xff] %vm503, %v851
  %944 = vst.msk [vmem:[%s3 + $0x1b8] sm:$0xff] %vm503, %v854
  %945 = vst.msk [vmem:[%s3 + $0x1c0] sm:$0xff] %vm503, %v859
  %946 = vst.msk [vmem:[%s3 + $0x1c8] sm:$0xff] %vm503, %v862
  %947 = vst.msk [vmem:[%s3 + $0x1d0] sm:$0xff] %vm503, %v867
  %948 = vst.msk [vmem:[%s3 + $0x1d8] sm:$0xff] %vm503, %v870
  %949 = vst.msk [vmem:[%s3 + $0x1e0] sm:$0xff] %vm503, %v875
  %950 = vst.msk [vmem:[%s3 + $0x1e8] sm:$0xff] %vm503, %v878
  %951 = vst.msk [vmem:[%s3 + $0x1f0] sm:$0xff] %vm503, %v883
  %952 = vst.msk [vmem:[%s3 + $0x1f8] sm:$0xff] %vm503, %v886
  // Predicated region
  $region14: #{_lambda_.14} parent=0 // pred_check
    _
  $region15: #{_lambda_.14} parent=0 // pred_check_branch
    %954 = sbr.rel (0) target = $region17
  $region16: #{_lambda_.14} parent=0 // pred_region
    _
  $region17: #{_lambda_.14} parent=0 // pred_fallthru
    _
  // Predicated region
  $region18: #{_lambda_.14} parent=0 // pred_check
    _
  $region19: #{_lambda_.14} parent=0 // pred_check_branch
    %956 = sbr.rel (0) target = $region21
  $region20: #{_lambda_.14} parent=0 // pred_region
    _
  $region21: #{_lambda_.14} parent=0 // pred_fallthru
    _

// kernel: _lambda_.13
$region0: #{_lambda_.13}
  #allocation0 [shape = 'u32[]', space=smem, size = 0x4, offset = 0x4, fixed_abs, tag = 'smem constant byte address 0x4 - core index']
  #allocation1 [shape = 'u32[144,128]{1,0:T(1,128)}', space=vmem, size = 0x12000, scoped, tag = 'internal scratch']
  %s0 = inlined_call_operand.vmem [shape: bf16[512,144], index: 0, kind: input, shape index: {}]
  %s1 = inlined_call_operand.vmem [shape: bf16[144,16], index: 1, kind: input, shape index: {}]
  %s2 = inlined_call_operand.vmem [shape: f32[1,16], index: 2, kind: input, shape index: {}]
  %s3 = inlined_call_operand.vmem [shape: f32[1,16], index: 3, kind: input, shape index: {}]
  %s4 = inlined_call_operand.vmem [shape: bf16[512,16], index: 4, kind: output, shape index: {}]
  %s5 = sld [smem:[#allocation0]]
  $region26: #{_lambda_.13} parent=0
    _
  %s7 = ssub.s32 1, %s5
  %s8 = scalar_select 0, %s7, %s5
  // Predicated region
  $region2: #{_lambda_.13} parent=0 // pred_check
    _
  $region3: #{_lambda_.13} parent=0 // pred_check_branch
    %10 = sbr.rel (0) target = $region5
  $region4: #{_lambda_.13} parent=0 // pred_region
    _
  $region5: #{_lambda_.13} parent=0 // pred_fallthru
    _
  // Predicated region
  $region6: #{_lambda_.13} parent=0 // pred_check
    _
  $region7: #{_lambda_.13} parent=0 // pred_check_branch
    %12 = sbr.rel (0) target = $region9
  $region8: #{_lambda_.13} parent=0 // pred_region
    _
  $region9: #{_lambda_.13} parent=0 // pred_fallthru
    _
  // Predicated region
  $region10: #{_lambda_.13} parent=0 // pred_check
    _
  $region11: #{_lambda_.13} parent=0 // pred_check_branch
    %14 = sbr.rel (0) target = $region13
  $region12: #{_lambda_.13} parent=0 // pred_region
    _
  $region13: #{_lambda_.13} parent=0 // pred_fallthru
    _
  // Predicated region
  $region14: #{_lambda_.13} parent=0 // pred_check
    _
  $region15: #{_lambda_.13} parent=0 // pred_check_branch
    %16 = sbr.rel (0) target = $region17
  $region16: #{_lambda_.13} parent=0 // pred_region
    _
  $region17: #{_lambda_.13} parent=0 // pred_fallthru
    _
  %v18 = vld [vmem:[%s0] sm:$0xff]
  %v19 = vld [vmem:[%s0 + $0x8] sm:$0xff]
  %v20 = vld [vmem:[%s0 + $0x10] sm:$0xff]
  %v21 = vld [vmem:[%s0 + $0x18] sm:$0xff]
  %v22 = vld [vmem:[%s0 + $0x20] sm:$0xff]
  %v23 = vld [vmem:[%s0 + $0x28] sm:$0xff]
  %v24 = vld [vmem:[%s0 + $0x30] sm:$0xff]
  %v25 = vld [vmem:[%s0 + $0x38] sm:$0xff]
  %v26 = vld [vmem:[%s0 + $0x40] sm:$0xff]
  %v27 = vld [vmem:[%s0 + $0x48] sm:$0xff]
  %v28 = vld [vmem:[%s0 + $0x50] sm:$0xff]
  %v29 = vld [vmem:[%s0 + $0x58] sm:$0xff]
  %v30 = vld [vmem:[%s0 + $0x60] sm:$0xff]
  %v31 = vld [vmem:[%s0 + $0x68] sm:$0xff]
  %v32 = vld [vmem:[%s0 + $0x70] sm:$0xff]
  %v33 = vld [vmem:[%s0 + $0x78] sm:$0xff]
  %v34 = vld [vmem:[%s0 + $0x80] sm:$0xff]
  %v35 = vld [vmem:[%s0 + $0x88] sm:$0xff]
  %v36 = vld [vmem:[%s0 + $0x90] sm:$0xff]
  %v37 = vld [vmem:[%s0 + $0x98] sm:$0xff]
  %v38 = vld [vmem:[%s0 + $0xa0] sm:$0xff]
  %v39 = vld [vmem:[%s0 + $0xa8] sm:$0xff]
  %v40 = vld [vmem:[%s0 + $0xb0] sm:$0xff]
  %v41 = vld [vmem:[%s0 + $0xb8] sm:$0xff]
  %v42 = vld [vmem:[%s0 + $0xc0] sm:$0xff]
  %v43 = vld [vmem:[%s0 + $0xc8] sm:$0xff]
  %v44 = vld [vmem:[%s0 + $0xd0] sm:$0xff]
  %v45 = vld [vmem:[%s0 + $0xd8] sm:$0xff]
  %v46 = vld [vmem:[%s0 + $0xe0] sm:$0xff]
  %v47 = vld [vmem:[%s0 + $0xe8] sm:$0xff]
  %v48 = vld [vmem:[%s0 + $0xf0] sm:$0xff]
  %v49 = vld [vmem:[%s0 + $0xf8] sm:$0xff]
  %v50 = vld [vmem:[%s0 + $0x100] sm:$0xff]
  %v51 = vld [vmem:[%s0 + $0x108] sm:$0xff]
  %v52 = vld [vmem:[%s0 + $0x110] sm:$0xff]
  %v53 = vld [vmem:[%s0 + $0x118] sm:$0xff]
  %v54 = vld [vmem:[%s0 + $0x120] sm:$0xff]
  %v55 = vld [vmem:[%s0 + $0x128] sm:$0xff]
  %v56 = vld [vmem:[%s0 + $0x130] sm:$0xff]
  %v57 = vld [vmem:[%s0 + $0x138] sm:$0xff]
  %v58 = vld [vmem:[%s0 + $0x140] sm:$0xff]
  %v59 = vld [vmem:[%s0 + $0x148] sm:$0xff]
  %v60 = vld [vmem:[%s0 + $0x150] sm:$0xff]
  %v61 = vld [vmem:[%s0 + $0x158] sm:$0xff]
  %v62 = vld [vmem:[%s0 + $0x160] sm:$0xff]
  %v63 = vld [vmem:[%s0 + $0x168] sm:$0xff]
  %v64 = vld [vmem:[%s0 + $0x170] sm:$0xff]
  %v65 = vld [vmem:[%s0 + $0x178] sm:$0xff]
  %v66 = vld [vmem:[%s0 + $0x180] sm:$0xff]
  %v67 = vld [vmem:[%s0 + $0x188] sm:$0xff]
  %v68 = vld [vmem:[%s0 + $0x190] sm:$0xff]
  %v69 = vld [vmem:[%s0 + $0x198] sm:$0xff]
  %v70 = vld [vmem:[%s0 + $0x1a0] sm:$0xff]
  %v71 = vld [vmem:[%s0 + $0x1a8] sm:$0xff]
  %v72 = vld [vmem:[%s0 + $0x1b0] sm:$0xff]
  %v73 = vld [vmem:[%s0 + $0x1b8] sm:$0xff]
  %v74 = vld [vmem:[%s0 + $0x1c0] sm:$0xff]
  %v75 = vld [vmem:[%s0 + $0x1c8] sm:$0xff]
  %v76 = vld [vmem:[%s0 + $0x1d0] sm:$0xff]
  %v77 = vld [vmem:[%s0 + $0x1d8] sm:$0xff]
  %v78 = vld [vmem:[%s0 + $0x1e0] sm:$0xff]
  %v79 = vld [vmem:[%s0 + $0x1e8] sm:$0xff]
  %v80 = vld [vmem:[%s0 + $0x1f0] sm:$0xff]
  %v81 = vld [vmem:[%s0 + $0x1f8] sm:$0xff]
  %v82 = vld [vmem:[%s1] sm:$0xf]
  %v83 = vld [vmem:[%s1 + $0x4] sm:$0xf]
  %v84 = vld [vmem:[%s1 + $0x8] sm:$0xf]
  %v85 = vld [vmem:[%s1 + $0xc] sm:$0xf]
  %v86 = vld [vmem:[%s1 + $0x10] sm:$0xf]
  %v87 = vld [vmem:[%s1 + $0x14] sm:$0xf]
  %v88 = vld [vmem:[%s1 + $0x18] sm:$0xf]
  %v89 = vld [vmem:[%s1 + $0x1c] sm:$0xf]
  %v90 = vld [vmem:[%s1 + $0x20] sm:$0xf]
  %v91 = vld [vmem:[%s1 + $0x24] sm:$0xf]
  %v92 = vld [vmem:[%s1 + $0x28] sm:$0xf]
  %v93 = vld [vmem:[%s1 + $0x2c] sm:$0xf]
  %v94 = vld [vmem:[%s1 + $0x30] sm:$0xf]
  %v95 = vld [vmem:[%s1 + $0x34] sm:$0xf]
  %v96 = vld [vmem:[%s1 + $0x38] sm:$0xf]
  %v97 = vld [vmem:[%s1 + $0x3c] sm:$0xf]
  %v98 = vld [vmem:[%s1 + $0x40] sm:$0xf]
  %v99 = vld [vmem:[%s1 + $0x44] sm:$0xf]
  %v164 = vunpack.c.l.b16 %v18
  %v165 = vunpack.c.h.b16 %v18
  %v166 = vunpack.c.l.b16 %v19
  %v167 = vunpack.c.h.b16 %v19
  %v168 = vunpack.c.l.b16 %v20
  %v169 = vunpack.c.h.b16 %v20
  %v170 = vunpack.c.l.b16 %v21
  %v171 = vunpack.c.h.b16 %v21
  %v172 = vunpack.c.l.b16 %v22
  %v173 = vunpack.c.h.b16 %v22
  %v174 = vunpack.c.l.b16 %v23
  %v175 = vunpack.c.h.b16 %v23
  %v176 = vunpack.c.l.b16 %v24
  %v177 = vunpack.c.h.b16 %v24
  %v178 = vunpack.c.l.b16 %v25
  %v179 = vunpack.c.h.b16 %v25
  %v180 = vunpack.c.l.b16 %v26
  %v181 = vunpack.c.h.b16 %v26
  %v182 = vunpack.c.l.b16 %v27
  %v183 = vunpack.c.h.b16 %v27
  %v184 = vunpack.c.l.b16 %v28
  %v185 = vunpack.c.h.b16 %v28
  %v186 = vunpack.c.l.b16 %v29
  %v187 = vunpack.c.h.b16 %v29
  %v188 = vunpack.c.l.b16 %v30
  %v189 = vunpack.c.h.b16 %v30
  %v190 = vunpack.c.l.b16 %v31
  %v191 = vunpack.c.h.b16 %v31
  %v192 = vunpack.c.l.b16 %v32
  %v193 = vunpack.c.h.b16 %v32
  %v194 = vunpack.c.l.b16 %v33
  %v195 = vunpack.c.h.b16 %v33
  %v196 = vunpack.c.l.b16 %v34
  %v197 = vunpack.c.h.b16 %v34
  %v198 = vunpack.c.l.b16 %v35
  %v199 = vunpack.c.h.b16 %v35
  %v200 = vunpack.c.l.b16 %v36
  %v201 = vunpack.c.h.b16 %v36
  %v202 = vunpack.c.l.b16 %v37
  %v203 = vunpack.c.h.b16 %v37
  %v204 = vunpack.c.l.b16 %v38
  %v205 = vunpack.c.h.b16 %v38
  %v206 = vunpack.c.l.b16 %v39
  %v207 = vunpack.c.h.b16 %v39
  %v208 = vunpack.c.l.b16 %v40
  %v209 = vunpack.c.h.b16 %v40
  %v210 = vunpack.c.l.b16 %v41
  %v211 = vunpack.c.h.b16 %v41
  %v212 = vunpack.c.l.b16 %v42
  %v213 = vunpack.c.h.b16 %v42
  %v214 = vunpack.c.l.b16 %v43
  %v215 = vunpack.c.h.b16 %v43
  %v216 = vunpack.c.l.b16 %v44
  %v217 = vunpack.c.h.b16 %v44
  %v218 = vunpack.c.l.b16 %v45
  %v219 = vunpack.c.h.b16 %v45
  %v220 = vunpack.c.l.b16 %v46
  %v221 = vunpack.c.h.b16 %v46
  %v222 = vunpack.c.l.b16 %v47
  %v223 = vunpack.c.h.b16 %v47
  %v224 = vunpack.c.l.b16 %v48
  %v225 = vunpack.c.h.b16 %v48
  %v226 = vunpack.c.l.b16 %v49
  %v227 = vunpack.c.h.b16 %v49
  %v228 = vunpack.c.l.b16 %v50
  %v229 = vunpack.c.h.b16 %v50
  %v230 = vunpack.c.l.b16 %v51
  %v231 = vunpack.c.h.b16 %v51
  %v232 = vunpack.c.l.b16 %v52
  %v233 = vunpack.c.h.b16 %v52
  %v234 = vunpack.c.l.b16 %v53
  %v235 = vunpack.c.h.b16 %v53
  %v236 = vunpack.c.l.b16 %v54
  %v237 = vunpack.c.h.b16 %v54
  %v238 = vunpack.c.l.b16 %v55
  %v239 = vunpack.c.h.b16 %v55
  %v240 = vunpack.c.l.b16 %v56
  %v241 = vunpack.c.h.b16 %v56
  %v242 = vunpack.c.l.b16 %v57
  %v243 = vunpack.c.h.b16 %v57
  %v244 = vunpack.c.l.b16 %v58
  %v245 = vunpack.c.h.b16 %v58
  %v246 = vunpack.c.l.b16 %v59
  %v247 = vunpack.c.h.b16 %v59
  %v248 = vunpack.c.l.b16 %v60
  %v249 = vunpack.c.h.b16 %v60
  %v250 = vunpack.c.l.b16 %v61
  %v251 = vunpack.c.h.b16 %v61
  %v252 = vunpack.c.l.b16 %v62
  %v253 = vunpack.c.h.b16 %v62
  %v254 = vunpack.c.l.b16 %v63
  %v255 = vunpack.c.h.b16 %v63
  %v256 = vunpack.c.l.b16 %v64
  %v257 = vunpack.c.h.b16 %v64
  %v258 = vunpack.c.l.b16 %v65
  %v259 = vunpack.c.h.b16 %v65
  %v260 = vunpack.c.l.b16 %v66
  %v261 = vunpack.c.h.b16 %v66
  %v262 = vunpack.c.l.b16 %v67
  %v263 = vunpack.c.h.b16 %v67
  %v264 = vunpack.c.l.b16 %v68
  %v265 = vunpack.c.h.b16 %v68
  %v266 = vunpack.c.l.b16 %v69
  %v267 = vunpack.c.h.b16 %v69
  %v268 = vunpack.c.l.b16 %v70
  %v269 = vunpack.c.h.b16 %v70
  %v270 = vunpack.c.l.b16 %v71
  %v271 = vunpack.c.h.b16 %v71
  %v272 = vunpack.c.l.b16 %v72
  %v273 = vunpack.c.h.b16 %v72
  %v274 = vunpack.c.l.b16 %v73
  %v275 = vunpack.c.h.b16 %v73
  %v276 = vunpack.c.l.b16 %v74
  %v277 = vunpack.c.h.b16 %v74
  %v278 = vunpack.c.l.b16 %v75
  %v279 = vunpack.c.h.b16 %v75
  %v280 = vunpack.c.l.b16 %v76
  %v281 = vunpack.c.h.b16 %v76
  %v282 = vunpack.c.l.b16 %v77
  %v283 = vunpack.c.h.b16 %v77
  %v284 = vunpack.c.l.b16 %v78
  %v285 = vunpack.c.h.b16 %v78
  %v286 = vunpack.c.l.b16 %v79
  %v287 = vunpack.c.h.b16 %v79
  %v288 = vunpack.c.l.b16 %v80
  %v289 = vunpack.c.h.b16 %v80
  %v290 = vunpack.c.l.b16 %v81
  %v291 = vunpack.c.h.b16 %v81
  %v292 = vpack.c.b16 %v166, %v164
  %v293 = vpack.c.b16 %v167, %v165
  %v294 = vpack.c.b16 %v170, %v168
  %v295 = vpack.c.b16 %v171, %v169
  %v296 = vpack.c.b16 %v174, %v172
  %v297 = vpack.c.b16 %v175, %v173
  %v298 = vpack.c.b16 %v178, %v176
  %v299 = vpack.c.b16 %v179, %v177
  %v300 = vpack.c.b16 %v182, %v180
  %v301 = vpack.c.b16 %v183, %v181
  %v302 = vpack.c.b16 %v186, %v184
  %v303 = vpack.c.b16 %v187, %v185
  %v304 = vpack.c.b16 %v190, %v188
  %v305 = vpack.c.b16 %v191, %v189
  %v306 = vpack.c.b16 %v194, %v192
  %v307 = vpack.c.b16 %v195, %v193
  %v308 = vpack.c.b16 %v198, %v196
  %v309 = vpack.c.b16 %v199, %v197
  %v310 = vpack.c.b16 %v202, %v200
  %v311 = vpack.c.b16 %v203, %v201
  %v312 = vpack.c.b16 %v206, %v204
  %v313 = vpack.c.b16 %v207, %v205
  %v314 = vpack.c.b16 %v210, %v208
  %v315 = vpack.c.b16 %v211, %v209
  %v316 = vpack.c.b16 %v214, %v212
  %v317 = vpack.c.b16 %v215, %v213
  %v318 = vpack.c.b16 %v218, %v216
  %v319 = vpack.c.b16 %v219, %v217
  %v320 = vpack.c.b16 %v222, %v220
  %v321 = vpack.c.b16 %v223, %v221
  %v322 = vpack.c.b16 %v226, %v224
  %v323 = vpack.c.b16 %v227, %v225
  %v324 = vpack.c.b16 %v230, %v228
  %v325 = vpack.c.b16 %v231, %v229
  %v326 = vpack.c.b16 %v234, %v232
  %v327 = vpack.c.b16 %v235, %v233
  %v328 = vpack.c.b16 %v238, %v236
  %v329 = vpack.c.b16 %v239, %v237
  %v330 = vpack.c.b16 %v242, %v240
  %v331 = vpack.c.b16 %v243, %v241
  %v332 = vpack.c.b16 %v246, %v244
  %v333 = vpack.c.b16 %v247, %v245
  %v334 = vpack.c.b16 %v250, %v248
  %v335 = vpack.c.b16 %v251, %v249
  %v336 = vpack.c.b16 %v254, %v252
  %v337 = vpack.c.b16 %v255, %v253
  %v338 = vpack.c.b16 %v258, %v256
  %v339 = vpack.c.b16 %v259, %v257
  %v340 = vpack.c.b16 %v262, %v260
  %v341 = vpack.c.b16 %v263, %v261
  %v342 = vpack.c.b16 %v266, %v264
  %v343 = vpack.c.b16 %v267, %v265
  %v344 = vpack.c.b16 %v270, %v268
  %v345 = vpack.c.b16 %v271, %v269
  %v346 = vpack.c.b16 %v274, %v272
  %v347 = vpack.c.b16 %v275, %v273
  %v348 = vpack.c.b16 %v278, %v276
  %v349 = vpack.c.b16 %v279, %v277
  %v350 = vpack.c.b16 %v282, %v280
  %v351 = vpack.c.b16 %v283, %v281
  %v352 = vpack.c.b16 %v286, %v284
  %v353 = vpack.c.b16 %v287, %v285
  %v354 = vpack.c.b16 %v290, %v288
  %v355 = vpack.c.b16 %v291, %v289
  %v406 = vunpack.c.l.b16 %v82
  %v407 = vunpack.c.l.b16 %v83
  %v408 = vunpack.c.l.b16 %v84
  %v409 = vunpack.c.l.b16 %v85
  %v410 = vunpack.c.l.b16 %v86
  %v411 = vunpack.c.l.b16 %v87
  %v412 = vunpack.c.l.b16 %v88
  %v413 = vunpack.c.l.b16 %v89
  %v414 = vunpack.c.l.b16 %v90
  %v415 = vunpack.c.l.b16 %v91
  %v416 = vunpack.c.l.b16 %v92
  %v417 = vunpack.c.l.b16 %v93
  %v418 = vunpack.c.l.b16 %v94
  %v419 = vunpack.c.l.b16 %v95
  %v420 = vunpack.c.l.b16 %v96
  %v421 = vunpack.c.l.b16 %v97
  %v422 = vunpack.c.l.b16 %v98
  %v423 = vunpack.c.l.b16 %v99
  %v424 = vpack.c.b16 %v407, %v406
  %v425 = vpack.c.b16 %v409, %v408
  %v426 = vpack.c.b16 %v411, %v410
  %v427 = vpack.c.b16 %v413, %v412
  %v428 = vpack.c.b16 %v415, %v414
  %v429 = vpack.c.b16 %v417, %v416
  %v430 = vpack.c.b16 %v419, %v418
  %v431 = vpack.c.b16 %v421, %v420
  %v432 = vpack.c.b16 %v423, %v422
  %vm442 = vcmask 130048
  %v444 = vsel %vm442, %v293, 0
  %v447 = vsel %vm442, %v295, 0
  %v450 = vsel %vm442, %v297, 0
  %v453 = vsel %vm442, %v299, 0
  %v456 = vsel %vm442, %v301, 0
  %v459 = vsel %vm442, %v303, 0
  %v462 = vsel %vm442, %v305, 0
  %v465 = vsel %vm442, %v307, 0
  %v468 = vsel %vm442, %v309, 0
  %v471 = vsel %vm442, %v311, 0
  %v474 = vsel %vm442, %v313, 0
  %v477 = vsel %vm442, %v315, 0
  %v480 = vsel %vm442, %v317, 0
  %v483 = vsel %vm442, %v319, 0
  %v486 = vsel %vm442, %v321, 0
  %v489 = vsel %vm442, %v323, 0
  %v492 = vsel %vm442, %v325, 0
  %v495 = vsel %vm442, %v327, 0
  %v498 = vsel %vm442, %v329, 0
  %v501 = vsel %vm442, %v331, 0
  %v504 = vsel %vm442, %v333, 0
  %v507 = vsel %vm442, %v335, 0
  %v510 = vsel %vm442, %v337, 0
  %v513 = vsel %vm442, %v339, 0
  %v516 = vsel %vm442, %v341, 0
  %v519 = vsel %vm442, %v343, 0
  %v522 = vsel %vm442, %v345, 0
  %v525 = vsel %vm442, %v347, 0
  %v528 = vsel %vm442, %v349, 0
  %v531 = vsel %vm442, %v351, 0
  %v534 = vsel %vm442, %v353, 0
  %v537 = vsel %vm442, %v355, 0
  %539 = vmatprep.subr.bf16.mxu0 0
  %540 = vmatpush1.bf16.msra.mxu0 %v431
  %541 = vmatprep.subr.bf16.mxu0 0
  %542 = vmatpush1.bf16.msra.mxu0 %v430
  %543 = vmatprep.subr.bf16.mxu0 0
  %544 = vmatpush1.bf16.msra.mxu0 %v429
  %545 = vmatprep.subr.bf16.mxu0 0
  %546 = vmatpush1.bf16.msra.mxu0 %v428
  %547 = vmatprep.subr.bf16.mxu0 0
  %548 = vmatpush1.bf16.msra.mxu0 %v427
  %549 = vmatprep.subr.bf16.mxu0 0
  %550 = vmatpush1.bf16.msra.mxu0 %v426
  %551 = vmatprep.subr.bf16.mxu0 0
  %552 = vmatpush1.bf16.msra.mxu0 %v425
  %553 = vmatprep.subr.bf16.mxu0 0
  %554 = vmatpush1.bf16.msra.mxu0 %v424
  %555 = vmatprep.subr.bf16.mxu0 0
  %556 = vmatpush2.bf16.msra.mxu0 0
  %557 = vmatprep.subr.bf16.mxu0 0
  %558 = vmatpush2.bf16.msra.mxu0 0
  %559 = vmatprep.subr.bf16.mxu0 0
  %560 = vmatpush2.bf16.msra.mxu0 0
  %561 = vmatprep.subr.bf16.mxu0 0
  %562 = vmatpush2.bf16.msra.mxu0 0
  %563 = vmatprep.subr.bf16.mxu0 0
  %564 = vmatpush2.bf16.msra.mxu0 0
  %565 = vmatprep.subr.bf16.mxu0 0
  %566 = vmatpush2.bf16.msra.mxu0 0
  %567 = vmatprep.subr.bf16.mxu0 0
  %568 = vmatpush2.bf16.msra.mxu0 0
  %569 = vmatprep.subr.bf16.mxu0 0
  %570 = vmatpush2.bf16.msra.mxu0 %v432
  %571 = vmatprep.mubr.bf16.mxu0 %v444
  %572 = vmatmul.mubr.bf16.gmra.mxu0 %v292
  %v573 = vpop.f32.mrf.mxu0
  %v574 = vadd.f32 0.0, %v573
  %v575 = vpop.f32.mrf.mxu0
  %v576 = vpop.f32.mrf.mxu0
  %v577 = vadd.f32 0.0, %v576
  %v578 = vpop.f32.mrf.mxu0
  %579 = vmatprep.mubr.bf16.mxu0 %v447
  %580 = vmatmul.mubr.bf16.gmra.mxu0 %v294
  %v581 = vpop.f32.mrf.mxu0
  %v582 = vadd.f32 0.0, %v581
  %v583 = vpop.f32.mrf.mxu0
  %v584 = vpop.f32.mrf.mxu0
  %v585 = vadd.f32 0.0, %v584
  %v586 = vpop.f32.mrf.mxu0
  %587 = vmatprep.mubr.bf16.mxu0 %v450
  %588 = vmatmul.mubr.bf16.gmra.mxu0 %v296
  %v589 = vpop.f32.mrf.mxu0
  %v590 = vadd.f32 0.0, %v589
  %v591 = vpop.f32.mrf.mxu0
  %v592 = vpop.f32.mrf.mxu0
  %v593 = vadd.f32 0.0, %v592
  %v594 = vpop.f32.mrf.mxu0
  %595 = vmatprep.mubr.bf16.mxu0 %v453
  %596 = vmatmul.mubr.bf16.gmra.mxu0 %v298
  %v597 = vpop.f32.mrf.mxu0
  %v598 = vadd.f32 0.0, %v597
  %v599 = vpop.f32.mrf.mxu0
  %v600 = vpop.f32.mrf.mxu0
  %v601 = vadd.f32 0.0, %v600
  %v602 = vpop.f32.mrf.mxu0
  %603 = vmatprep.mubr.bf16.mxu0 %v456
  %604 = vmatmul.mubr.bf16.gmra.mxu0 %v300
  %v605 = vpop.f32.mrf.mxu0
  %v606 = vadd.f32 0.0, %v605
  %v607 = vpop.f32.mrf.mxu0
  %v608 = vpop.f32.mrf.mxu0
  %v609 = vadd.f32 0.0, %v608
  %v610 = vpop.f32.mrf.mxu0
  %611 = vmatprep.mubr.bf16.mxu0 %v459
  %612 = vmatmul.mubr.bf16.gmra.mxu0 %v302
  %v613 = vpop.f32.mrf.mxu0
  %v614 = vadd.f32 0.0, %v613
  %v615 = vpop.f32.mrf.mxu0
  %v616 = vpop.f32.mrf.mxu0
  %v617 = vadd.f32 0.0, %v616
  %v618 = vpop.f32.mrf.mxu0
  %619 = vmatprep.mubr.bf16.mxu0 %v462
  %620 = vmatmul.mubr.bf16.gmra.mxu0 %v304
  %v621 = vpop.f32.mrf.mxu0
  %v622 = vadd.f32 0.0, %v621
  %v623 = vpop.f32.mrf.mxu0
  %v624 = vpop.f32.mrf.mxu0
  %v625 = vadd.f32 0.0, %v624
  %v626 = vpop.f32.mrf.mxu0
  %627 = vmatprep.mubr.bf16.mxu0 %v465
  %628 = vmatmul.mubr.bf16.gmra.mxu0 %v306
  %v629 = vpop.f32.mrf.mxu0
  %v630 = vadd.f32 0.0, %v629
  %v631 = vpop.f32.mrf.mxu0
  %v632 = vpop.f32.mrf.mxu0
  %v633 = vadd.f32 0.0, %v632
  %v634 = vpop.f32.mrf.mxu0
  %635 = vmatprep.mubr.bf16.mxu0 %v468
  %636 = vmatmul.mubr.bf16.gmra.mxu0 %v308
  %v637 = vpop.f32.mrf.mxu0
  %v638 = vadd.f32 0.0, %v637
  %v639 = vpop.f32.mrf.mxu0
  %v640 = vpop.f32.mrf.mxu0
  %v641 = vadd.f32 0.0, %v640
  %v642 = vpop.f32.mrf.mxu0
  %643 = vmatprep.mubr.bf16.mxu0 %v471
  %644 = vmatmul.mubr.bf16.gmra.mxu0 %v310
  %v645 = vpop.f32.mrf.mxu0
  %v646 = vadd.f32 0.0, %v645
  %v647 = vpop.f32.mrf.mxu0
  %v648 = vpop.f32.mrf.mxu0
  %v649 = vadd.f32 0.0, %v648
  %v650 = vpop.f32.mrf.mxu0
  %651 = vmatprep.mubr.bf16.mxu0 %v474
  %652 = vmatmul.mubr.bf16.gmra.mxu0 %v312
  %v653 = vpop.f32.mrf.mxu0
  %v654 = vadd.f32 0.0, %v653
  %v655 = vpop.f32.mrf.mxu0
  %v656 = vpop.f32.mrf.mxu0
  %v657 = vadd.f32 0.0, %v656
  %v658 = vpop.f32.mrf.mxu0
  %659 = vmatprep.mubr.bf16.mxu0 %v477
  %660 = vmatmul.mubr.bf16.gmra.mxu0 %v314
  %v661 = vpop.f32.mrf.mxu0
  %v662 = vadd.f32 0.0, %v661
  %v663 = vpop.f32.mrf.mxu0
  %v664 = vpop.f32.mrf.mxu0
  %v665 = vadd.f32 0.0, %v664
  %v666 = vpop.f32.mrf.mxu0
  %667 = vmatprep.mubr.bf16.mxu0 %v480
  %668 = vmatmul.mubr.bf16.gmra.mxu0 %v316
  %v669 = vpop.f32.mrf.mxu0
  %v670 = vadd.f32 0.0, %v669
  %v671 = vpop.f32.mrf.mxu0
  %v672 = vpop.f32.mrf.mxu0
  %v673 = vadd.f32 0.0, %v672
  %v674 = vpop.f32.mrf.mxu0
  %675 = vmatprep.mubr.bf16.mxu0 %v483
  %676 = vmatmul.mubr.bf16.gmra.mxu0 %v318
  %v677 = vpop.f32.mrf.mxu0
  %v678 = vadd.f32 0.0, %v677
  %v679 = vpop.f32.mrf.mxu0
  %v680 = vpop.f32.mrf.mxu0
  %v681 = vadd.f32 0.0, %v680
  %v682 = vpop.f32.mrf.mxu0
  %683 = vmatprep.mubr.bf16.mxu0 %v486
  %684 = vmatmul.mubr.bf16.gmra.mxu0 %v320
  %v685 = vpop.f32.mrf.mxu0
  %v686 = vadd.f32 0.0, %v685
  %v687 = vpop.f32.mrf.mxu0
  %v688 = vpop.f32.mrf.mxu0
  %v689 = vadd.f32 0.0, %v688
  %v690 = vpop.f32.mrf.mxu0
  %691 = vmatprep.mubr.bf16.mxu0 %v489
  %692 = vmatmul.mubr.bf16.gmra.mxu0 %v322
  %v693 = vpop.f32.mrf.mxu0
  %v694 = vadd.f32 0.0, %v693
  %v695 = vpop.f32.mrf.mxu0
  %v696 = vpop.f32.mrf.mxu0
  %v697 = vadd.f32 0.0, %v696
  %v698 = vpop.f32.mrf.mxu0
  %699 = vmatprep.mubr.bf16.mxu0 %v492
  %700 = vmatmul.mubr.bf16.gmra.mxu0 %v324
  %v701 = vpop.f32.mrf.mxu0
  %v702 = vadd.f32 0.0, %v701
  %v703 = vpop.f32.mrf.mxu0
  %v704 = vpop.f32.mrf.mxu0
  %v705 = vadd.f32 0.0, %v704
  %v706 = vpop.f32.mrf.mxu0
  %707 = vmatprep.mubr.bf16.mxu0 %v495
  %708 = vmatmul.mubr.bf16.gmra.mxu0 %v326
  %v709 = vpop.f32.mrf.mxu0
  %v710 = vadd.f32 0.0, %v709
  %v711 = vpop.f32.mrf.mxu0
  %v712 = vpop.f32.mrf.mxu0
  %v713 = vadd.f32 0.0, %v712
  %v714 = vpop.f32.mrf.mxu0
  %715 = vmatprep.mubr.bf16.mxu0 %v498
  %716 = vmatmul.mubr.bf16.gmra.mxu0 %v328
  %v717 = vpop.f32.mrf.mxu0
  %v718 = vadd.f32 0.0, %v717
  %v719 = vpop.f32.mrf.mxu0
  %v720 = vpop.f32.mrf.mxu0
  %v721 = vadd.f32 0.0, %v720
  %v722 = vpop.f32.mrf.mxu0
  %723 = vmatprep.mubr.bf16.mxu0 %v501
  %724 = vmatmul.mubr.bf16.gmra.mxu0 %v330
  %v725 = vpop.f32.mrf.mxu0
  %v726 = vadd.f32 0.0, %v725
  %v727 = vpop.f32.mrf.mxu0
  %v728 = vpop.f32.mrf.mxu0
  %v729 = vadd.f32 0.0, %v728
  %v730 = vpop.f32.mrf.mxu0
  %731 = vmatprep.mubr.bf16.mxu0 %v504
  %732 = vmatmul.mubr.bf16.gmra.mxu0 %v332
  %v733 = vpop.f32.mrf.mxu0
  %v734 = vadd.f32 0.0, %v733
  %v735 = vpop.f32.mrf.mxu0
  %v736 = vpop.f32.mrf.mxu0
  %v737 = vadd.f32 0.0, %v736
  %v738 = vpop.f32.mrf.mxu0
  %739 = vmatprep.mubr.bf16.mxu0 %v507
  %740 = vmatmul.mubr.bf16.gmra.mxu0 %v334
  %v741 = vpop.f32.mrf.mxu0
  %v742 = vadd.f32 0.0, %v741
  %v743 = vpop.f32.mrf.mxu0
  %v744 = vpop.f32.mrf.mxu0
  %v745 = vadd.f32 0.0, %v744
  %v746 = vpop.f32.mrf.mxu0
  %747 = vmatprep.mubr.bf16.mxu0 %v510
  %748 = vmatmul.mubr.bf16.gmra.mxu0 %v336
  %v749 = vpop.f32.mrf.mxu0
  %v750 = vadd.f32 0.0, %v749
  %v751 = vpop.f32.mrf.mxu0
  %v752 = vpop.f32.mrf.mxu0
  %v753 = vadd.f32 0.0, %v752
  %v754 = vpop.f32.mrf.mxu0
  %755 = vmatprep.mubr.bf16.mxu0 %v513
  %756 = vmatmul.mubr.bf16.gmra.mxu0 %v338
  %v757 = vpop.f32.mrf.mxu0
  %v758 = vadd.f32 0.0, %v757
  %v759 = vpop.f32.mrf.mxu0
  %v760 = vpop.f32.mrf.mxu0
  %v761 = vadd.f32 0.0, %v760
  %v762 = vpop.f32.mrf.mxu0
  %763 = vmatprep.mubr.bf16.mxu0 %v516
  %764 = vmatmul.mubr.bf16.gmra.mxu0 %v340
  %v765 = vpop.f32.mrf.mxu0
  %v766 = vadd.f32 0.0, %v765
  %v767 = vpop.f32.mrf.mxu0
  %v768 = vpop.f32.mrf.mxu0
  %v769 = vadd.f32 0.0, %v768
  %v770 = vpop.f32.mrf.mxu0
  %771 = vmatprep.mubr.bf16.mxu0 %v519
  %772 = vmatmul.mubr.bf16.gmra.mxu0 %v342
  %v773 = vpop.f32.mrf.mxu0
  %v774 = vadd.f32 0.0, %v773
  %v775 = vpop.f32.mrf.mxu0
  %v776 = vpop.f32.mrf.mxu0
  %v777 = vadd.f32 0.0, %v776
  %v778 = vpop.f32.mrf.mxu0
  %779 = vmatprep.mubr.bf16.mxu0 %v522
  %780 = vmatmul.mubr.bf16.gmra.mxu0 %v344
  %v781 = vpop.f32.mrf.mxu0
  %v782 = vadd.f32 0.0, %v781
  %v783 = vpop.f32.mrf.mxu0
  %v784 = vpop.f32.mrf.mxu0
  %v785 = vadd.f32 0.0, %v784
  %v786 = vpop.f32.mrf.mxu0
  %787 = vmatprep.mubr.bf16.mxu0 %v525
  %788 = vmatmul.mubr.bf16.gmra.mxu0 %v346
  %v789 = vpop.f32.mrf.mxu0
  %v790 = vadd.f32 0.0, %v789
  %v791 = vpop.f32.mrf.mxu0
  %v792 = vpop.f32.mrf.mxu0
  %v793 = vadd.f32 0.0, %v792
  %v794 = vpop.f32.mrf.mxu0
  %795 = vmatprep.mubr.bf16.mxu0 %v528
  %796 = vmatmul.mubr.bf16.gmra.mxu0 %v348
  %v797 = vpop.f32.mrf.mxu0
  %v798 = vadd.f32 0.0, %v797
  %v799 = vpop.f32.mrf.mxu0
  %v800 = vpop.f32.mrf.mxu0
  %v801 = vadd.f32 0.0, %v800
  %v802 = vpop.f32.mrf.mxu0
  %803 = vmatprep.mubr.bf16.mxu0 %v531
  %804 = vmatmul.mubr.bf16.gmra.mxu0 %v350
  %v805 = vpop.f32.mrf.mxu0
  %v806 = vadd.f32 0.0, %v805
  %v807 = vpop.f32.mrf.mxu0
  %v808 = vpop.f32.mrf.mxu0
  %v809 = vadd.f32 0.0, %v808
  %v810 = vpop.f32.mrf.mxu0
  %811 = vmatprep.mubr.bf16.mxu0 %v534
  %812 = vmatmul.mubr.bf16.gmra.mxu0 %v352
  %v813 = vpop.f32.mrf.mxu0
  %v814 = vadd.f32 0.0, %v813
  %v815 = vpop.f32.mrf.mxu0
  %v816 = vpop.f32.mrf.mxu0
  %v817 = vadd.f32 0.0, %v816
  %v818 = vpop.f32.mrf.mxu0
  %819 = vmatprep.mubr.bf16.mxu0 %v537
  %820 = vmatmul.mubr.bf16.gmra.mxu0 %v354
  %v821 = vpop.f32.mrf.mxu0
  %v822 = vadd.f32 0.0, %v821
  %v823 = vpop.f32.mrf.mxu0
  %v824 = vpop.f32.mrf.mxu0
  %v825 = vadd.f32 0.0, %v824
  %v826 = vpop.f32.mrf.mxu0
  %827 = vdwg.mxu0
  %v828 = vsel %vm442, %v574, 0.0
  %v829 = vsel %vm442, %v577, 0.0
  %v830 = vadd.f32 %v828, %v829
  %v831 = vsel %vm442, %v582, 0.0
  %v832 = vadd.f32 %v830, %v831
  %v833 = vsel %vm442, %v585, 0.0
  %v834 = vadd.f32 %v832, %v833
  %v835 = vsel %vm442, %v590, 0.0
  %v836 = vadd.f32 %v834, %v835
  %v837 = vsel %vm442, %v593, 0.0
  %v838 = vadd.f32 %v836, %v837
  %v839 = vsel %vm442, %v598, 0.0
  %v840 = vadd.f32 %v838, %v839
  %v841 = vsel %vm442, %v601, 0.0
  %v842 = vadd.f32 %v840, %v841
  %v843 = vsel %vm442, %v606, 0.0
  %v844 = vadd.f32 %v842, %v843
  %v845 = vsel %vm442, %v609, 0.0
  %v846 = vadd.f32 %v844, %v845
  %v847 = vsel %vm442, %v614, 0.0
  %v848 = vadd.f32 %v846, %v847
  %v849 = vsel %vm442, %v617, 0.0
  %v850 = vadd.f32 %v848, %v849
  %v851 = vsel %vm442, %v622, 0.0
  %v852 = vadd.f32 %v850, %v851
  %v853 = vsel %vm442, %v625, 0.0
  %v854 = vadd.f32 %v852, %v853
  %v855 = vsel %vm442, %v630, 0.0
  %v856 = vadd.f32 %v854, %v855
  %v857 = vsel %vm442, %v633, 0.0
  %v858 = vadd.f32 %v856, %v857
  %v859 = vsel %vm442, %v638, 0.0
  %v860 = vadd.f32 %v858, %v859
  %v861 = vsel %vm442, %v641, 0.0
  %v862 = vadd.f32 %v860, %v861
  %v863 = vsel %vm442, %v646, 0.0
  %v864 = vadd.f32 %v862, %v863
  %v865 = vsel %vm442, %v649, 0.0
  %v866 = vadd.f32 %v864, %v865
  %v867 = vsel %vm442, %v654, 0.0
  %v868 = vadd.f32 %v866, %v867
  %v869 = vsel %vm442, %v657, 0.0
  %v870 = vadd.f32 %v868, %v869
  %v871 = vsel %vm442, %v662, 0.0
  %v872 = vadd.f32 %v870, %v871
  %v873 = vsel %vm442, %v665, 0.0
  %v874 = vadd.f32 %v872, %v873
  %v875 = vsel %vm442, %v670, 0.0
  %v876 = vadd.f32 %v874, %v875
  %v877 = vsel %vm442, %v673, 0.0
  %v878 = vadd.f32 %v876, %v877
  %v879 = vsel %vm442, %v678, 0.0
  %v880 = vadd.f32 %v878, %v879
  %v881 = vsel %vm442, %v681, 0.0
  %v882 = vadd.f32 %v880, %v881
  %v883 = vsel %vm442, %v686, 0.0
  %v884 = vadd.f32 %v882, %v883
  %v885 = vsel %vm442, %v689, 0.0
  %v886 = vadd.f32 %v884, %v885
  %v887 = vsel %vm442, %v694, 0.0
  %v888 = vadd.f32 %v886, %v887
  %v889 = vsel %vm442, %v697, 0.0
  %v890 = vadd.f32 %v888, %v889
  %v891 = vsel %vm442, %v702, 0.0
  %v892 = vadd.f32 %v890, %v891
  %v893 = vsel %vm442, %v705, 0.0
  %v894 = vadd.f32 %v892, %v893
  %v895 = vsel %vm442, %v710, 0.0
  %v896 = vadd.f32 %v894, %v895
  %v897 = vsel %vm442, %v713, 0.0
  %v898 = vadd.f32 %v896, %v897
  %v899 = vsel %vm442, %v718, 0.0
  %v900 = vadd.f32 %v898, %v899
  %v901 = vsel %vm442, %v721, 0.0
  %v902 = vadd.f32 %v900, %v901
  %v903 = vsel %vm442, %v726, 0.0
  %v904 = vadd.f32 %v902, %v903
  %v905 = vsel %vm442, %v729, 0.0
  %v906 = vadd.f32 %v904, %v905
  %v907 = vsel %vm442, %v734, 0.0
  %v908 = vadd.f32 %v906, %v907
  %v909 = vsel %vm442, %v737, 0.0
  %v910 = vadd.f32 %v908, %v909
  %v911 = vsel %vm442, %v742, 0.0
  %v912 = vadd.f32 %v910, %v911
  %v913 = vsel %vm442, %v745, 0.0
  %v914 = vadd.f32 %v912, %v913
  %v915 = vsel %vm442, %v750, 0.0
  %v916 = vadd.f32 %v914, %v915
  %v917 = vsel %vm442, %v753, 0.0
  %v918 = vadd.f32 %v916, %v917
  %v919 = vsel %vm442, %v758, 0.0
  %v920 = vadd.f32 %v918, %v919
  %v921 = vsel %vm442, %v761, 0.0
  %v922 = vadd.f32 %v920, %v921
  %v923 = vsel %vm442, %v766, 0.0
  %v924 = vadd.f32 %v922, %v923
  %v925 = vsel %vm442, %v769, 0.0
  %v926 = vadd.f32 %v924, %v925
  %v927 = vsel %vm442, %v774, 0.0
  %v928 = vadd.f32 %v926, %v927
  %v929 = vsel %vm442, %v777, 0.0
  %v930 = vadd.f32 %v928, %v929
  %v931 = vsel %vm442, %v782, 0.0
  %v932 = vadd.f32 %v930, %v931
  %v933 = vsel %vm442, %v785, 0.0
  %v934 = vadd.f32 %v932, %v933
  %v935 = vsel %vm442, %v790, 0.0
  %v936 = vadd.f32 %v934, %v935
  %v937 = vsel %vm442, %v793, 0.0
  %v938 = vadd.f32 %v936, %v937
  %v939 = vsel %vm442, %v798, 0.0
  %v940 = vadd.f32 %v938, %v939
  %v941 = vsel %vm442, %v801, 0.0
  %v942 = vadd.f32 %v940, %v941
  %v943 = vsel %vm442, %v806, 0.0
  %v944 = vadd.f32 %v942, %v943
  %v945 = vsel %vm442, %v809, 0.0
  %v946 = vadd.f32 %v944, %v945
  %v947 = vsel %vm442, %v814, 0.0
  %v948 = vadd.f32 %v946, %v947
  %v949 = vsel %vm442, %v817, 0.0
  %v950 = vadd.f32 %v948, %v949
  %v951 = vsel %vm442, %v822, 0.0
  %v952 = vadd.f32 %v950, %v951
  %v953 = vsel %vm442, %v825, 0.0
  %v954 = vadd.f32 %v952, %v953
  %v955 = vrot.slane %v954, 4
  %v956 = vadd.f32 %v954, %v955
  %v957 = vrot.slane %v956, 2
  %v958 = vadd.f32 %v956, %v957
  %v959 = vrot.slane %v958, 1
  %v960 = vadd.f32 %v958, %v959
  %v961 = vmul.f32 %v960, 0.001953125
  %v962 = vmul.f32 %v574, %v574
  %v963 = vmul.f32 %v577, %v577
  %v964 = vmul.f32 %v582, %v582
  %v965 = vmul.f32 %v585, %v585
  %v966 = vmul.f32 %v590, %v590
  %v967 = vmul.f32 %v593, %v593
  %v968 = vmul.f32 %v598, %v598
  %v969 = vmul.f32 %v601, %v601
  %v970 = vmul.f32 %v606, %v606
  %v971 = vmul.f32 %v609, %v609
  %v972 = vmul.f32 %v614, %v614
  %v973 = vmul.f32 %v617, %v617
  %v974 = vmul.f32 %v622, %v622
  %v975 = vmul.f32 %v625, %v625
  %v976 = vmul.f32 %v630, %v630
  %v977 = vmul.f32 %v633, %v633
  %v978 = vmul.f32 %v638, %v638
  %v979 = vmul.f32 %v641, %v641
  %v980 = vmul.f32 %v646, %v646
  %v981 = vmul.f32 %v649, %v649
  %v982 = vmul.f32 %v654, %v654
  %v983 = vmul.f32 %v657, %v657
  %v984 = vmul.f32 %v662, %v662
  %v985 = vmul.f32 %v665, %v665
  %v986 = vmul.f32 %v670, %v670
  %v987 = vmul.f32 %v673, %v673
  %v988 = vmul.f32 %v678, %v678
  %v989 = vmul.f32 %v681, %v681
  %v990 = vmul.f32 %v686, %v686
  %v991 = vmul.f32 %v689, %v689
  %v992 = vmul.f32 %v694, %v694
  %v993 = vmul.f32 %v697, %v697
  %v994 = vmul.f32 %v702, %v702
  %v995 = vmul.f32 %v705, %v705
  %v996 = vmul.f32 %v710, %v710
  %v997 = vmul.f32 %v713, %v713
  %v998 = vmul.f32 %v718, %v718
  %v999 = vmul.f32 %v721, %v721
  %v1000 = vmul.f32 %v726, %v726
  %v1001 = vmul.f32 %v729, %v729
  %v1002 = vmul.f32 %v734, %v734
  %v1003 = vmul.f32 %v737, %v737
  %v1004 = vmul.f32 %v742, %v742
  %v1005 = vmul.f32 %v745, %v745
  %v1006 = vmul.f32 %v750, %v750
  %v1007 = vmul.f32 %v753, %v753
  %v1008 = vmul.f32 %v758, %v758
  %v1009 = vmul.f32 %v761, %v761
  %v1010 = vmul.f32 %v766, %v766
  %v1011 = vmul.f32 %v769, %v769
  %v1012 = vmul.f32 %v774, %v774
  %v1013 = vmul.f32 %v777, %v777
  %v1014 = vmul.f32 %v782, %v782
  %v1015 = vmul.f32 %v785, %v785
  %v1016 = vmul.f32 %v790, %v790
  %v1017 = vmul.f32 %v793, %v793
  %v1018 = vmul.f32 %v798, %v798
  %v1019 = vmul.f32 %v801, %v801
  %v1020 = vmul.f32 %v806, %v806
  %v1021 = vmul.f32 %v809, %v809
  %v1022 = vmul.f32 %v814, %v814
  %v1023 = vmul.f32 %v817, %v817
  %v1024 = vmul.f32 %v822, %v822
  %v1025 = vmul.f32 %v825, %v825
  %v1026 = vsel %vm442, %v962, 0.0
  %v1027 = vsel %vm442, %v963, 0.0
  %v1028 = vadd.f32 %v1026, %v1027
  %v1029 = vsel %vm442, %v964, 0.0
  %v1030 = vadd.f32 %v1028, %v1029
  %v1031 = vsel %vm442, %v965, 0.0
  %v1032 = vadd.f32 %v1030, %v1031
  %v1033 = vsel %vm442, %v966, 0.0
  %v1034 = vadd.f32 %v1032, %v1033
  %v1035 = vsel %vm442, %v967, 0.0
  %v1036 = vadd.f32 %v1034, %v1035
  %v1037 = vsel %vm442, %v968, 0.0
  %v1038 = vadd.f32 %v1036, %v1037
  %v1039 = vsel %vm442, %v969, 0.0
  %v1040 = vadd.f32 %v1038, %v1039
  %v1041 = vsel %vm442, %v970, 0.0
  %v1042 = vadd.f32 %v1040, %v1041
  %v1043 = vsel %vm442, %v971, 0.0
  %v1044 = vadd.f32 %v1042, %v1043
  %v1045 = vsel %vm442, %v972, 0.0
  %v1046 = vadd.f32 %v1044, %v1045
  %v1047 = vsel %vm442, %v973, 0.0
  %v1048 = vadd.f32 %v1046, %v1047
  %v1049 = vsel %vm442, %v974, 0.0
  %v1050 = vadd.f32 %v1048, %v1049
  %v1051 = vsel %vm442, %v975, 0.0
  %v1052 = vadd.f32 %v1050, %v1051
  %v1053 = vsel %vm442, %v976, 0.0
  %v1054 = vadd.f32 %v1052, %v1053
  %v1055 = vsel %vm442, %v977, 0.0
  %v1056 = vadd.f32 %v1054, %v1055
  %v1057 = vsel %vm442, %v978, 0.0
  %v1058 = vadd.f32 %v1056, %v1057
  %v1059 = vsel %vm442, %v979, 0.0
  %v1060 = vadd.f32 %v1058, %v1059
  %v1061 = vsel %vm442, %v980, 0.0
  %v1062 = vadd.f32 %v1060, %v1061
  %v1063 = vsel %vm442, %v981, 0.0
  %v1064 = vadd.f32 %v1062, %v1063
  %v1065 = vsel %vm442, %v982, 0.0
  %v1066 = vadd.f32 %v1064, %v1065
  %v1067 = vsel %vm442, %v983, 0.0
  %v1068 = vadd.f32 %v1066, %v1067
  %v1069 = vsel %vm442, %v984, 0.0
  %v1070 = vadd.f32 %v1068, %v1069
  %v1071 = vsel %vm442, %v985, 0.0
  %v1072 = vadd.f32 %v1070, %v1071
  %v1073 = vsel %vm442, %v986, 0.0
  %v1074 = vadd.f32 %v1072, %v1073
  %v1075 = vsel %vm442, %v987, 0.0
  %v1076 = vadd.f32 %v1074, %v1075
  %v1077 = vsel %vm442, %v988, 0.0
  %v1078 = vadd.f32 %v1076, %v1077
  %v1079 = vsel %vm442, %v989, 0.0
  %v1080 = vadd.f32 %v1078, %v1079
  %v1081 = vsel %vm442, %v990, 0.0
  %v1082 = vadd.f32 %v1080, %v1081
  %v1083 = vsel %vm442, %v991, 0.0
  %v1084 = vadd.f32 %v1082, %v1083
  %v1085 = vsel %vm442, %v992, 0.0
  %v1086 = vadd.f32 %v1084, %v1085
  %v1087 = vsel %vm442, %v993, 0.0
  %v1088 = vadd.f32 %v1086, %v1087
  %v1089 = vsel %vm442, %v994, 0.0
  %v1090 = vadd.f32 %v1088, %v1089
  %v1091 = vsel %vm442, %v995, 0.0
  %v1092 = vadd.f32 %v1090, %v1091
  %v1093 = vsel %vm442, %v996, 0.0
  %v1094 = vadd.f32 %v1092, %v1093
  %v1095 = vsel %vm442, %v997, 0.0
  %v1096 = vadd.f32 %v1094, %v1095
  %v1097 = vsel %vm442, %v998, 0.0
  %v1098 = vadd.f32 %v1096, %v1097
  %v1099 = vsel %vm442, %v999, 0.0
  %v1100 = vadd.f32 %v1098, %v1099
  %v1101 = vsel %vm442, %v1000, 0.0
  %v1102 = vadd.f32 %v1100, %v1101
  %v1103 = vsel %vm442, %v1001, 0.0
  %v1104 = vadd.f32 %v1102, %v1103
  %v1105 = vsel %vm442, %v1002, 0.0
  %v1106 = vadd.f32 %v1104, %v1105
  %v1107 = vsel %vm442, %v1003, 0.0
  %v1108 = vadd.f32 %v1106, %v1107
  %v1109 = vsel %vm442, %v1004, 0.0
  %v1110 = vadd.f32 %v1108, %v1109
  %v1111 = vsel %vm442, %v1005, 0.0
  %v1112 = vadd.f32 %v1110, %v1111
  %v1113 = vsel %vm442, %v1006, 0.0
  %v1114 = vadd.f32 %v1112, %v1113
  %v1115 = vsel %vm442, %v1007, 0.0
  %v1116 = vadd.f32 %v1114, %v1115
  %v1117 = vsel %vm442, %v1008, 0.0
  %v1118 = vadd.f32 %v1116, %v1117
  %v1119 = vsel %vm442, %v1009, 0.0
  %v1120 = vadd.f32 %v1118, %v1119
  %v1121 = vsel %vm442, %v1010, 0.0
  %v1122 = vadd.f32 %v1120, %v1121
  %v1123 = vsel %vm442, %v1011, 0.0
  %v1124 = vadd.f32 %v1122, %v1123
  %v1125 = vsel %vm442, %v1012, 0.0
  %v1126 = vadd.f32 %v1124, %v1125
  %v1127 = vsel %vm442, %v1013, 0.0
  %v1128 = vadd.f32 %v1126, %v1127
  %v1129 = vsel %vm442, %v1014, 0.0
  %v1130 = vadd.f32 %v1128, %v1129
  %v1131 = vsel %vm442, %v1015, 0.0
  %v1132 = vadd.f32 %v1130, %v1131
  %v1133 = vsel %vm442, %v1016, 0.0
  %v1134 = vadd.f32 %v1132, %v1133
  %v1135 = vsel %vm442, %v1017, 0.0
  %v1136 = vadd.f32 %v1134, %v1135
  %v1137 = vsel %vm442, %v1018, 0.0
  %v1138 = vadd.f32 %v1136, %v1137
  %v1139 = vsel %vm442, %v1019, 0.0
  %v1140 = vadd.f32 %v1138, %v1139
  %v1141 = vsel %vm442, %v1020, 0.0
  %v1142 = vadd.f32 %v1140, %v1141
  %v1143 = vsel %vm442, %v1021, 0.0
  %v1144 = vadd.f32 %v1142, %v1143
  %v1145 = vsel %vm442, %v1022, 0.0
  %v1146 = vadd.f32 %v1144, %v1145
  %v1147 = vsel %vm442, %v1023, 0.0
  %v1148 = vadd.f32 %v1146, %v1147
  %v1149 = vsel %vm442, %v1024, 0.0
  %v1150 = vadd.f32 %v1148, %v1149
  %v1151 = vsel %vm442, %v1025, 0.0
  %v1152 = vadd.f32 %v1150, %v1151
  %v1153 = vrot.slane %v1152, 4
  %v1154 = vadd.f32 %v1152, %v1153
  %v1155 = vrot.slane %v1154, 2
  %v1156 = vadd.f32 %v1154, %v1155
  %v1157 = vrot.slane %v1156, 1
  %v1158 = vadd.f32 %v1156, %v1157
  %v1159 = vmul.f32 %v1158, 0.001953125
  %v1160 = vmul.f32 %v961, %v961
  %v1161 = vsub.f32 %v1159, %v1160
  %v1162 = vld [vmem:[%s2] sm:$0x1]
  %v1163 = vadd.f32 %v1161, 1e-05
  %v1164 = vrsqrt.pop %v1163
  %v1165 = vmul.f32 %v1162, %v1164
  %v1166 = vld [vmem:[%s3] sm:$0x1]
  %v1167 = vmul.f32 %v961, %v1165
  %v1168 = vsub.f32 %v1166, %v1167
  %v1170 = vlaneseq
  %v1171 = vshrl.u32 %v1170, 7
  %v1172 = vsub.s32 0, %v1171
  %v1173 = vrot.slane %v1165, %v1172
  %v1175 = vmul.f32 %v574, %v1173
  %v1176 = vmul.f32 %v577, %v1173
  %v1177 = vmul.f32 %v582, %v1173
  %v1178 = vmul.f32 %v585, %v1173
  %v1179 = vmul.f32 %v590, %v1173
  %v1180 = vmul.f32 %v593, %v1173
  %v1181 = vmul.f32 %v598, %v1173
  %v1182 = vmul.f32 %v601, %v1173
  %v1183 = vmul.f32 %v606, %v1173
  %v1184 = vmul.f32 %v609, %v1173
  %v1185 = vmul.f32 %v614, %v1173
  %v1186 = vmul.f32 %v617, %v1173
  %v1187 = vmul.f32 %v622, %v1173
  %v1188 = vmul.f32 %v625, %v1173
  %v1189 = vmul.f32 %v630, %v1173
  %v1190 = vmul.f32 %v633, %v1173
  %v1191 = vmul.f32 %v638, %v1173
  %v1192 = vmul.f32 %v641, %v1173
  %v1193 = vmul.f32 %v646, %v1173
  %v1194 = vmul.f32 %v649, %v1173
  %v1195 = vmul.f32 %v654, %v1173
  %v1196 = vmul.f32 %v657, %v1173
  %v1197 = vmul.f32 %v662, %v1173
  %v1198 = vmul.f32 %v665, %v1173
  %v1199 = vmul.f32 %v670, %v1173
  %v1200 = vmul.f32 %v673, %v1173
  %v1201 = vmul.f32 %v678, %v1173
  %v1202 = vmul.f32 %v681, %v1173
  %v1203 = vmul.f32 %v686, %v1173
  %v1204 = vmul.f32 %v689, %v1173
  %v1205 = vmul.f32 %v694, %v1173
  %v1206 = vmul.f32 %v697, %v1173
  %v1207 = vmul.f32 %v702, %v1173
  %v1208 = vmul.f32 %v705, %v1173
  %v1209 = vmul.f32 %v710, %v1173
  %v1210 = vmul.f32 %v713, %v1173
  %v1211 = vmul.f32 %v718, %v1173
  %v1212 = vmul.f32 %v721, %v1173
  %v1213 = vmul.f32 %v726, %v1173
  %v1214 = vmul.f32 %v729, %v1173
  %v1215 = vmul.f32 %v734, %v1173
  %v1216 = vmul.f32 %v737, %v1173
  %v1217 = vmul.f32 %v742, %v1173
  %v1218 = vmul.f32 %v745, %v1173
  %v1219 = vmul.f32 %v750, %v1173
  %v1220 = vmul.f32 %v753, %v1173
  %v1221 = vmul.f32 %v758, %v1173
  %v1222 = vmul.f32 %v761, %v1173
  %v1223 = vmul.f32 %v766, %v1173
  %v1224 = vmul.f32 %v769, %v1173
  %v1225 = vmul.f32 %v774, %v1173
  %v1226 = vmul.f32 %v777, %v1173
  %v1227 = vmul.f32 %v782, %v1173
  %v1228 = vmul.f32 %v785, %v1173
  %v1229 = vmul.f32 %v790, %v1173
  %v1230 = vmul.f32 %v793, %v1173
  %v1231 = vmul.f32 %v798, %v1173
  %v1232 = vmul.f32 %v801, %v1173
  %v1233 = vmul.f32 %v806, %v1173
  %v1234 = vmul.f32 %v809, %v1173
  %v1235 = vmul.f32 %v814, %v1173
  %v1236 = vmul.f32 %v817, %v1173
  %v1237 = vmul.f32 %v822, %v1173
  %v1238 = vmul.f32 %v825, %v1173
  %v1240 = vlaneseq
  %v1241 = vshrl.u32 %v1240, 7
  %v1242 = vsub.s32 0, %v1241
  %v1243 = vrot.slane %v1168, %v1242
  %v1245 = vadd.f32 %v1175, %v1243
  %v1246 = vadd.f32 %v1176, %v1243
  %v1247 = vadd.f32 %v1177, %v1243
  %v1248 = vadd.f32 %v1178, %v1243
  %v1249 = vadd.f32 %v1179, %v1243
  %v1250 = vadd.f32 %v1180, %v1243
  %v1251 = vadd.f32 %v1181, %v1243
  %v1252 = vadd.f32 %v1182, %v1243
  %v1253 = vadd.f32 %v1183, %v1243
  %v1254 = vadd.f32 %v1184, %v1243
  %v1255 = vadd.f32 %v1185, %v1243
  %v1256 = vadd.f32 %v1186, %v1243
  %v1257 = vadd.f32 %v1187, %v1243
  %v1258 = vadd.f32 %v1188, %v1243
  %v1259 = vadd.f32 %v1189, %v1243
  %v1260 = vadd.f32 %v1190, %v1243
  %v1261 = vadd.f32 %v1191, %v1243
  %v1262 = vadd.f32 %v1192, %v1243
  %v1263 = vadd.f32 %v1193, %v1243
  %v1264 = vadd.f32 %v1194, %v1243
  %v1265 = vadd.f32 %v1195, %v1243
  %v1266 = vadd.f32 %v1196, %v1243
  %v1267 = vadd.f32 %v1197, %v1243
  %v1268 = vadd.f32 %v1198, %v1243
  %v1269 = vadd.f32 %v1199, %v1243
  %v1270 = vadd.f32 %v1200, %v1243
  %v1271 = vadd.f32 %v1201, %v1243
  %v1272 = vadd.f32 %v1202, %v1243
  %v1273 = vadd.f32 %v1203, %v1243
  %v1274 = vadd.f32 %v1204, %v1243
  %v1275 = vadd.f32 %v1205, %v1243
  %v1276 = vadd.f32 %v1206, %v1243
  %v1277 = vadd.f32 %v1207, %v1243
  %v1278 = vadd.f32 %v1208, %v1243
  %v1279 = vadd.f32 %v1209, %v1243
  %v1280 = vadd.f32 %v1210, %v1243
  %v1281 = vadd.f32 %v1211, %v1243
  %v1282 = vadd.f32 %v1212, %v1243
  %v1283 = vadd.f32 %v1213, %v1243
  %v1284 = vadd.f32 %v1214, %v1243
  %v1285 = vadd.f32 %v1215, %v1243
  %v1286 = vadd.f32 %v1216, %v1243
  %v1287 = vadd.f32 %v1217, %v1243
  %v1288 = vadd.f32 %v1218, %v1243
  %v1289 = vadd.f32 %v1219, %v1243
  %v1290 = vadd.f32 %v1220, %v1243
  %v1291 = vadd.f32 %v1221, %v1243
  %v1292 = vadd.f32 %v1222, %v1243
  %v1293 = vadd.f32 %v1223, %v1243
  %v1294 = vadd.f32 %v1224, %v1243
  %v1295 = vadd.f32 %v1225, %v1243
  %v1296 = vadd.f32 %v1226, %v1243
  %v1297 = vadd.f32 %v1227, %v1243
  %v1298 = vadd.f32 %v1228, %v1243
  %v1299 = vadd.f32 %v1229, %v1243
  %v1300 = vadd.f32 %v1230, %v1243
  %v1301 = vadd.f32 %v1231, %v1243
  %v1302 = vadd.f32 %v1232, %v1243
  %v1303 = vadd.f32 %v1233, %v1243
  %v1304 = vadd.f32 %v1234, %v1243
  %v1305 = vadd.f32 %v1235, %v1243
  %v1306 = vadd.f32 %v1236, %v1243
  %v1307 = vadd.f32 %v1237, %v1243
  %v1308 = vadd.f32 %v1238, %v1243
  %v1309 = vmax.f32 %v1245, 0.0
  %v1310 = vmax.f32 %v1246, 0.0
  %v1311 = vmax.f32 %v1247, 0.0
  %v1312 = vmax.f32 %v1248, 0.0
  %v1313 = vmax.f32 %v1249, 0.0
  %v1314 = vmax.f32 %v1250, 0.0
  %v1315 = vmax.f32 %v1251, 0.0
  %v1316 = vmax.f32 %v1252, 0.0
  %v1317 = vmax.f32 %v1253, 0.0
  %v1318 = vmax.f32 %v1254, 0.0
  %v1319 = vmax.f32 %v1255, 0.0
  %v1320 = vmax.f32 %v1256, 0.0
  %v1321 = vmax.f32 %v1257, 0.0
  %v1322 = vmax.f32 %v1258, 0.0
  %v1323 = vmax.f32 %v1259, 0.0
  %v1324 = vmax.f32 %v1260, 0.0
  %v1325 = vmax.f32 %v1261, 0.0
  %v1326 = vmax.f32 %v1262, 0.0
  %v1327 = vmax.f32 %v1263, 0.0
  %v1328 = vmax.f32 %v1264, 0.0
  %v1329 = vmax.f32 %v1265, 0.0
  %v1330 = vmax.f32 %v1266, 0.0
  %v1331 = vmax.f32 %v1267, 0.0
  %v1332 = vmax.f32 %v1268, 0.0
  %v1333 = vmax.f32 %v1269, 0.0
  %v1334 = vmax.f32 %v1270, 0.0
  %v1335 = vmax.f32 %v1271, 0.0
  %v1336 = vmax.f32 %v1272, 0.0
  %v1337 = vmax.f32 %v1273, 0.0
  %v1338 = vmax.f32 %v1274, 0.0
  %v1339 = vmax.f32 %v1275, 0.0
  %v1340 = vmax.f32 %v1276, 0.0
  %v1341 = vmax.f32 %v1277, 0.0
  %v1342 = vmax.f32 %v1278, 0.0
  %v1343 = vmax.f32 %v1279, 0.0
  %v1344 = vmax.f32 %v1280, 0.0
  %v1345 = vmax.f32 %v1281, 0.0
  %v1346 = vmax.f32 %v1282, 0.0
  %v1347 = vmax.f32 %v1283, 0.0
  %v1348 = vmax.f32 %v1284, 0.0
  %v1349 = vmax.f32 %v1285, 0.0
  %v1350 = vmax.f32 %v1286, 0.0
  %v1351 = vmax.f32 %v1287, 0.0
  %v1352 = vmax.f32 %v1288, 0.0
  %v1353 = vmax.f32 %v1289, 0.0
  %v1354 = vmax.f32 %v1290, 0.0
  %v1355 = vmax.f32 %v1291, 0.0
  %v1356 = vmax.f32 %v1292, 0.0
  %v1357 = vmax.f32 %v1293, 0.0
  %v1358 = vmax.f32 %v1294, 0.0
  %v1359 = vmax.f32 %v1295, 0.0
  %v1360 = vmax.f32 %v1296, 0.0
  %v1361 = vmax.f32 %v1297, 0.0
  %v1362 = vmax.f32 %v1298, 0.0
  %v1363 = vmax.f32 %v1299, 0.0
  %v1364 = vmax.f32 %v1300, 0.0
  %v1365 = vmax.f32 %v1301, 0.0
  %v1366 = vmax.f32 %v1302, 0.0
  %v1367 = vmax.f32 %v1303, 0.0
  %v1368 = vmax.f32 %v1304, 0.0
  %v1369 = vmax.f32 %v1305, 0.0
  %v1370 = vmax.f32 %v1306, 0.0
  %v1371 = vmax.f32 %v1307, 0.0
  %v1372 = vmax.f32 %v1308, 0.0
  %v1373 = vpack.c.bf16 %v1310, %v1309
  %v1374 = vpack.c.bf16 %v1312, %v1311
  %v1375 = vpack.c.bf16 %v1314, %v1313
  %v1376 = vpack.c.bf16 %v1316, %v1315
  %v1377 = vpack.c.bf16 %v1318, %v1317
  %v1378 = vpack.c.bf16 %v1320, %v1319
  %v1379 = vpack.c.bf16 %v1322, %v1321
  %v1380 = vpack.c.bf16 %v1324, %v1323
  %v1381 = vpack.c.bf16 %v1326, %v1325
  %v1382 = vpack.c.bf16 %v1328, %v1327
  %v1383 = vpack.c.bf16 %v1330, %v1329
  %v1384 = vpack.c.bf16 %v1332, %v1331
  %v1385 = vpack.c.bf16 %v1334, %v1333
  %v1386 = vpack.c.bf16 %v1336, %v1335
  %v1387 = vpack.c.bf16 %v1338, %v1337
  %v1388 = vpack.c.bf16 %v1340, %v1339
  %v1389 = vpack.c.bf16 %v1342, %v1341
  %v1390 = vpack.c.bf16 %v1344, %v1343
  %v1391 = vpack.c.bf16 %v1346, %v1345
  %v1392 = vpack.c.bf16 %v1348, %v1347
  %v1393 = vpack.c.bf16 %v1350, %v1349
  %v1394 = vpack.c.bf16 %v1352, %v1351
  %v1395 = vpack.c.bf16 %v1354, %v1353
  %v1396 = vpack.c.bf16 %v1356, %v1355
  %v1397 = vpack.c.bf16 %v1358, %v1357
  %v1398 = vpack.c.bf16 %v1360, %v1359
  %v1399 = vpack.c.bf16 %v1362, %v1361
  %v1400 = vpack.c.bf16 %v1364, %v1363
  %v1401 = vpack.c.bf16 %v1366, %v1365
  %v1402 = vpack.c.bf16 %v1368, %v1367
  %v1403 = vpack.c.bf16 %v1370, %v1369
  %v1404 = vpack.c.bf16 %v1372, %v1371
  %v1437 = vunpack.c.l.b16 %v1373
  %v1438 = vunpack.c.h.b16 %v1373
  %v1439 = vunpack.c.l.b16 %v1374
  %v1440 = vunpack.c.h.b16 %v1374
  %v1441 = vunpack.c.l.b16 %v1375
  %v1442 = vunpack.c.h.b16 %v1375
  %v1443 = vunpack.c.l.b16 %v1376
  %v1444 = vunpack.c.h.b16 %v1376
  %v1445 = vunpack.c.l.b16 %v1377
  %v1446 = vunpack.c.h.b16 %v1377
  %v1447 = vunpack.c.l.b16 %v1378
  %v1448 = vunpack.c.h.b16 %v1378
  %v1449 = vunpack.c.l.b16 %v1379
  %v1450 = vunpack.c.h.b16 %v1379
  %v1451 = vunpack.c.l.b16 %v1380
  %v1452 = vunpack.c.h.b16 %v1380
  %v1453 = vunpack.c.l.b16 %v1381
  %v1454 = vunpack.c.h.b16 %v1381
  %v1455 = vunpack.c.l.b16 %v1382
  %v1456 = vunpack.c.h.b16 %v1382
  %v1457 = vunpack.c.l.b16 %v1383
  %v1458 = vunpack.c.h.b16 %v1383
  %v1459 = vunpack.c.l.b16 %v1384
  %v1460 = vunpack.c.h.b16 %v1384
  %v1461 = vunpack.c.l.b16 %v1385
  %v1462 = vunpack.c.h.b16 %v1385
  %v1463 = vunpack.c.l.b16 %v1386
  %v1464 = vunpack.c.h.b16 %v1386
  %v1465 = vunpack.c.l.b16 %v1387
  %v1466 = vunpack.c.h.b16 %v1387
  %v1467 = vunpack.c.l.b16 %v1388
  %v1468 = vunpack.c.h.b16 %v1388
  %v1469 = vunpack.c.l.b16 %v1389
  %v1470 = vunpack.c.h.b16 %v1389
  %v1471 = vunpack.c.l.b16 %v1390
  %v1472 = vunpack.c.h.b16 %v1390
  %v1473 = vunpack.c.l.b16 %v1391
  %v1474 = vunpack.c.h.b16 %v1391
  %v1475 = vunpack.c.l.b16 %v1392
  %v1476 = vunpack.c.h.b16 %v1392
  %v1477 = vunpack.c.l.b16 %v1393
  %v1478 = vunpack.c.h.b16 %v1393
  %v1479 = vunpack.c.l.b16 %v1394
  %v1480 = vunpack.c.h.b16 %v1394
  %v1481 = vunpack.c.l.b16 %v1395
  %v1482 = vunpack.c.h.b16 %v1395
  %v1483 = vunpack.c.l.b16 %v1396
  %v1484 = vunpack.c.h.b16 %v1396
  %v1485 = vunpack.c.l.b16 %v1397
  %v1486 = vunpack.c.h.b16 %v1397
  %v1487 = vunpack.c.l.b16 %v1398
  %v1488 = vunpack.c.h.b16 %v1398
  %v1489 = vunpack.c.l.b16 %v1399
  %v1490 = vunpack.c.h.b16 %v1399
  %v1491 = vunpack.c.l.b16 %v1400
  %v1492 = vunpack.c.h.b16 %v1400
  %v1493 = vunpack.c.l.b16 %v1401
  %v1494 = vunpack.c.h.b16 %v1401
  %v1495 = vunpack.c.l.b16 %v1402
  %v1496 = vunpack.c.h.b16 %v1402
  %v1497 = vunpack.c.l.b16 %v1403
  %v1498 = vunpack.c.h.b16 %v1403
  %v1499 = vunpack.c.l.b16 %v1404
  %v1500 = vunpack.c.h.b16 %v1404
  %v1501 = vpack.c.b16 %v1437, %v1437
  %v1502 = vpack.c.b16 %v1438, %v1438
  %v1503 = vpack.c.b16 %v1439, %v1439
  %v1504 = vpack.c.b16 %v1440, %v1440
  %v1505 = vpack.c.b16 %v1441, %v1441
  %v1506 = vpack.c.b16 %v1442, %v1442
  %v1507 = vpack.c.b16 %v1443, %v1443
  %v1508 = vpack.c.b16 %v1444, %v1444
  %v1509 = vpack.c.b16 %v1445, %v1445
  %v1510 = vpack.c.b16 %v1446, %v1446
  %v1511 = vpack.c.b16 %v1447, %v1447
  %v1512 = vpack.c.b16 %v1448, %v1448
  %v1513 = vpack.c.b16 %v1449, %v1449
  %v1514 = vpack.c.b16 %v1450, %v1450
  %v1515 = vpack.c.b16 %v1451, %v1451
  %v1516 = vpack.c.b16 %v1452, %v1452
  %v1517 = vpack.c.b16 %v1453, %v1453
  %v1518 = vpack.c.b16 %v1454, %v1454
  %v1519 = vpack.c.b16 %v1455, %v1455
  %v1520 = vpack.c.b16 %v1456, %v1456
  %v1521 = vpack.c.b16 %v1457, %v1457
  %v1522 = vpack.c.b16 %v1458, %v1458
  %v1523 = vpack.c.b16 %v1459, %v1459
  %v1524 = vpack.c.b16 %v1460, %v1460
  %v1525 = vpack.c.b16 %v1461, %v1461
  %v1526 = vpack.c.b16 %v1462, %v1462
  %v1527 = vpack.c.b16 %v1463, %v1463
  %v1528 = vpack.c.b16 %v1464, %v1464
  %v1529 = vpack.c.b16 %v1465, %v1465
  %v1530 = vpack.c.b16 %v1466, %v1466
  %v1531 = vpack.c.b16 %v1467, %v1467
  %v1532 = vpack.c.b16 %v1468, %v1468
  %v1533 = vpack.c.b16 %v1469, %v1469
  %v1534 = vpack.c.b16 %v1470, %v1470
  %v1535 = vpack.c.b16 %v1471, %v1471
  %v1536 = vpack.c.b16 %v1472, %v1472
  %v1537 = vpack.c.b16 %v1473, %v1473
  %v1538 = vpack.c.b16 %v1474, %v1474
  %v1539 = vpack.c.b16 %v1475, %v1475
  %v1540 = vpack.c.b16 %v1476, %v1476
  %v1541 = vpack.c.b16 %v1477, %v1477
  %v1542 = vpack.c.b16 %v1478, %v1478
  %v1543 = vpack.c.b16 %v1479, %v1479
  %v1544 = vpack.c.b16 %v1480, %v1480
  %v1545 = vpack.c.b16 %v1481, %v1481
  %v1546 = vpack.c.b16 %v1482, %v1482
  %v1547 = vpack.c.b16 %v1483, %v1483
  %v1548 = vpack.c.b16 %v1484, %v1484
  %v1549 = vpack.c.b16 %v1485, %v1485
  %v1550 = vpack.c.b16 %v1486, %v1486
  %v1551 = vpack.c.b16 %v1487, %v1487
  %v1552 = vpack.c.b16 %v1488, %v1488
  %v1553 = vpack.c.b16 %v1489, %v1489
  %v1554 = vpack.c.b16 %v1490, %v1490
  %v1555 = vpack.c.b16 %v1491, %v1491
  %v1556 = vpack.c.b16 %v1492, %v1492
  %v1557 = vpack.c.b16 %v1493, %v1493
  %v1558 = vpack.c.b16 %v1494, %v1494
  %v1559 = vpack.c.b16 %v1495, %v1495
  %v1560 = vpack.c.b16 %v1496, %v1496
  %v1561 = vpack.c.b16 %v1497, %v1497
  %v1562 = vpack.c.b16 %v1498, %v1498
  %v1563 = vpack.c.b16 %v1499, %v1499
  %v1564 = vpack.c.b16 %v1500, %v1500
  %vm1629 = vcmask 125952
  %1630 = vst.msk [vmem:[%s4] sm:$0xf] %vm1629, %v1501
  %1631 = vst.msk [vmem:[%s4 + $0x4] sm:$0xf] %vm1629, %v1502
  %1632 = vst.msk [vmem:[%s4 + $0x8] sm:$0xf] %vm1629, %v1503
  %1633 = vst.msk [vmem:[%s4 + $0xc] sm:$0xf] %vm1629, %v1504
  %1634 = vst.msk [vmem:[%s4 + $0x10] sm:$0xf] %vm1629, %v1505
  %1635 = vst.msk [vmem:[%s4 + $0x14] sm:$0xf] %vm1629, %v1506
  %1636 = vst.msk [vmem:[%s4 + $0x18] sm:$0xf] %vm1629, %v1507
  %1637 = vst.msk [vmem:[%s4 + $0x1c] sm:$0xf] %vm1629, %v1508
  %1638 = vst.msk [vmem:[%s4 + $0x20] sm:$0xf] %vm1629, %v1509
  %1639 = vst.msk [vmem:[%s4 + $0x24] sm:$0xf] %vm1629, %v1510
  %1640 = vst.msk [vmem:[%s4 + $0x28] sm:$0xf] %vm1629, %v1511
  %1641 = vst.msk [vmem:[%s4 + $0x2c] sm:$0xf] %vm1629, %v1512
  %1642 = vst.msk [vmem:[%s4 + $0x30] sm:$0xf] %vm1629, %v1513
  %1643 = vst.msk [vmem:[%s4 + $0x34] sm:$0xf] %vm1629, %v1514
  %1644 = vst.msk [vmem:[%s4 + $0x38] sm:$0xf] %vm1629, %v1515
  %1645 = vst.msk [vmem:[%s4 + $0x3c] sm:$0xf] %vm1629, %v1516
  %1646 = vst.msk [vmem:[%s4 + $0x40] sm:$0xf] %vm1629, %v1517
  %1647 = vst.msk [vmem:[%s4 + $0x44] sm:$0xf] %vm1629, %v1518
  %1648 = vst.msk [vmem:[%s4 + $0x48] sm:$0xf] %vm1629, %v1519
  %1649 = vst.msk [vmem:[%s4 + $0x4c] sm:$0xf] %vm1629, %v1520
  %1650 = vst.msk [vmem:[%s4 + $0x50] sm:$0xf] %vm1629, %v1521
  %1651 = vst.msk [vmem:[%s4 + $0x54] sm:$0xf] %vm1629, %v1522
  %1652 = vst.msk [vmem:[%s4 + $0x58] sm:$0xf] %vm1629, %v1523
  %1653 = vst.msk [vmem:[%s4 + $0x5c] sm:$0xf] %vm1629, %v1524
  %1654 = vst.msk [vmem:[%s4 + $0x60] sm:$0xf] %vm1629, %v1525
  %1655 = vst.msk [vmem:[%s4 + $0x64] sm:$0xf] %vm1629, %v1526
  %1656 = vst.msk [vmem:[%s4 + $0x68] sm:$0xf] %vm1629, %v1527
  %1657 = vst.msk [vmem:[%s4 + $0x6c] sm:$0xf] %vm1629, %v1528
  %1658 = vst.msk [vmem:[%s4 + $0x70] sm:$0xf] %vm1629, %v1529
  %1659 = vst.msk [vmem:[%s4 + $0x74] sm:$0xf] %vm1629, %v1530
  %1660 = vst.msk [vmem:[%s4 + $0x78] sm:$0xf] %vm1629, %v1531
  %1661 = vst.msk [vmem:[%s4 + $0x7c] sm:$0xf] %vm1629, %v1532
  %1662 = vst.msk [vmem:[%s4 + $0x80] sm:$0xf] %vm1629, %v1533
  %1663 = vst.msk [vmem:[%s4 + $0x84] sm:$0xf] %vm1629, %v1534
  %1664 = vst.msk [vmem:[%s4 + $0x88] sm:$0xf] %vm1629, %v1535
  %1665 = vst.msk [vmem:[%s4 + $0x8c] sm:$0xf] %vm1629, %v1536
  %1666 = vst.msk [vmem:[%s4 + $0x90] sm:$0xf] %vm1629, %v1537
  %1667 = vst.msk [vmem:[%s4 + $0x94] sm:$0xf] %vm1629, %v1538
  %1668 = vst.msk [vmem:[%s4 + $0x98] sm:$0xf] %vm1629, %v1539
  %1669 = vst.msk [vmem:[%s4 + $0x9c] sm:$0xf] %vm1629, %v1540
  %1670 = vst.msk [vmem:[%s4 + $0xa0] sm:$0xf] %vm1629, %v1541
  %1671 = vst.msk [vmem:[%s4 + $0xa4] sm:$0xf] %vm1629, %v1542
  %1672 = vst.msk [vmem:[%s4 + $0xa8] sm:$0xf] %vm1629, %v1543
  %1673 = vst.msk [vmem:[%s4 + $0xac] sm:$0xf] %vm1629, %v1544
  %1674 = vst.msk [vmem:[%s4 + $0xb0] sm:$0xf] %vm1629, %v1545
  %1675 = vst.msk [vmem:[%s4 + $0xb4] sm:$0xf] %vm1629, %v1546
  %1676 = vst.msk [vmem:[%s4 + $0xb8] sm:$0xf] %vm1629, %v1547
  %1677 = vst.msk [vmem:[%s4 + $0xbc] sm:$0xf] %vm1629, %v1548
  %1678 = vst.msk [vmem:[%s4 + $0xc0] sm:$0xf] %vm1629, %v1549
  %1679 = vst.msk [vmem:[%s4 + $0xc4] sm:$0xf] %vm1629, %v1550
  %1680 = vst.msk [vmem:[%s4 + $0xc8] sm:$0xf] %vm1629, %v1551
  %1681 = vst.msk [vmem:[%s4 + $0xcc] sm:$0xf] %vm1629, %v1552
  %1682 = vst.msk [vmem:[%s4 + $0xd0] sm:$0xf] %vm1629, %v1553
  %1683 = vst.msk [vmem:[%s4 + $0xd4] sm:$0xf] %vm1629, %v1554
  %1684 = vst.msk [vmem:[%s4 + $0xd8] sm:$0xf] %vm1629, %v1555
  %1685 = vst.msk [vmem:[%s4 + $0xdc] sm:$0xf] %vm1629, %v1556
  %1686 = vst.msk [vmem:[%s4 + $0xe0] sm:$0xf] %vm1629, %v1557
  %1687 = vst.msk [vmem:[%s4 + $0xe4] sm:$0xf] %vm1629, %v1558
  %1688 = vst.msk [vmem:[%s4 + $0xe8] sm:$0xf] %vm1629, %v1559
  %1689 = vst.msk [vmem:[%s4 + $0xec] sm:$0xf] %vm1629, %v1560
  %1690 = vst.msk [vmem:[%s4 + $0xf0] sm:$0xf] %vm1629, %v1561
  %1691 = vst.msk [vmem:[%s4 + $0xf4] sm:$0xf] %vm1629, %v1562
  %1692 = vst.msk [vmem:[%s4 + $0xf8] sm:$0xf] %vm1629, %v1563
  %1693 = vst.msk [vmem:[%s4 + $0xfc] sm:$0xf] %vm1629, %v1564
  // Predicated region
  $region18: #{_lambda_.13} parent=0 // pred_check
    _
  $region19: #{_lambda_.13} parent=0 // pred_check_branch
    %1695 = sbr.rel (0) target = $region21
  $region20: #{_lambda_.13} parent=0 // pred_region
    _
  $region21: #{_lambda_.13} parent=0 // pred_fallthru
    _
  // Predicated region
  $region22: #{_lambda_.13} parent=0 // pred_check
    _
  $region23: #{_lambda_.13} parent=0 // pred_check_branch
    %1697 = sbr.rel (0) target = $region25
  $region24: #{_lambda_.13} parent=0 // pred_region
    _
  $region25: #{_lambda_.13} parent=0 // pred_fallthru
    _

// kernel: _lambda_.16
$region0: #{_lambda_.16}
  #allocation0 [shape = 'u32[]', space=smem, size = 0x4, offset = 0x4, fixed_abs, tag = 'smem constant byte address 0x4 - core index']
  #allocation1 [shape = 'u32[144,128]{1,0:T(1,128)}', space=vmem, size = 0x12000, scoped, tag = 'internal scratch']
  %s0 = inlined_call_operand.vmem [shape: bf16[128,144], index: 0, kind: input, shape index: {}]
  %s1 = inlined_call_operand.vmem [shape: bf16[144,32], index: 1, kind: input, shape index: {}]
  %s2 = inlined_call_operand.vmem [shape: f32[1,32], index: 2, kind: input, shape index: {}]
  %s3 = inlined_call_operand.vmem [shape: f32[1,32], index: 3, kind: input, shape index: {}]
  %s4 = inlined_call_operand.vmem [shape: bf16[128,32], index: 4, kind: output, shape index: {}]
  %s5 = sld [smem:[#allocation0]]
  $region26: #{_lambda_.16} parent=0
    _
  %s7 = ssub.s32 1, %s5
  %s8 = scalar_select 0, %s7, %s5
  // Predicated region
  $region2: #{_lambda_.16} parent=0 // pred_check
    _
  $region3: #{_lambda_.16} parent=0 // pred_check_branch
    %10 = sbr.rel (0) target = $region5
  $region4: #{_lambda_.16} parent=0 // pred_region
    _
  $region5: #{_lambda_.16} parent=0 // pred_fallthru
    _
  // Predicated region
  $region6: #{_lambda_.16} parent=0 // pred_check
    _
  $region7: #{_lambda_.16} parent=0 // pred_check_branch
    %12 = sbr.rel (0) target = $region9
  $region8: #{_lambda_.16} parent=0 // pred_region
    _
  $region9: #{_lambda_.16} parent=0 // pred_fallthru
    _
  // Predicated region
  $region10: #{_lambda_.16} parent=0 // pred_check
    _
  $region11: #{_lambda_.16} parent=0 // pred_check_branch
    %14 = sbr.rel (0) target = $region13
  $region12: #{_lambda_.16} parent=0 // pred_region
    _
  $region13: #{_lambda_.16} parent=0 // pred_fallthru
    _
  // Predicated region
  $region14: #{_lambda_.16} parent=0 // pred_check
    _
  $region15: #{_lambda_.16} parent=0 // pred_check_branch
    %16 = sbr.rel (0) target = $region17
  $region16: #{_lambda_.16} parent=0 // pred_region
    _
  $region17: #{_lambda_.16} parent=0 // pred_fallthru
    _
  %v18 = vld [vmem:[%s0] sm:$0xff]
  %v19 = vld [vmem:[%s0 + $0x8] sm:$0xff]
  %v20 = vld [vmem:[%s0 + $0x10] sm:$0xff]
  %v21 = vld [vmem:[%s0 + $0x18] sm:$0xff]
  %v22 = vld [vmem:[%s0 + $0x20] sm:$0xff]
  %v23 = vld [vmem:[%s0 + $0x28] sm:$0xff]
  %v24 = vld [vmem:[%s0 + $0x30] sm:$0xff]
  %v25 = vld [vmem:[%s0 + $0x38] sm:$0xff]
  %v26 = vld [vmem:[%s0 + $0x40] sm:$0xff]
  %v27 = vld [vmem:[%s0 + $0x48] sm:$0xff]
  %v28 = vld [vmem:[%s0 + $0x50] sm:$0xff]
  %v29 = vld [vmem:[%s0 + $0x58] sm:$0xff]
  %v30 = vld [vmem:[%s0 + $0x60] sm:$0xff]
  %v31 = vld [vmem:[%s0 + $0x68] sm:$0xff]
  %v32 = vld [vmem:[%s0 + $0x70] sm:$0xff]
  %v33 = vld [vmem:[%s0 + $0x78] sm:$0xff]
  %v34 = vld [vmem:[%s1] sm:$0xf]
  %v35 = vld [vmem:[%s1 + $0x4] sm:$0xf]
  %v36 = vld [vmem:[%s1 + $0x8] sm:$0xf]
  %v37 = vld [vmem:[%s1 + $0xc] sm:$0xf]
  %v38 = vld [vmem:[%s1 + $0x10] sm:$0xf]
  %v39 = vld [vmem:[%s1 + $0x14] sm:$0xf]
  %v40 = vld [vmem:[%s1 + $0x18] sm:$0xf]
  %v41 = vld [vmem:[%s1 + $0x1c] sm:$0xf]
  %v42 = vld [vmem:[%s1 + $0x20] sm:$0xf]
  %v43 = vld [vmem:[%s1 + $0x24] sm:$0xf]
  %v44 = vld [vmem:[%s1 + $0x28] sm:$0xf]
  %v45 = vld [vmem:[%s1 + $0x2c] sm:$0xf]
  %v46 = vld [vmem:[%s1 + $0x30] sm:$0xf]
  %v47 = vld [vmem:[%s1 + $0x34] sm:$0xf]
  %v48 = vld [vmem:[%s1 + $0x38] sm:$0xf]
  %v49 = vld [vmem:[%s1 + $0x3c] sm:$0xf]
  %v50 = vld [vmem:[%s1 + $0x40] sm:$0xf]
  %v51 = vld [vmem:[%s1 + $0x44] sm:$0xf]
  %v68 = vunpack.c.l.b16 %v18
  %v69 = vunpack.c.h.b16 %v18
  %v70 = vunpack.c.l.b16 %v19
  %v71 = vunpack.c.h.b16 %v19
  %v72 = vunpack.c.l.b16 %v20
  %v73 = vunpack.c.h.b16 %v20
  %v74 = vunpack.c.l.b16 %v21
  %v75 = vunpack.c.h.b16 %v21
  %v76 = vunpack.c.l.b16 %v22
  %v77 = vunpack.c.h.b16 %v22
  %v78 = vunpack.c.l.b16 %v23
  %v79 = vunpack.c.h.b16 %v23
  %v80 = vunpack.c.l.b16 %v24
  %v81 = vunpack.c.h.b16 %v24
  %v82 = vunpack.c.l.b16 %v25
  %v83 = vunpack.c.h.b16 %v25
  %v84 = vunpack.c.l.b16 %v26
  %v85 = vunpack.c.h.b16 %v26
  %v86 = vunpack.c.l.b16 %v27
  %v87 = vunpack.c.h.b16 %v27
  %v88 = vunpack.c.l.b16 %v28
  %v89 = vunpack.c.h.b16 %v28
  %v90 = vunpack.c.l.b16 %v29
  %v91 = vunpack.c.h.b16 %v29
  %v92 = vunpack.c.l.b16 %v30
  %v93 = vunpack.c.h.b16 %v30
  %v94 = vunpack.c.l.b16 %v31
  %v95 = vunpack.c.h.b16 %v31
  %v96 = vunpack.c.l.b16 %v32
  %v97 = vunpack.c.h.b16 %v32
  %v98 = vunpack.c.l.b16 %v33
  %v99 = vunpack.c.h.b16 %v33
  %v100 = vpack.c.b16 %v70, %v68
  %v101 = vpack.c.b16 %v71, %v69
  %v102 = vpack.c.b16 %v74, %v72
  %v103 = vpack.c.b16 %v75, %v73
  %v104 = vpack.c.b16 %v78, %v76
  %v105 = vpack.c.b16 %v79, %v77
  %v106 = vpack.c.b16 %v82, %v80
  %v107 = vpack.c.b16 %v83, %v81
  %v108 = vpack.c.b16 %v86, %v84
  %v109 = vpack.c.b16 %v87, %v85
  %v110 = vpack.c.b16 %v90, %v88
  %v111 = vpack.c.b16 %v91, %v89
  %v112 = vpack.c.b16 %v94, %v92
  %v113 = vpack.c.b16 %v95, %v93
  %v114 = vpack.c.b16 %v98, %v96
  %v115 = vpack.c.b16 %v99, %v97
  %v142 = vunpack.c.l.b16 %v34
  %v143 = vunpack.c.l.b16 %v35
  %v144 = vunpack.c.l.b16 %v36
  %v145 = vunpack.c.l.b16 %v37
  %v146 = vunpack.c.l.b16 %v38
  %v147 = vunpack.c.l.b16 %v39
  %v148 = vunpack.c.l.b16 %v40
  %v149 = vunpack.c.l.b16 %v41
  %v150 = vunpack.c.l.b16 %v42
  %v151 = vunpack.c.l.b16 %v43
  %v152 = vunpack.c.l.b16 %v44
  %v153 = vunpack.c.l.b16 %v45
  %v154 = vunpack.c.l.b16 %v46
  %v155 = vunpack.c.l.b16 %v47
  %v156 = vunpack.c.l.b16 %v48
  %v157 = vunpack.c.l.b16 %v49
  %v158 = vunpack.c.l.b16 %v50
  %v159 = vunpack.c.l.b16 %v51
  %v160 = vpack.c.b16 %v143, %v142
  %v161 = vpack.c.b16 %v145, %v144
  %v162 = vpack.c.b16 %v147, %v146
  %v163 = vpack.c.b16 %v149, %v148
  %v164 = vpack.c.b16 %v151, %v150
  %v165 = vpack.c.b16 %v153, %v152
  %v166 = vpack.c.b16 %v155, %v154
  %v167 = vpack.c.b16 %v157, %v156
  %v168 = vpack.c.b16 %v159, %v158
  %vm178 = vcmask 130048
  %v180 = vsel %vm178, %v101, 0
  %v183 = vsel %vm178, %v103, 0
  %v186 = vsel %vm178, %v105, 0
  %v189 = vsel %vm178, %v107, 0
  %v192 = vsel %vm178, %v109, 0
  %v195 = vsel %vm178, %v111, 0
  %v198 = vsel %vm178, %v113, 0
  %v201 = vsel %vm178, %v115, 0
  %203 = vmatprep.subr.bf16.mxu0 0
  %204 = vmatpush1.bf16.msra.mxu0 %v167
  %205 = vmatprep.subr.bf16.mxu0 0
  %206 = vmatpush1.bf16.msra.mxu0 %v166
  %207 = vmatprep.subr.bf16.mxu0 0
  %208 = vmatpush1.bf16.msra.mxu0 %v165
  %209 = vmatprep.subr.bf16.mxu0 0
  %210 = vmatpush1.bf16.msra.mxu0 %v164
  %211 = vmatprep.subr.bf16.mxu0 0
  %212 = vmatpush1.bf16.msra.mxu0 %v163
  %213 = vmatprep.subr.bf16.mxu0 0
  %214 = vmatpush1.bf16.msra.mxu0 %v162
  %215 = vmatprep.subr.bf16.mxu0 0
  %216 = vmatpush1.bf16.msra.mxu0 %v161
  %217 = vmatprep.subr.bf16.mxu0 0
  %218 = vmatpush1.bf16.msra.mxu0 %v160
  %219 = vmatprep.subr.bf16.mxu0 0
  %220 = vmatpush2.bf16.msra.mxu0 0
  %221 = vmatprep.subr.bf16.mxu0 0
  %222 = vmatpush2.bf16.msra.mxu0 0
  %223 = vmatprep.subr.bf16.mxu0 0
  %224 = vmatpush2.bf16.msra.mxu0 0
  %225 = vmatprep.subr.bf16.mxu0 0
  %226 = vmatpush2.bf16.msra.mxu0 0
  %227 = vmatprep.subr.bf16.mxu0 0
  %228 = vmatpush2.bf16.msra.mxu0 0
  %229 = vmatprep.subr.bf16.mxu0 0
  %230 = vmatpush2.bf16.msra.mxu0 0
  %231 = vmatprep.subr.bf16.mxu0 0
  %232 = vmatpush2.bf16.msra.mxu0 0
  %233 = vmatprep.subr.bf16.mxu0 0
  %234 = vmatpush2.bf16.msra.mxu0 %v168
  %235 = vmatprep.mubr.bf16.mxu0 %v180
  %236 = vmatmul.mubr.bf16.gmra.mxu0 %v100
  %v237 = vpop.f32.mrf.mxu0
  %v238 = vadd.f32 0.0, %v237
  %v239 = vpop.f32.mrf.mxu0
  %v240 = vpop.f32.mrf.mxu0
  %v241 = vadd.f32 0.0, %v240
  %v242 = vpop.f32.mrf.mxu0
  %243 = vmatprep.mubr.bf16.mxu0 %v183
  %244 = vmatmul.mubr.bf16.gmra.mxu0 %v102
  %v245 = vpop.f32.mrf.mxu0
  %v246 = vadd.f32 0.0, %v245
  %v247 = vpop.f32.mrf.mxu0
  %v248 = vpop.f32.mrf.mxu0
  %v249 = vadd.f32 0.0, %v248
  %v250 = vpop.f32.mrf.mxu0
  %251 = vmatprep.mubr.bf16.mxu0 %v186
  %252 = vmatmul.mubr.bf16.gmra.mxu0 %v104
  %v253 = vpop.f32.mrf.mxu0
  %v254 = vadd.f32 0.0, %v253
  %v255 = vpop.f32.mrf.mxu0
  %v256 = vpop.f32.mrf.mxu0
  %v257 = vadd.f32 0.0, %v256
  %v258 = vpop.f32.mrf.mxu0
  %259 = vmatprep.mubr.bf16.mxu0 %v189
  %260 = vmatmul.mubr.bf16.gmra.mxu0 %v106
  %v261 = vpop.f32.mrf.mxu0
  %v262 = vadd.f32 0.0, %v261
  %v263 = vpop.f32.mrf.mxu0
  %v264 = vpop.f32.mrf.mxu0
  %v265 = vadd.f32 0.0, %v264
  %v266 = vpop.f32.mrf.mxu0
  %267 = vmatprep.mubr.bf16.mxu0 %v192
  %268 = vmatmul.mubr.bf16.gmra.mxu0 %v108
  %v269 = vpop.f32.mrf.mxu0
  %v270 = vadd.f32 0.0, %v269
  %v271 = vpop.f32.mrf.mxu0
  %v272 = vpop.f32.mrf.mxu0
  %v273 = vadd.f32 0.0, %v272
  %v274 = vpop.f32.mrf.mxu0
  %275 = vmatprep.mubr.bf16.mxu0 %v195
  %276 = vmatmul.mubr.bf16.gmra.mxu0 %v110
  %v277 = vpop.f32.mrf.mxu0
  %v278 = vadd.f32 0.0, %v277
  %v279 = vpop.f32.mrf.mxu0
  %v280 = vpop.f32.mrf.mxu0
  %v281 = vadd.f32 0.0, %v280
  %v282 = vpop.f32.mrf.mxu0
  %283 = vmatprep.mubr.bf16.mxu0 %v198
  %284 = vmatmul.mubr.bf16.gmra.mxu0 %v112
  %v285 = vpop.f32.mrf.mxu0
  %v286 = vadd.f32 0.0, %v285
  %v287 = vpop.f32.mrf.mxu0
  %v288 = vpop.f32.mrf.mxu0
  %v289 = vadd.f32 0.0, %v288
  %v290 = vpop.f32.mrf.mxu0
  %291 = vmatprep.mubr.bf16.mxu0 %v201
  %292 = vmatmul.mubr.bf16.gmra.mxu0 %v114
  %v293 = vpop.f32.mrf.mxu0
  %v294 = vadd.f32 0.0, %v293
  %v295 = vpop.f32.mrf.mxu0
  %v296 = vpop.f32.mrf.mxu0
  %v297 = vadd.f32 0.0, %v296
  %v298 = vpop.f32.mrf.mxu0
  %299 = vdwg.mxu0
  %vm300 = vcmask 261120
  %v301 = vsel %vm300, %v238, 0.0
  %v302 = vsel %vm300, %v241, 0.0
  %v303 = vadd.f32 %v301, %v302
  %v304 = vsel %vm300, %v246, 0.0
  %v305 = vadd.f32 %v303, %v304
  %v306 = vsel %vm300, %v249, 0.0
  %v307 = vadd.f32 %v305, %v306
  %v308 = vsel %vm300, %v254, 0.0
  %v309 = vadd.f32 %v307, %v308
  %v310 = vsel %vm300, %v257, 0.0
  %v311 = vadd.f32 %v309, %v310
  %v312 = vsel %vm300, %v262, 0.0
  %v313 = vadd.f32 %v311, %v312
  %v314 = vsel %vm300, %v265, 0.0
  %v315 = vadd.f32 %v313, %v314
  %v316 = vsel %vm300, %v270, 0.0
  %v317 = vadd.f32 %v315, %v316
  %v318 = vsel %vm300, %v273, 0.0
  %v319 = vadd.f32 %v317, %v318
  %v320 = vsel %vm300, %v278, 0.0
  %v321 = vadd.f32 %v319, %v320
  %v322 = vsel %vm300, %v281, 0.0
  %v323 = vadd.f32 %v321, %v322
  %v324 = vsel %vm300, %v286, 0.0
  %v325 = vadd.f32 %v323, %v324
  %v326 = vsel %vm300, %v289, 0.0
  %v327 = vadd.f32 %v325, %v326
  %v328 = vsel %vm300, %v294, 0.0
  %v329 = vadd.f32 %v327, %v328
  %v330 = vsel %vm300, %v297, 0.0
  %v331 = vadd.f32 %v329, %v330
  %v332 = vrot.slane %v331, 4
  %v333 = vadd.f32 %v331, %v332
  %v334 = vrot.slane %v333, 2
  %v335 = vadd.f32 %v333, %v334
  %v336 = vrot.slane %v335, 1
  %v337 = vadd.f32 %v335, %v336
  %v338 = vmul.f32 %v337, 0.0078125
  %v339 = vmul.f32 %v238, %v238
  %v340 = vmul.f32 %v241, %v241
  %v341 = vmul.f32 %v246, %v246
  %v342 = vmul.f32 %v249, %v249
  %v343 = vmul.f32 %v254, %v254
  %v344 = vmul.f32 %v257, %v257
  %v345 = vmul.f32 %v262, %v262
  %v346 = vmul.f32 %v265, %v265
  %v347 = vmul.f32 %v270, %v270
  %v348 = vmul.f32 %v273, %v273
  %v349 = vmul.f32 %v278, %v278
  %v350 = vmul.f32 %v281, %v281
  %v351 = vmul.f32 %v286, %v286
  %v352 = vmul.f32 %v289, %v289
  %v353 = vmul.f32 %v294, %v294
  %v354 = vmul.f32 %v297, %v297
  %v355 = vsel %vm300, %v339, 0.0
  %v356 = vsel %vm300, %v340, 0.0
  %v357 = vadd.f32 %v355, %v356
  %v358 = vsel %vm300, %v341, 0.0
  %v359 = vadd.f32 %v357, %v358
  %v360 = vsel %vm300, %v342, 0.0
  %v361 = vadd.f32 %v359, %v360
  %v362 = vsel %vm300, %v343, 0.0
  %v363 = vadd.f32 %v361, %v362
  %v364 = vsel %vm300, %v344, 0.0
  %v365 = vadd.f32 %v363, %v364
  %v366 = vsel %vm300, %v345, 0.0
  %v367 = vadd.f32 %v365, %v366
  %v368 = vsel %vm300, %v346, 0.0
  %v369 = vadd.f32 %v367, %v368
  %v370 = vsel %vm300, %v347, 0.0
  %v371 = vadd.f32 %v369, %v370
  %v372 = vsel %vm300, %v348, 0.0
  %v373 = vadd.f32 %v371, %v372
  %v374 = vsel %vm300, %v349, 0.0
  %v375 = vadd.f32 %v373, %v374
  %v376 = vsel %vm300, %v350, 0.0
  %v377 = vadd.f32 %v375, %v376
  %v378 = vsel %vm300, %v351, 0.0
  %v379 = vadd.f32 %v377, %v378
  %v380 = vsel %vm300, %v352, 0.0
  %v381 = vadd.f32 %v379, %v380
  %v382 = vsel %vm300, %v353, 0.0
  %v383 = vadd.f32 %v381, %v382
  %v384 = vsel %vm300, %v354, 0.0
  %v385 = vadd.f32 %v383, %v384
  %v386 = vrot.slane %v385, 4
  %v387 = vadd.f32 %v385, %v386
  %v388 = vrot.slane %v387, 2
  %v389 = vadd.f32 %v387, %v388
  %v390 = vrot.slane %v389, 1
  %v391 = vadd.f32 %v389, %v390
  %v392 = vmul.f32 %v391, 0.0078125
  %v393 = vmul.f32 %v338, %v338
  %v394 = vsub.f32 %v392, %v393
  %v395 = vld [vmem:[%s2] sm:$0x1]
  %v396 = vadd.f32 %v394, 1e-05
  %v397 = vrsqrt.pop %v396
  %v398 = vmul.f32 %v395, %v397
  %v399 = vld [vmem:[%s3] sm:$0x1]
  %v400 = vmul.f32 %v338, %v398
  %v401 = vsub.f32 %v399, %v400
  %v403 = vlaneseq
  %v404 = vshrl.u32 %v403, 7
  %v405 = vsub.s32 0, %v404
  %v406 = vrot.slane %v398, %v405
  %v408 = vmul.f32 %v238, %v406
  %v409 = vmul.f32 %v241, %v406
  %v410 = vmul.f32 %v246, %v406
  %v411 = vmul.f32 %v249, %v406
  %v412 = vmul.f32 %v254, %v406
  %v413 = vmul.f32 %v257, %v406
  %v414 = vmul.f32 %v262, %v406
  %v415 = vmul.f32 %v265, %v406
  %v416 = vmul.f32 %v270, %v406
  %v417 = vmul.f32 %v273, %v406
  %v418 = vmul.f32 %v278, %v406
  %v419 = vmul.f32 %v281, %v406
  %v420 = vmul.f32 %v286, %v406
  %v421 = vmul.f32 %v289, %v406
  %v422 = vmul.f32 %v294, %v406
  %v423 = vmul.f32 %v297, %v406
  %v425 = vlaneseq
  %v426 = vshrl.u32 %v425, 7
  %v427 = vsub.s32 0, %v426
  %v428 = vrot.slane %v401, %v427
  %v430 = vadd.f32 %v408, %v428
  %v431 = vadd.f32 %v409, %v428
  %v432 = vadd.f32 %v410, %v428
  %v433 = vadd.f32 %v411, %v428
  %v434 = vadd.f32 %v412, %v428
  %v435 = vadd.f32 %v413, %v428
  %v436 = vadd.f32 %v414, %v428
  %v437 = vadd.f32 %v415, %v428
  %v438 = vadd.f32 %v416, %v428
  %v439 = vadd.f32 %v417, %v428
  %v440 = vadd.f32 %v418, %v428
  %v441 = vadd.f32 %v419, %v428
  %v442 = vadd.f32 %v420, %v428
  %v443 = vadd.f32 %v421, %v428
  %v444 = vadd.f32 %v422, %v428
  %v445 = vadd.f32 %v423, %v428
  %v446 = vmax.f32 %v430, 0.0
  %v447 = vmax.f32 %v431, 0.0
  %v448 = vmax.f32 %v432, 0.0
  %v449 = vmax.f32 %v433, 0.0
  %v450 = vmax.f32 %v434, 0.0
  %v451 = vmax.f32 %v435, 0.0
  %v452 = vmax.f32 %v436, 0.0
  %v453 = vmax.f32 %v437, 0.0
  %v454 = vmax.f32 %v438, 0.0
  %v455 = vmax.f32 %v439, 0.0
  %v456 = vmax.f32 %v440, 0.0
  %v457 = vmax.f32 %v441, 0.0
  %v458 = vmax.f32 %v442, 0.0
  %v459 = vmax.f32 %v443, 0.0
  %v460 = vmax.f32 %v444, 0.0
  %v461 = vmax.f32 %v445, 0.0
  %v462 = vpack.c.bf16 %v447, %v446
  %v463 = vpack.c.bf16 %v449, %v448
  %v464 = vpack.c.bf16 %v451, %v450
  %v465 = vpack.c.bf16 %v453, %v452
  %v466 = vpack.c.bf16 %v455, %v454
  %v467 = vpack.c.bf16 %v457, %v456
  %v468 = vpack.c.bf16 %v459, %v458
  %v469 = vpack.c.bf16 %v461, %v460
  %v478 = vunpack.c.l.b16 %v462
  %v479 = vunpack.c.h.b16 %v462
  %v480 = vunpack.c.l.b16 %v463
  %v481 = vunpack.c.h.b16 %v463
  %v482 = vunpack.c.l.b16 %v464
  %v483 = vunpack.c.h.b16 %v464
  %v484 = vunpack.c.l.b16 %v465
  %v485 = vunpack.c.h.b16 %v465
  %v486 = vunpack.c.l.b16 %v466
  %v487 = vunpack.c.h.b16 %v466
  %v488 = vunpack.c.l.b16 %v467
  %v489 = vunpack.c.h.b16 %v467
  %v490 = vunpack.c.l.b16 %v468
  %v491 = vunpack.c.h.b16 %v468
  %v492 = vunpack.c.l.b16 %v469
  %v493 = vunpack.c.h.b16 %v469
  %v494 = vpack.c.b16 %v478, %v478
  %v495 = vpack.c.b16 %v479, %v479
  %v496 = vpack.c.b16 %v480, %v480
  %v497 = vpack.c.b16 %v481, %v481
  %v498 = vpack.c.b16 %v482, %v482
  %v499 = vpack.c.b16 %v483, %v483
  %v500 = vpack.c.b16 %v484, %v484
  %v501 = vpack.c.b16 %v485, %v485
  %v502 = vpack.c.b16 %v486, %v486
  %v503 = vpack.c.b16 %v487, %v487
  %v504 = vpack.c.b16 %v488, %v488
  %v505 = vpack.c.b16 %v489, %v489
  %v506 = vpack.c.b16 %v490, %v490
  %v507 = vpack.c.b16 %v491, %v491
  %v508 = vpack.c.b16 %v492, %v492
  %v509 = vpack.c.b16 %v493, %v493
  %vm526 = vcmask 257024
  %527 = vst.msk [vmem:[%s4] sm:$0xf] %vm526, %v494
  %528 = vst.msk [vmem:[%s4 + $0x4] sm:$0xf] %vm526, %v495
  %529 = vst.msk [vmem:[%s4 + $0x8] sm:$0xf] %vm526, %v496
  %530 = vst.msk [vmem:[%s4 + $0xc] sm:$0xf] %vm526, %v497
  %531 = vst.msk [vmem:[%s4 + $0x10] sm:$0xf] %vm526, %v498
  %532 = vst.msk [vmem:[%s4 + $0x14] sm:$0xf] %vm526, %v499
  %533 = vst.msk [vmem:[%s4 + $0x18] sm:$0xf] %vm526, %v500
  %534 = vst.msk [vmem:[%s4 + $0x1c] sm:$0xf] %vm526, %v501
  %535 = vst.msk [vmem:[%s4 + $0x20] sm:$0xf] %vm526, %v502
  %536 = vst.msk [vmem:[%s4 + $0x24] sm:$0xf] %vm526, %v503
  %537 = vst.msk [vmem:[%s4 + $0x28] sm:$0xf] %vm526, %v504
  %538 = vst.msk [vmem:[%s4 + $0x2c] sm:$0xf] %vm526, %v505
  %539 = vst.msk [vmem:[%s4 + $0x30] sm:$0xf] %vm526, %v506
  %540 = vst.msk [vmem:[%s4 + $0x34] sm:$0xf] %vm526, %v507
  %541 = vst.msk [vmem:[%s4 + $0x38] sm:$0xf] %vm526, %v508
  %542 = vst.msk [vmem:[%s4 + $0x3c] sm:$0xf] %vm526, %v509
  // Predicated region
  $region18: #{_lambda_.16} parent=0 // pred_check
    _
  $region19: #{_lambda_.16} parent=0 // pred_check_branch
    %544 = sbr.rel (0) target = $region21
  $region20: #{_lambda_.16} parent=0 // pred_region
    _
  $region21: #{_lambda_.16} parent=0 // pred_fallthru
    _
  // Predicated region
  $region22: #{_lambda_.16} parent=0 // pred_check
    _
  $region23: #{_lambda_.16} parent=0 // pred_check_branch
    %546 = sbr.rel (0) target = $region25
  $region24: #{_lambda_.16} parent=0 // pred_region
    _
  $region25: #{_lambda_.16} parent=0 // pred_fallthru
    _

// kernel: _lambda_.17
$region0: #{_lambda_.17}
  #allocation0 [shape = 'u32[]', space=smem, size = 0x4, offset = 0x4, fixed_abs, tag = 'smem constant byte address 0x4 - core index']
  #allocation1 [shape = 'u32[144,128]{1,0:T(1,128)}', space=vmem, size = 0x12000, scoped, tag = 'internal scratch']
  %s0 = inlined_call_operand.vmem [shape: bf16[128,288], index: 0, kind: input, shape index: {}]
  %s1 = inlined_call_operand.vmem [shape: bf16[288,32], index: 1, kind: input, shape index: {}]
  %s2 = inlined_call_operand.vmem [shape: bf16[128,16], index: 2, kind: input, shape index: {}]
  %s3 = inlined_call_operand.vmem [shape: bf16[16,32], index: 3, kind: input, shape index: {}]
  %s4 = inlined_call_operand.vmem [shape: f32[128,32], index: 4, kind: output, shape index: {}]
  %s5 = sld [smem:[#allocation0]]
  $region26: #{_lambda_.17} parent=0
    _
  %s7 = ssub.s32 1, %s5
  %s8 = scalar_select 0, %s7, %s5
  // Predicated region
  $region2: #{_lambda_.17} parent=0 // pred_check
    _
  $region3: #{_lambda_.17} parent=0 // pred_check_branch
    %10 = sbr.rel (0) target = $region5
  $region4: #{_lambda_.17} parent=0 // pred_region
    _
  $region5: #{_lambda_.17} parent=0 // pred_fallthru
    _
  // Predicated region
  $region6: #{_lambda_.17} parent=0 // pred_check
    _
  $region7: #{_lambda_.17} parent=0 // pred_check_branch
    %12 = sbr.rel (0) target = $region9
  $region8: #{_lambda_.17} parent=0 // pred_region
    _
  $region9: #{_lambda_.17} parent=0 // pred_fallthru
    _
  // Predicated region
  $region10: #{_lambda_.17} parent=0 // pred_check
    _
  $region11: #{_lambda_.17} parent=0 // pred_check_branch
    %14 = sbr.rel (0) target = $region13
  $region12: #{_lambda_.17} parent=0 // pred_region
    _
  $region13: #{_lambda_.17} parent=0 // pred_fallthru
    _
  // Predicated region
  $region14: #{_lambda_.17} parent=0 // pred_check
    _
  $region15: #{_lambda_.17} parent=0 // pred_check_branch
    %16 = sbr.rel (0) target = $region17
  $region16: #{_lambda_.17} parent=0 // pred_region
    _
  $region17: #{_lambda_.17} parent=0 // pred_fallthru
    _
  %v18 = vld [vmem:[%s0] sm:$0xff]
  %v19 = vld [vmem:[%s0 + $0x8] sm:$0xf]
  %v20 = vld [vmem:[%s0 + $0xc] sm:$0xff]
  %v21 = vld [vmem:[%s0 + $0x14] sm:$0xf]
  %v22 = vld [vmem:[%s0 + $0x18] sm:$0xff]
  %v23 = vld [vmem:[%s0 + $0x20] sm:$0xf]
  %v24 = vld [vmem:[%s0 + $0x24] sm:$0xff]
  %v25 = vld [vmem:[%s0 + $0x2c] sm:$0xf]
  %v26 = vld [vmem:[%s0 + $0x30] sm:$0xff]
  %v27 = vld [vmem:[%s0 + $0x38] sm:$0xf]
  %v28 = vld [vmem:[%s0 + $0x3c] sm:$0xff]
  %v29 = vld [vmem:[%s0 + $0x44] sm:$0xf]
  %v30 = vld [vmem:[%s0 + $0x48] sm:$0xff]
  %v31 = vld [vmem:[%s0 + $0x50] sm:$0xf]
  %v32 = vld [vmem:[%s0 + $0x54] sm:$0xff]
  %v33 = vld [vmem:[%s0 + $0x5c] sm:$0xf]
  %v34 = vld [vmem:[%s0 + $0x60] sm:$0xff]
  %v35 = vld [vmem:[%s0 + $0x68] sm:$0xf]
  %v36 = vld [vmem:[%s0 + $0x6c] sm:$0xff]
  %v37 = vld [vmem:[%s0 + $0x74] sm:$0xf]
  %v38 = vld [vmem:[%s0 + $0x78] sm:$0xff]
  %v39 = vld [vmem:[%s0 + $0x80] sm:$0xf]
  %v40 = vld [vmem:[%s0 + $0x84] sm:$0xff]
  %v41 = vld [vmem:[%s0 + $0x8c] sm:$0xf]
  %v42 = vld [vmem:[%s0 + $0x90] sm:$0xff]
  %v43 = vld [vmem:[%s0 + $0x98] sm:$0xf]
  %v44 = vld [vmem:[%s0 + $0x9c] sm:$0xff]
  %v45 = vld [vmem:[%s0 + $0xa4] sm:$0xf]
  %v46 = vld [vmem:[%s0 + $0xa8] sm:$0xff]
  %v47 = vld [vmem:[%s0 + $0xb0] sm:$0xf]
  %v48 = vld [vmem:[%s0 + $0xb4] sm:$0xff]
  %v49 = vld [vmem:[%s0 + $0xbc] sm:$0xf]
  %v50 = vld [vmem:[%s1] sm:$0xf]
  %v51 = vld [vmem:[%s1 + $0x4] sm:$0xf]
  %v52 = vld [vmem:[%s1 + $0x8] sm:$0xf]
  %v53 = vld [vmem:[%s1 + $0xc] sm:$0xf]
  %v54 = vld [vmem:[%s1 + $0x10] sm:$0xf]
  %v55 = vld [vmem:[%s1 + $0x14] sm:$0xf]
  %v56 = vld [vmem:[%s1 + $0x18] sm:$0xf]
  %v57 = vld [vmem:[%s1 + $0x1c] sm:$0xf]
  %v58 = vld [vmem:[%s1 + $0x20] sm:$0xf]
  %v59 = vld [vmem:[%s1 + $0x24] sm:$0xf]
  %v60 = vld [vmem:[%s1 + $0x28] sm:$0xf]
  %v61 = vld [vmem:[%s1 + $0x2c] sm:$0xf]
  %v62 = vld [vmem:[%s1 + $0x30] sm:$0xf]
  %v63 = vld [vmem:[%s1 + $0x34] sm:$0xf]
  %v64 = vld [vmem:[%s1 + $0x38] sm:$0xf]
  %v65 = vld [vmem:[%s1 + $0x3c] sm:$0xf]
  %v66 = vld [vmem:[%s1 + $0x40] sm:$0xf]
  %v67 = vld [vmem:[%s1 + $0x44] sm:$0xf]
  %v68 = vld [vmem:[%s1 + $0x48] sm:$0xf]
  %v69 = vld [vmem:[%s1 + $0x4c] sm:$0xf]
  %v70 = vld [vmem:[%s1 + $0x50] sm:$0xf]
  %v71 = vld [vmem:[%s1 + $0x54] sm:$0xf]
  %v72 = vld [vmem:[%s1 + $0x58] sm:$0xf]
  %v73 = vld [vmem:[%s1 + $0x5c] sm:$0xf]
  %v74 = vld [vmem:[%s1 + $0x60] sm:$0xf]
  %v75 = vld [vmem:[%s1 + $0x64] sm:$0xf]
  %v76 = vld [vmem:[%s1 + $0x68] sm:$0xf]
  %v77 = vld [vmem:[%s1 + $0x6c] sm:$0xf]
  %v78 = vld [vmem:[%s1 + $0x70] sm:$0xf]
  %v79 = vld [vmem:[%s1 + $0x74] sm:$0xf]
  %v80 = vld [vmem:[%s1 + $0x78] sm:$0xf]
  %v81 = vld [vmem:[%s1 + $0x7c] sm:$0xf]
  %v82 = vld [vmem:[%s1 + $0x80] sm:$0xf]
  %v83 = vld [vmem:[%s1 + $0x84] sm:$0xf]
  %v84 = vld [vmem:[%s1 + $0x88] sm:$0xf]
  %v85 = vld [vmem:[%s1 + $0x8c] sm:$0xf]
  %v86 = vld [vmem:[%s2] sm:$0xf]
  %v87 = vld [vmem:[%s2 + $0x4] sm:$0xf]
  %v88 = vld [vmem:[%s2 + $0x8] sm:$0xf]
  %v89 = vld [vmem:[%s2 + $0xc] sm:$0xf]
  %v90 = vld [vmem:[%s2 + $0x10] sm:$0xf]
  %v91 = vld [vmem:[%s2 + $0x14] sm:$0xf]
  %v92 = vld [vmem:[%s2 + $0x18] sm:$0xf]
  %v93 = vld [vmem:[%s2 + $0x1c] sm:$0xf]
  %v94 = vld [vmem:[%s2 + $0x20] sm:$0xf]
  %v95 = vld [vmem:[%s2 + $0x24] sm:$0xf]
  %v96 = vld [vmem:[%s2 + $0x28] sm:$0xf]
  %v97 = vld [vmem:[%s2 + $0x2c] sm:$0xf]
  %v98 = vld [vmem:[%s2 + $0x30] sm:$0xf]
  %v99 = vld [vmem:[%s2 + $0x34] sm:$0xf]
  %v100 = vld [vmem:[%s2 + $0x38] sm:$0xf]
  %v101 = vld [vmem:[%s2 + $0x3c] sm:$0xf]
  %v102 = vld [vmem:[%s3] sm:$0xf]
  %v103 = vld [vmem:[%s3 + $0x4] sm:$0xf]
  %v120 = vunpack.c.l.b16 %v86
  %v121 = vunpack.c.l.b16 %v87
  %v122 = vunpack.c.l.b16 %v88
  %v123 = vunpack.c.l.b16 %v89
  %v124 = vunpack.c.l.b16 %v90
  %v125 = vunpack.c.l.b16 %v91
  %v126 = vunpack.c.l.b16 %v92
  %v127 = vunpack.c.l.b16 %v93
  %v128 = vunpack.c.l.b16 %v94
  %v129 = vunpack.c.l.b16 %v95
  %v130 = vunpack.c.l.b16 %v96
  %v131 = vunpack.c.l.b16 %v97
  %v132 = vunpack.c.l.b16 %v98
  %v133 = vunpack.c.l.b16 %v99
  %v134 = vunpack.c.l.b16 %v100
  %v135 = vunpack.c.l.b16 %v101
  %v136 = vpack.c.b16 %v121, %v120
  %v137 = vpack.c.b16 %v123, %v122
  %v138 = vpack.c.b16 %v125, %v124
  %v139 = vpack.c.b16 %v127, %v126
  %v140 = vpack.c.b16 %v129, %v128
  %v141 = vpack.c.b16 %v131, %v130
  %v142 = vpack.c.b16 %v133, %v132
  %v143 = vpack.c.b16 %v135, %v134
  %v146 = vunpack.c.l.b16 %v102
  %v147 = vunpack.c.l.b16 %v103
  %v148 = vpack.c.b16 %v147, %v146
  %vm150 = vcmask 130048
  %v152 = vsel %vm150, %v136, 0
  %v155 = vsel %vm150, %v137, 0
  %v158 = vsel %vm150, %v138, 0
  %v161 = vsel %vm150, %v139, 0
  %v164 = vsel %vm150, %v140, 0
  %v167 = vsel %vm150, %v141, 0
  %v170 = vsel %vm150, %v142, 0
  %v173 = vsel %vm150, %v143, 0
  %175 = vmatprep.subr.bf16.mxu0 0
  %176 = vmatpush1.bf16.msra.mxu0 0
  %177 = vmatprep.subr.bf16.mxu0 0
  %178 = vmatpush1.bf16.msra.mxu0 0
  %179 = vmatprep.subr.bf16.mxu0 0
  %180 = vmatpush1.bf16.msra.mxu0 0
  %181 = vmatprep.subr.bf16.mxu0 0
  %182 = vmatpush1.bf16.msra.mxu0 0
  %183 = vmatprep.subr.bf16.mxu0 0
  %184 = vmatpush1.bf16.msra.mxu0 0
  %185 = vmatprep.subr.bf16.mxu0 0
  %186 = vmatpush1.bf16.msra.mxu0 0
  %187 = vmatprep.subr.bf16.mxu0 0
  %188 = vmatpush1.bf16.msra.mxu0 0
  %189 = vmatprep.subr.bf16.mxu0 0
  %190 = vmatpush1.bf16.msra.mxu0 %v148
  %191 = vmatprep.subr.bf16.mxu0 0
  %192 = vmatpush2.bf16.msra.mxu0 0
  %193 = vmatprep.subr.bf16.mxu0 0
  %194 = vmatpush2.bf16.msra.mxu0 0
  %195 = vmatprep.subr.bf16.mxu0 0
  %196 = vmatpush2.bf16.msra.mxu0 0
  %197 = vmatprep.subr.bf16.mxu0 0
  %198 = vmatpush2.bf16.msra.mxu0 0
  %199 = vmatprep.subr.bf16.mxu0 0
  %200 = vmatpush2.bf16.msra.mxu0 0
  %201 = vmatprep.subr.bf16.mxu0 0
  %202 = vmatpush2.bf16.msra.mxu0 0
  %203 = vmatprep.subr.bf16.mxu0 0
  %204 = vmatpush2.bf16.msra.mxu0 0
  %205 = vmatprep.subr.bf16.mxu0 0
  %206 = vmatpush2.bf16.msra.mxu0 0
  %207 = vmatprep.mubr.bf16.mxu0 0
  %208 = vmatmul.mubr.bf16.gmra.mxu0 %v152
  %v209 = vpop.f32.mrf.mxu0
  %v210 = vadd.f32 0.0, %v209
  %v211 = vpop.f32.mrf.mxu0
  %v212 = vpop.f32.mrf.mxu0
  %v213 = vadd.f32 0.0, %v212
  %v214 = vpop.f32.mrf.mxu0
  %215 = vmatprep.mubr.bf16.mxu0 0
  %216 = vmatmul.mubr.bf16.gmra.mxu0 %v155
  %v217 = vpop.f32.mrf.mxu0
  %v218 = vadd.f32 0.0, %v217
  %v219 = vpop.f32.mrf.mxu0
  %v220 = vpop.f32.mrf.mxu0
  %v221 = vadd.f32 0.0, %v220
  %v222 = vpop.f32.mrf.mxu0
  %223 = vmatprep.mubr.bf16.mxu0 0
  %224 = vmatmul.mubr.bf16.gmra.mxu0 %v158
  %v225 = vpop.f32.mrf.mxu0
  %v226 = vadd.f32 0.0, %v225
  %v227 = vpop.f32.mrf.mxu0
  %v228 = vpop.f32.mrf.mxu0
  %v229 = vadd.f32 0.0, %v228
  %v230 = vpop.f32.mrf.mxu0
  %231 = vmatprep.mubr.bf16.mxu0 0
  %232 = vmatmul.mubr.bf16.gmra.mxu0 %v161
  %v233 = vpop.f32.mrf.mxu0
  %v234 = vadd.f32 0.0, %v233
  %v235 = vpop.f32.mrf.mxu0
  %v236 = vpop.f32.mrf.mxu0
  %v237 = vadd.f32 0.0, %v236
  %v238 = vpop.f32.mrf.mxu0
  %239 = vmatprep.mubr.bf16.mxu0 0
  %240 = vmatmul.mubr.bf16.gmra.mxu0 %v164
  %v241 = vpop.f32.mrf.mxu0
  %v242 = vadd.f32 0.0, %v241
  %v243 = vpop.f32.mrf.mxu0
  %v244 = vpop.f32.mrf.mxu0
  %v245 = vadd.f32 0.0, %v244
  %v246 = vpop.f32.mrf.mxu0
  %247 = vmatprep.mubr.bf16.mxu0 0
  %248 = vmatmul.mubr.bf16.gmra.mxu0 %v167
  %v249 = vpop.f32.mrf.mxu0
  %v250 = vadd.f32 0.0, %v249
  %v251 = vpop.f32.mrf.mxu0
  %v252 = vpop.f32.mrf.mxu0
  %v253 = vadd.f32 0.0, %v252
  %v254 = vpop.f32.mrf.mxu0
  %255 = vmatprep.mubr.bf16.mxu0 0
  %256 = vmatmul.mubr.bf16.gmra.mxu0 %v170
  %v257 = vpop.f32.mrf.mxu0
  %v258 = vadd.f32 0.0, %v257
  %v259 = vpop.f32.mrf.mxu0
  %v260 = vpop.f32.mrf.mxu0
  %v261 = vadd.f32 0.0, %v260
  %v262 = vpop.f32.mrf.mxu0
  %263 = vmatprep.mubr.bf16.mxu0 0
  %264 = vmatmul.mubr.bf16.gmra.mxu0 %v173
  %v265 = vpop.f32.mrf.mxu0
  %v266 = vadd.f32 0.0, %v265
  %v267 = vpop.f32.mrf.mxu0
  %v268 = vpop.f32.mrf.mxu0
  %v269 = vadd.f32 0.0, %v268
  %v270 = vpop.f32.mrf.mxu0
  %271 = vdwg.mxu0
  %v304 = vunpack.c.l.b16 %v18
  %v305 = vunpack.c.h.b16 %v18
  %v306 = vunpack.c.l.b16 %v19
  %v307 = vunpack.c.l.b16 %v20
  %v308 = vunpack.c.h.b16 %v20
  %v309 = vunpack.c.l.b16 %v21
  %v310 = vunpack.c.l.b16 %v22
  %v311 = vunpack.c.h.b16 %v22
  %v312 = vunpack.c.l.b16 %v23
  %v313 = vunpack.c.l.b16 %v24
  %v314 = vunpack.c.h.b16 %v24
  %v315 = vunpack.c.l.b16 %v25
  %v316 = vunpack.c.l.b16 %v26
  %v317 = vunpack.c.h.b16 %v26
  %v318 = vunpack.c.l.b16 %v27
  %v319 = vunpack.c.l.b16 %v28
  %v320 = vunpack.c.h.b16 %v28
  %v321 = vunpack.c.l.b16 %v29
  %v322 = vunpack.c.l.b16 %v30
  %v323 = vunpack.c.h.b16 %v30
  %v324 = vunpack.c.l.b16 %v31
  %v325 = vunpack.c.l.b16 %v32
  %v326 = vunpack.c.h.b16 %v32
  %v327 = vunpack.c.l.b16 %v33
  %v328 = vunpack.c.l.b16 %v34
  %v329 = vunpack.c.h.b16 %v34
  %v330 = vunpack.c.l.b16 %v35
  %v331 = vunpack.c.l.b16 %v36
  %v332 = vunpack.c.h.b16 %v36
  %v333 = vunpack.c.l.b16 %v37
  %v334 = vunpack.c.l.b16 %v38
  %v335 = vunpack.c.h.b16 %v38
  %v336 = vunpack.c.l.b16 %v39
  %v337 = vunpack.c.l.b16 %v40
  %v338 = vunpack.c.h.b16 %v40
  %v339 = vunpack.c.l.b16 %v41
  %v340 = vunpack.c.l.b16 %v42
  %v341 = vunpack.c.h.b16 %v42
  %v342 = vunpack.c.l.b16 %v43
  %v343 = vunpack.c.l.b16 %v44
  %v344 = vunpack.c.h.b16 %v44
  %v345 = vunpack.c.l.b16 %v45
  %v346 = vunpack.c.l.b16 %v46
  %v347 = vunpack.c.h.b16 %v46
  %v348 = vunpack.c.l.b16 %v47
  %v349 = vunpack.c.l.b16 %v48
  %v350 = vunpack.c.h.b16 %v48
  %v351 = vunpack.c.l.b16 %v49
  %v352 = vpack.c.b16 %v307, %v304
  %v353 = vpack.c.b16 %v308, %v305
  %v354 = vpack.c.b16 %v309, %v306
  %v355 = vpack.c.b16 %v313, %v310
  %v356 = vpack.c.b16 %v314, %v311
  %v357 = vpack.c.b16 %v315, %v312
  %v358 = vpack.c.b16 %v319, %v316
  %v359 = vpack.c.b16 %v320, %v317
  %v360 = vpack.c.b16 %v321, %v318
  %v361 = vpack.c.b16 %v325, %v322
  %v362 = vpack.c.b16 %v326, %v323
  %v363 = vpack.c.b16 %v327, %v324
  %v364 = vpack.c.b16 %v331, %v328
  %v365 = vpack.c.b16 %v332, %v329
  %v366 = vpack.c.b16 %v333, %v330
  %v367 = vpack.c.b16 %v337, %v334
  %v368 = vpack.c.b16 %v338, %v335
  %v369 = vpack.c.b16 %v339, %v336
  %v370 = vpack.c.b16 %v343, %v340
  %v371 = vpack.c.b16 %v344, %v341
  %v372 = vpack.c.b16 %v345, %v342
  %v373 = vpack.c.b16 %v349, %v346
  %v374 = vpack.c.b16 %v350, %v347
  %v375 = vpack.c.b16 %v351, %v348
  %v428 = vunpack.c.l.b16 %v50
  %v429 = vunpack.c.l.b16 %v51
  %v430 = vunpack.c.l.b16 %v52
  %v431 = vunpack.c.l.b16 %v53
  %v432 = vunpack.c.l.b16 %v54
  %v433 = vunpack.c.l.b16 %v55
  %v434 = vunpack.c.l.b16 %v56
  %v435 = vunpack.c.l.b16 %v57
  %v436 = vunpack.c.l.b16 %v58
  %v437 = vunpack.c.l.b16 %v59
  %v438 = vunpack.c.l.b16 %v60
  %v439 = vunpack.c.l.b16 %v61
  %v440 = vunpack.c.l.b16 %v62
  %v441 = vunpack.c.l.b16 %v63
  %v442 = vunpack.c.l.b16 %v64
  %v443 = vunpack.c.l.b16 %v65
  %v444 = vunpack.c.l.b16 %v66
  %v445 = vunpack.c.l.b16 %v67
  %v446 = vunpack.c.l.b16 %v68
  %v447 = vunpack.c.l.b16 %v69
  %v448 = vunpack.c.l.b16 %v70
  %v449 = vunpack.c.l.b16 %v71
  %v450 = vunpack.c.l.b16 %v72
  %v451 = vunpack.c.l.b16 %v73
  %v452 = vunpack.c.l.b16 %v74
  %v453 = vunpack.c.l.b16 %v75
  %v454 = vunpack.c.l.b16 %v76
  %v455 = vunpack.c.l.b16 %v77
  %v456 = vunpack.c.l.b16 %v78
  %v457 = vunpack.c.l.b16 %v79
  %v458 = vunpack.c.l.b16 %v80
  %v459 = vunpack.c.l.b16 %v81
  %v460 = vunpack.c.l.b16 %v82
  %v461 = vunpack.c.l.b16 %v83
  %v462 = vunpack.c.l.b16 %v84
  %v463 = vunpack.c.l.b16 %v85
  %v464 = vpack.c.b16 %v429, %v428
  %v465 = vpack.c.b16 %v431, %v430
  %v466 = vpack.c.b16 %v433, %v432
  %v467 = vpack.c.b16 %v435, %v434
  %v468 = vpack.c.b16 %v437, %v436
  %v469 = vpack.c.b16 %v439, %v438
  %v470 = vpack.c.b16 %v441, %v440
  %v471 = vpack.c.b16 %v443, %v442
  %v472 = vpack.c.b16 %v445, %v444
  %v473 = vpack.c.b16 %v447, %v446
  %v474 = vpack.c.b16 %v449, %v448
  %v475 = vpack.c.b16 %v451, %v450
  %v476 = vpack.c.b16 %v453, %v452
  %v477 = vpack.c.b16 %v455, %v454
  %v478 = vpack.c.b16 %v457, %v456
  %v479 = vpack.c.b16 %v459, %v458
  %v480 = vpack.c.b16 %v461, %v460
  %v481 = vpack.c.b16 %v463, %v462
  %vm500 = vcmask 261120
  %v502 = vsel %vm500, %v354, 0
  %v505 = vsel %vm500, %v357, 0
  %v508 = vsel %vm500, %v360, 0
  %v511 = vsel %vm500, %v363, 0
  %v514 = vsel %vm500, %v366, 0
  %v517 = vsel %vm500, %v369, 0
  %v520 = vsel %vm500, %v372, 0
  %v523 = vsel %vm500, %v375, 0
  %525 = vmatprep.subr.bf16.mxu0 0
  %526 = vmatpush1.bf16.msra.mxu0 %v471
  %527 = vmatprep.subr.bf16.mxu0 0
  %528 = vmatpush1.bf16.msra.mxu0 %v470
  %529 = vmatprep.subr.bf16.mxu0 0
  %530 = vmatpush1.bf16.msra.mxu0 %v469
  %531 = vmatprep.subr.bf16.mxu0 0
  %532 = vmatpush1.bf16.msra.mxu0 %v468
  %533 = vmatprep.subr.bf16.mxu0 0
  %534 = vmatpush1.bf16.msra.mxu0 %v467
  %535 = vmatprep.subr.bf16.mxu0 0
  %536 = vmatpush1.bf16.msra.mxu0 %v466
  %537 = vmatprep.subr.bf16.mxu0 0
  %538 = vmatpush1.bf16.msra.mxu0 %v465
  %539 = vmatprep.subr.bf16.mxu0 0
  %540 = vmatpush1.bf16.msra.mxu0 %v464
  %541 = vmatprep.subr.bf16.mxu0 0
  %542 = vmatpush2.bf16.msra.mxu0 %v479
  %543 = vmatprep.subr.bf16.mxu0 0
  %544 = vmatpush2.bf16.msra.mxu0 %v478
  %545 = vmatprep.subr.bf16.mxu0 0
  %546 = vmatpush2.bf16.msra.mxu0 %v477
  %547 = vmatprep.subr.bf16.mxu0 0
  %548 = vmatpush2.bf16.msra.mxu0 %v476
  %549 = vmatprep.subr.bf16.mxu0 0
  %550 = vmatpush2.bf16.msra.mxu0 %v475
  %551 = vmatprep.subr.bf16.mxu0 0
  %552 = vmatpush2.bf16.msra.mxu0 %v474
  %553 = vmatprep.subr.bf16.mxu0 0
  %554 = vmatpush2.bf16.msra.mxu0 %v473
  %555 = vmatprep.subr.bf16.mxu0 0
  %556 = vmatpush2.bf16.msra.mxu0 %v472
  %557 = vmatprep.mubr.bf16.mxu0 %v353
  %558 = vmatmul.mubr.bf16.gmra.mxu0 %v352
  %v559 = vpop.f32.mrf.mxu0
  %v560 = vadd.f32 %v210, %v559
  %v561 = vpop.f32.mrf.mxu0
  %v562 = vpop.f32.mrf.mxu0
  %v563 = vadd.f32 %v213, %v562
  %v564 = vpop.f32.mrf.mxu0
  %565 = vmatprep.mubr.bf16.mxu0 %v356
  %566 = vmatmul.mubr.bf16.gmra.mxu0 %v355
  %v567 = vpop.f32.mrf.mxu0
  %v568 = vadd.f32 %v218, %v567
  %v569 = vpop.f32.mrf.mxu0
  %v570 = vpop.f32.mrf.mxu0
  %v571 = vadd.f32 %v221, %v570
  %v572 = vpop.f32.mrf.mxu0
  %573 = vmatprep.mubr.bf16.mxu0 %v359
  %574 = vmatmul.mubr.bf16.gmra.mxu0 %v358
  %v575 = vpop.f32.mrf.mxu0
  %v576 = vadd.f32 %v226, %v575
  %v577 = vpop.f32.mrf.mxu0
  %v578 = vpop.f32.mrf.mxu0
  %v579 = vadd.f32 %v229, %v578
  %v580 = vpop.f32.mrf.mxu0
  %581 = vmatprep.mubr.bf16.mxu0 %v362
  %582 = vmatmul.mubr.bf16.gmra.mxu0 %v361
  %v583 = vpop.f32.mrf.mxu0
  %v584 = vadd.f32 %v234, %v583
  %v585 = vpop.f32.mrf.mxu0
  %v586 = vpop.f32.mrf.mxu0
  %v587 = vadd.f32 %v237, %v586
  %v588 = vpop.f32.mrf.mxu0
  %589 = vmatprep.mubr.bf16.mxu0 %v365
  %590 = vmatmul.mubr.bf16.gmra.mxu0 %v364
  %v591 = vpop.f32.mrf.mxu0
  %v592 = vadd.f32 %v242, %v591
  %v593 = vpop.f32.mrf.mxu0
  %v594 = vpop.f32.mrf.mxu0
  %v595 = vadd.f32 %v245, %v594
  %v596 = vpop.f32.mrf.mxu0
  %597 = vmatprep.mubr.bf16.mxu0 %v368
  %598 = vmatmul.mubr.bf16.gmra.mxu0 %v367
  %v599 = vpop.f32.mrf.mxu0
  %v600 = vadd.f32 %v250, %v599
  %v601 = vpop.f32.mrf.mxu0
  %v602 = vpop.f32.mrf.mxu0
  %v603 = vadd.f32 %v253, %v602
  %v604 = vpop.f32.mrf.mxu0
  %605 = vmatprep.mubr.bf16.mxu0 %v371
  %606 = vmatmul.mubr.bf16.gmra.mxu0 %v370
  %v607 = vpop.f32.mrf.mxu0
  %v608 = vadd.f32 %v258, %v607
  %v609 = vpop.f32.mrf.mxu0
  %v610 = vpop.f32.mrf.mxu0
  %v611 = vadd.f32 %v261, %v610
  %v612 = vpop.f32.mrf.mxu0
  %613 = vmatprep.mubr.bf16.mxu0 %v374
  %614 = vmatmul.mubr.bf16.gmra.mxu0 %v373
  %v615 = vpop.f32.mrf.mxu0
  %v616 = vadd.f32 %v266, %v615
  %v617 = vpop.f32.mrf.mxu0
  %v618 = vpop.f32.mrf.mxu0
  %v619 = vadd.f32 %v269, %v618
  %v620 = vpop.f32.mrf.mxu0
  %621 = vdwg.mxu0
  %622 = vmatprep.subr.bf16.mxu0 0
  %623 = vmatpush1.bf16.msra.mxu0 0
  %624 = vmatprep.subr.bf16.mxu0 0
  %625 = vmatpush1.bf16.msra.mxu0 0
  %626 = vmatprep.subr.bf16.mxu0 0
  %627 = vmatpush1.bf16.msra.mxu0 0
  %628 = vmatprep.subr.bf16.mxu0 0
  %629 = vmatpush1.bf16.msra.mxu0 0
  %630 = vmatprep.subr.bf16.mxu0 0
  %631 = vmatpush1.bf16.msra.mxu0 0
  %632 = vmatprep.subr.bf16.mxu0 0
  %633 = vmatpush1.bf16.msra.mxu0 0
  %634 = vmatprep.subr.bf16.mxu0 0
  %635 = vmatpush1.bf16.msra.mxu0 %v481
  %636 = vmatprep.subr.bf16.mxu0 0
  %637 = vmatpush1.bf16.msra.mxu0 %v480
  %638 = vmatprep.subr.bf16.mxu0 0
  %639 = vmatpush2.bf16.msra.mxu0 0
  %640 = vmatprep.subr.bf16.mxu0 0
  %641 = vmatpush2.bf16.msra.mxu0 0
  %642 = vmatprep.subr.bf16.mxu0 0
  %643 = vmatpush2.bf16.msra.mxu0 0
  %644 = vmatprep.subr.bf16.mxu0 0
  %645 = vmatpush2.bf16.msra.mxu0 0
  %646 = vmatprep.subr.bf16.mxu0 0
  %647 = vmatpush2.bf16.msra.mxu0 0
  %648 = vmatprep.subr.bf16.mxu0 0
  %649 = vmatpush2.bf16.msra.mxu0 0
  %650 = vmatprep.subr.bf16.mxu0 0
  %651 = vmatpush2.bf16.msra.mxu0 0
  %652 = vmatprep.subr.bf16.mxu0 0
  %653 = vmatpush2.bf16.msra.mxu0 0
  %654 = vmatprep.mubr.bf16.mxu0 0
  %655 = vmatmul.mubr.bf16.gmra.mxu0 %v502
  %v656 = vpop.f32.mrf.mxu0
  %v657 = vadd.f32 %v560, %v656
  %v658 = vpop.f32.mrf.mxu0
  %v659 = vpop.f32.mrf.mxu0
  %v660 = vadd.f32 %v563, %v659
  %v661 = vpop.f32.mrf.mxu0
  %662 = vmatprep.mubr.bf16.mxu0 0
  %663 = vmatmul.mubr.bf16.gmra.mxu0 %v505
  %v664 = vpop.f32.mrf.mxu0
  %v665 = vadd.f32 %v568, %v664
  %v666 = vpop.f32.mrf.mxu0
  %v667 = vpop.f32.mrf.mxu0
  %v668 = vadd.f32 %v571, %v667
  %v669 = vpop.f32.mrf.mxu0
  %670 = vmatprep.mubr.bf16.mxu0 0
  %671 = vmatmul.mubr.bf16.gmra.mxu0 %v508
  %v672 = vpop.f32.mrf.mxu0
  %v673 = vadd.f32 %v576, %v672
  %v674 = vpop.f32.mrf.mxu0
  %v675 = vpop.f32.mrf.mxu0
  %v676 = vadd.f32 %v579, %v675
  %v677 = vpop.f32.mrf.mxu0
  %678 = vmatprep.mubr.bf16.mxu0 0
  %679 = vmatmul.mubr.bf16.gmra.mxu0 %v511
  %v680 = vpop.f32.mrf.mxu0
  %v681 = vadd.f32 %v584, %v680
  %v682 = vpop.f32.mrf.mxu0
  %v683 = vpop.f32.mrf.mxu0
  %v684 = vadd.f32 %v587, %v683
  %v685 = vpop.f32.mrf.mxu0
  %686 = vmatprep.mubr.bf16.mxu0 0
  %687 = vmatmul.mubr.bf16.gmra.mxu0 %v514
  %v688 = vpop.f32.mrf.mxu0
  %v689 = vadd.f32 %v592, %v688
  %v690 = vpop.f32.mrf.mxu0
  %v691 = vpop.f32.mrf.mxu0
  %v692 = vadd.f32 %v595, %v691
  %v693 = vpop.f32.mrf.mxu0
  %694 = vmatprep.mubr.bf16.mxu0 0
  %695 = vmatmul.mubr.bf16.gmra.mxu0 %v517
  %v696 = vpop.f32.mrf.mxu0
  %v697 = vadd.f32 %v600, %v696
  %v698 = vpop.f32.mrf.mxu0
  %v699 = vpop.f32.mrf.mxu0
  %v700 = vadd.f32 %v603, %v699
  %v701 = vpop.f32.mrf.mxu0
  %702 = vmatprep.mubr.bf16.mxu0 0
  %703 = vmatmul.mubr.bf16.gmra.mxu0 %v520
  %v704 = vpop.f32.mrf.mxu0
  %v705 = vadd.f32 %v608, %v704
  %v706 = vpop.f32.mrf.mxu0
  %v707 = vpop.f32.mrf.mxu0
  %v708 = vadd.f32 %v611, %v707
  %v709 = vpop.f32.mrf.mxu0
  %710 = vmatprep.mubr.bf16.mxu0 0
  %711 = vmatmul.mubr.bf16.gmra.mxu0 %v523
  %v712 = vpop.f32.mrf.mxu0
  %v713 = vadd.f32 %v616, %v712
  %v714 = vpop.f32.mrf.mxu0
  %v715 = vpop.f32.mrf.mxu0
  %v716 = vadd.f32 %v619, %v715
  %v717 = vpop.f32.mrf.mxu0
  %718 = vdwg.mxu0
  %719 = vst.msk [vmem:[%s4] sm:$0xff] %vm500, %v657
  %720 = vst.msk [vmem:[%s4 + $0x8] sm:$0xff] %vm500, %v660
  %721 = vst.msk [vmem:[%s4 + $0x10] sm:$0xff] %vm500, %v665
  %722 = vst.msk [vmem:[%s4 + $0x18] sm:$0xff] %vm500, %v668
  %723 = vst.msk [vmem:[%s4 + $0x20] sm:$0xff] %vm500, %v673
  %724 = vst.msk [vmem:[%s4 + $0x28] sm:$0xff] %vm500, %v676
  %725 = vst.msk [vmem:[%s4 + $0x30] sm:$0xff] %vm500, %v681
  %726 = vst.msk [vmem:[%s4 + $0x38] sm:$0xff] %vm500, %v684
  %727 = vst.msk [vmem:[%s4 + $0x40] sm:$0xff] %vm500, %v689
  %728 = vst.msk [vmem:[%s4 + $0x48] sm:$0xff] %vm500, %v692
  %729 = vst.msk [vmem:[%s4 + $0x50] sm:$0xff] %vm500, %v697
  %730 = vst.msk [vmem:[%s4 + $0x58] sm:$0xff] %vm500, %v700
  %731 = vst.msk [vmem:[%s4 + $0x60] sm:$0xff] %vm500, %v705
  %732 = vst.msk [vmem:[%s4 + $0x68] sm:$0xff] %vm500, %v708
  %733 = vst.msk [vmem:[%s4 + $0x70] sm:$0xff] %vm500, %v713
  %734 = vst.msk [vmem:[%s4 + $0x78] sm:$0xff] %vm500, %v716
  // Predicated region
  $region18: #{_lambda_.17} parent=0 // pred_check
    _
  $region19: #{_lambda_.17} parent=0 // pred_check_branch
    %736 = sbr.rel (0) target = $region21
  $region20: #{_lambda_.17} parent=0 // pred_region
    _
  $region21: #{_lambda_.17} parent=0 // pred_fallthru
    _
  // Predicated region
  $region22: #{_lambda_.17} parent=0 // pred_check
    _
  $region23: #{_lambda_.17} parent=0 // pred_check_branch
    %738 = sbr.rel (0) target = $region25
  $region24: #{_lambda_.17} parent=0 // pred_region
    _
  $region25: #{_lambda_.17} parent=0 // pred_fallthru
    _

// kernel: _lambda_.18
$region0: #{_lambda_.18}
  #allocation0 [shape = 'u32[]', space=smem, size = 0x4, offset = 0x4, fixed_abs, tag = 'smem constant byte address 0x4 - core index']
  #allocation1 [shape = 'u32[144,128]{1,0:T(1,128)}', space=vmem, size = 0x12000, scoped, tag = 'internal scratch']
  %s0 = inlined_call_operand.vmem [shape: f32[128,32], index: 0, kind: input, shape index: {}]
  %s1 = inlined_call_operand.vmem [shape: f32[1,32], index: 1, kind: input, shape index: {}]
  %s2 = inlined_call_operand.vmem [shape: f32[1,32], index: 2, kind: input, shape index: {}]
  %s3 = inlined_call_operand.vmem [shape: bf16[128,32], index: 3, kind: output, shape index: {}]
  %s4 = sld [smem:[#allocation0]]
  $region22: #{_lambda_.18} parent=0
    _
  %s6 = ssub.s32 1, %s4
  %s7 = scalar_select 0, %s6, %s4
  // Predicated region
  $region2: #{_lambda_.18} parent=0 // pred_check
    _
  $region3: #{_lambda_.18} parent=0 // pred_check_branch
    %9 = sbr.rel (0) target = $region5
  $region4: #{_lambda_.18} parent=0 // pred_region
    _
  $region5: #{_lambda_.18} parent=0 // pred_fallthru
    _
  // Predicated region
  $region6: #{_lambda_.18} parent=0 // pred_check
    _
  $region7: #{_lambda_.18} parent=0 // pred_check_branch
    %11 = sbr.rel (0) target = $region9
  $region8: #{_lambda_.18} parent=0 // pred_region
    _
  $region9: #{_lambda_.18} parent=0 // pred_fallthru
    _
  // Predicated region
  $region10: #{_lambda_.18} parent=0 // pred_check
    _
  $region11: #{_lambda_.18} parent=0 // pred_check_branch
    %13 = sbr.rel (0) target = $region13
  $region12: #{_lambda_.18} parent=0 // pred_region
    _
  $region13: #{_lambda_.18} parent=0 // pred_fallthru
    _
  %v14 = vld [vmem:[%s0] sm:$0xff]
  %v15 = vld [vmem:[%s0 + $0x8] sm:$0xff]
  %v16 = vld [vmem:[%s0 + $0x10] sm:$0xff]
  %v17 = vld [vmem:[%s0 + $0x18] sm:$0xff]
  %v18 = vld [vmem:[%s0 + $0x20] sm:$0xff]
  %v19 = vld [vmem:[%s0 + $0x28] sm:$0xff]
  %v20 = vld [vmem:[%s0 + $0x30] sm:$0xff]
  %v21 = vld [vmem:[%s0 + $0x38] sm:$0xff]
  %v22 = vld [vmem:[%s0 + $0x40] sm:$0xff]
  %v23 = vld [vmem:[%s0 + $0x48] sm:$0xff]
  %v24 = vld [vmem:[%s0 + $0x50] sm:$0xff]
  %v25 = vld [vmem:[%s0 + $0x58] sm:$0xff]
  %v26 = vld [vmem:[%s0 + $0x60] sm:$0xff]
  %v27 = vld [vmem:[%s0 + $0x68] sm:$0xff]
  %v28 = vld [vmem:[%s0 + $0x70] sm:$0xff]
  %v29 = vld [vmem:[%s0 + $0x78] sm:$0xff]
  %vm30 = vcmask 261120
  %v31 = vsel %vm30, %v14, 0.0
  %v32 = vsel %vm30, %v15, 0.0
  %v33 = vadd.f32 %v31, %v32
  %v34 = vsel %vm30, %v16, 0.0
  %v35 = vadd.f32 %v33, %v34
  %v36 = vsel %vm30, %v17, 0.0
  %v37 = vadd.f32 %v35, %v36
  %v38 = vsel %vm30, %v18, 0.0
  %v39 = vadd.f32 %v37, %v38
  %v40 = vsel %vm30, %v19, 0.0
  %v41 = vadd.f32 %v39, %v40
  %v42 = vsel %vm30, %v20, 0.0
  %v43 = vadd.f32 %v41, %v42
  %v44 = vsel %vm30, %v21, 0.0
  %v45 = vadd.f32 %v43, %v44
  %v46 = vsel %vm30, %v22, 0.0
  %v47 = vadd.f32 %v45, %v46
  %v48 = vsel %vm30, %v23, 0.0
  %v49 = vadd.f32 %v47, %v48
  %v50 = vsel %vm30, %v24, 0.0
  %v51 = vadd.f32 %v49, %v50
  %v52 = vsel %vm30, %v25, 0.0
  %v53 = vadd.f32 %v51, %v52
  %v54 = vsel %vm30, %v26, 0.0
  %v55 = vadd.f32 %v53, %v54
  %v56 = vsel %vm30, %v27, 0.0
  %v57 = vadd.f32 %v55, %v56
  %v58 = vsel %vm30, %v28, 0.0
  %v59 = vadd.f32 %v57, %v58
  %v60 = vsel %vm30, %v29, 0.0
  %v61 = vadd.f32 %v59, %v60
  %v62 = vrot.slane %v61, 4
  %v63 = vadd.f32 %v61, %v62
  %v64 = vrot.slane %v63, 2
  %v65 = vadd.f32 %v63, %v64
  %v66 = vrot.slane %v65, 1
  %v67 = vadd.f32 %v65, %v66
  %v68 = vmul.f32 %v67, 0.0078125
  %v69 = vmul.f32 %v14, %v14
  %v70 = vmul.f32 %v15, %v15
  %v71 = vmul.f32 %v16, %v16
  %v72 = vmul.f32 %v17, %v17
  %v73 = vmul.f32 %v18, %v18
  %v74 = vmul.f32 %v19, %v19
  %v75 = vmul.f32 %v20, %v20
  %v76 = vmul.f32 %v21, %v21
  %v77 = vmul.f32 %v22, %v22
  %v78 = vmul.f32 %v23, %v23
  %v79 = vmul.f32 %v24, %v24
  %v80 = vmul.f32 %v25, %v25
  %v81 = vmul.f32 %v26, %v26
  %v82 = vmul.f32 %v27, %v27
  %v83 = vmul.f32 %v28, %v28
  %v84 = vmul.f32 %v29, %v29
  %v85 = vsel %vm30, %v69, 0.0
  %v86 = vsel %vm30, %v70, 0.0
  %v87 = vadd.f32 %v85, %v86
  %v88 = vsel %vm30, %v71, 0.0
  %v89 = vadd.f32 %v87, %v88
  %v90 = vsel %vm30, %v72, 0.0
  %v91 = vadd.f32 %v89, %v90
  %v92 = vsel %vm30, %v73, 0.0
  %v93 = vadd.f32 %v91, %v92
  %v94 = vsel %vm30, %v74, 0.0
  %v95 = vadd.f32 %v93, %v94
  %v96 = vsel %vm30, %v75, 0.0
  %v97 = vadd.f32 %v95, %v96
  %v98 = vsel %vm30, %v76, 0.0
  %v99 = vadd.f32 %v97, %v98
  %v100 = vsel %vm30, %v77, 0.0
  %v101 = vadd.f32 %v99, %v100
  %v102 = vsel %vm30, %v78, 0.0
  %v103 = vadd.f32 %v101, %v102
  %v104 = vsel %vm30, %v79, 0.0
  %v105 = vadd.f32 %v103, %v104
  %v106 = vsel %vm30, %v80, 0.0
  %v107 = vadd.f32 %v105, %v106
  %v108 = vsel %vm30, %v81, 0.0
  %v109 = vadd.f32 %v107, %v108
  %v110 = vsel %vm30, %v82, 0.0
  %v111 = vadd.f32 %v109, %v110
  %v112 = vsel %vm30, %v83, 0.0
  %v113 = vadd.f32 %v111, %v112
  %v114 = vsel %vm30, %v84, 0.0
  %v115 = vadd.f32 %v113, %v114
  %v116 = vrot.slane %v115, 4
  %v117 = vadd.f32 %v115, %v116
  %v118 = vrot.slane %v117, 2
  %v119 = vadd.f32 %v117, %v118
  %v120 = vrot.slane %v119, 1
  %v121 = vadd.f32 %v119, %v120
  %v122 = vmul.f32 %v121, 0.0078125
  %v123 = vmul.f32 %v68, %v68
  %v124 = vsub.f32 %v122, %v123
  %v125 = vld [vmem:[%s1] sm:$0x1]
  %v126 = vadd.f32 %v124, 1e-05
  %v127 = vrsqrt.pop %v126
  %v128 = vmul.f32 %v125, %v127
  %v129 = vld [vmem:[%s2] sm:$0x1]
  %v130 = vmul.f32 %v68, %v128
  %v131 = vsub.f32 %v129, %v130
  %v133 = vlaneseq
  %v134 = vshrl.u32 %v133, 7
  %v135 = vsub.s32 0, %v134
  %v136 = vrot.slane %v128, %v135
  %v138 = vmul.f32 %v14, %v136
  %v139 = vmul.f32 %v15, %v136
  %v140 = vmul.f32 %v16, %v136
  %v141 = vmul.f32 %v17, %v136
  %v142 = vmul.f32 %v18, %v136
  %v143 = vmul.f32 %v19, %v136
  %v144 = vmul.f32 %v20, %v136
  %v145 = vmul.f32 %v21, %v136
  %v146 = vmul.f32 %v22, %v136
  %v147 = vmul.f32 %v23, %v136
  %v148 = vmul.f32 %v24, %v136
  %v149 = vmul.f32 %v25, %v136
  %v150 = vmul.f32 %v26, %v136
  %v151 = vmul.f32 %v27, %v136
  %v152 = vmul.f32 %v28, %v136
  %v153 = vmul.f32 %v29, %v136
  %v155 = vlaneseq
  %v156 = vshrl.u32 %v155, 7
  %v157 = vsub.s32 0, %v156
  %v158 = vrot.slane %v131, %v157
  %v160 = vadd.f32 %v138, %v158
  %v161 = vadd.f32 %v139, %v158
  %v162 = vadd.f32 %v140, %v158
  %v163 = vadd.f32 %v141, %v158
  %v164 = vadd.f32 %v142, %v158
  %v165 = vadd.f32 %v143, %v158
  %v166 = vadd.f32 %v144, %v158
  %v167 = vadd.f32 %v145, %v158
  %v168 = vadd.f32 %v146, %v158
  %v169 = vadd.f32 %v147, %v158
  %v170 = vadd.f32 %v148, %v158
  %v171 = vadd.f32 %v149, %v158
  %v172 = vadd.f32 %v150, %v158
  %v173 = vadd.f32 %v151, %v158
  %v174 = vadd.f32 %v152, %v158
  %v175 = vadd.f32 %v153, %v158
  %v176 = vmax.f32 %v160, 0.0
  %v177 = vmax.f32 %v161, 0.0
  %v178 = vmax.f32 %v162, 0.0
  %v179 = vmax.f32 %v163, 0.0
  %v180 = vmax.f32 %v164, 0.0
  %v181 = vmax.f32 %v165, 0.0
  %v182 = vmax.f32 %v166, 0.0
  %v183 = vmax.f32 %v167, 0.0
  %v184 = vmax.f32 %v168, 0.0
  %v185 = vmax.f32 %v169, 0.0
  %v186 = vmax.f32 %v170, 0.0
  %v187 = vmax.f32 %v171, 0.0
  %v188 = vmax.f32 %v172, 0.0
  %v189 = vmax.f32 %v173, 0.0
  %v190 = vmax.f32 %v174, 0.0
  %v191 = vmax.f32 %v175, 0.0
  %v192 = vpack.c.bf16 %v177, %v176
  %v193 = vpack.c.bf16 %v179, %v178
  %v194 = vpack.c.bf16 %v181, %v180
  %v195 = vpack.c.bf16 %v183, %v182
  %v196 = vpack.c.bf16 %v185, %v184
  %v197 = vpack.c.bf16 %v187, %v186
  %v198 = vpack.c.bf16 %v189, %v188
  %v199 = vpack.c.bf16 %v191, %v190
  %v208 = vunpack.c.l.b16 %v192
  %v209 = vunpack.c.h.b16 %v192
  %v210 = vunpack.c.l.b16 %v193
  %v211 = vunpack.c.h.b16 %v193
  %v212 = vunpack.c.l.b16 %v194
  %v213 = vunpack.c.h.b16 %v194
  %v214 = vunpack.c.l.b16 %v195
  %v215 = vunpack.c.h.b16 %v195
  %v216 = vunpack.c.l.b16 %v196
  %v217 = vunpack.c.h.b16 %v196
  %v218 = vunpack.c.l.b16 %v197
  %v219 = vunpack.c.h.b16 %v197
  %v220 = vunpack.c.l.b16 %v198
  %v221 = vunpack.c.h.b16 %v198
  %v222 = vunpack.c.l.b16 %v199
  %v223 = vunpack.c.h.b16 %v199
  %v224 = vpack.c.b16 %v208, %v208
  %v225 = vpack.c.b16 %v209, %v209
  %v226 = vpack.c.b16 %v210, %v210
  %v227 = vpack.c.b16 %v211, %v211
  %v228 = vpack.c.b16 %v212, %v212
  %v229 = vpack.c.b16 %v213, %v213
  %v230 = vpack.c.b16 %v214, %v214
  %v231 = vpack.c.b16 %v215, %v215
  %v232 = vpack.c.b16 %v216, %v216
  %v233 = vpack.c.b16 %v217, %v217
  %v234 = vpack.c.b16 %v218, %v218
  %v235 = vpack.c.b16 %v219, %v219
  %v236 = vpack.c.b16 %v220, %v220
  %v237 = vpack.c.b16 %v221, %v221
  %v238 = vpack.c.b16 %v222, %v222
  %v239 = vpack.c.b16 %v223, %v223
  %vm256 = vcmask 257024
  %257 = vst.msk [vmem:[%s3] sm:$0xf] %vm256, %v224
  %258 = vst.msk [vmem:[%s3 + $0x4] sm:$0xf] %vm256, %v225
  %259 = vst.msk [vmem:[%s3 + $0x8] sm:$0xf] %vm256, %v226
  %260 = vst.msk [vmem:[%s3 + $0xc] sm:$0xf] %vm256, %v227
  %261 = vst.msk [vmem:[%s3 + $0x10] sm:$0xf] %vm256, %v228
  %262 = vst.msk [vmem:[%s3 + $0x14] sm:$0xf] %vm256, %v229
  %263 = vst.msk [vmem:[%s3 + $0x18] sm:$0xf] %vm256, %v230
  %264 = vst.msk [vmem:[%s3 + $0x1c] sm:$0xf] %vm256, %v231
  %265 = vst.msk [vmem:[%s3 + $0x20] sm:$0xf] %vm256, %v232
  %266 = vst.msk [vmem:[%s3 + $0x24] sm:$0xf] %vm256, %v233
  %267 = vst.msk [vmem:[%s3 + $0x28] sm:$0xf] %vm256, %v234
  %268 = vst.msk [vmem:[%s3 + $0x2c] sm:$0xf] %vm256, %v235
  %269 = vst.msk [vmem:[%s3 + $0x30] sm:$0xf] %vm256, %v236
  %270 = vst.msk [vmem:[%s3 + $0x34] sm:$0xf] %vm256, %v237
  %271 = vst.msk [vmem:[%s3 + $0x38] sm:$0xf] %vm256, %v238
  %272 = vst.msk [vmem:[%s3 + $0x3c] sm:$0xf] %vm256, %v239
  // Predicated region
  $region14: #{_lambda_.18} parent=0 // pred_check
    _
  $region15: #{_lambda_.18} parent=0 // pred_check_branch
    %274 = sbr.rel (0) target = $region17
  $region16: #{_lambda_.18} parent=0 // pred_region
    _
  $region17: #{_lambda_.18} parent=0 // pred_fallthru
    _
  // Predicated region
  $region18: #{_lambda_.18} parent=0 // pred_check
    _
  $region19: #{_lambda_.18} parent=0 // pred_check_branch
    %276 = sbr.rel (0) target = $region21
  $region20: #{_lambda_.18} parent=0 // pred_region
    _
  $region21: #{_lambda_.18} parent=0 // pred_fallthru
    _

// kernel: _lambda_.19
$region0: #{_lambda_.19}
  #allocation0 [shape = 'u32[]', space=smem, size = 0x4, offset = 0x4, fixed_abs, tag = 'smem constant byte address 0x4 - core index']
  #allocation1 [shape = 'u32[144,128]{1,0:T(1,128)}', space=vmem, size = 0x12000, scoped, tag = 'internal scratch']
  %s0 = inlined_call_operand.vmem [shape: bf16[32,288], index: 0, kind: input, shape index: {}]
  %s1 = inlined_call_operand.vmem [shape: bf16[288,64], index: 1, kind: input, shape index: {}]
  %s2 = inlined_call_operand.vmem [shape: f32[1,64], index: 2, kind: input, shape index: {}]
  %s3 = inlined_call_operand.vmem [shape: f32[1,64], index: 3, kind: input, shape index: {}]
  %s4 = inlined_call_operand.vmem [shape: bf16[32,64], index: 4, kind: output, shape index: {}]
  %s5 = sld [smem:[#allocation0]]
  $region26: #{_lambda_.19} parent=0
    _
  %s7 = ssub.s32 1, %s5
  %s8 = scalar_select 0, %s7, %s5
  // Predicated region
  $region2: #{_lambda_.19} parent=0 // pred_check
    _
  $region3: #{_lambda_.19} parent=0 // pred_check_branch
    %10 = sbr.rel (0) target = $region5
  $region4: #{_lambda_.19} parent=0 // pred_region
    _
  $region5: #{_lambda_.19} parent=0 // pred_fallthru
    _
  // Predicated region
  $region6: #{_lambda_.19} parent=0 // pred_check
    _
  $region7: #{_lambda_.19} parent=0 // pred_check_branch
    %12 = sbr.rel (0) target = $region9
  $region8: #{_lambda_.19} parent=0 // pred_region
    _
  $region9: #{_lambda_.19} parent=0 // pred_fallthru
    _
  // Predicated region
  $region10: #{_lambda_.19} parent=0 // pred_check
    _
  $region11: #{_lambda_.19} parent=0 // pred_check_branch
    %14 = sbr.rel (0) target = $region13
  $region12: #{_lambda_.19} parent=0 // pred_region
    _
  $region13: #{_lambda_.19} parent=0 // pred_fallthru
    _
  // Predicated region
  $region14: #{_lambda_.19} parent=0 // pred_check
    _
  $region15: #{_lambda_.19} parent=0 // pred_check_branch
    %16 = sbr.rel (0) target = $region17
  $region16: #{_lambda_.19} parent=0 // pred_region
    _
  $region17: #{_lambda_.19} parent=0 // pred_fallthru
    _
  %v18 = vld [vmem:[%s0] sm:$0xff]
  %v19 = vld [vmem:[%s0 + $0x8] sm:$0xf]
  %v20 = vld [vmem:[%s0 + $0xc] sm:$0xff]
  %v21 = vld [vmem:[%s0 + $0x14] sm:$0xf]
  %v22 = vld [vmem:[%s0 + $0x18] sm:$0xff]
  %v23 = vld [vmem:[%s0 + $0x20] sm:$0xf]
  %v24 = vld [vmem:[%s0 + $0x24] sm:$0xff]
  %v25 = vld [vmem:[%s0 + $0x2c] sm:$0xf]
  %v26 = vld [vmem:[%s1] sm:$0xf]
  %v27 = vld [vmem:[%s1 + $0x4] sm:$0xf]
  %v28 = vld [vmem:[%s1 + $0x8] sm:$0xf]
  %v29 = vld [vmem:[%s1 + $0xc] sm:$0xf]
  %v30 = vld [vmem:[%s1 + $0x10] sm:$0xf]
  %v31 = vld [vmem:[%s1 + $0x14] sm:$0xf]
  %v32 = vld [vmem:[%s1 + $0x18] sm:$0xf]
  %v33 = vld [vmem:[%s1 + $0x1c] sm:$0xf]
  %v34 = vld [vmem:[%s1 + $0x20] sm:$0xf]
  %v35 = vld [vmem:[%s1 + $0x24] sm:$0xf]
  %v36 = vld [vmem:[%s1 + $0x28] sm:$0xf]
  %v37 = vld [vmem:[%s1 + $0x2c] sm:$0xf]
  %v38 = vld [vmem:[%s1 + $0x30] sm:$0xf]
  %v39 = vld [vmem:[%s1 + $0x34] sm:$0xf]
  %v40 = vld [vmem:[%s1 + $0x38] sm:$0xf]
  %v41 = vld [vmem:[%s1 + $0x3c] sm:$0xf]
  %v42 = vld [vmem:[%s1 + $0x40] sm:$0xf]
  %v43 = vld [vmem:[%s1 + $0x44] sm:$0xf]
  %v44 = vld [vmem:[%s1 + $0x48] sm:$0xf]
  %v45 = vld [vmem:[%s1 + $0x4c] sm:$0xf]
  %v46 = vld [vmem:[%s1 + $0x50] sm:$0xf]
  %v47 = vld [vmem:[%s1 + $0x54] sm:$0xf]
  %v48 = vld [vmem:[%s1 + $0x58] sm:$0xf]
  %v49 = vld [vmem:[%s1 + $0x5c] sm:$0xf]
  %v50 = vld [vmem:[%s1 + $0x60] sm:$0xf]
  %v51 = vld [vmem:[%s1 + $0x64] sm:$0xf]
  %v52 = vld [vmem:[%s1 + $0x68] sm:$0xf]
  %v53 = vld [vmem:[%s1 + $0x6c] sm:$0xf]
  %v54 = vld [vmem:[%s1 + $0x70] sm:$0xf]
  %v55 = vld [vmem:[%s1 + $0x74] sm:$0xf]
  %v56 = vld [vmem:[%s1 + $0x78] sm:$0xf]
  %v57 = vld [vmem:[%s1 + $0x7c] sm:$0xf]
  %v58 = vld [vmem:[%s1 + $0x80] sm:$0xf]
  %v59 = vld [vmem:[%s1 + $0x84] sm:$0xf]
  %v60 = vld [vmem:[%s1 + $0x88] sm:$0xf]
  %v61 = vld [vmem:[%s1 + $0x8c] sm:$0xf]
  %v70 = vunpack.c.l.b16 %v18
  %v71 = vunpack.c.h.b16 %v18
  %v72 = vunpack.c.l.b16 %v19
  %v73 = vunpack.c.l.b16 %v20
  %v74 = vunpack.c.h.b16 %v20
  %v75 = vunpack.c.l.b16 %v21
  %v76 = vunpack.c.l.b16 %v22
  %v77 = vunpack.c.h.b16 %v22
  %v78 = vunpack.c.l.b16 %v23
  %v79 = vunpack.c.l.b16 %v24
  %v80 = vunpack.c.h.b16 %v24
  %v81 = vunpack.c.l.b16 %v25
  %v82 = vpack.c.b16 %v73, %v70
  %v83 = vpack.c.b16 %v74, %v71
  %v84 = vpack.c.b16 %v75, %v72
  %v85 = vpack.c.b16 %v79, %v76
  %v86 = vpack.c.b16 %v80, %v77
  %v87 = vpack.c.b16 %v81, %v78
  %v128 = vunpack.c.l.b16 %v26
  %v129 = vunpack.c.l.b16 %v27
  %v130 = vunpack.c.l.b16 %v28
  %v131 = vunpack.c.l.b16 %v29
  %v132 = vunpack.c.l.b16 %v30
  %v133 = vunpack.c.l.b16 %v31
  %v134 = vunpack.c.l.b16 %v32
  %v135 = vunpack.c.l.b16 %v33
  %v136 = vunpack.c.l.b16 %v34
  %v137 = vunpack.c.l.b16 %v35
  %v138 = vunpack.c.l.b16 %v36
  %v139 = vunpack.c.l.b16 %v37
  %v140 = vunpack.c.l.b16 %v38
  %v141 = vunpack.c.l.b16 %v39
  %v142 = vunpack.c.l.b16 %v40
  %v143 = vunpack.c.l.b16 %v41
  %v144 = vunpack.c.l.b16 %v42
  %v145 = vunpack.c.l.b16 %v43
  %v146 = vunpack.c.l.b16 %v44
  %v147 = vunpack.c.l.b16 %v45
  %v148 = vunpack.c.l.b16 %v46
  %v149 = vunpack.c.l.b16 %v47
  %v150 = vunpack.c.l.b16 %v48
  %v151 = vunpack.c.l.b16 %v49
  %v152 = vunpack.c.l.b16 %v50
  %v153 = vunpack.c.l.b16 %v51
  %v154 = vunpack.c.l.b16 %v52
  %v155 = vunpack.c.l.b16 %v53
  %v156 = vunpack.c.l.b16 %v54
  %v157 = vunpack.c.l.b16 %v55
  %v158 = vunpack.c.l.b16 %v56
  %v159 = vunpack.c.l.b16 %v57
  %v160 = vunpack.c.l.b16 %v58
  %v161 = vunpack.c.l.b16 %v59
  %v162 = vunpack.c.l.b16 %v60
  %v163 = vunpack.c.l.b16 %v61
  %v164 = vpack.c.b16 %v129, %v128
  %v165 = vpack.c.b16 %v131, %v130
  %v166 = vpack.c.b16 %v133, %v132
  %v167 = vpack.c.b16 %v135, %v134
  %v168 = vpack.c.b16 %v137, %v136
  %v169 = vpack.c.b16 %v139, %v138
  %v170 = vpack.c.b16 %v141, %v140
  %v171 = vpack.c.b16 %v143, %v142
  %v172 = vpack.c.b16 %v145, %v144
  %v173 = vpack.c.b16 %v147, %v146
  %v174 = vpack.c.b16 %v149, %v148
  %v175 = vpack.c.b16 %v151, %v150
  %v176 = vpack.c.b16 %v153, %v152
  %v177 = vpack.c.b16 %v155, %v154
  %v178 = vpack.c.b16 %v157, %v156
  %v179 = vpack.c.b16 %v159, %v158
  %v180 = vpack.c.b16 %v161, %v160
  %v181 = vpack.c.b16 %v163, %v162
  %vm200 = vcmask 261120
  %v202 = vsel %vm200, %v84, 0
  %v205 = vsel %vm200, %v87, 0
  %207 = vmatprep.subr.bf16.mxu0 0
  %208 = vmatpush1.bf16.msra.mxu0 %v171
  %209 = vmatprep.subr.bf16.mxu0 0
  %210 = vmatpush1.bf16.msra.mxu0 %v170
  %211 = vmatprep.subr.bf16.mxu0 0
  %212 = vmatpush1.bf16.msra.mxu0 %v169
  %213 = vmatprep.subr.bf16.mxu0 0
  %214 = vmatpush1.bf16.msra.mxu0 %v168
  %215 = vmatprep.subr.bf16.mxu0 0
  %216 = vmatpush1.bf16.msra.mxu0 %v167
  %217 = vmatprep.subr.bf16.mxu0 0
  %218 = vmatpush1.bf16.msra.mxu0 %v166
  %219 = vmatprep.subr.bf16.mxu0 0
  %220 = vmatpush1.bf16.msra.mxu0 %v165
  %221 = vmatprep.subr.bf16.mxu0 0
  %222 = vmatpush1.bf16.msra.mxu0 %v164
  %223 = vmatprep.subr.bf16.mxu0 0
  %224 = vmatpush2.bf16.msra.mxu0 %v179
  %225 = vmatprep.subr.bf16.mxu0 0
  %226 = vmatpush2.bf16.msra.mxu0 %v178
  %227 = vmatprep.subr.bf16.mxu0 0
  %228 = vmatpush2.bf16.msra.mxu0 %v177
  %229 = vmatprep.subr.bf16.mxu0 0
  %230 = vmatpush2.bf16.msra.mxu0 %v176
  %231 = vmatprep.subr.bf16.mxu0 0
  %232 = vmatpush2.bf16.msra.mxu0 %v175
  %233 = vmatprep.subr.bf16.mxu0 0
  %234 = vmatpush2.bf16.msra.mxu0 %v174
  %235 = vmatprep.subr.bf16.mxu0 0
  %236 = vmatpush2.bf16.msra.mxu0 %v173
  %237 = vmatprep.subr.bf16.mxu0 0
  %238 = vmatpush2.bf16.msra.mxu0 %v172
  %239 = vmatprep.mubr.bf16.mxu0 %v83
  %240 = vmatmul.mubr.bf16.gmra.mxu0 %v82
  %v241 = vpop.f32.mrf.mxu0
  %v242 = vadd.f32 0.0, %v241
  %v243 = vpop.f32.mrf.mxu0
  %v244 = vpop.f32.mrf.mxu0
  %v245 = vadd.f32 0.0, %v244
  %v246 = vpop.f32.mrf.mxu0
  %247 = vmatprep.mubr.bf16.mxu0 %v86
  %248 = vmatmul.mubr.bf16.gmra.mxu0 %v85
  %v249 = vpop.f32.mrf.mxu0
  %v250 = vadd.f32 0.0, %v249
  %v251 = vpop.f32.mrf.mxu0
  %v252 = vpop.f32.mrf.mxu0
  %v253 = vadd.f32 0.0, %v252
  %v254 = vpop.f32.mrf.mxu0
  %255 = vdwg.mxu0
  %256 = vmatprep.subr.bf16.mxu0 0
  %257 = vmatpush1.bf16.msra.mxu0 0
  %258 = vmatprep.subr.bf16.mxu0 0
  %259 = vmatpush1.bf16.msra.mxu0 0
  %260 = vmatprep.subr.bf16.mxu0 0
  %261 = vmatpush1.bf16.msra.mxu0 0
  %262 = vmatprep.subr.bf16.mxu0 0
  %263 = vmatpush1.bf16.msra.mxu0 0
  %264 = vmatprep.subr.bf16.mxu0 0
  %265 = vmatpush1.bf16.msra.mxu0 0
  %266 = vmatprep.subr.bf16.mxu0 0
  %267 = vmatpush1.bf16.msra.mxu0 0
  %268 = vmatprep.subr.bf16.mxu0 0
  %269 = vmatpush1.bf16.msra.mxu0 %v181
  %270 = vmatprep.subr.bf16.mxu0 0
  %271 = vmatpush1.bf16.msra.mxu0 %v180
  %272 = vmatprep.subr.bf16.mxu0 0
  %273 = vmatpush2.bf16.msra.mxu0 0
  %274 = vmatprep.subr.bf16.mxu0 0
  %275 = vmatpush2.bf16.msra.mxu0 0
  %276 = vmatprep.subr.bf16.mxu0 0
  %277 = vmatpush2.bf16.msra.mxu0 0
  %278 = vmatprep.subr.bf16.mxu0 0
  %279 = vmatpush2.bf16.msra.mxu0 0
  %280 = vmatprep.subr.bf16.mxu0 0
  %281 = vmatpush2.bf16.msra.mxu0 0
  %282 = vmatprep.subr.bf16.mxu0 0
  %283 = vmatpush2.bf16.msra.mxu0 0
  %284 = vmatprep.subr.bf16.mxu0 0
  %285 = vmatpush2.bf16.msra.mxu0 0
  %286 = vmatprep.subr.bf16.mxu0 0
  %287 = vmatpush2.bf16.msra.mxu0 0
  %288 = vmatprep.mubr.bf16.mxu0 0
  %289 = vmatmul.mubr.bf16.gmra.mxu0 %v202
  %v290 = vpop.f32.mrf.mxu0
  %v291 = vadd.f32 %v242, %v290
  %v292 = vpop.f32.mrf.mxu0
  %v293 = vpop.f32.mrf.mxu0
  %v294 = vadd.f32 %v245, %v293
  %v295 = vpop.f32.mrf.mxu0
  %296 = vmatprep.mubr.bf16.mxu0 0
  %297 = vmatmul.mubr.bf16.gmra.mxu0 %v205
  %v298 = vpop.f32.mrf.mxu0
  %v299 = vadd.f32 %v250, %v298
  %v300 = vpop.f32.mrf.mxu0
  %v301 = vpop.f32.mrf.mxu0
  %v302 = vadd.f32 %v253, %v301
  %v303 = vpop.f32.mrf.mxu0
  %304 = vdwg.mxu0
  %vm305 = vcmask 523264
  %v306 = vsel %vm305, %v291, 0.0
  %v307 = vsel %vm305, %v294, 0.0
  %v308 = vadd.f32 %v306, %v307
  %v309 = vsel %vm305, %v299, 0.0
  %v310 = vadd.f32 %v308, %v309
  %v311 = vsel %vm305, %v302, 0.0
  %v312 = vadd.f32 %v310, %v311
  %v313 = vrot.slane %v312, 4
  %v314 = vadd.f32 %v312, %v313
  %v315 = vrot.slane %v314, 2
  %v316 = vadd.f32 %v314, %v315
  %v317 = vrot.slane %v316, 1
  %v318 = vadd.f32 %v316, %v317
  %v319 = vmul.f32 %v318, 0.03125
  %v320 = vmul.f32 %v291, %v291
  %v321 = vmul.f32 %v294, %v294
  %v322 = vmul.f32 %v299, %v299
  %v323 = vmul.f32 %v302, %v302
  %v324 = vsel %vm305, %v320, 0.0
  %v325 = vsel %vm305, %v321, 0.0
  %v326 = vadd.f32 %v324, %v325
  %v327 = vsel %vm305, %v322, 0.0
  %v328 = vadd.f32 %v326, %v327
  %v329 = vsel %vm305, %v323, 0.0
  %v330 = vadd.f32 %v328, %v329
  %v331 = vrot.slane %v330, 4
  %v332 = vadd.f32 %v330, %v331
  %v333 = vrot.slane %v332, 2
  %v334 = vadd.f32 %v332, %v333
  %v335 = vrot.slane %v334, 1
  %v336 = vadd.f32 %v334, %v335
  %v337 = vmul.f32 %v336, 0.03125
  %v338 = vmul.f32 %v319, %v319
  %v339 = vsub.f32 %v337, %v338
  %v340 = vld [vmem:[%s2] sm:$0x1]
  %v341 = vadd.f32 %v339, 1e-05
  %v342 = vrsqrt.pop %v341
  %v343 = vmul.f32 %v340, %v342
  %v344 = vld [vmem:[%s3] sm:$0x1]
  %v345 = vmul.f32 %v319, %v343
  %v346 = vsub.f32 %v344, %v345
  %v348 = vlaneseq
  %v349 = vshrl.u32 %v348, 7
  %v350 = vsub.s32 0, %v349
  %v351 = vrot.slane %v343, %v350
  %v353 = vmul.f32 %v291, %v351
  %v354 = vmul.f32 %v294, %v351
  %v355 = vmul.f32 %v299, %v351
  %v356 = vmul.f32 %v302, %v351
  %v358 = vlaneseq
  %v359 = vshrl.u32 %v358, 7
  %v360 = vsub.s32 0, %v359
  %v361 = vrot.slane %v346, %v360
  %v363 = vadd.f32 %v353, %v361
  %v364 = vadd.f32 %v354, %v361
  %v365 = vadd.f32 %v355, %v361
  %v366 = vadd.f32 %v356, %v361
  %v367 = vmax.f32 %v363, 0.0
  %v368 = vmax.f32 %v364, 0.0
  %v369 = vmax.f32 %v365, 0.0
  %v370 = vmax.f32 %v366, 0.0
  %v371 = vpack.c.bf16 %v368, %v367
  %v372 = vpack.c.bf16 %v370, %v369
  %v375 = vunpack.c.l.b16 %v371
  %v376 = vunpack.c.h.b16 %v371
  %v377 = vunpack.c.l.b16 %v372
  %v378 = vunpack.c.h.b16 %v372
  %v379 = vpack.c.b16 %v375, %v375
  %v380 = vpack.c.b16 %v376, %v376
  %v381 = vpack.c.b16 %v377, %v377
  %v382 = vpack.c.b16 %v378, %v378
  %vm387 = vcmask 519168
  %388 = vst.msk [vmem:[%s4] sm:$0xf] %vm387, %v379
  %389 = vst.msk [vmem:[%s4 + $0x4] sm:$0xf] %vm387, %v380
  %390 = vst.msk [vmem:[%s4 + $0x8] sm:$0xf] %vm387, %v381
  %391 = vst.msk [vmem:[%s4 + $0xc] sm:$0xf] %vm387, %v382
  // Predicated region
  $region18: #{_lambda_.19} parent=0 // pred_check
    _
  $region19: #{_lambda_.19} parent=0 // pred_check_branch
    %393 = sbr.rel (0) target = $region21
  $region20: #{_lambda_.19} parent=0 // pred_region
    _
  $region21: #{_lambda_.19} parent=0 // pred_fallthru
    _
  // Predicated region
  $region22: #{_lambda_.19} parent=0 // pred_check
    _
  $region23: #{_lambda_.19} parent=0 // pred_check_branch
    %395 = sbr.rel (0) target = $region25
  $region24: #{_lambda_.19} parent=0 // pred_region
    _
  $region25: #{_lambda_.19} parent=0 // pred_fallthru
    _

// kernel: _lambda_.20
$region0: #{_lambda_.20}
  #allocation0 [shape = 'u32[]', space=smem, size = 0x4, offset = 0x4, fixed_abs, tag = 'smem constant byte address 0x4 - core index']
  #allocation1 [shape = 'u32[144,128]{1,0:T(1,128)}', space=vmem, size = 0x12000, scoped, tag = 'internal scratch']
  %s0 = inlined_call_operand.vmem [shape: bf16[32,576], index: 0, kind: input, shape index: {}]
  %s1 = inlined_call_operand.vmem [shape: bf16[576,64], index: 1, kind: input, shape index: {}]
  %s2 = inlined_call_operand.vmem [shape: bf16[32,32], index: 2, kind: input, shape index: {}]
  %s3 = inlined_call_operand.vmem [shape: bf16[32,64], index: 3, kind: input, shape index: {}]
  %s4 = inlined_call_operand.vmem [shape: f32[32,64], index: 4, kind: output, shape index: {}]
  %s5 = sld [smem:[#allocation0]]
  $region26: #{_lambda_.20} parent=0
    _
  %s7 = ssub.s32 1, %s5
  %s8 = scalar_select 0, %s7, %s5
  // Predicated region
  $region2: #{_lambda_.20} parent=0 // pred_check
    _
  $region3: #{_lambda_.20} parent=0 // pred_check_branch
    %10 = sbr.rel (0) target = $region5
  $region4: #{_lambda_.20} parent=0 // pred_region
    _
  $region5: #{_lambda_.20} parent=0 // pred_fallthru
    _
  // Predicated region
  $region6: #{_lambda_.20} parent=0 // pred_check
    _
  $region7: #{_lambda_.20} parent=0 // pred_check_branch
    %12 = sbr.rel (0) target = $region9
  $region8: #{_lambda_.20} parent=0 // pred_region
    _
  $region9: #{_lambda_.20} parent=0 // pred_fallthru
    _
  // Predicated region
  $region10: #{_lambda_.20} parent=0 // pred_check
    _
  $region11: #{_lambda_.20} parent=0 // pred_check_branch
    %14 = sbr.rel (0) target = $region13
  $region12: #{_lambda_.20} parent=0 // pred_region
    _
  $region13: #{_lambda_.20} parent=0 // pred_fallthru
    _
  // Predicated region
  $region14: #{_lambda_.20} parent=0 // pred_check
    _
  $region15: #{_lambda_.20} parent=0 // pred_check_branch
    %16 = sbr.rel (0) target = $region17
  $region16: #{_lambda_.20} parent=0 // pred_region
    _
  $region17: #{_lambda_.20} parent=0 // pred_fallthru
    _
  %v18 = vld [vmem:[%s0] sm:$0xff]
  %v19 = vld [vmem:[%s0 + $0x8] sm:$0xff]
  %v20 = vld [vmem:[%s0 + $0x10] sm:$0xf]
  %v21 = vld [vmem:[%s0 + $0x14] sm:$0xff]
  %v22 = vld [vmem:[%s0 + $0x1c] sm:$0xff]
  %v23 = vld [vmem:[%s0 + $0x24] sm:$0xf]
  %v24 = vld [vmem:[%s0 + $0x28] sm:$0xff]
  %v25 = vld [vmem:[%s0 + $0x30] sm:$0xff]
  %v26 = vld [vmem:[%s0 + $0x38] sm:$0xf]
  %v27 = vld [vmem:[%s0 + $0x3c] sm:$0xff]
  %v28 = vld [vmem:[%s0 + $0x44] sm:$0xff]
  %v29 = vld [vmem:[%s0 + $0x4c] sm:$0xf]
  %v30 = vld [vmem:[%s1] sm:$0xf]
  %v31 = vld [vmem:[%s1 + $0x4] sm:$0xf]
  %v32 = vld [vmem:[%s1 + $0x8] sm:$0xf]
  %v33 = vld [vmem:[%s1 + $0xc] sm:$0xf]
  %v34 = vld [vmem:[%s1 + $0x10] sm:$0xf]
  %v35 = vld [vmem:[%s1 + $0x14] sm:$0xf]
  %v36 = vld [vmem:[%s1 + $0x18] sm:$0xf]
  %v37 = vld [vmem:[%s1 + $0x1c] sm:$0xf]
  %v38 = vld [vmem:[%s1 + $0x20] sm:$0xf]
  %v39 = vld [vmem:[%s1 + $0x24] sm:$0xf]
  %v40 = vld [vmem:[%s1 + $0x28] sm:$0xf]
  %v41 = vld [vmem:[%s1 + $0x2c] sm:$0xf]
  %v42 = vld [vmem:[%s1 + $0x30] sm:$0xf]
  %v43 = vld [vmem:[%s1 + $0x34] sm:$0xf]
  %v44 = vld [vmem:[%s1 + $0x38] sm:$0xf]
  %v45 = vld [vmem:[%s1 + $0x3c] sm:$0xf]
  %v46 = vld [vmem:[%s1 + $0x40] sm:$0xf]
  %v47 = vld [vmem:[%s1 + $0x44] sm:$0xf]
  %v48 = vld [vmem:[%s1 + $0x48] sm:$0xf]
  %v49 = vld [vmem:[%s1 + $0x4c] sm:$0xf]
  %v50 = vld [vmem:[%s1 + $0x50] sm:$0xf]
  %v51 = vld [vmem:[%s1 + $0x54] sm:$0xf]
  %v52 = vld [vmem:[%s1 + $0x58] sm:$0xf]
  %v53 = vld [vmem:[%s1 + $0x5c] sm:$0xf]
  %v54 = vld [vmem:[%s1 + $0x60] sm:$0xf]
  %v55 = vld [vmem:[%s1 + $0x64] sm:$0xf]
  %v56 = vld [vmem:[%s1 + $0x68] sm:$0xf]
  %v57 = vld [vmem:[%s1 + $0x6c] sm:$0xf]
  %v58 = vld [vmem:[%s1 + $0x70] sm:$0xf]
  %v59 = vld [vmem:[%s1 + $0x74] sm:$0xf]
  %v60 = vld [vmem:[%s1 + $0x78] sm:$0xf]
  %v61 = vld [vmem:[%s1 + $0x7c] sm:$0xf]
  %v62 = vld [vmem:[%s1 + $0x80] sm:$0xf]
  %v63 = vld [vmem:[%s1 + $0x84] sm:$0xf]
  %v64 = vld [vmem:[%s1 + $0x88] sm:$0xf]
  %v65 = vld [vmem:[%s1 + $0x8c] sm:$0xf]
  %v66 = vld [vmem:[%s1 + $0x90] sm:$0xf]
  %v67 = vld [vmem:[%s1 + $0x94] sm:$0xf]
  %v68 = vld [vmem:[%s1 + $0x98] sm:$0xf]
  %v69 = vld [vmem:[%s1 + $0x9c] sm:$0xf]
  %v70 = vld [vmem:[%s1 + $0xa0] sm:$0xf]
  %v71 = vld [vmem:[%s1 + $0xa4] sm:$0xf]
  %v72 = vld [vmem:[%s1 + $0xa8] sm:$0xf]
  %v73 = vld [vmem:[%s1 + $0xac] sm:$0xf]
  %v74 = vld [vmem:[%s1 + $0xb0] sm:$0xf]
  %v75 = vld [vmem:[%s1 + $0xb4] sm:$0xf]
  %v76 = vld [vmem:[%s1 + $0xb8] sm:$0xf]
  %v77 = vld [vmem:[%s1 + $0xbc] sm:$0xf]
  %v78 = vld [vmem:[%s1 + $0xc0] sm:$0xf]
  %v79 = vld [vmem:[%s1 + $0xc4] sm:$0xf]
  %v80 = vld [vmem:[%s1 + $0xc8] sm:$0xf]
  %v81 = vld [vmem:[%s1 + $0xcc] sm:$0xf]
  %v82 = vld [vmem:[%s1 + $0xd0] sm:$0xf]
  %v83 = vld [vmem:[%s1 + $0xd4] sm:$0xf]
  %v84 = vld [vmem:[%s1 + $0xd8] sm:$0xf]
  %v85 = vld [vmem:[%s1 + $0xdc] sm:$0xf]
  %v86 = vld [vmem:[%s1 + $0xe0] sm:$0xf]
  %v87 = vld [vmem:[%s1 + $0xe4] sm:$0xf]
  %v88 = vld [vmem:[%s1 + $0xe8] sm:$0xf]
  %v89 = vld [vmem:[%s1 + $0xec] sm:$0xf]
  %v90 = vld [vmem:[%s1 + $0xf0] sm:$0xf]
  %v91 = vld [vmem:[%s1 + $0xf4] sm:$0xf]
  %v92 = vld [vmem:[%s1 + $0xf8] sm:$0xf]
  %v93 = vld [vmem:[%s1 + $0xfc] sm:$0xf]
  %v94 = vld [vmem:[%s1 + $0x100] sm:$0xf]
  %v95 = vld [vmem:[%s1 + $0x104] sm:$0xf]
  %v96 = vld [vmem:[%s1 + $0x108] sm:$0xf]
  %v97 = vld [vmem:[%s1 + $0x10c] sm:$0xf]
  %v98 = vld [vmem:[%s1 + $0x110] sm:$0xf]
  %v99 = vld [vmem:[%s1 + $0x114] sm:$0xf]
  %v100 = vld [vmem:[%s1 + $0x118] sm:$0xf]
  %v101 = vld [vmem:[%s1 + $0x11c] sm:$0xf]
  %v102 = vld [vmem:[%s2] sm:$0xf]
  %v103 = vld [vmem:[%s2 + $0x4] sm:$0xf]
  %v104 = vld [vmem:[%s2 + $0x8] sm:$0xf]
  %v105 = vld [vmem:[%s2 + $0xc] sm:$0xf]
  %v106 = vld [vmem:[%s3] sm:$0xf]
  %v107 = vld [vmem:[%s3 + $0x4] sm:$0xf]
  %v108 = vld [vmem:[%s3 + $0x8] sm:$0xf]
  %v109 = vld [vmem:[%s3 + $0xc] sm:$0xf]
  %v114 = vunpack.c.l.b16 %v102
  %v115 = vunpack.c.l.b16 %v103
  %v116 = vunpack.c.l.b16 %v104
  %v117 = vunpack.c.l.b16 %v105
  %v118 = vpack.c.b16 %v115, %v114
  %v119 = vpack.c.b16 %v117, %v116
  %v124 = vunpack.c.l.b16 %v106
  %v125 = vunpack.c.l.b16 %v107
  %v126 = vunpack.c.l.b16 %v108
  %v127 = vunpack.c.l.b16 %v109
  %v128 = vpack.c.b16 %v125, %v124
  %v129 = vpack.c.b16 %v127, %v126
  %vm132 = vcmask 261120
  %v134 = vsel %vm132, %v118, 0
  %v137 = vsel %vm132, %v119, 0
  %139 = vmatprep.subr.bf16.mxu0 0
  %140 = vmatpush1.bf16.msra.mxu0 0
  %141 = vmatprep.subr.bf16.mxu0 0
  %142 = vmatpush1.bf16.msra.mxu0 0
  %143 = vmatprep.subr.bf16.mxu0 0
  %144 = vmatpush1.bf16.msra.mxu0 0
  %145 = vmatprep.subr.bf16.mxu0 0
  %146 = vmatpush1.bf16.msra.mxu0 0
  %147 = vmatprep.subr.bf16.mxu0 0
  %148 = vmatpush1.bf16.msra.mxu0 0
  %149 = vmatprep.subr.bf16.mxu0 0
  %150 = vmatpush1.bf16.msra.mxu0 0
  %151 = vmatprep.subr.bf16.mxu0 0
  %152 = vmatpush1.bf16.msra.mxu0 %v129
  %153 = vmatprep.subr.bf16.mxu0 0
  %154 = vmatpush1.bf16.msra.mxu0 %v128
  %155 = vmatprep.subr.bf16.mxu0 0
  %156 = vmatpush2.bf16.msra.mxu0 0
  %157 = vmatprep.subr.bf16.mxu0 0
  %158 = vmatpush2.bf16.msra.mxu0 0
  %159 = vmatprep.subr.bf16.mxu0 0
  %160 = vmatpush2.bf16.msra.mxu0 0
  %161 = vmatprep.subr.bf16.mxu0 0
  %162 = vmatpush2.bf16.msra.mxu0 0
  %163 = vmatprep.subr.bf16.mxu0 0
  %164 = vmatpush2.bf16.msra.mxu0 0
  %165 = vmatprep.subr.bf16.mxu0 0
  %166 = vmatpush2.bf16.msra.mxu0 0
  %167 = vmatprep.subr.bf16.mxu0 0
  %168 = vmatpush2.bf16.msra.mxu0 0
  %169 = vmatprep.subr.bf16.mxu0 0
  %170 = vmatpush2.bf16.msra.mxu0 0
  %171 = vmatprep.mubr.bf16.mxu0 0
  %172 = vmatmul.mubr.bf16.gmra.mxu0 %v134
  %v173 = vpop.f32.mrf.mxu0
  %v174 = vadd.f32 0.0, %v173
  %v175 = vpop.f32.mrf.mxu0
  %v176 = vpop.f32.mrf.mxu0
  %v177 = vadd.f32 0.0, %v176
  %v178 = vpop.f32.mrf.mxu0
  %179 = vmatprep.mubr.bf16.mxu0 0
  %180 = vmatmul.mubr.bf16.gmra.mxu0 %v137
  %v181 = vpop.f32.mrf.mxu0
  %v182 = vadd.f32 0.0, %v181
  %v183 = vpop.f32.mrf.mxu0
  %v184 = vpop.f32.mrf.mxu0
  %v185 = vadd.f32 0.0, %v184
  %v186 = vpop.f32.mrf.mxu0
  %187 = vdwg.mxu0
  %v200 = vunpack.c.l.b16 %v18
  %v201 = vunpack.c.h.b16 %v18
  %v202 = vunpack.c.l.b16 %v19
  %v203 = vunpack.c.h.b16 %v19
  %v204 = vunpack.c.l.b16 %v20
  %v205 = vunpack.c.l.b16 %v21
  %v206 = vunpack.c.h.b16 %v21
  %v207 = vunpack.c.l.b16 %v22
  %v208 = vunpack.c.h.b16 %v22
  %v209 = vunpack.c.l.b16 %v23
  %v210 = vunpack.c.l.b16 %v24
  %v211 = vunpack.c.h.b16 %v24
  %v212 = vunpack.c.l.b16 %v25
  %v213 = vunpack.c.h.b16 %v25
  %v214 = vunpack.c.l.b16 %v26
  %v215 = vunpack.c.l.b16 %v27
  %v216 = vunpack.c.h.b16 %v27
  %v217 = vunpack.c.l.b16 %v28
  %v218 = vunpack.c.h.b16 %v28
  %v219 = vunpack.c.l.b16 %v29
  %v220 = vpack.c.b16 %v205, %v200
  %v221 = vpack.c.b16 %v206, %v201
  %v222 = vpack.c.b16 %v207, %v202
  %v223 = vpack.c.b16 %v208, %v203
  %v224 = vpack.c.b16 %v209, %v204
  %v225 = vpack.c.b16 %v215, %v210
  %v226 = vpack.c.b16 %v216, %v211
  %v227 = vpack.c.b16 %v217, %v212
  %v228 = vpack.c.b16 %v218, %v213
  %v229 = vpack.c.b16 %v219, %v214
  %v310 = vunpack.c.l.b16 %v30
  %v311 = vunpack.c.l.b16 %v31
  %v312 = vunpack.c.l.b16 %v32
  %v313 = vunpack.c.l.b16 %v33
  %v314 = vunpack.c.l.b16 %v34
  %v315 = vunpack.c.l.b16 %v35
  %v316 = vunpack.c.l.b16 %v36
  %v317 = vunpack.c.l.b16 %v37
  %v318 = vunpack.c.l.b16 %v38
  %v319 = vunpack.c.l.b16 %v39
  %v320 = vunpack.c.l.b16 %v40
  %v321 = vunpack.c.l.b16 %v41
  %v322 = vunpack.c.l.b16 %v42
  %v323 = vunpack.c.l.b16 %v43
  %v324 = vunpack.c.l.b16 %v44
  %v325 = vunpack.c.l.b16 %v45
  %v326 = vunpack.c.l.b16 %v46
  %v327 = vunpack.c.l.b16 %v47
  %v328 = vunpack.c.l.b16 %v48
  %v329 = vunpack.c.l.b16 %v49
  %v330 = vunpack.c.l.b16 %v50
  %v331 = vunpack.c.l.b16 %v51
  %v332 = vunpack.c.l.b16 %v52
  %v333 = vunpack.c.l.b16 %v53
  %v334 = vunpack.c.l.b16 %v54
  %v335 = vunpack.c.l.b16 %v55
  %v336 = vunpack.c.l.b16 %v56
  %v337 = vunpack.c.l.b16 %v57
  %v338 = vunpack.c.l.b16 %v58
  %v339 = vunpack.c.l.b16 %v59
  %v340 = vunpack.c.l.b16 %v60
  %v341 = vunpack.c.l.b16 %v61
  %v342 = vunpack.c.l.b16 %v62
  %v343 = vunpack.c.l.b16 %v63
  %v344 = vunpack.c.l.b16 %v64
  %v345 = vunpack.c.l.b16 %v65
  %v346 = vunpack.c.l.b16 %v66
  %v347 = vunpack.c.l.b16 %v67
  %v348 = vunpack.c.l.b16 %v68
  %v349 = vunpack.c.l.b16 %v69
  %v350 = vunpack.c.l.b16 %v70
  %v351 = vunpack.c.l.b16 %v71
  %v352 = vunpack.c.l.b16 %v72
  %v353 = vunpack.c.l.b16 %v73
  %v354 = vunpack.c.l.b16 %v74
  %v355 = vunpack.c.l.b16 %v75
  %v356 = vunpack.c.l.b16 %v76
  %v357 = vunpack.c.l.b16 %v77
  %v358 = vunpack.c.l.b16 %v78
  %v359 = vunpack.c.l.b16 %v79
  %v360 = vunpack.c.l.b16 %v80
  %v361 = vunpack.c.l.b16 %v81
  %v362 = vunpack.c.l.b16 %v82
  %v363 = vunpack.c.l.b16 %v83
  %v364 = vunpack.c.l.b16 %v84
  %v365 = vunpack.c.l.b16 %v85
  %v366 = vunpack.c.l.b16 %v86
  %v367 = vunpack.c.l.b16 %v87
  %v368 = vunpack.c.l.b16 %v88
  %v369 = vunpack.c.l.b16 %v89
  %v370 = vunpack.c.l.b16 %v90
  %v371 = vunpack.c.l.b16 %v91
  %v372 = vunpack.c.l.b16 %v92
  %v373 = vunpack.c.l.b16 %v93
  %v374 = vunpack.c.l.b16 %v94
  %v375 = vunpack.c.l.b16 %v95
  %v376 = vunpack.c.l.b16 %v96
  %v377 = vunpack.c.l.b16 %v97
  %v378 = vunpack.c.l.b16 %v98
  %v379 = vunpack.c.l.b16 %v99
  %v380 = vunpack.c.l.b16 %v100
  %v381 = vunpack.c.l.b16 %v101
  %v382 = vpack.c.b16 %v311, %v310
  %v383 = vpack.c.b16 %v313, %v312
  %v384 = vpack.c.b16 %v315, %v314
  %v385 = vpack.c.b16 %v317, %v316
  %v386 = vpack.c.b16 %v319, %v318
  %v387 = vpack.c.b16 %v321, %v320
  %v388 = vpack.c.b16 %v323, %v322
  %v389 = vpack.c.b16 %v325, %v324
  %v390 = vpack.c.b16 %v327, %v326
  %v391 = vpack.c.b16 %v329, %v328
  %v392 = vpack.c.b16 %v331, %v330
  %v393 = vpack.c.b16 %v333, %v332
  %v394 = vpack.c.b16 %v335, %v334
  %v395 = vpack.c.b16 %v337, %v336
  %v396 = vpack.c.b16 %v339, %v338
  %v397 = vpack.c.b16 %v341, %v340
  %v398 = vpack.c.b16 %v343, %v342
  %v399 = vpack.c.b16 %v345, %v344
  %v400 = vpack.c.b16 %v347, %v346
  %v401 = vpack.c.b16 %v349, %v348
  %v402 = vpack.c.b16 %v351, %v350
  %v403 = vpack.c.b16 %v353, %v352
  %v404 = vpack.c.b16 %v355, %v354
  %v405 = vpack.c.b16 %v357, %v356
  %v406 = vpack.c.b16 %v359, %v358
  %v407 = vpack.c.b16 %v361, %v360
  %v408 = vpack.c.b16 %v363, %v362
  %v409 = vpack.c.b16 %v365, %v364
  %v410 = vpack.c.b16 %v367, %v366
  %v411 = vpack.c.b16 %v369, %v368
  %v412 = vpack.c.b16 %v371, %v370
  %v413 = vpack.c.b16 %v373, %v372
  %v414 = vpack.c.b16 %v375, %v374
  %v415 = vpack.c.b16 %v377, %v376
  %v416 = vpack.c.b16 %v379, %v378
  %v417 = vpack.c.b16 %v381, %v380
  %vm454 = vcmask 523264
  %v456 = vsel %vm454, %v224, 0
  %v459 = vsel %vm454, %v229, 0
  %461 = vmatprep.subr.bf16.mxu0 0
  %462 = vmatpush1.bf16.msra.mxu0 %v389
  %463 = vmatprep.subr.bf16.mxu0 0
  %464 = vmatpush1.bf16.msra.mxu0 %v388
  %465 = vmatprep.subr.bf16.mxu0 0
  %466 = vmatpush1.bf16.msra.mxu0 %v387
  %467 = vmatprep.subr.bf16.mxu0 0
  %468 = vmatpush1.bf16.msra.mxu0 %v386
  %469 = vmatprep.subr.bf16.mxu0 0
  %470 = vmatpush1.bf16.msra.mxu0 %v385
  %471 = vmatprep.subr.bf16.mxu0 0
  %472 = vmatpush1.bf16.msra.mxu0 %v384
  %473 = vmatprep.subr.bf16.mxu0 0
  %474 = vmatpush1.bf16.msra.mxu0 %v383
  %475 = vmatprep.subr.bf16.mxu0 0
  %476 = vmatpush1.bf16.msra.mxu0 %v382
  %477 = vmatprep.subr.bf16.mxu0 0
  %478 = vmatpush2.bf16.msra.mxu0 %v397
  %479 = vmatprep.subr.bf16.mxu0 0
  %480 = vmatpush2.bf16.msra.mxu0 %v396
  %481 = vmatprep.subr.bf16.mxu0 0
  %482 = vmatpush2.bf16.msra.mxu0 %v395
  %483 = vmatprep.subr.bf16.mxu0 0
  %484 = vmatpush2.bf16.msra.mxu0 %v394
  %485 = vmatprep.subr.bf16.mxu0 0
  %486 = vmatpush2.bf16.msra.mxu0 %v393
  %487 = vmatprep.subr.bf16.mxu0 0
  %488 = vmatpush2.bf16.msra.mxu0 %v392
  %489 = vmatprep.subr.bf16.mxu0 0
  %490 = vmatpush2.bf16.msra.mxu0 %v391
  %491 = vmatprep.subr.bf16.mxu0 0
  %492 = vmatpush2.bf16.msra.mxu0 %v390
  %493 = vmatprep.mubr.bf16.mxu0 %v221
  %494 = vmatmul.mubr.bf16.gmra.mxu0 %v220
  %v495 = vpop.f32.mrf.mxu0
  %v496 = vadd.f32 %v174, %v495
  %v497 = vpop.f32.mrf.mxu0
  %v498 = vpop.f32.mrf.mxu0
  %v499 = vadd.f32 %v177, %v498
  %v500 = vpop.f32.mrf.mxu0
  %501 = vmatprep.mubr.bf16.mxu0 %v226
  %502 = vmatmul.mubr.bf16.gmra.mxu0 %v225
  %v503 = vpop.f32.mrf.mxu0
  %v504 = vadd.f32 %v182, %v503
  %v505 = vpop.f32.mrf.mxu0
  %v506 = vpop.f32.mrf.mxu0
  %v507 = vadd.f32 %v185, %v506
  %v508 = vpop.f32.mrf.mxu0
  %509 = vdwg.mxu0
  %510 = vmatprep.subr.bf16.mxu0 0
  %511 = vmatpush1.bf16.msra.mxu0 %v405
  %512 = vmatprep.subr.bf16.mxu0 0
  %513 = vmatpush1.bf16.msra.mxu0 %v404
  %514 = vmatprep.subr.bf16.mxu0 0
  %515 = vmatpush1.bf16.msra.mxu0 %v403
  %516 = vmatprep.subr.bf16.mxu0 0
  %517 = vmatpush1.bf16.msra.mxu0 %v402
  %518 = vmatprep.subr.bf16.mxu0 0
  %519 = vmatpush1.bf16.msra.mxu0 %v401
  %520 = vmatprep.subr.bf16.mxu0 0
  %521 = vmatpush1.bf16.msra.mxu0 %v400
  %522 = vmatprep.subr.bf16.mxu0 0
  %523 = vmatpush1.bf16.msra.mxu0 %v399
  %524 = vmatprep.subr.bf16.mxu0 0
  %525 = vmatpush1.bf16.msra.mxu0 %v398
  %526 = vmatprep.subr.bf16.mxu0 0
  %527 = vmatpush2.bf16.msra.mxu0 %v413
  %528 = vmatprep.subr.bf16.mxu0 0
  %529 = vmatpush2.bf16.msra.mxu0 %v412
  %530 = vmatprep.subr.bf16.mxu0 0
  %531 = vmatpush2.bf16.msra.mxu0 %v411
  %532 = vmatprep.subr.bf16.mxu0 0
  %533 = vmatpush2.bf16.msra.mxu0 %v410
  %534 = vmatprep.subr.bf16.mxu0 0
  %535 = vmatpush2.bf16.msra.mxu0 %v409
  %536 = vmatprep.subr.bf16.mxu0 0
  %537 = vmatpush2.bf16.msra.mxu0 %v408
  %538 = vmatprep.subr.bf16.mxu0 0
  %539 = vmatpush2.bf16.msra.mxu0 %v407
  %540 = vmatprep.subr.bf16.mxu0 0
  %541 = vmatpush2.bf16.msra.mxu0 %v406
  %542 = vmatprep.mubr.bf16.mxu0 %v223
  %543 = vmatmul.mubr.bf16.gmra.mxu0 %v222
  %v544 = vpop.f32.mrf.mxu0
  %v545 = vadd.f32 %v496, %v544
  %v546 = vpop.f32.mrf.mxu0
  %v547 = vpop.f32.mrf.mxu0
  %v548 = vadd.f32 %v499, %v547
  %v549 = vpop.f32.mrf.mxu0
  %550 = vmatprep.mubr.bf16.mxu0 %v228
  %551 = vmatmul.mubr.bf16.gmra.mxu0 %v227
  %v552 = vpop.f32.mrf.mxu0
  %v553 = vadd.f32 %v504, %v552
  %v554 = vpop.f32.mrf.mxu0
  %v555 = vpop.f32.mrf.mxu0
  %v556 = vadd.f32 %v507, %v555
  %v557 = vpop.f32.mrf.mxu0
  %558 = vdwg.mxu0
  %559 = vmatprep.subr.bf16.mxu0 0
  %560 = vmatpush1.bf16.msra.mxu0 0
  %561 = vmatprep.subr.bf16.mxu0 0
  %562 = vmatpush1.bf16.msra.mxu0 0
  %563 = vmatprep.subr.bf16.mxu0 0
  %564 = vmatpush1.bf16.msra.mxu0 0
  %565 = vmatprep.subr.bf16.mxu0 0
  %566 = vmatpush1.bf16.msra.mxu0 0
  %567 = vmatprep.subr.bf16.mxu0 0
  %568 = vmatpush1.bf16.msra.mxu0 %v417
  %569 = vmatprep.subr.bf16.mxu0 0
  %570 = vmatpush1.bf16.msra.mxu0 %v416
  %571 = vmatprep.subr.bf16.mxu0 0
  %572 = vmatpush1.bf16.msra.mxu0 %v415
  %573 = vmatprep.subr.bf16.mxu0 0
  %574 = vmatpush1.bf16.msra.mxu0 %v414
  %575 = vmatprep.subr.bf16.mxu0 0
  %576 = vmatpush2.bf16.msra.mxu0 0
  %577 = vmatprep.subr.bf16.mxu0 0
  %578 = vmatpush2.bf16.msra.mxu0 0
  %579 = vmatprep.subr.bf16.mxu0 0
  %580 = vmatpush2.bf16.msra.mxu0 0
  %581 = vmatprep.subr.bf16.mxu0 0
  %582 = vmatpush2.bf16.msra.mxu0 0
  %583 = vmatprep.subr.bf16.mxu0 0
  %584 = vmatpush2.bf16.msra.mxu0 0
  %585 = vmatprep.subr.bf16.mxu0 0
  %586 = vmatpush2.bf16.msra.mxu0 0
  %587 = vmatprep.subr.bf16.mxu0 0
  %588 = vmatpush2.bf16.msra.mxu0 0
  %589 = vmatprep.subr.bf16.mxu0 0
  %590 = vmatpush2.bf16.msra.mxu0 0
  %591 = vmatprep.mubr.bf16.mxu0 0
  %592 = vmatmul.mubr.bf16.gmra.mxu0 %v456
  %v593 = vpop.f32.mrf.mxu0
  %v594 = vadd.f32 %v545, %v593
  %v595 = vpop.f32.mrf.mxu0
  %v596 = vpop.f32.mrf.mxu0
  %v597 = vadd.f32 %v548, %v596
  %v598 = vpop.f32.mrf.mxu0
  %599 = vmatprep.mubr.bf16.mxu0 0
  %600 = vmatmul.mubr.bf16.gmra.mxu0 %v459
  %v601 = vpop.f32.mrf.mxu0
  %v602 = vadd.f32 %v553, %v601
  %v603 = vpop.f32.mrf.mxu0
  %v604 = vpop.f32.mrf.mxu0
  %v605 = vadd.f32 %v556, %v604
  %v606 = vpop.f32.mrf.mxu0
  %607 = vdwg.mxu0
  %608 = vst.msk [vmem:[%s4] sm:$0xff] %vm454, %v594
  %609 = vst.msk [vmem:[%s4 + $0x8] sm:$0xff] %vm454, %v597
  %610 = vst.msk [vmem:[%s4 + $0x10] sm:$0xff] %vm454, %v602
  %611 = vst.msk [vmem:[%s4 + $0x18] sm:$0xff] %vm454, %v605
  // Predicated region
  $region18: #{_lambda_.20} parent=0 // pred_check
    _
  $region19: #{_lambda_.20} parent=0 // pred_check_branch
    %613 = sbr.rel (0) target = $region21
  $region20: #{_lambda_.20} parent=0 // pred_region
    _
  $region21: #{_lambda_.20} parent=0 // pred_fallthru
    _
  // Predicated region
  $region22: #{_lambda_.20} parent=0 // pred_check
    _
  $region23: #{_lambda_.20} parent=0 // pred_check_branch
    %615 = sbr.rel (0) target = $region25
  $region24: #{_lambda_.20} parent=0 // pred_region
    _
  $region25: #{_lambda_.20} parent=0 // pred_fallthru
    _

// kernel: _lambda_.21
$region0: #{_lambda_.21}
  #allocation0 [shape = 'u32[]', space=smem, size = 0x4, offset = 0x4, fixed_abs, tag = 'smem constant byte address 0x4 - core index']
  #allocation1 [shape = 'u32[144,128]{1,0:T(1,128)}', space=vmem, size = 0x12000, scoped, tag = 'internal scratch']
  %s0 = inlined_call_operand.vmem [shape: f32[32,64], index: 0, kind: input, shape index: {}]
  %s1 = inlined_call_operand.vmem [shape: f32[1,64], index: 1, kind: input, shape index: {}]
  %s2 = inlined_call_operand.vmem [shape: f32[1,64], index: 2, kind: input, shape index: {}]
  %s3 = inlined_call_operand.vmem [shape: f32[2,32], index: 3, kind: input, shape index: {}]
  %s4 = inlined_call_operand.vmem [shape: f32[64,10], index: 4, kind: input, shape index: {}]
  %s5 = inlined_call_operand.vmem [shape: f32[1,10], index: 5, kind: input, shape index: {}]
  %s6 = inlined_call_operand.hbm [shape: f32[2,10], index: 6, kind: output, shape index: {}]
  %s7 = sld [smem:[#allocation0]]
  $region34: #{_lambda_.21} parent=0
    _
  %s9 = ssub.s32 1, %s7
  %s10 = scalar_select 0, %s9, %s7
  $region1: #{_lambda_.21} parent=0
    #allocation2 [shape = 'u8[1024]{0}', space=vmem, size = 0x400, scoped, tag = 'output window, operand 0, single buffered']
    #allocation3 [shape = 's32[1]{0}', space=sflag, size = 0x4, scoped, tag = 'scoped memory for _lambda_.21']
    %11 = vsyncpa [#allocation3], 0
    // Predicated region
    $region2: #{_lambda_.21} parent=1 // pred_check
      _
    $region3: #{_lambda_.21} parent=1 // pred_check_branch
      %13 = sbr.rel (0) target = $region5
    $region4: #{_lambda_.21} parent=1 // pred_region
      _
    $region5: #{_lambda_.21} parent=1 // pred_fallthru
      _
    // Predicated region
    $region6: #{_lambda_.21} parent=1 // pred_check
      _
    $region7: #{_lambda_.21} parent=1 // pred_check_branch
      %15 = sbr.rel (0) target = $region9
    $region8: #{_lambda_.21} parent=1 // pred_region
      _
    $region9: #{_lambda_.21} parent=1 // pred_fallthru
      _
    // Predicated region
    $region10: #{_lambda_.21} parent=1 // pred_check
      _
    $region11: #{_lambda_.21} parent=1 // pred_check_branch
      %17 = sbr.rel (0) target = $region13
    $region12: #{_lambda_.21} parent=1 // pred_region
      _
    $region13: #{_lambda_.21} parent=1 // pred_fallthru
      _
    // Predicated region
    $region14: #{_lambda_.21} parent=1 // pred_check
      _
    $region15: #{_lambda_.21} parent=1 // pred_check_branch
      %19 = sbr.rel (0) target = $region17
    $region16: #{_lambda_.21} parent=1 // pred_region
      _
    $region17: #{_lambda_.21} parent=1 // pred_fallthru
      _
    // Predicated region
    $region18: #{_lambda_.21} parent=1 // pred_check
      _
    $region19: #{_lambda_.21} parent=1 // pred_check_branch
      %21 = sbr.rel (0) target = $region21
    $region20: #{_lambda_.21} parent=1 // pred_region
      _
    $region21: #{_lambda_.21} parent=1 // pred_fallthru
      _
    // Predicated region
    $region22: #{_lambda_.21} parent=1 // pred_check
      _
    $region23: #{_lambda_.21} parent=1 // pred_check_branch
      %23 = sbr.rel (0) target = $region25
    $region24: #{_lambda_.21} parent=1 // pred_region
      _
    $region25: #{_lambda_.21} parent=1 // pred_fallthru
      _
    %v24 = vld [vmem:[%s0] sm:$0xff]
    %v25 = vld [vmem:[%s0 + $0x8] sm:$0xff]
    %v26 = vld [vmem:[%s0 + $0x10] sm:$0xff]
    %v27 = vld [vmem:[%s0 + $0x18] sm:$0xff]
    %vm28 = vcmask 523264
    %v29 = vsel %vm28, %v24, 0.0
    %v30 = vsel %vm28, %v25, 0.0
    %v31 = vadd.f32 %v29, %v30
    %v32 = vsel %vm28, %v26, 0.0
    %v33 = vadd.f32 %v31, %v32
    %v34 = vsel %vm28, %v27, 0.0
    %v35 = vadd.f32 %v33, %v34
    %v36 = vrot.slane %v35, 4
    %v37 = vadd.f32 %v35, %v36
    %v38 = vrot.slane %v37, 2
    %v39 = vadd.f32 %v37, %v38
    %v40 = vrot.slane %v39, 1
    %v41 = vadd.f32 %v39, %v40
    %v42 = vmul.f32 %v41, 0.03125
    %v43 = vmul.f32 %v24, %v24
    %v44 = vmul.f32 %v25, %v25
    %v45 = vmul.f32 %v26, %v26
    %v46 = vmul.f32 %v27, %v27
    %v47 = vsel %vm28, %v43, 0.0
    %v48 = vsel %vm28, %v44, 0.0
    %v49 = vadd.f32 %v47, %v48
    %v50 = vsel %vm28, %v45, 0.0
    %v51 = vadd.f32 %v49, %v50
    %v52 = vsel %vm28, %v46, 0.0
    %v53 = vadd.f32 %v51, %v52
    %v54 = vrot.slane %v53, 4
    %v55 = vadd.f32 %v53, %v54
    %v56 = vrot.slane %v55, 2
    %v57 = vadd.f32 %v55, %v56
    %v58 = vrot.slane %v57, 1
    %v59 = vadd.f32 %v57, %v58
    %v60 = vmul.f32 %v59, 0.03125
    %v61 = vmul.f32 %v42, %v42
    %v62 = vsub.f32 %v60, %v61
    %v63 = vld [vmem:[%s1] sm:$0x1]
    %v64 = vadd.f32 %v62, 1e-05
    %v65 = vrsqrt.pop %v64
    %v66 = vmul.f32 %v63, %v65
    %v67 = vld [vmem:[%s2] sm:$0x1]
    %v68 = vmul.f32 %v42, %v66
    %v69 = vsub.f32 %v67, %v68
    %v71 = vlaneseq
    %v72 = vshrl.u32 %v71, 7
    %v73 = vsub.s32 0, %v72
    %v74 = vrot.slane %v66, %v73
    %v76 = vmul.f32 %v24, %v74
    %v77 = vmul.f32 %v25, %v74
    %v78 = vmul.f32 %v26, %v74
    %v79 = vmul.f32 %v27, %v74
    %v81 = vlaneseq
    %v82 = vshrl.u32 %v81, 7
    %v83 = vsub.s32 0, %v82
    %v84 = vrot.slane %v69, %v83
    %v86 = vadd.f32 %v76, %v84
    %v87 = vadd.f32 %v77, %v84
    %v88 = vadd.f32 %v78, %v84
    %v89 = vadd.f32 %v79, %v84
    %v90 = vmax.f32 %v86, 0.0
    %v91 = vmax.f32 %v87, 0.0
    %v92 = vmax.f32 %v88, 0.0
    %v93 = vmax.f32 %v89, 0.0
    %v94 = vld [vmem:[%s3] sm:$0x3]
    %vm95 = vcmask 261120
    %v97 = vsel %vm95, %v94, 0
    %99 = vmatprep.subr.mxu0 0.0
    %100 = vmatpush1.msra.mxu0 0.0
    %101 = vmatprep.subr.mxu0 0.0
    %102 = vmatpush1.msra.mxu0 0.0
    %103 = vmatprep.subr.mxu0 0.0
    %104 = vmatpush1.msra.mxu0 0.0
    %105 = vmatprep.subr.mxu0 0.0
    %106 = vmatpush1.msra.mxu0 0.0
    %107 = vmatprep.subr.mxu0 0.0
    %108 = vmatpush1.msra.mxu0 0.0
    %109 = vmatprep.subr.mxu0 0.0
    %110 = vmatpush1.msra.mxu0 0.0
    %111 = vmatprep.subr.mxu0 0.0
    %112 = vmatpush1.msra.mxu0 0.0
    %113 = vmatprep.subr.mxu0 0.0
    %114 = vmatpush1.msra.mxu0 0.0
    %115 = vmatprep.subr.mxu0 0.0
    %116 = vmatpush1.msra.mxu0 0.0
    %117 = vmatprep.subr.mxu0 0.0
    %118 = vmatpush1.msra.mxu0 0.0
    %119 = vmatprep.subr.mxu0 0.0
    %120 = vmatpush1.msra.mxu0 0.0
    %121 = vmatprep.subr.mxu0 0.0
    %122 = vmatpush1.msra.mxu0 0.0
    %123 = vmatprep.subr.mxu0 0.0
    %124 = vmatpush1.msra.mxu0 %v93
    %125 = vmatprep.subr.mxu0 0.0
    %126 = vmatpush1.msra.mxu0 %v92
    %127 = vmatprep.subr.mxu0 0.0
    %128 = vmatpush1.msra.mxu0 %v91
    %129 = vmatprep.subr.mxu0 0.0
    %130 = vmatpush1.msra.mxu0 %v90
    %131 = vmatprep.subr.mxu0 0.0
    %132 = vmatpush2.msra.mxu0 0.0
    %133 = vmatprep.subr.mxu0 0.0
    %134 = vmatpush2.msra.mxu0 0.0
    %135 = vmatprep.subr.mxu0 0.0
    %136 = vmatpush2.msra.mxu0 0.0
    %137 = vmatprep.subr.mxu0 0.0
    %138 = vmatpush2.msra.mxu0 0.0
    %139 = vmatprep.subr.mxu0 0.0
    %140 = vmatpush2.msra.mxu0 0.0
    %141 = vmatprep.subr.mxu0 0.0
    %142 = vmatpush2.msra.mxu0 0.0
    %143 = vmatprep.subr.mxu0 0.0
    %144 = vmatpush2.msra.mxu0 0.0
    %145 = vmatprep.subr.mxu0 0.0
    %146 = vmatpush2.msra.mxu0 0.0
    %147 = vmatprep.subr.mxu0 0.0
    %148 = vmatpush2.msra.mxu0 0.0
    %149 = vmatprep.subr.mxu0 0.0
    %150 = vmatpush2.msra.mxu0 0.0
    %151 = vmatprep.subr.mxu0 0.0
    %152 = vmatpush2.msra.mxu0 0.0
    %153 = vmatprep.subr.mxu0 0.0
    %154 = vmatpush2.msra.mxu0 0.0
    %155 = vmatprep.subr.mxu0 0.0
    %156 = vmatpush2.msra.mxu0 0.0
    %157 = vmatprep.subr.mxu0 0.0
    %158 = vmatpush2.msra.mxu0 0.0
    %159 = vmatprep.subr.mxu0 0.0
    %160 = vmatpush2.msra.mxu0 0.0
    %161 = vmatprep.subr.mxu0 0.0
    %162 = vmatpush2.msra.mxu0 0.0
    %163 = vmatprep.mubr.f32.mxu0 0.0
    %164 = vmatmul.mubr.f32.gmra.mxu0 %v97
    %v165 = vpop.f32.mrf.mxu0
    %v166 = vadd.f32 0.0, %v165
    %v167 = vpop.f32.mrf.mxu0
    %168 = vdwg.mxu0
    %v169 = vld [vmem:[%s4] sm:$0xff]
    %v170 = vld [vmem:[%s4 + $0x8] sm:$0xff]
    %v171 = vld [vmem:[%s4 + $0x10] sm:$0xff]
    %v172 = vld [vmem:[%s4 + $0x18] sm:$0xff]
    %v173 = vld [vmem:[%s4 + $0x20] sm:$0xff]
    %v174 = vld [vmem:[%s4 + $0x28] sm:$0xff]
    %v175 = vld [vmem:[%s4 + $0x30] sm:$0xff]
    %v176 = vld [vmem:[%s4 + $0x38] sm:$0xff]
    %v177 = vld [vmem:[%s5] sm:$0x1]
    %v179 = vlaneseq
    %v180 = vshrl.u32 %v179, 7
    %v181 = vsub.s32 0, %v180
    %v182 = vrot.slane %v177, %v181
    %v185 = vsel %vm28, %v166, 0
    %187 = vmatprep.subr.mxu0 0.0
    %188 = vmatpush1.msra.mxu0 0.0
    %189 = vmatprep.subr.mxu0 0.0
    %190 = vmatpush1.msra.mxu0 0.0
    %191 = vmatprep.subr.mxu0 0.0
    %192 = vmatpush1.msra.mxu0 0.0
    %193 = vmatprep.subr.mxu0 0.0
    %194 = vmatpush1.msra.mxu0 0.0
    %195 = vmatprep.subr.mxu0 0.0
    %196 = vmatpush1.msra.mxu0 0.0
    %197 = vmatprep.subr.mxu0 0.0
    %198 = vmatpush1.msra.mxu0 0.0
    %199 = vmatprep.subr.mxu0 0.0
    %200 = vmatpush1.msra.mxu0 0.0
    %201 = vmatprep.subr.mxu0 0.0
    %202 = vmatpush1.msra.mxu0 0.0
    %203 = vmatprep.subr.mxu0 0.0
    %204 = vmatpush1.msra.mxu0 %v176
    %205 = vmatprep.subr.mxu0 0.0
    %206 = vmatpush1.msra.mxu0 %v175
    %207 = vmatprep.subr.mxu0 0.0
    %208 = vmatpush1.msra.mxu0 %v174
    %209 = vmatprep.subr.mxu0 0.0
    %210 = vmatpush1.msra.mxu0 %v173
    %211 = vmatprep.subr.mxu0 0.0
    %212 = vmatpush1.msra.mxu0 %v172
    %213 = vmatprep.subr.mxu0 0.0
    %214 = vmatpush1.msra.mxu0 %v171
    %215 = vmatprep.subr.mxu0 0.0
    %216 = vmatpush1.msra.mxu0 %v170
    %217 = vmatprep.subr.mxu0 0.0
    %218 = vmatpush1.msra.mxu0 %v169
    %219 = vmatprep.subr.mxu0 0.0
    %220 = vmatpush2.msra.mxu0 0.0
    %221 = vmatprep.subr.mxu0 0.0
    %222 = vmatpush2.msra.mxu0 0.0
    %223 = vmatprep.subr.mxu0 0.0
    %224 = vmatpush2.msra.mxu0 0.0
    %225 = vmatprep.subr.mxu0 0.0
    %226 = vmatpush2.msra.mxu0 0.0
    %227 = vmatprep.subr.mxu0 0.0
    %228 = vmatpush2.msra.mxu0 0.0
    %229 = vmatprep.subr.mxu0 0.0
    %230 = vmatpush2.msra.mxu0 0.0
    %231 = vmatprep.subr.mxu0 0.0
    %232 = vmatpush2.msra.mxu0 0.0
    %233 = vmatprep.subr.mxu0 0.0
    %234 = vmatpush2.msra.mxu0 0.0
    %235 = vmatprep.subr.mxu0 0.0
    %236 = vmatpush2.msra.mxu0 0.0
    %237 = vmatprep.subr.mxu0 0.0
    %238 = vmatpush2.msra.mxu0 0.0
    %239 = vmatprep.subr.mxu0 0.0
    %240 = vmatpush2.msra.mxu0 0.0
    %241 = vmatprep.subr.mxu0 0.0
    %242 = vmatpush2.msra.mxu0 0.0
    %243 = vmatprep.subr.mxu0 0.0
    %244 = vmatpush2.msra.mxu0 0.0
    %245 = vmatprep.subr.mxu0 0.0
    %246 = vmatpush2.msra.mxu0 0.0
    %247 = vmatprep.subr.mxu0 0.0
    %248 = vmatpush2.msra.mxu0 0.0
    %249 = vmatprep.subr.mxu0 0.0
    %250 = vmatpush2.msra.mxu0 0.0
    %251 = vmatprep.mubr.f32.mxu0 0.0
    %252 = vmatmul.mubr.f32.gmra.mxu0 %v185
    %v253 = vpop.f32.mrf.mxu0
    %v254 = vadd.f32 %v182, %v253
    %v255 = vpop.f32.mrf.mxu0
    %256 = vdwg.mxu0
    %vm257 = vcmask 74752
    %258 = vst.msk [vmem:[#allocation2] sm:$0x3] %vm257, %v254
    // Predicated region
    $region26: #{_lambda_.21} parent=1 // pred_check
      _
    $region27: #{_lambda_.21} parent=1 // pred_check_branch
      %260 = sbr.rel (0) target = $region29
    $region28: #{_lambda_.21} parent=1 // pred_region
      %s262 = ssub.s32 32, 32
      %263 = vsyncadd [#allocation3], %s262
      %s265 = sshll.u32 [#allocation2], 4
      %s266 = int_to_ptr.vmem [resolvable:$true] %s265
      %268 = dma.vmem_to_hbm [thread:$0]  %s266, 32, %s6, [#allocation3]
    $region29: #{_lambda_.21} parent=1 // pred_fallthru
      _
    // Predicated region
    $region30: #{_lambda_.21} parent=1 // pred_check
      _
    $region31: #{_lambda_.21} parent=1 // pred_check_branch
      %270 = sbr.rel (0) target = $region33
    $region32: #{_lambda_.21} parent=1 // pred_region
      %271 = dma.done [#allocation3], 32
    $region33: #{_lambda_.21} parent=1 // pred_fallthru
      _
    %272 = vsyncpa [#allocation3], 1

</llo_original>
